<compile_context>
chip_gen: v7x
topology: tpu7x:2x2x1
jax: 0.10.0
libtpu: 0.0.40
codegen_flags: <defaults>
</compile_context>

<pallas_src>
import functools

import jax
import jax.numpy as jnp
from jax.experimental import pallas as pl
from jax.experimental.pallas import tpu as pltpu


IN_DIM = 784          # 28*28
H1 = 512
H2 = 256
TB_MAX = 512          # max batch-tile rows per grid step
SMALL_W = 128         # lane-dense slab for the small outputs (z_mu|z_var|x_var)


def _round_up(n, m):
    return ((n + m - 1) // m) * m


def _choose_tile(batch):
    b8 = _round_up(batch, 8)
    if b8 <= 8:
        tb = b8
    else:
        # >= 2 grid steps: one "parallel" step per v7x TensorCore and
        # DMA/compute overlap on every generation; capped at TB_MAX rows.
        tb = min(TB_MAX, _round_up((b8 + 1) // 2, 8))
    padded_b = _round_up(b8, tb)
    return tb, padded_b


def _softplus(x):
    # matches torch.nn.Softplus(beta=1, threshold=20)
    return jnp.where(x > 20.0, x, jnp.log1p(jnp.exp(jnp.minimum(x, 20.0))))


def _sigmoid(x):
    # exact sigmoid with a single EUP transcendental (tanh); range-safe [0, 1].
    return 0.5 * (1.0 + jnp.tanh(0.5 * x))


# ----------------------------- fused kernel -----------------------------

def vae_fused_kernel(
    x_ref, eps_ref,
    w1e_ref, b1e_ref,                     # packed encoder layer 1 (mu|var)
    w2em_ref, b2em_ref, w2ev_ref, b2ev_ref,
    w3em_ref, b3em_ref, w3ev_ref, b3ev_ref,
    w1d_ref, b1d_ref,                     # packed decoder layer 1 (mu|var)
    w2dm_ref, b2dm_ref, w2dv_ref, b2dv_ref,
    w3dm_ref, b3dm_ref, w3dv_ref, b3dv_ref,
    xmu_ref, small_ref,
    *, latent, switch):

    f32 = jnp.float32
    bf16 = jnp.bfloat16

    def dense(a, w_ref, b_ref):
        # bf16 operands, f32 accumulation on the MXU, f32 bias add.
        return jnp.dot(a, w_ref[...], preferred_element_type=f32) + b_ref[...]

    # ------------------------------ encoder ------------------------------
    x = x_ref[...].astype(bf16)                                     # (TB, 784)
    h1 = jnp.maximum(dense(x, w1e_ref, b1e_ref), 0.0).astype(bf16)  # (TB,1024)
    h1m, h1v = h1[:, :H1], h1[:, H1:]

    h2m = jnp.maximum(dense(h1m, w2em_ref, b2em_ref), 0.0).astype(bf16)
    h2v = jnp.maximum(dense(h1v, w2ev_ref, b2ev_ref), 0.0).astype(bf16)

    z_mu = dense(h2m, w3em_ref, b3em_ref)                           # (TB, L) f32
    z_var = _softplus(dense(h2v, w3ev_ref, b3ev_ref))               # (TB, L) f32

    # reparameterization trick: z stays in VMEM/vregs, never written to HBM.
    z = z_mu + eps_ref[...] * jnp.sqrt(z_var)

    # ------------------------------ decoder ------------------------------
    zb = z.astype(bf16)
    g1 = jnp.maximum(dense(zb, w1d_ref, b1d_ref), 0.0).astype(bf16)  # (TB, 512)
    g1m, g1v = g1[:, :H2], g1[:, H2:]

    g2m = jnp.maximum(dense(g1m, w2dm_ref, b2dm_ref), 0.0).astype(bf16)
    g2v = jnp.maximum(dense(g1v, w2dv_ref, b2dv_ref), 0.0).astype(bf16)

    x_mu = _sigmoid(dense(g2m, w3dm_ref, b3dm_ref))                  # (TB, 784)
    d_var = _softplus(dense(g2v, w3dv_ref, b3dv_ref))                # (TB, 1)
    # matches the PyTorch linear blend: switch * dec_var(z) + (1-switch)*0.02^2
    x_var = switch * d_var + (1.0 - switch) * (0.02 ** 2)

    # ------------------------- lane-dense outputs -------------------------
    xmu_ref[...] = x_mu.astype(xmu_ref.dtype)

    rows = z_mu.shape[0]
    pad_w = SMALL_W - (2 * latent + 1)
    small = jnp.concatenate(
        [z_mu, z_var, x_var, jnp.zeros((rows, pad_w), f32)], axis=-1)
    small_ref[...] = small.astype(small_ref.dtype)      # one unmasked store


# ----------------------------- wrapper -----------------------------

def vae_normal_forward(packed_params, x, eps, switch, *, latent):
    """Mirrors VAE_normal.forward(x, switch).

    x:      (B, 1, 28, 28) float32
    eps:    (B, latent)    float32  (the torch.randn_like noise, passed in)
    switch: python float
    returns (x_mu, x_var, z_mu, z_var)
    """
    assert 2 * latent + 1 <= SMALL_W, "latent too large for the small-output slab"

    batch = x.shape[0]
    x2d = x.reshape(batch, -1).astype(jnp.float32)               # (B, 784)
    eps = eps.astype(jnp.float32)

    tb, padded_b = _choose_tile(batch)
    if padded_b != batch:
        # only the batch axis is ever padded (and only when batch % tb != 0)
        x2d = jnp.zeros((padded_b, IN_DIM), jnp.float32).at[:batch].set(x2d)
        eps = jnp.zeros((padded_b, latent), jnp.float32).at[:batch].set(eps)

    grid = (padded_b // tb,)

    in_specs = [
        pl.BlockSpec((tb, IN_DIM), lambda i: (i, 0)),            # x
        pl.BlockSpec((tb, latent), lambda i: (i, 0)),            # eps
    ] + [
        # weights/biases: constant block index -> DMA'd once, VMEM-resident
        # across the batch grid (Pallas skips the re-DMA when unchanged)
        pl.BlockSpec(p.shape, lambda i: (0, 0)) for p in packed_params
    ]

    out_shape = (
        jax.ShapeDtypeStruct((padded_b, IN_DIM), jnp.float32),   # x_mu (B, 784)
        jax.ShapeDtypeStruct((padded_b, SMALL_W), jnp.float32),  # z_mu|z_var|x_var
    )
    out_specs = (
        pl.BlockSpec((tb, IN_DIM), lambda i: (i, 0)),
        pl.BlockSpec((tb, SMALL_W), lambda i: (i, 0)),
    )

    x_mu_full, small = pl.pallas_call(
        functools.partial(vae_fused_kernel, latent=latent, switch=float(switch)),
        out_shape=out_shape,
        grid=grid,
        in_specs=in_specs,
        out_specs=out_specs,
        compiler_params=pltpu.CompilerParams(
            dimension_semantics=("parallel",)),
    )(x2d, eps, *packed_params)

    if padded_b != batch:
        x_mu_full = x_mu_full[:batch]
        small = small[:batch]

    x_mu = x_mu_full
    z_mu = small[:, 0:latent]
    z_var = small[:, latent:2 * latent]
    x_var = small[:, 2 * latent:2 * latent + 1]
    return x_mu, x_var, z_mu, z_var


# ----------------------------- parameter init -----------------------------

def _init_linear(key, in_dim, out_dim):
    # torch.nn.Linear default init: U(-1/sqrt(in), 1/sqrt(in)) for W and b.
    kw, kb = jax.random.split(key)
    bound = 1.0 / jnp.sqrt(jnp.float32(in_dim))
    w = jax.random.uniform(kw, (in_dim, out_dim), jnp.float32, -bound, bound)
    b = jax.random.uniform(kb, (1, out_dim), jnp.float32, -bound, bound)
    return w, b


def init_vae_params(key, latent):
    ks = jax.random.split(key, 12)
    # encoder heads (784 -> 512 -> 256 -> L)
    w1em, b1em = _init_linear(ks[0], IN_DIM, H1)
    w2em, b2em = _init_linear(ks[1], H1, H2)
    w3em, b3em = _init_linear(ks[2], H2, latent)
    w1ev, b1ev = _init_linear(ks[3], IN_DIM, H1)
    w2ev, b2ev = _init_linear(ks[4], H1, H2)
    w3ev, b3ev = _init_linear(ks[5], H2, latent)
    # decoder heads (L -> 256 -> 512 -> {784 | 1})
    w1dm, b1dm = _init_linear(ks[6], latent, H2)
    w2dm, b2dm = _init_linear(ks[7], H2, H1)
    w3dm, b3dm = _init_linear(ks[8], H1, IN_DIM)
    w1dv, b1dv = _init_linear(ks[9], latent, H2)
    w2dv, b2dv = _init_linear(ks[10], H2, H1)
    w3dv, b3dv = _init_linear(ks[11], H1, 1)

    bf16 = jnp.bfloat16

    # encoders share input x -> pack layer-1 weights side by side: (784, 1024)
    w1e = jnp.concatenate([w1em, w1ev], axis=1)
    b1e = jnp.concatenate([b1em, b1ev], axis=1)

    # decoders share input z -> pack layer-1 weights side by side: (L, 512)
    w1d = jnp.concatenate([w1dm, w1dv], axis=1)
    b1d = jnp.concatenate([b1dm, b1dv], axis=1)

    # weights in bf16 (halves HBM traffic, doubles MXU rate on v6e/v7x);
    # biases stay f32 (added after f32 accumulation).
    return (
        w1e.astype(bf16), b1e,
        w2em.astype(bf16), b2em, w2ev.astype(bf16), b2ev,
        w3em.astype(bf16), b3em, w3ev.astype(bf16), b3ev,
        w1d.astype(bf16), b1d,
        w2dm.astype(bf16), b2dm, w2dv.astype(bf16), b2dv,
        w3dm.astype(bf16), b3dm, w3dv.astype(bf16), b3dv,
    )


# ----------------------------- main -----------------------------

if __name__ == "__main__":
    LATENT_SIZE = 8
    BATCH = 8

    root = jax.random.PRNGKey(0)
    k_param, k_x, k_eps = jax.random.split(root, 3)

    params = init_vae_params(k_param, LATENT_SIZE)
    x = jax.random.uniform(k_x, (BATCH, 1, 28, 28), jnp.float32)   # fake images
    eps = jax.random.normal(k_eps, (BATCH, LATENT_SIZE), jnp.float32)
    switch = 1.0

    fwd = jax.jit(functools.partial(vae_normal_forward,
                                    switch=switch, latent=LATENT_SIZE))
    x_mu, x_var, z_mu, z_var = fwd(params, x, eps)
    jax.block_until_ready((x_mu, x_var, z_mu, z_var))

    assert x_mu.shape == (BATCH, 784)
    assert x_var.shape == (BATCH, 1)
    assert z_mu.shape == (BATCH, LATENT_SIZE)
    assert z_var.shape == (BATCH, LATENT_SIZE)
    assert bool(jnp.all(jnp.isfinite(x_mu)))
    assert bool(jnp.all(x_mu >= 0.0)) and bool(jnp.all(x_mu <= 1.0))    # sigmoid range
    assert bool(jnp.all(z_var >= 0.0)) and bool(jnp.all(x_var >= 0.0))  # softplus range

    # TODO(synk): training loop / Adam optimizer / loss_function / image saving
    # are host-side and not part of forward; intentionally not translated.
    print("KERNEL_OK")
</pallas_src>

<mosaic_0001>
module attributes {stable_mosaic.version = 11 : i64} {
  func.func @vae_fused_kernel(%arg0: i32, %arg1: memref<8x784xf32, #tpu.memory_space<vmem>>, %arg2: memref<8x8xf32, #tpu.memory_space<vmem>>, %arg3: memref<784x1024xbf16, #tpu.memory_space<vmem>>, %arg4: memref<1x1024xf32, #tpu.memory_space<vmem>>, %arg5: memref<512x256xbf16, #tpu.memory_space<vmem>>, %arg6: memref<1x256xf32, #tpu.memory_space<vmem>>, %arg7: memref<512x256xbf16, #tpu.memory_space<vmem>>, %arg8: memref<1x256xf32, #tpu.memory_space<vmem>>, %arg9: memref<256x8xbf16, #tpu.memory_space<vmem>>, %arg10: memref<1x8xf32, #tpu.memory_space<vmem>>, %arg11: memref<256x8xbf16, #tpu.memory_space<vmem>>, %arg12: memref<1x8xf32, #tpu.memory_space<vmem>>, %arg13: memref<8x512xbf16, #tpu.memory_space<vmem>>, %arg14: memref<1x512xf32, #tpu.memory_space<vmem>>, %arg15: memref<256x512xbf16, #tpu.memory_space<vmem>>, %arg16: memref<1x512xf32, #tpu.memory_space<vmem>>, %arg17: memref<256x512xbf16, #tpu.memory_space<vmem>>, %arg18: memref<1x512xf32, #tpu.memory_space<vmem>>, %arg19: memref<512x784xbf16, #tpu.memory_space<vmem>>, %arg20: memref<1x784xf32, #tpu.memory_space<vmem>>, %arg21: memref<512x1xbf16, #tpu.memory_space<vmem>>, %arg22: memref<1x1xf32, #tpu.memory_space<vmem>>, %arg23: memref<8x784xf32, #tpu.memory_space<vmem>>, %arg24: memref<8x128xf32, #tpu.memory_space<vmem>>) attributes {dimension_semantics = [#tpu.dimension_semantics<parallel>], iteration_bounds = array<i64: 1>, scalar_prefetch = 0 : i64, scratch_operands = 0 : i64, tpu.core_type = #tpu.core_type<tc>, window_params = [{transform_indices = @transform_0, window_bounds = array<i64: 8, 784>}, {transform_indices = @transform_1, window_bounds = array<i64: 8, 8>}, {pipeline_mode = #tpu.pipeline_mode<synchronous>, transform_indices = @transform_2, window_bounds = array<i64: 784, 1024>}, {pipeline_mode = #tpu.pipeline_mode<synchronous>, transform_indices = @transform_3, window_bounds = array<i64: 1, 1024>}, {pipeline_mode = #tpu.pipeline_mode<synchronous>, transform_indices = @transform_4, window_bounds = array<i64: 512, 256>}, {pipeline_mode = #tpu.pipeline_mode<synchronous>, transform_indices = @transform_5, window_bounds = array<i64: 1, 256>}, {pipeline_mode = #tpu.pipeline_mode<synchronous>, transform_indices = @transform_6, window_bounds = array<i64: 512, 256>}, {pipeline_mode = #tpu.pipeline_mode<synchronous>, transform_indices = @transform_7, window_bounds = array<i64: 1, 256>}, {pipeline_mode = #tpu.pipeline_mode<synchronous>, transform_indices = @transform_8, window_bounds = array<i64: 256, 8>}, {pipeline_mode = #tpu.pipeline_mode<synchronous>, transform_indices = @transform_9, window_bounds = array<i64: 1, 8>}, {pipeline_mode = #tpu.pipeline_mode<synchronous>, transform_indices = @transform_10, window_bounds = array<i64: 256, 8>}, {pipeline_mode = #tpu.pipeline_mode<synchronous>, transform_indices = @transform_11, window_bounds = array<i64: 1, 8>}, {pipeline_mode = #tpu.pipeline_mode<synchronous>, transform_indices = @transform_12, window_bounds = array<i64: 8, 512>}, {pipeline_mode = #tpu.pipeline_mode<synchronous>, transform_indices = @transform_13, window_bounds = array<i64: 1, 512>}, {pipeline_mode = #tpu.pipeline_mode<synchronous>, transform_indices = @transform_14, window_bounds = array<i64: 256, 512>}, {pipeline_mode = #tpu.pipeline_mode<synchronous>, transform_indices = @transform_15, window_bounds = array<i64: 1, 512>}, {pipeline_mode = #tpu.pipeline_mode<synchronous>, transform_indices = @transform_16, window_bounds = array<i64: 256, 512>}, {pipeline_mode = #tpu.pipeline_mode<synchronous>, transform_indices = @transform_17, window_bounds = array<i64: 1, 512>}, {pipeline_mode = #tpu.pipeline_mode<synchronous>, transform_indices = @transform_18, window_bounds = array<i64: 512, 784>}, {pipeline_mode = #tpu.pipeline_mode<synchronous>, transform_indices = @transform_19, window_bounds = array<i64: 1, 784>}, {pipeline_mode = #tpu.pipeline_mode<synchronous>, transform_indices = @transform_20, window_bounds = array<i64: 512, 1>}, {pipeline_mode = #tpu.pipeline_mode<synchronous>, transform_indices = @transform_21, window_bounds = array<i64: 1, 1>}, {transform_indices = @transform_22, window_bounds = array<i64: 8, 784>}, {transform_indices = @transform_23, window_bounds = array<i64: 8, 128>}]} {
    %c0 = arith.constant 0 : index
    %c0_0 = arith.constant 0 : index
    %0 = vector.load %arg1[%c0, %c0_0] : memref<8x784xf32, #tpu.memory_space<vmem>>, vector<8x784xf32>
    %1 = arith.truncf %0 : vector<8x784xf32> to vector<8x784xbf16>
    %c0_1 = arith.constant 0 : index
    %c0_2 = arith.constant 0 : index
    %2 = vector.load %arg3[%c0_1, %c0_2] : memref<784x1024xbf16, #tpu.memory_space<vmem>>, vector<784x1024xbf16>
    %cst = arith.constant dense<0.000000e+00> : vector<8x1024xf32>
    %3 = tpu.matmul %1, %2, %cst {dimension_numbers = #tpu.dot_dimension_numbers<[1], [0], [0], [1], [0, 0, 1, 1], [], []>} : vector<8x784xbf16>, vector<784x1024xbf16>, vector<8x1024xf32> -> vector<8x1024xf32>
    %c0_3 = arith.constant 0 : index
    %c0_4 = arith.constant 0 : index
    %4 = vector.load %arg4[%c0_3, %c0_4] : memref<1x1024xf32, #tpu.memory_space<vmem>>, vector<1x1024xf32>
    %5 = vector.broadcast %4 : vector<1x1024xf32> to vector<8x1024xf32>
    %6 = arith.addf %3, %5 : vector<8x1024xf32>
    %cst_5 = arith.constant 0.000000e+00 : f32
    %7 = vector.broadcast %cst_5 : f32 to vector<8x1024xf32>
    %8 = arith.maximumf %6, %7 : vector<8x1024xf32>
    %9 = arith.truncf %8 : vector<8x1024xf32> to vector<8x1024xbf16>
    %10 = vector.extract_strided_slice %9 {offsets = [0, 0], sizes = [8, 512], strides = [1, 1]} : vector<8x1024xbf16> to vector<8x512xbf16>
    %11 = vector.extract_strided_slice %9 {offsets = [0, 512], sizes = [8, 512], strides = [1, 1]} : vector<8x1024xbf16> to vector<8x512xbf16>
    %c0_6 = arith.constant 0 : index
    %c0_7 = arith.constant 0 : index
    %12 = vector.load %arg5[%c0_6, %c0_7] : memref<512x256xbf16, #tpu.memory_space<vmem>>, vector<512x256xbf16>
    %cst_8 = arith.constant dense<0.000000e+00> : vector<8x256xf32>
    %13 = tpu.matmul %10, %12, %cst_8 {dimension_numbers = #tpu.dot_dimension_numbers<[1], [0], [0], [1], [0, 0, 1, 1], [], []>} : vector<8x512xbf16>, vector<512x256xbf16>, vector<8x256xf32> -> vector<8x256xf32>
    %c0_9 = arith.constant 0 : index
    %c0_10 = arith.constant 0 : index
    %14 = vector.load %arg6[%c0_9, %c0_10] : memref<1x256xf32, #tpu.memory_space<vmem>>, vector<1x256xf32>
    %15 = vector.broadcast %14 : vector<1x256xf32> to vector<8x256xf32>
    %16 = arith.addf %13, %15 : vector<8x256xf32>
    %cst_11 = arith.constant 0.000000e+00 : f32
    %17 = vector.broadcast %cst_11 : f32 to vector<8x256xf32>
    %18 = arith.maximumf %16, %17 : vector<8x256xf32>
    %19 = arith.truncf %18 : vector<8x256xf32> to vector<8x256xbf16>
    %c0_12 = arith.constant 0 : index
    %c0_13 = arith.constant 0 : index
    %20 = vector.load %arg7[%c0_12, %c0_13] : memref<512x256xbf16, #tpu.memory_space<vmem>>, vector<512x256xbf16>
    %cst_14 = arith.constant dense<0.000000e+00> : vector<8x256xf32>
    %21 = tpu.matmul %11, %20, %cst_14 {dimension_numbers = #tpu.dot_dimension_numbers<[1], [0], [0], [1], [0, 0, 1, 1], [], []>} : vector<8x512xbf16>, vector<512x256xbf16>, vector<8x256xf32> -> vector<8x256xf32>
    %c0_15 = arith.constant 0 : index
    %c0_16 = arith.constant 0 : index
    %22 = vector.load %arg8[%c0_15, %c0_16] : memref<1x256xf32, #tpu.memory_space<vmem>>, vector<1x256xf32>
    %23 = vector.broadcast %22 : vector<1x256xf32> to vector<8x256xf32>
    %24 = arith.addf %21, %23 : vector<8x256xf32>
    %cst_17 = arith.constant 0.000000e+00 : f32
    %25 = vector.broadcast %cst_17 : f32 to vector<8x256xf32>
    %26 = arith.maximumf %24, %25 : vector<8x256xf32>
    %27 = arith.truncf %26 : vector<8x256xf32> to vector<8x256xbf16>
    %c0_18 = arith.constant 0 : index
    %c0_19 = arith.constant 0 : index
    %28 = vector.load %arg9[%c0_18, %c0_19] : memref<256x8xbf16, #tpu.memory_space<vmem>>, vector<256x8xbf16>
    %cst_20 = arith.constant dense<0.000000e+00> : vector<8x8xf32>
    %29 = tpu.matmul %19, %28, %cst_20 {dimension_numbers = #tpu.dot_dimension_numbers<[1], [0], [0], [1], [0, 0, 1, 1], [], []>} : vector<8x256xbf16>, vector<256x8xbf16>, vector<8x8xf32> -> vector<8x8xf32>
    %c0_21 = arith.constant 0 : index
    %c0_22 = arith.constant 0 : index
    %30 = vector.load %arg10[%c0_21, %c0_22] : memref<1x8xf32, #tpu.memory_space<vmem>>, vector<1x8xf32>
    %31 = vector.broadcast %30 : vector<1x8xf32> to vector<8x8xf32>
    %32 = arith.addf %29, %31 : vector<8x8xf32>
    %c0_23 = arith.constant 0 : index
    %c0_24 = arith.constant 0 : index
    %33 = vector.load %arg11[%c0_23, %c0_24] : memref<256x8xbf16, #tpu.memory_space<vmem>>, vector<256x8xbf16>
    %cst_25 = arith.constant dense<0.000000e+00> : vector<8x8xf32>
    %34 = tpu.matmul %27, %33, %cst_25 {dimension_numbers = #tpu.dot_dimension_numbers<[1], [0], [0], [1], [0, 0, 1, 1], [], []>} : vector<8x256xbf16>, vector<256x8xbf16>, vector<8x8xf32> -> vector<8x8xf32>
    %c0_26 = arith.constant 0 : index
    %c0_27 = arith.constant 0 : index
    %35 = vector.load %arg12[%c0_26, %c0_27] : memref<1x8xf32, #tpu.memory_space<vmem>>, vector<1x8xf32>
    %36 = vector.broadcast %35 : vector<1x8xf32> to vector<8x8xf32>
    %37 = arith.addf %34, %36 : vector<8x8xf32>
    %cst_28 = arith.constant 2.000000e+01 : f32
    %38 = vector.broadcast %cst_28 : f32 to vector<8x8xf32>
    %39 = arith.cmpf ogt, %37, %38 : vector<8x8xf32>
    %cst_29 = arith.constant 2.000000e+01 : f32
    %40 = vector.broadcast %cst_29 : f32 to vector<8x8xf32>
    %41 = arith.minimumf %37, %40 : vector<8x8xf32>
    %42 = math.exp %41 : vector<8x8xf32>
    %43 = math.log1p %42 : vector<8x8xf32>
    %44 = arith.select %39, %37, %43 : vector<8x8xi1>, vector<8x8xf32>
    %c0_30 = arith.constant 0 : index
    %c0_31 = arith.constant 0 : index
    %45 = vector.load %arg2[%c0_30, %c0_31] : memref<8x8xf32, #tpu.memory_space<vmem>>, vector<8x8xf32>
    %46 = math.sqrt %44 : vector<8x8xf32>
    %47 = arith.mulf %45, %46 : vector<8x8xf32>
    %48 = arith.addf %32, %47 : vector<8x8xf32>
    %49 = arith.truncf %48 : vector<8x8xf32> to vector<8x8xbf16>
    %c0_32 = arith.constant 0 : index
    %c0_33 = arith.constant 0 : index
    %50 = vector.load %arg13[%c0_32, %c0_33] : memref<8x512xbf16, #tpu.memory_space<vmem>>, vector<8x512xbf16>
    %cst_34 = arith.constant dense<0.000000e+00> : vector<8x512xf32>
    %51 = tpu.matmul %49, %50, %cst_34 {dimension_numbers = #tpu.dot_dimension_numbers<[1], [0], [0], [1], [0, 0, 1, 1], [], []>} : vector<8x8xbf16>, vector<8x512xbf16>, vector<8x512xf32> -> vector<8x512xf32>
    %c0_35 = arith.constant 0 : index
    %c0_36 = arith.constant 0 : index
    %52 = vector.load %arg14[%c0_35, %c0_36] : memref<1x512xf32, #tpu.memory_space<vmem>>, vector<1x512xf32>
    %53 = vector.broadcast %52 : vector<1x512xf32> to vector<8x512xf32>
    %54 = arith.addf %51, %53 : vector<8x512xf32>
    %cst_37 = arith.constant 0.000000e+00 : f32
    %55 = vector.broadcast %cst_37 : f32 to vector<8x512xf32>
    %56 = arith.maximumf %54, %55 : vector<8x512xf32>
    %57 = arith.truncf %56 : vector<8x512xf32> to vector<8x512xbf16>
    %58 = vector.extract_strided_slice %57 {offsets = [0, 0], sizes = [8, 256], strides = [1, 1]} : vector<8x512xbf16> to vector<8x256xbf16>
    %59 = vector.extract_strided_slice %57 {offsets = [0, 256], sizes = [8, 256], strides = [1, 1]} : vector<8x512xbf16> to vector<8x256xbf16>
    %c0_38 = arith.constant 0 : index
    %c0_39 = arith.constant 0 : index
    %60 = vector.load %arg15[%c0_38, %c0_39] : memref<256x512xbf16, #tpu.memory_space<vmem>>, vector<256x512xbf16>
    %cst_40 = arith.constant dense<0.000000e+00> : vector<8x512xf32>
    %61 = tpu.matmul %58, %60, %cst_40 {dimension_numbers = #tpu.dot_dimension_numbers<[1], [0], [0], [1], [0, 0, 1, 1], [], []>} : vector<8x256xbf16>, vector<256x512xbf16>, vector<8x512xf32> -> vector<8x512xf32>
    %c0_41 = arith.constant 0 : index
    %c0_42 = arith.constant 0 : index
    %62 = vector.load %arg16[%c0_41, %c0_42] : memref<1x512xf32, #tpu.memory_space<vmem>>, vector<1x512xf32>
    %63 = vector.broadcast %62 : vector<1x512xf32> to vector<8x512xf32>
    %64 = arith.addf %61, %63 : vector<8x512xf32>
    %cst_43 = arith.constant 0.000000e+00 : f32
    %65 = vector.broadcast %cst_43 : f32 to vector<8x512xf32>
    %66 = arith.maximumf %64, %65 : vector<8x512xf32>
    %67 = arith.truncf %66 : vector<8x512xf32> to vector<8x512xbf16>
    %c0_44 = arith.constant 0 : index
    %c0_45 = arith.constant 0 : index
    %68 = vector.load %arg17[%c0_44, %c0_45] : memref<256x512xbf16, #tpu.memory_space<vmem>>, vector<256x512xbf16>
    %cst_46 = arith.constant dense<0.000000e+00> : vector<8x512xf32>
    %69 = tpu.matmul %59, %68, %cst_46 {dimension_numbers = #tpu.dot_dimension_numbers<[1], [0], [0], [1], [0, 0, 1, 1], [], []>} : vector<8x256xbf16>, vector<256x512xbf16>, vector<8x512xf32> -> vector<8x512xf32>
    %c0_47 = arith.constant 0 : index
    %c0_48 = arith.constant 0 : index
    %70 = vector.load %arg18[%c0_47, %c0_48] : memref<1x512xf32, #tpu.memory_space<vmem>>, vector<1x512xf32>
    %71 = vector.broadcast %70 : vector<1x512xf32> to vector<8x512xf32>
    %72 = arith.addf %69, %71 : vector<8x512xf32>
    %cst_49 = arith.constant 0.000000e+00 : f32
    %73 = vector.broadcast %cst_49 : f32 to vector<8x512xf32>
    %74 = arith.maximumf %72, %73 : vector<8x512xf32>
    %75 = arith.truncf %74 : vector<8x512xf32> to vector<8x512xbf16>
    %c0_50 = arith.constant 0 : index
    %c0_51 = arith.constant 0 : index
    %76 = vector.load %arg19[%c0_50, %c0_51] : memref<512x784xbf16, #tpu.memory_space<vmem>>, vector<512x784xbf16>
    %cst_52 = arith.constant dense<0.000000e+00> : vector<8x784xf32>
    %77 = tpu.matmul %67, %76, %cst_52 {dimension_numbers = #tpu.dot_dimension_numbers<[1], [0], [0], [1], [0, 0, 1, 1], [], []>} : vector<8x512xbf16>, vector<512x784xbf16>, vector<8x784xf32> -> vector<8x784xf32>
    %c0_53 = arith.constant 0 : index
    %c0_54 = arith.constant 0 : index
    %78 = vector.load %arg20[%c0_53, %c0_54] : memref<1x784xf32, #tpu.memory_space<vmem>>, vector<1x784xf32>
    %79 = vector.broadcast %78 : vector<1x784xf32> to vector<8x784xf32>
    %80 = arith.addf %77, %79 : vector<8x784xf32>
    %cst_55 = arith.constant 5.000000e-01 : f32
    %81 = vector.broadcast %cst_55 : f32 to vector<8x784xf32>
    %82 = arith.mulf %81, %80 : vector<8x784xf32>
    %83 = math.tanh %82 : vector<8x784xf32>
    %cst_56 = arith.constant 1.000000e+00 : f32
    %84 = vector.broadcast %cst_56 : f32 to vector<8x784xf32>
    %85 = arith.addf %84, %83 : vector<8x784xf32>
    %cst_57 = arith.constant 5.000000e-01 : f32
    %86 = vector.broadcast %cst_57 : f32 to vector<8x784xf32>
    %87 = arith.mulf %86, %85 : vector<8x784xf32>
    %c0_58 = arith.constant 0 : index
    %c0_59 = arith.constant 0 : index
    %88 = vector.load %arg21[%c0_58, %c0_59] : memref<512x1xbf16, #tpu.memory_space<vmem>>, vector<512x1xbf16>
    %cst_60 = arith.constant dense<0.000000e+00> : vector<8x1xf32>
    %89 = tpu.matmul %75, %88, %cst_60 {dimension_numbers = #tpu.dot_dimension_numbers<[1], [0], [0], [1], [0, 0, 1, 1], [], []>} : vector<8x512xbf16>, vector<512x1xbf16>, vector<8x1xf32> -> vector<8x1xf32>
    %c0_61 = arith.constant 0 : index
    %c0_62 = arith.constant 0 : index
    %90 = vector.load %arg22[%c0_61, %c0_62] : memref<1x1xf32, #tpu.memory_space<vmem>>, vector<1x1xf32>
    %91 = vector.broadcast %90 : vector<1x1xf32> to vector<8x1xf32>
    %92 = arith.addf %89, %91 : vector<8x1xf32>
    %cst_63 = arith.constant 2.000000e+01 : f32
    %93 = vector.broadcast %cst_63 : f32 to vector<8x1xf32>
    %94 = arith.cmpf ogt, %92, %93 : vector<8x1xf32>
    %cst_64 = arith.constant 2.000000e+01 : f32
    %95 = vector.broadcast %cst_64 : f32 to vector<8x1xf32>
    %96 = arith.minimumf %92, %95 : vector<8x1xf32>
    %97 = math.exp %96 : vector<8x1xf32>
    %98 = math.log1p %97 : vector<8x1xf32>
    %99 = arith.select %94, %92, %98 : vector<8x1xi1>, vector<8x1xf32>
    %cst_65 = arith.constant 1.000000e+00 : f32
    %100 = vector.broadcast %cst_65 : f32 to vector<8x1xf32>
    %101 = arith.mulf %100, %99 : vector<8x1xf32>
    %cst_66 = arith.constant 0.000000e+00 : f32
    %102 = vector.broadcast %cst_66 : f32 to vector<8x1xf32>
    %103 = arith.addf %101, %102 : vector<8x1xf32>
    %c0_67 = arith.constant 0 : index
    %c0_68 = arith.constant 0 : index
    %104 = vector.load %arg23[%c0_67, %c0_68] : memref<8x784xf32, #tpu.memory_space<vmem>>, vector<8x784xf32>
    tpu.vector_store %arg23[%c0_67, %c0_68], %87 {strides = array<i32>} : memref<8x784xf32, #tpu.memory_space<vmem>>, vector<8x784xf32>,
    %cst_69 = arith.constant 0.000000e+00 : f32
    %105 = vector.broadcast %cst_69 : f32 to vector<8x111xf32>
    %106 = tpu.concatenate %32, %44, %103, %105 in 1 : vector<8x8xf32>, vector<8x8xf32>, vector<8x1xf32>, vector<8x111xf32> -> vector<8x128xf32>
    %c0_70 = arith.constant 0 : index
    %c0_71 = arith.constant 0 : index
    %107 = vector.load %arg24[%c0_70, %c0_71] : memref<8x128xf32, #tpu.memory_space<vmem>>, vector<8x128xf32>
    tpu.vector_store %arg24[%c0_70, %c0_71], %106 {strides = array<i32>} : memref<8x128xf32, #tpu.memory_space<vmem>>, vector<8x128xf32>,
    return
  }
  func.func @transform_0(%arg0: i32) -> (i32, i32) {
    %c0_i32 = arith.constant 0 : i32
    %c0_i32_0 = arith.constant 0 : i32
    return %arg0, %c0_i32 : i32, i32
  }
  func.func @transform_1(%arg0: i32) -> (i32, i32) {
    %c0_i32 = arith.constant 0 : i32
    %c0_i32_0 = arith.constant 0 : i32
    return %arg0, %c0_i32 : i32, i32
  }
  func.func @transform_2(%arg0: i32) -> (i32, i32) {
    %c0_i32 = arith.constant 0 : i32
    %c0_i32_0 = arith.constant 0 : i32
    %c0_i32_1 = arith.constant 0 : i32
    return %c0_i32, %c0_i32_0 : i32, i32
  }
  func.func @transform_3(%arg0: i32) -> (i32, i32) {
    %c0_i32 = arith.constant 0 : i32
    %c0_i32_0 = arith.constant 0 : i32
    %c0_i32_1 = arith.constant 0 : i32
    return %c0_i32, %c0_i32_0 : i32, i32
  }
  func.func @transform_4(%arg0: i32) -> (i32, i32) {
    %c0_i32 = arith.constant 0 : i32
    %c0_i32_0 = arith.constant 0 : i32
    %c0_i32_1 = arith.constant 0 : i32
    return %c0_i32, %c0_i32_0 : i32, i32
  }
  func.func @transform_5(%arg0: i32) -> (i32, i32) {
    %c0_i32 = arith.constant 0 : i32
    %c0_i32_0 = arith.constant 0 : i32
    %c0_i32_1 = arith.constant 0 : i32
    return %c0_i32, %c0_i32_0 : i32, i32
  }
  func.func @transform_6(%arg0: i32) -> (i32, i32) {
    %c0_i32 = arith.constant 0 : i32
    %c0_i32_0 = arith.constant 0 : i32
    %c0_i32_1 = arith.constant 0 : i32
    return %c0_i32, %c0_i32_0 : i32, i32
  }
  func.func @transform_7(%arg0: i32) -> (i32, i32) {
    %c0_i32 = arith.constant 0 : i32
    %c0_i32_0 = arith.constant 0 : i32
    %c0_i32_1 = arith.constant 0 : i32
    return %c0_i32, %c0_i32_0 : i32, i32
  }
  func.func @transform_8(%arg0: i32) -> (i32, i32) {
    %c0_i32 = arith.constant 0 : i32
    %c0_i32_0 = arith.constant 0 : i32
    %c0_i32_1 = arith.constant 0 : i32
    return %c0_i32, %c0_i32_0 : i32, i32
  }
  func.func @transform_9(%arg0: i32) -> (i32, i32) {
    %c0_i32 = arith.constant 0 : i32
    %c0_i32_0 = arith.constant 0 : i32
    %c0_i32_1 = arith.constant 0 : i32
    return %c0_i32, %c0_i32_0 : i32, i32
  }
  func.func @transform_10(%arg0: i32) -> (i32, i32) {
    %c0_i32 = arith.constant 0 : i32
    %c0_i32_0 = arith.constant 0 : i32
    %c0_i32_1 = arith.constant 0 : i32
    return %c0_i32, %c0_i32_0 : i32, i32
  }
  func.func @transform_11(%arg0: i32) -> (i32, i32) {
    %c0_i32 = arith.constant 0 : i32
    %c0_i32_0 = arith.constant 0 : i32
    %c0_i32_1 = arith.constant 0 : i32
    return %c0_i32, %c0_i32_0 : i32, i32
  }
  func.func @transform_12(%arg0: i32) -> (i32, i32) {
    %c0_i32 = arith.constant 0 : i32
    %c0_i32_0 = arith.constant 0 : i32
    %c0_i32_1 = arith.constant 0 : i32
    return %c0_i32, %c0_i32_0 : i32, i32
  }
  func.func @transform_13(%arg0: i32) -> (i32, i32) {
    %c0_i32 = arith.constant 0 : i32
    %c0_i32_0 = arith.constant 0 : i32
    %c0_i32_1 = arith.constant 0 : i32
    return %c0_i32, %c0_i32_0 : i32, i32
  }
  func.func @transform_14(%arg0: i32) -> (i32, i32) {
    %c0_i32 = arith.constant 0 : i32
    %c0_i32_0 = arith.constant 0 : i32
    %c0_i32_1 = arith.constant 0 : i32
    return %c0_i32, %c0_i32_0 : i32, i32
  }
  func.func @transform_15(%arg0: i32) -> (i32, i32) {
    %c0_i32 = arith.constant 0 : i32
    %c0_i32_0 = arith.constant 0 : i32
    %c0_i32_1 = arith.constant 0 : i32
    return %c0_i32, %c0_i32_0 : i32, i32
  }
  func.func @transform_16(%arg0: i32) -> (i32, i32) {
    %c0_i32 = arith.constant 0 : i32
    %c0_i32_0 = arith.constant 0 : i32
    %c0_i32_1 = arith.constant 0 : i32
    return %c0_i32, %c0_i32_0 : i32, i32
  }
  func.func @transform_17(%arg0: i32) -> (i32, i32) {
    %c0_i32 = arith.constant 0 : i32
    %c0_i32_0 = arith.constant 0 : i32
    %c0_i32_1 = arith.constant 0 : i32
    return %c0_i32, %c0_i32_0 : i32, i32
  }
  func.func @transform_18(%arg0: i32) -> (i32, i32) {
    %c0_i32 = arith.constant 0 : i32
    %c0_i32_0 = arith.constant 0 : i32
    %c0_i32_1 = arith.constant 0 : i32
    return %c0_i32, %c0_i32_0 : i32, i32
  }
  func.func @transform_19(%arg0: i32) -> (i32, i32) {
    %c0_i32 = arith.constant 0 : i32
    %c0_i32_0 = arith.constant 0 : i32
    %c0_i32_1 = arith.constant 0 : i32
    return %c0_i32, %c0_i32_0 : i32, i32
  }
  func.func @transform_20(%arg0: i32) -> (i32, i32) {
    %c0_i32 = arith.constant 0 : i32
    %c0_i32_0 = arith.constant 0 : i32
    %c0_i32_1 = arith.constant 0 : i32
    return %c0_i32, %c0_i32_0 : i32, i32
  }
  func.func @transform_21(%arg0: i32) -> (i32, i32) {
    %c0_i32 = arith.constant 0 : i32
    %c0_i32_0 = arith.constant 0 : i32
    %c0_i32_1 = arith.constant 0 : i32
    return %c0_i32, %c0_i32_0 : i32, i32
  }
  func.func @transform_22(%arg0: i32) -> (i32, i32) {
    %c0_i32 = arith.constant 0 : i32
    %c0_i32_0 = arith.constant 0 : i32
    return %arg0, %c0_i32 : i32, i32
  }
  func.func @transform_23(%arg0: i32) -> (i32, i32) {
    %c0_i32 = arith.constant 0 : i32
    %c0_i32_0 = arith.constant 0 : i32
    return %arg0, %c0_i32 : i32, i32
  }
}

</mosaic_0001>

<llo_original>
// kernel: vae_normal_forward.1
$region0: #{vae_normal_forward.1}
  #allocation0 [shape = 'u32[]', space=smem, size = 0x4, offset = 0x4, fixed_abs, tag = 'smem constant byte address 0x4 - core index']
  #allocation1 [shape = 'u32[144,128]{1,0:T(1,128)}', space=vmem, size = 0x12000, scoped, tag = 'internal scratch']
  #allocation2 [shape = 'f32[1,1]{1,0:T(1,128)S(1)}', space=vmem, size = 0x200, scoped, tag = 'scoped memory for vae_normal_forward.1']
  %s0 = inlined_call_operand.vmem [shape: f32[8,784], index: 0, kind: input, shape index: {}]
  %s1 = inlined_call_operand.vmem [shape: f32[8,8], index: 1, kind: input, shape index: {}]
  %s2 = inlined_call_operand.vmem [shape: bf16[784,1024], index: 2, kind: input, shape index: {}]
  %s3 = inlined_call_operand.vmem [shape: f32[1,1024], index: 3, kind: input, shape index: {}]
  %s4 = inlined_call_operand.vmem [shape: bf16[512,256], index: 4, kind: input, shape index: {}]
  %s5 = inlined_call_operand.vmem [shape: f32[1,256], index: 5, kind: input, shape index: {}]
  %s6 = inlined_call_operand.vmem [shape: bf16[512,256], index: 6, kind: input, shape index: {}]
  %s7 = inlined_call_operand.vmem [shape: f32[1,256], index: 7, kind: input, shape index: {}]
  %s8 = inlined_call_operand.vmem [shape: bf16[256,8], index: 8, kind: input, shape index: {}]
  %s9 = inlined_call_operand.vmem [shape: f32[1,8], index: 9, kind: input, shape index: {}]
  %s10 = inlined_call_operand.vmem [shape: bf16[256,8], index: 10, kind: input, shape index: {}]
  %s11 = inlined_call_operand.vmem [shape: f32[1,8], index: 11, kind: input, shape index: {}]
  %s12 = inlined_call_operand.vmem [shape: bf16[8,512], index: 12, kind: input, shape index: {}]
  %s13 = inlined_call_operand.vmem [shape: f32[1,512], index: 13, kind: input, shape index: {}]
  %s14 = inlined_call_operand.vmem [shape: bf16[256,512], index: 14, kind: input, shape index: {}]
  %s15 = inlined_call_operand.vmem [shape: f32[1,512], index: 15, kind: input, shape index: {}]
  %s16 = inlined_call_operand.hbm [shape: bf16[256,512], index: 16, kind: input, shape index: {}]
  %s17 = inlined_call_operand.vmem [shape: f32[1,512], index: 17, kind: input, shape index: {}]
  %s18 = inlined_call_operand.vmem [shape: bf16[512,784], index: 18, kind: input, shape index: {}]
  %s19 = inlined_call_operand.vmem [shape: f32[1,784], index: 19, kind: input, shape index: {}]
  %s20 = inlined_call_operand.vmem [shape: bf16[512,1], index: 20, kind: input, shape index: {}]
  %s21 = inlined_call_operand.<no memory space> [shape: f32[1,1], index: 21, kind: input, shape index: {}]
  %s22 = inlined_call_operand.hbm [shape: f32[8,784], index: 22, kind: output, shape index: {0}]
  %s23 = inlined_call_operand.vmem [shape: f32[8,128], index: 23, kind: output, shape index: {1}]
  %24 = xla_tuple %s22, %s23
  %s25 = sld [smem:[#allocation0]]
  $region110: #{vae_normal_forward.1} parent=0
    _
  %s27 = ssub.s32 1, %s25
  %s28 = scalar_select 0, %s27, %s25
  %v29 = vstv %s21
  %30 = vst [vmem:[#allocation2] sm:$0x1] %v29
  $region1: #{vae_normal_forward.1} parent=0
    #allocation3 [shape = 'u8[262144]{0}', space=vmem, size = 0x40000, scoped, tag = 'input window, operand 16, single buffered']
    #allocation4 [shape = 's32[1]{0}', space=sflag, size = 0x4, scoped, tag = 'scoped memory for vae_normal_forward.1']
    #allocation5 [shape = 's32[1]{0}', space=sflag, size = 0x4, scoped, tag = 'scoped memory for vae_normal_forward.1']
    #allocation6 [shape = 'u8[28672]{0}', space=vmem, size = 0x7000, scoped, tag = 'output window, operand 0, single buffered']
    %31 = vsyncpa [#allocation4], 0
    %32 = vsyncpa [#allocation5], 0
    // Predicated region
    $region2: #{vae_normal_forward.1} parent=1 // pred_check
      _
    $region3: #{vae_normal_forward.1} parent=1 // pred_check_branch
      %34 = sbr.rel (0) target = $region5
    $region4: #{vae_normal_forward.1} parent=1 // pred_region
      _
    $region5: #{vae_normal_forward.1} parent=1 // pred_fallthru
      _
    // Predicated region
    $region6: #{vae_normal_forward.1} parent=1 // pred_check
      _
    $region7: #{vae_normal_forward.1} parent=1 // pred_check_branch
      %36 = sbr.rel (0) target = $region9
    $region8: #{vae_normal_forward.1} parent=1 // pred_region
      _
    $region9: #{vae_normal_forward.1} parent=1 // pred_fallthru
      _
    // Predicated region
    $region10: #{vae_normal_forward.1} parent=1 // pred_check
      _
    $region11: #{vae_normal_forward.1} parent=1 // pred_check_branch
      %38 = sbr.rel (0) target = $region13
    $region12: #{vae_normal_forward.1} parent=1 // pred_region
      _
    $region13: #{vae_normal_forward.1} parent=1 // pred_fallthru
      _
    // Predicated region
    $region14: #{vae_normal_forward.1} parent=1 // pred_check
      _
    $region15: #{vae_normal_forward.1} parent=1 // pred_check_branch
      %40 = sbr.rel (0) target = $region17
    $region16: #{vae_normal_forward.1} parent=1 // pred_region
      _
    $region17: #{vae_normal_forward.1} parent=1 // pred_fallthru
      _
    // Predicated region
    $region18: #{vae_normal_forward.1} parent=1 // pred_check
      _
    $region19: #{vae_normal_forward.1} parent=1 // pred_check_branch
      %42 = sbr.rel (0) target = $region21
    $region20: #{vae_normal_forward.1} parent=1 // pred_region
      _
    $region21: #{vae_normal_forward.1} parent=1 // pred_fallthru
      _
    // Predicated region
    $region22: #{vae_normal_forward.1} parent=1 // pred_check
      _
    $region23: #{vae_normal_forward.1} parent=1 // pred_check_branch
      %44 = sbr.rel (0) target = $region25
    $region24: #{vae_normal_forward.1} parent=1 // pred_region
      _
    $region25: #{vae_normal_forward.1} parent=1 // pred_fallthru
      _
    // Predicated region
    $region26: #{vae_normal_forward.1} parent=1 // pred_check
      _
    $region27: #{vae_normal_forward.1} parent=1 // pred_check_branch
      %46 = sbr.rel (0) target = $region29
    $region28: #{vae_normal_forward.1} parent=1 // pred_region
      _
    $region29: #{vae_normal_forward.1} parent=1 // pred_fallthru
      _
    // Predicated region
    $region30: #{vae_normal_forward.1} parent=1 // pred_check
      _
    $region31: #{vae_normal_forward.1} parent=1 // pred_check_branch
      %48 = sbr.rel (0) target = $region33
    $region32: #{vae_normal_forward.1} parent=1 // pred_region
      _
    $region33: #{vae_normal_forward.1} parent=1 // pred_fallthru
      _
    // Predicated region
    $region34: #{vae_normal_forward.1} parent=1 // pred_check
      _
    $region35: #{vae_normal_forward.1} parent=1 // pred_check_branch
      %50 = sbr.rel (0) target = $region37
    $region36: #{vae_normal_forward.1} parent=1 // pred_region
      _
    $region37: #{vae_normal_forward.1} parent=1 // pred_fallthru
      _
    // Predicated region
    $region38: #{vae_normal_forward.1} parent=1 // pred_check
      _
    $region39: #{vae_normal_forward.1} parent=1 // pred_check_branch
      %52 = sbr.rel (0) target = $region41
    $region40: #{vae_normal_forward.1} parent=1 // pred_region
      _
    $region41: #{vae_normal_forward.1} parent=1 // pred_fallthru
      _
    // Predicated region
    $region42: #{vae_normal_forward.1} parent=1 // pred_check
      _
    $region43: #{vae_normal_forward.1} parent=1 // pred_check_branch
      %54 = sbr.rel (0) target = $region45
    $region44: #{vae_normal_forward.1} parent=1 // pred_region
      _
    $region45: #{vae_normal_forward.1} parent=1 // pred_fallthru
      _
    // Predicated region
    $region46: #{vae_normal_forward.1} parent=1 // pred_check
      _
    $region47: #{vae_normal_forward.1} parent=1 // pred_check_branch
      %56 = sbr.rel (0) target = $region49
    $region48: #{vae_normal_forward.1} parent=1 // pred_region
      _
    $region49: #{vae_normal_forward.1} parent=1 // pred_fallthru
      _
    // Predicated region
    $region50: #{vae_normal_forward.1} parent=1 // pred_check
      _
    $region51: #{vae_normal_forward.1} parent=1 // pred_check_branch
      %58 = sbr.rel (0) target = $region53
    $region52: #{vae_normal_forward.1} parent=1 // pred_region
      _
    $region53: #{vae_normal_forward.1} parent=1 // pred_fallthru
      _
    // Predicated region
    $region54: #{vae_normal_forward.1} parent=1 // pred_check
      _
    $region55: #{vae_normal_forward.1} parent=1 // pred_check_branch
      %60 = sbr.rel (0) target = $region57
    $region56: #{vae_normal_forward.1} parent=1 // pred_region
      _
    $region57: #{vae_normal_forward.1} parent=1 // pred_fallthru
      _
    // Predicated region
    $region58: #{vae_normal_forward.1} parent=1 // pred_check
      _
    $region59: #{vae_normal_forward.1} parent=1 // pred_check_branch
      %62 = sbr.rel (0) target = $region61
    $region60: #{vae_normal_forward.1} parent=1 // pred_region
      _
    $region61: #{vae_normal_forward.1} parent=1 // pred_fallthru
      _
    // Predicated region
    $region62: #{vae_normal_forward.1} parent=1 // pred_check
      _
    $region63: #{vae_normal_forward.1} parent=1 // pred_check_branch
      %64 = sbr.rel (0) target = $region65
    $region64: #{vae_normal_forward.1} parent=1 // pred_region
      _
    $region65: #{vae_normal_forward.1} parent=1 // pred_fallthru
      _
    // Predicated region
    $region66: #{vae_normal_forward.1} parent=1 // pred_check
      _
    $region67: #{vae_normal_forward.1} parent=1 // pred_check_branch
      %66 = sbr.rel (0) target = $region69
    $region68: #{vae_normal_forward.1} parent=1 // pred_region
      %s68 = ssub.s32 8192, 8192
      %69 = vsyncadd [#allocation4], %s68
      %s70 = sshll.u32 [#allocation3], 4
      %s71 = int_to_ptr.vmem [resolvable:$true] %s70
      %76 = dma.hbm_to_vmem [thread:$0]  %s16, 8192, %s71, [#allocation4], 256, 256, 16
    $region69: #{vae_normal_forward.1} parent=1 // pred_fallthru
      _
    // Predicated region
    $region70: #{vae_normal_forward.1} parent=1 // pred_check
      _
    $region71: #{vae_normal_forward.1} parent=1 // pred_check_branch
      %78 = sbr.rel (0) target = $region73
    $region72: #{vae_normal_forward.1} parent=1 // pred_region
      _
    $region73: #{vae_normal_forward.1} parent=1 // pred_fallthru
      _
    // Predicated region
    $region74: #{vae_normal_forward.1} parent=1 // pred_check
      _
    $region75: #{vae_normal_forward.1} parent=1 // pred_check_branch
      %80 = sbr.rel (0) target = $region77
    $region76: #{vae_normal_forward.1} parent=1 // pred_region
      _
    $region77: #{vae_normal_forward.1} parent=1 // pred_fallthru
      _
    // Predicated region
    $region78: #{vae_normal_forward.1} parent=1 // pred_check
      _
    $region79: #{vae_normal_forward.1} parent=1 // pred_check_branch
      %82 = sbr.rel (0) target = $region81
    $region80: #{vae_normal_forward.1} parent=1 // pred_region
      _
    $region81: #{vae_normal_forward.1} parent=1 // pred_fallthru
      _
    // Predicated region
    $region82: #{vae_normal_forward.1} parent=1 // pred_check
      _
    $region83: #{vae_normal_forward.1} parent=1 // pred_check_branch
      %84 = sbr.rel (0) target = $region85
    $region84: #{vae_normal_forward.1} parent=1 // pred_region
      _
    $region85: #{vae_normal_forward.1} parent=1 // pred_fallthru
      _
    // Predicated region
    $region86: #{vae_normal_forward.1} parent=1 // pred_check
      _
    $region87: #{vae_normal_forward.1} parent=1 // pred_check_branch
      %86 = sbr.rel (0) target = $region89
    $region88: #{vae_normal_forward.1} parent=1 // pred_region
      _
    $region89: #{vae_normal_forward.1} parent=1 // pred_fallthru
      _
    // Predicated region
    $region90: #{vae_normal_forward.1} parent=1 // pred_check
      _
    $region91: #{vae_normal_forward.1} parent=1 // pred_check_branch
      %88 = sbr.rel (0) target = $region93
    $region92: #{vae_normal_forward.1} parent=1 // pred_region
      %89 = dma.done [#allocation4], 8192
    $region93: #{vae_normal_forward.1} parent=1 // pred_fallthru
      _
    %v91 = vld [vmem:[%s0] sm:$0xff]
    %v92 = vld [vmem:[%s0 + $0x8] sm:$0xff]
    %v93 = vld [vmem:[%s0 + $0x10] sm:$0xff]
    %v94 = vld [vmem:[%s0 + $0x18] sm:$0xff]
    %v95 = vld [vmem:[%s0 + $0x20] sm:$0xff]
    %v96 = vld [vmem:[%s0 + $0x28] sm:$0xff]
    %v97 = vld [vmem:[%s0 + $0x30] sm:$0xff]
    %v98 = vpack.c.bf16 %v91, %v91
    %v99 = vpack.c.bf16 %v92, %v92
    %v100 = vpack.c.bf16 %v93, %v93
    %v101 = vpack.c.bf16 %v94, %v94
    %v102 = vpack.c.bf16 %v95, %v95
    %v103 = vpack.c.bf16 %v96, %v96
    %v104 = vpack.c.bf16 %v97, %v97
    %v105 = vld [vmem:[%s2] sm:$0xff]
    %v106 = vld [vmem:[%s2 + $0x8] sm:$0xff]
    %v107 = vld [vmem:[%s2 + $0x10] sm:$0xff]
    %v108 = vld [vmem:[%s2 + $0x18] sm:$0xff]
    %v109 = vld [vmem:[%s2 + $0x20] sm:$0xff]
    %v110 = vld [vmem:[%s2 + $0x28] sm:$0xff]
    %v111 = vld [vmem:[%s2 + $0x30] sm:$0xff]
    %v112 = vld [vmem:[%s2 + $0x38] sm:$0xff]
    %v113 = vld [vmem:[%s2 + $0x40] sm:$0xff]
    %v114 = vld [vmem:[%s2 + $0x48] sm:$0xff]
    %v115 = vld [vmem:[%s2 + $0x50] sm:$0xff]
    %v116 = vld [vmem:[%s2 + $0x58] sm:$0xff]
    %v117 = vld [vmem:[%s2 + $0x60] sm:$0xff]
    %v118 = vld [vmem:[%s2 + $0x68] sm:$0xff]
    %v119 = vld [vmem:[%s2 + $0x70] sm:$0xff]
    %v120 = vld [vmem:[%s2 + $0x78] sm:$0xff]
    %v121 = vld [vmem:[%s2 + $0x80] sm:$0xff]
    %v122 = vld [vmem:[%s2 + $0x88] sm:$0xff]
    %v123 = vld [vmem:[%s2 + $0x90] sm:$0xff]
    %v124 = vld [vmem:[%s2 + $0x98] sm:$0xff]
    %v125 = vld [vmem:[%s2 + $0xa0] sm:$0xff]
    %v126 = vld [vmem:[%s2 + $0xa8] sm:$0xff]
    %v127 = vld [vmem:[%s2 + $0xb0] sm:$0xff]
    %v128 = vld [vmem:[%s2 + $0xb8] sm:$0xff]
    %v129 = vld [vmem:[%s2 + $0xc0] sm:$0xff]
    %v130 = vld [vmem:[%s2 + $0xc8] sm:$0xff]
    %v131 = vld [vmem:[%s2 + $0xd0] sm:$0xff]
    %v132 = vld [vmem:[%s2 + $0xd8] sm:$0xff]
    %v133 = vld [vmem:[%s2 + $0xe0] sm:$0xff]
    %v134 = vld [vmem:[%s2 + $0xe8] sm:$0xff]
    %v135 = vld [vmem:[%s2 + $0xf0] sm:$0xff]
    %v136 = vld [vmem:[%s2 + $0xf8] sm:$0xff]
    %v137 = vld [vmem:[%s2 + $0x100] sm:$0xff]
    %v138 = vld [vmem:[%s2 + $0x108] sm:$0xff]
    %v139 = vld [vmem:[%s2 + $0x110] sm:$0xff]
    %v140 = vld [vmem:[%s2 + $0x118] sm:$0xff]
    %v141 = vld [vmem:[%s2 + $0x120] sm:$0xff]
    %v142 = vld [vmem:[%s2 + $0x128] sm:$0xff]
    %v143 = vld [vmem:[%s2 + $0x130] sm:$0xff]
    %v144 = vld [vmem:[%s2 + $0x138] sm:$0xff]
    %v145 = vld [vmem:[%s2 + $0x140] sm:$0xff]
    %v146 = vld [vmem:[%s2 + $0x148] sm:$0xff]
    %v147 = vld [vmem:[%s2 + $0x150] sm:$0xff]
    %v148 = vld [vmem:[%s2 + $0x158] sm:$0xff]
    %v149 = vld [vmem:[%s2 + $0x160] sm:$0xff]
    %v150 = vld [vmem:[%s2 + $0x168] sm:$0xff]
    %v151 = vld [vmem:[%s2 + $0x170] sm:$0xff]
    %v152 = vld [vmem:[%s2 + $0x178] sm:$0xff]
    %v153 = vld [vmem:[%s2 + $0x180] sm:$0xff]
    %v154 = vld [vmem:[%s2 + $0x188] sm:$0xff]
    %v155 = vld [vmem:[%s2 + $0x190] sm:$0xff]
    %v156 = vld [vmem:[%s2 + $0x198] sm:$0xff]
    %v157 = vld [vmem:[%s2 + $0x1a0] sm:$0xff]
    %v158 = vld [vmem:[%s2 + $0x1a8] sm:$0xff]
    %v159 = vld [vmem:[%s2 + $0x1b0] sm:$0xff]
    %v160 = vld [vmem:[%s2 + $0x1b8] sm:$0xff]
    %v161 = vld [vmem:[%s2 + $0x1c0] sm:$0xff]
    %v162 = vld [vmem:[%s2 + $0x1c8] sm:$0xff]
    %v163 = vld [vmem:[%s2 + $0x1d0] sm:$0xff]
    %v164 = vld [vmem:[%s2 + $0x1d8] sm:$0xff]
    %v165 = vld [vmem:[%s2 + $0x1e0] sm:$0xff]
    %v166 = vld [vmem:[%s2 + $0x1e8] sm:$0xff]
    %v167 = vld [vmem:[%s2 + $0x1f0] sm:$0xff]
    %v168 = vld [vmem:[%s2 + $0x1f8] sm:$0xff]
    %v169 = vld [vmem:[%s2 + $0x200] sm:$0xff]
    %v170 = vld [vmem:[%s2 + $0x208] sm:$0xff]
    %v171 = vld [vmem:[%s2 + $0x210] sm:$0xff]
    %v172 = vld [vmem:[%s2 + $0x218] sm:$0xff]
    %v173 = vld [vmem:[%s2 + $0x220] sm:$0xff]
    %v174 = vld [vmem:[%s2 + $0x228] sm:$0xff]
    %v175 = vld [vmem:[%s2 + $0x230] sm:$0xff]
    %v176 = vld [vmem:[%s2 + $0x238] sm:$0xff]
    %v177 = vld [vmem:[%s2 + $0x240] sm:$0xff]
    %v178 = vld [vmem:[%s2 + $0x248] sm:$0xff]
    %v179 = vld [vmem:[%s2 + $0x250] sm:$0xff]
    %v180 = vld [vmem:[%s2 + $0x258] sm:$0xff]
    %v181 = vld [vmem:[%s2 + $0x260] sm:$0xff]
    %v182 = vld [vmem:[%s2 + $0x268] sm:$0xff]
    %v183 = vld [vmem:[%s2 + $0x270] sm:$0xff]
    %v184 = vld [vmem:[%s2 + $0x278] sm:$0xff]
    %v185 = vld [vmem:[%s2 + $0x280] sm:$0xff]
    %v186 = vld [vmem:[%s2 + $0x288] sm:$0xff]
    %v187 = vld [vmem:[%s2 + $0x290] sm:$0xff]
    %v188 = vld [vmem:[%s2 + $0x298] sm:$0xff]
    %v189 = vld [vmem:[%s2 + $0x2a0] sm:$0xff]
    %v190 = vld [vmem:[%s2 + $0x2a8] sm:$0xff]
    %v191 = vld [vmem:[%s2 + $0x2b0] sm:$0xff]
    %v192 = vld [vmem:[%s2 + $0x2b8] sm:$0xff]
    %v193 = vld [vmem:[%s2 + $0x2c0] sm:$0xff]
    %v194 = vld [vmem:[%s2 + $0x2c8] sm:$0xff]
    %v195 = vld [vmem:[%s2 + $0x2d0] sm:$0xff]
    %v196 = vld [vmem:[%s2 + $0x2d8] sm:$0xff]
    %v197 = vld [vmem:[%s2 + $0x2e0] sm:$0xff]
    %v198 = vld [vmem:[%s2 + $0x2e8] sm:$0xff]
    %v199 = vld [vmem:[%s2 + $0x2f0] sm:$0xff]
    %v200 = vld [vmem:[%s2 + $0x2f8] sm:$0xff]
    %v201 = vld [vmem:[%s2 + $0x300] sm:$0xff]
    %v202 = vld [vmem:[%s2 + $0x308] sm:$0xff]
    %v203 = vld [vmem:[%s2 + $0x310] sm:$0xff]
    %v204 = vld [vmem:[%s2 + $0x318] sm:$0xff]
    %v205 = vld [vmem:[%s2 + $0x320] sm:$0xff]
    %v206 = vld [vmem:[%s2 + $0x328] sm:$0xff]
    %v207 = vld [vmem:[%s2 + $0x330] sm:$0xff]
    %v208 = vld [vmem:[%s2 + $0x338] sm:$0xff]
    %v209 = vld [vmem:[%s2 + $0x340] sm:$0xff]
    %v210 = vld [vmem:[%s2 + $0x348] sm:$0xff]
    %v211 = vld [vmem:[%s2 + $0x350] sm:$0xff]
    %v212 = vld [vmem:[%s2 + $0x358] sm:$0xff]
    %v213 = vld [vmem:[%s2 + $0x360] sm:$0xff]
    %v214 = vld [vmem:[%s2 + $0x368] sm:$0xff]
    %v215 = vld [vmem:[%s2 + $0x370] sm:$0xff]
    %v216 = vld [vmem:[%s2 + $0x378] sm:$0xff]
    %v217 = vld [vmem:[%s2 + $0x380] sm:$0xff]
    %v218 = vld [vmem:[%s2 + $0x388] sm:$0xff]
    %v219 = vld [vmem:[%s2 + $0x390] sm:$0xff]
    %v220 = vld [vmem:[%s2 + $0x398] sm:$0xff]
    %v221 = vld [vmem:[%s2 + $0x3a0] sm:$0xff]
    %v222 = vld [vmem:[%s2 + $0x3a8] sm:$0xff]
    %v223 = vld [vmem:[%s2 + $0x3b0] sm:$0xff]
    %v224 = vld [vmem:[%s2 + $0x3b8] sm:$0xff]
    %v225 = vld [vmem:[%s2 + $0x3c0] sm:$0xff]
    %v226 = vld [vmem:[%s2 + $0x3c8] sm:$0xff]
    %v227 = vld [vmem:[%s2 + $0x3d0] sm:$0xff]
    %v228 = vld [vmem:[%s2 + $0x3d8] sm:$0xff]
    %v229 = vld [vmem:[%s2 + $0x3e0] sm:$0xff]
    %v230 = vld [vmem:[%s2 + $0x3e8] sm:$0xff]
    %v231 = vld [vmem:[%s2 + $0x3f0] sm:$0xff]
    %v232 = vld [vmem:[%s2 + $0x3f8] sm:$0xff]
    %v233 = vld [vmem:[%s2 + $0x400] sm:$0xff]
    %v234 = vld [vmem:[%s2 + $0x408] sm:$0xff]
    %v235 = vld [vmem:[%s2 + $0x410] sm:$0xff]
    %v236 = vld [vmem:[%s2 + $0x418] sm:$0xff]
    %v237 = vld [vmem:[%s2 + $0x420] sm:$0xff]
    %v238 = vld [vmem:[%s2 + $0x428] sm:$0xff]
    %v239 = vld [vmem:[%s2 + $0x430] sm:$0xff]
    %v240 = vld [vmem:[%s2 + $0x438] sm:$0xff]
    %v241 = vld [vmem:[%s2 + $0x440] sm:$0xff]
    %v242 = vld [vmem:[%s2 + $0x448] sm:$0xff]
    %v243 = vld [vmem:[%s2 + $0x450] sm:$0xff]
    %v244 = vld [vmem:[%s2 + $0x458] sm:$0xff]
    %v245 = vld [vmem:[%s2 + $0x460] sm:$0xff]
    %v246 = vld [vmem:[%s2 + $0x468] sm:$0xff]
    %v247 = vld [vmem:[%s2 + $0x470] sm:$0xff]
    %v248 = vld [vmem:[%s2 + $0x478] sm:$0xff]
    %v249 = vld [vmem:[%s2 + $0x480] sm:$0xff]
    %v250 = vld [vmem:[%s2 + $0x488] sm:$0xff]
    %v251 = vld [vmem:[%s2 + $0x490] sm:$0xff]
    %v252 = vld [vmem:[%s2 + $0x498] sm:$0xff]
    %v253 = vld [vmem:[%s2 + $0x4a0] sm:$0xff]
    %v254 = vld [vmem:[%s2 + $0x4a8] sm:$0xff]
    %v255 = vld [vmem:[%s2 + $0x4b0] sm:$0xff]
    %v256 = vld [vmem:[%s2 + $0x4b8] sm:$0xff]
    %v257 = vld [vmem:[%s2 + $0x4c0] sm:$0xff]
    %v258 = vld [vmem:[%s2 + $0x4c8] sm:$0xff]
    %v259 = vld [vmem:[%s2 + $0x4d0] sm:$0xff]
    %v260 = vld [vmem:[%s2 + $0x4d8] sm:$0xff]
    %v261 = vld [vmem:[%s2 + $0x4e0] sm:$0xff]
    %v262 = vld [vmem:[%s2 + $0x4e8] sm:$0xff]
    %v263 = vld [vmem:[%s2 + $0x4f0] sm:$0xff]
    %v264 = vld [vmem:[%s2 + $0x4f8] sm:$0xff]
    %v265 = vld [vmem:[%s2 + $0x500] sm:$0xff]
    %v266 = vld [vmem:[%s2 + $0x508] sm:$0xff]
    %v267 = vld [vmem:[%s2 + $0x510] sm:$0xff]
    %v268 = vld [vmem:[%s2 + $0x518] sm:$0xff]
    %v269 = vld [vmem:[%s2 + $0x520] sm:$0xff]
    %v270 = vld [vmem:[%s2 + $0x528] sm:$0xff]
    %v271 = vld [vmem:[%s2 + $0x530] sm:$0xff]
    %v272 = vld [vmem:[%s2 + $0x538] sm:$0xff]
    %v273 = vld [vmem:[%s2 + $0x540] sm:$0xff]
    %v274 = vld [vmem:[%s2 + $0x548] sm:$0xff]
    %v275 = vld [vmem:[%s2 + $0x550] sm:$0xff]
    %v276 = vld [vmem:[%s2 + $0x558] sm:$0xff]
    %v277 = vld [vmem:[%s2 + $0x560] sm:$0xff]
    %v278 = vld [vmem:[%s2 + $0x568] sm:$0xff]
    %v279 = vld [vmem:[%s2 + $0x570] sm:$0xff]
    %v280 = vld [vmem:[%s2 + $0x578] sm:$0xff]
    %v281 = vld [vmem:[%s2 + $0x580] sm:$0xff]
    %v282 = vld [vmem:[%s2 + $0x588] sm:$0xff]
    %v283 = vld [vmem:[%s2 + $0x590] sm:$0xff]
    %v284 = vld [vmem:[%s2 + $0x598] sm:$0xff]
    %v285 = vld [vmem:[%s2 + $0x5a0] sm:$0xff]
    %v286 = vld [vmem:[%s2 + $0x5a8] sm:$0xff]
    %v287 = vld [vmem:[%s2 + $0x5b0] sm:$0xff]
    %v288 = vld [vmem:[%s2 + $0x5b8] sm:$0xff]
    %v289 = vld [vmem:[%s2 + $0x5c0] sm:$0xff]
    %v290 = vld [vmem:[%s2 + $0x5c8] sm:$0xff]
    %v291 = vld [vmem:[%s2 + $0x5d0] sm:$0xff]
    %v292 = vld [vmem:[%s2 + $0x5d8] sm:$0xff]
    %v293 = vld [vmem:[%s2 + $0x5e0] sm:$0xff]
    %v294 = vld [vmem:[%s2 + $0x5e8] sm:$0xff]
    %v295 = vld [vmem:[%s2 + $0x5f0] sm:$0xff]
    %v296 = vld [vmem:[%s2 + $0x5f8] sm:$0xff]
    %v297 = vld [vmem:[%s2 + $0x600] sm:$0xff]
    %v298 = vld [vmem:[%s2 + $0x608] sm:$0xff]
    %v299 = vld [vmem:[%s2 + $0x610] sm:$0xff]
    %v300 = vld [vmem:[%s2 + $0x618] sm:$0xff]
    %v301 = vld [vmem:[%s2 + $0x620] sm:$0xff]
    %v302 = vld [vmem:[%s2 + $0x628] sm:$0xff]
    %v303 = vld [vmem:[%s2 + $0x630] sm:$0xff]
    %v304 = vld [vmem:[%s2 + $0x638] sm:$0xff]
    %v305 = vld [vmem:[%s2 + $0x640] sm:$0xff]
    %v306 = vld [vmem:[%s2 + $0x648] sm:$0xff]
    %v307 = vld [vmem:[%s2 + $0x650] sm:$0xff]
    %v308 = vld [vmem:[%s2 + $0x658] sm:$0xff]
    %v309 = vld [vmem:[%s2 + $0x660] sm:$0xff]
    %v310 = vld [vmem:[%s2 + $0x668] sm:$0xff]
    %v311 = vld [vmem:[%s2 + $0x670] sm:$0xff]
    %v312 = vld [vmem:[%s2 + $0x678] sm:$0xff]
    %v313 = vld [vmem:[%s2 + $0x680] sm:$0xff]
    %v314 = vld [vmem:[%s2 + $0x688] sm:$0xff]
    %v315 = vld [vmem:[%s2 + $0x690] sm:$0xff]
    %v316 = vld [vmem:[%s2 + $0x698] sm:$0xff]
    %v317 = vld [vmem:[%s2 + $0x6a0] sm:$0xff]
    %v318 = vld [vmem:[%s2 + $0x6a8] sm:$0xff]
    %v319 = vld [vmem:[%s2 + $0x6b0] sm:$0xff]
    %v320 = vld [vmem:[%s2 + $0x6b8] sm:$0xff]
    %v321 = vld [vmem:[%s2 + $0x6c0] sm:$0xff]
    %v322 = vld [vmem:[%s2 + $0x6c8] sm:$0xff]
    %v323 = vld [vmem:[%s2 + $0x6d0] sm:$0xff]
    %v324 = vld [vmem:[%s2 + $0x6d8] sm:$0xff]
    %v325 = vld [vmem:[%s2 + $0x6e0] sm:$0xff]
    %v326 = vld [vmem:[%s2 + $0x6e8] sm:$0xff]
    %v327 = vld [vmem:[%s2 + $0x6f0] sm:$0xff]
    %v328 = vld [vmem:[%s2 + $0x6f8] sm:$0xff]
    %v329 = vld [vmem:[%s2 + $0x700] sm:$0xff]
    %v330 = vld [vmem:[%s2 + $0x708] sm:$0xff]
    %v331 = vld [vmem:[%s2 + $0x710] sm:$0xff]
    %v332 = vld [vmem:[%s2 + $0x718] sm:$0xff]
    %v333 = vld [vmem:[%s2 + $0x720] sm:$0xff]
    %v334 = vld [vmem:[%s2 + $0x728] sm:$0xff]
    %v335 = vld [vmem:[%s2 + $0x730] sm:$0xff]
    %v336 = vld [vmem:[%s2 + $0x738] sm:$0xff]
    %v337 = vld [vmem:[%s2 + $0x740] sm:$0xff]
    %v338 = vld [vmem:[%s2 + $0x748] sm:$0xff]
    %v339 = vld [vmem:[%s2 + $0x750] sm:$0xff]
    %v340 = vld [vmem:[%s2 + $0x758] sm:$0xff]
    %v341 = vld [vmem:[%s2 + $0x760] sm:$0xff]
    %v342 = vld [vmem:[%s2 + $0x768] sm:$0xff]
    %v343 = vld [vmem:[%s2 + $0x770] sm:$0xff]
    %v344 = vld [vmem:[%s2 + $0x778] sm:$0xff]
    %v345 = vld [vmem:[%s2 + $0x780] sm:$0xff]
    %v346 = vld [vmem:[%s2 + $0x788] sm:$0xff]
    %v347 = vld [vmem:[%s2 + $0x790] sm:$0xff]
    %v348 = vld [vmem:[%s2 + $0x798] sm:$0xff]
    %v349 = vld [vmem:[%s2 + $0x7a0] sm:$0xff]
    %v350 = vld [vmem:[%s2 + $0x7a8] sm:$0xff]
    %v351 = vld [vmem:[%s2 + $0x7b0] sm:$0xff]
    %v352 = vld [vmem:[%s2 + $0x7b8] sm:$0xff]
    %v353 = vld [vmem:[%s2 + $0x7c0] sm:$0xff]
    %v354 = vld [vmem:[%s2 + $0x7c8] sm:$0xff]
    %v355 = vld [vmem:[%s2 + $0x7d0] sm:$0xff]
    %v356 = vld [vmem:[%s2 + $0x7d8] sm:$0xff]
    %v357 = vld [vmem:[%s2 + $0x7e0] sm:$0xff]
    %v358 = vld [vmem:[%s2 + $0x7e8] sm:$0xff]
    %v359 = vld [vmem:[%s2 + $0x7f0] sm:$0xff]
    %v360 = vld [vmem:[%s2 + $0x7f8] sm:$0xff]
    %v361 = vld [vmem:[%s2 + $0x800] sm:$0xff]
    %v362 = vld [vmem:[%s2 + $0x808] sm:$0xff]
    %v363 = vld [vmem:[%s2 + $0x810] sm:$0xff]
    %v364 = vld [vmem:[%s2 + $0x818] sm:$0xff]
    %v365 = vld [vmem:[%s2 + $0x820] sm:$0xff]
    %v366 = vld [vmem:[%s2 + $0x828] sm:$0xff]
    %v367 = vld [vmem:[%s2 + $0x830] sm:$0xff]
    %v368 = vld [vmem:[%s2 + $0x838] sm:$0xff]
    %v369 = vld [vmem:[%s2 + $0x840] sm:$0xff]
    %v370 = vld [vmem:[%s2 + $0x848] sm:$0xff]
    %v371 = vld [vmem:[%s2 + $0x850] sm:$0xff]
    %v372 = vld [vmem:[%s2 + $0x858] sm:$0xff]
    %v373 = vld [vmem:[%s2 + $0x860] sm:$0xff]
    %v374 = vld [vmem:[%s2 + $0x868] sm:$0xff]
    %v375 = vld [vmem:[%s2 + $0x870] sm:$0xff]
    %v376 = vld [vmem:[%s2 + $0x878] sm:$0xff]
    %v377 = vld [vmem:[%s2 + $0x880] sm:$0xff]
    %v378 = vld [vmem:[%s2 + $0x888] sm:$0xff]
    %v379 = vld [vmem:[%s2 + $0x890] sm:$0xff]
    %v380 = vld [vmem:[%s2 + $0x898] sm:$0xff]
    %v381 = vld [vmem:[%s2 + $0x8a0] sm:$0xff]
    %v382 = vld [vmem:[%s2 + $0x8a8] sm:$0xff]
    %v383 = vld [vmem:[%s2 + $0x8b0] sm:$0xff]
    %v384 = vld [vmem:[%s2 + $0x8b8] sm:$0xff]
    %v385 = vld [vmem:[%s2 + $0x8c0] sm:$0xff]
    %v386 = vld [vmem:[%s2 + $0x8c8] sm:$0xff]
    %v387 = vld [vmem:[%s2 + $0x8d0] sm:$0xff]
    %v388 = vld [vmem:[%s2 + $0x8d8] sm:$0xff]
    %v389 = vld [vmem:[%s2 + $0x8e0] sm:$0xff]
    %v390 = vld [vmem:[%s2 + $0x8e8] sm:$0xff]
    %v391 = vld [vmem:[%s2 + $0x8f0] sm:$0xff]
    %v392 = vld [vmem:[%s2 + $0x8f8] sm:$0xff]
    %v393 = vld [vmem:[%s2 + $0x900] sm:$0xff]
    %v394 = vld [vmem:[%s2 + $0x908] sm:$0xff]
    %v395 = vld [vmem:[%s2 + $0x910] sm:$0xff]
    %v396 = vld [vmem:[%s2 + $0x918] sm:$0xff]
    %v397 = vld [vmem:[%s2 + $0x920] sm:$0xff]
    %v398 = vld [vmem:[%s2 + $0x928] sm:$0xff]
    %v399 = vld [vmem:[%s2 + $0x930] sm:$0xff]
    %v400 = vld [vmem:[%s2 + $0x938] sm:$0xff]
    %v401 = vld [vmem:[%s2 + $0x940] sm:$0xff]
    %v402 = vld [vmem:[%s2 + $0x948] sm:$0xff]
    %v403 = vld [vmem:[%s2 + $0x950] sm:$0xff]
    %v404 = vld [vmem:[%s2 + $0x958] sm:$0xff]
    %v405 = vld [vmem:[%s2 + $0x960] sm:$0xff]
    %v406 = vld [vmem:[%s2 + $0x968] sm:$0xff]
    %v407 = vld [vmem:[%s2 + $0x970] sm:$0xff]
    %v408 = vld [vmem:[%s2 + $0x978] sm:$0xff]
    %v409 = vld [vmem:[%s2 + $0x980] sm:$0xff]
    %v410 = vld [vmem:[%s2 + $0x988] sm:$0xff]
    %v411 = vld [vmem:[%s2 + $0x990] sm:$0xff]
    %v412 = vld [vmem:[%s2 + $0x998] sm:$0xff]
    %v413 = vld [vmem:[%s2 + $0x9a0] sm:$0xff]
    %v414 = vld [vmem:[%s2 + $0x9a8] sm:$0xff]
    %v415 = vld [vmem:[%s2 + $0x9b0] sm:$0xff]
    %v416 = vld [vmem:[%s2 + $0x9b8] sm:$0xff]
    %v417 = vld [vmem:[%s2 + $0x9c0] sm:$0xff]
    %v418 = vld [vmem:[%s2 + $0x9c8] sm:$0xff]
    %v419 = vld [vmem:[%s2 + $0x9d0] sm:$0xff]
    %v420 = vld [vmem:[%s2 + $0x9d8] sm:$0xff]
    %v421 = vld [vmem:[%s2 + $0x9e0] sm:$0xff]
    %v422 = vld [vmem:[%s2 + $0x9e8] sm:$0xff]
    %v423 = vld [vmem:[%s2 + $0x9f0] sm:$0xff]
    %v424 = vld [vmem:[%s2 + $0x9f8] sm:$0xff]
    %v425 = vld [vmem:[%s2 + $0xa00] sm:$0xff]
    %v426 = vld [vmem:[%s2 + $0xa08] sm:$0xff]
    %v427 = vld [vmem:[%s2 + $0xa10] sm:$0xff]
    %v428 = vld [vmem:[%s2 + $0xa18] sm:$0xff]
    %v429 = vld [vmem:[%s2 + $0xa20] sm:$0xff]
    %v430 = vld [vmem:[%s2 + $0xa28] sm:$0xff]
    %v431 = vld [vmem:[%s2 + $0xa30] sm:$0xff]
    %v432 = vld [vmem:[%s2 + $0xa38] sm:$0xff]
    %v433 = vld [vmem:[%s2 + $0xa40] sm:$0xff]
    %v434 = vld [vmem:[%s2 + $0xa48] sm:$0xff]
    %v435 = vld [vmem:[%s2 + $0xa50] sm:$0xff]
    %v436 = vld [vmem:[%s2 + $0xa58] sm:$0xff]
    %v437 = vld [vmem:[%s2 + $0xa60] sm:$0xff]
    %v438 = vld [vmem:[%s2 + $0xa68] sm:$0xff]
    %v439 = vld [vmem:[%s2 + $0xa70] sm:$0xff]
    %v440 = vld [vmem:[%s2 + $0xa78] sm:$0xff]
    %v441 = vld [vmem:[%s2 + $0xa80] sm:$0xff]
    %v442 = vld [vmem:[%s2 + $0xa88] sm:$0xff]
    %v443 = vld [vmem:[%s2 + $0xa90] sm:$0xff]
    %v444 = vld [vmem:[%s2 + $0xa98] sm:$0xff]
    %v445 = vld [vmem:[%s2 + $0xaa0] sm:$0xff]
    %v446 = vld [vmem:[%s2 + $0xaa8] sm:$0xff]
    %v447 = vld [vmem:[%s2 + $0xab0] sm:$0xff]
    %v448 = vld [vmem:[%s2 + $0xab8] sm:$0xff]
    %v449 = vld [vmem:[%s2 + $0xac0] sm:$0xff]
    %v450 = vld [vmem:[%s2 + $0xac8] sm:$0xff]
    %v451 = vld [vmem:[%s2 + $0xad0] sm:$0xff]
    %v452 = vld [vmem:[%s2 + $0xad8] sm:$0xff]
    %v453 = vld [vmem:[%s2 + $0xae0] sm:$0xff]
    %v454 = vld [vmem:[%s2 + $0xae8] sm:$0xff]
    %v455 = vld [vmem:[%s2 + $0xaf0] sm:$0xff]
    %v456 = vld [vmem:[%s2 + $0xaf8] sm:$0xff]
    %v457 = vld [vmem:[%s2 + $0xb00] sm:$0xff]
    %v458 = vld [vmem:[%s2 + $0xb08] sm:$0xff]
    %v459 = vld [vmem:[%s2 + $0xb10] sm:$0xff]
    %v460 = vld [vmem:[%s2 + $0xb18] sm:$0xff]
    %v461 = vld [vmem:[%s2 + $0xb20] sm:$0xff]
    %v462 = vld [vmem:[%s2 + $0xb28] sm:$0xff]
    %v463 = vld [vmem:[%s2 + $0xb30] sm:$0xff]
    %v464 = vld [vmem:[%s2 + $0xb38] sm:$0xff]
    %v465 = vld [vmem:[%s2 + $0xb40] sm:$0xff]
    %v466 = vld [vmem:[%s2 + $0xb48] sm:$0xff]
    %v467 = vld [vmem:[%s2 + $0xb50] sm:$0xff]
    %v468 = vld [vmem:[%s2 + $0xb58] sm:$0xff]
    %v469 = vld [vmem:[%s2 + $0xb60] sm:$0xff]
    %v470 = vld [vmem:[%s2 + $0xb68] sm:$0xff]
    %v471 = vld [vmem:[%s2 + $0xb70] sm:$0xff]
    %v472 = vld [vmem:[%s2 + $0xb78] sm:$0xff]
    %v473 = vld [vmem:[%s2 + $0xb80] sm:$0xff]
    %v474 = vld [vmem:[%s2 + $0xb88] sm:$0xff]
    %v475 = vld [vmem:[%s2 + $0xb90] sm:$0xff]
    %v476 = vld [vmem:[%s2 + $0xb98] sm:$0xff]
    %v477 = vld [vmem:[%s2 + $0xba0] sm:$0xff]
    %v478 = vld [vmem:[%s2 + $0xba8] sm:$0xff]
    %v479 = vld [vmem:[%s2 + $0xbb0] sm:$0xff]
    %v480 = vld [vmem:[%s2 + $0xbb8] sm:$0xff]
    %v481 = vld [vmem:[%s2 + $0xbc0] sm:$0xff]
    %v482 = vld [vmem:[%s2 + $0xbc8] sm:$0xff]
    %v483 = vld [vmem:[%s2 + $0xbd0] sm:$0xff]
    %v484 = vld [vmem:[%s2 + $0xbd8] sm:$0xff]
    %v485 = vld [vmem:[%s2 + $0xbe0] sm:$0xff]
    %v486 = vld [vmem:[%s2 + $0xbe8] sm:$0xff]
    %v487 = vld [vmem:[%s2 + $0xbf0] sm:$0xff]
    %v488 = vld [vmem:[%s2 + $0xbf8] sm:$0xff]
    %v489 = vld [vmem:[%s2 + $0xc00] sm:$0xff]
    %v490 = vld [vmem:[%s2 + $0xc08] sm:$0xff]
    %v491 = vld [vmem:[%s2 + $0xc10] sm:$0xff]
    %v492 = vld [vmem:[%s2 + $0xc18] sm:$0xff]
    %v493 = vld [vmem:[%s2 + $0xc20] sm:$0xff]
    %v494 = vld [vmem:[%s2 + $0xc28] sm:$0xff]
    %v495 = vld [vmem:[%s2 + $0xc30] sm:$0xff]
    %v496 = vld [vmem:[%s2 + $0xc38] sm:$0xff]
    %v497 = vld [vmem:[%s3] sm:$0xff]
    %v499 = vlaneseq
    %v500 = vshrl.u32 %v499, 7
    %v501 = vsub.s32 0, %v500
    %v502 = vrot.slane %v497, %v501
    %v503 = vlaneseq
    %v504 = vshrl.u32 %v503, 7
    %v505 = vsub.s32 1, %v504
    %v506 = vrot.slane %v497, %v505
    %v507 = vlaneseq
    %v508 = vshrl.u32 %v507, 7
    %v509 = vsub.s32 2, %v508
    %v510 = vrot.slane %v497, %v509
    %v511 = vlaneseq
    %v512 = vshrl.u32 %v511, 7
    %v513 = vsub.s32 3, %v512
    %v514 = vrot.slane %v497, %v513
    %v515 = vlaneseq
    %v516 = vshrl.u32 %v515, 7
    %v517 = vsub.s32 4, %v516
    %v518 = vrot.slane %v497, %v517
    %v519 = vlaneseq
    %v520 = vshrl.u32 %v519, 7
    %v521 = vsub.s32 5, %v520
    %v522 = vrot.slane %v497, %v521
    %v523 = vlaneseq
    %v524 = vshrl.u32 %v523, 7
    %v525 = vsub.s32 6, %v524
    %v526 = vrot.slane %v497, %v525
    %v527 = vlaneseq
    %v528 = vshrl.u32 %v527, 7
    %v529 = vsub.s32 7, %v528
    %v530 = vrot.slane %v497, %v529
    %v931 = vunpack.c.l.b16 %v105
    %v932 = vunpack.c.h.b16 %v105
    %v933 = vunpack.c.l.b16 %v106
    %v934 = vunpack.c.h.b16 %v106
    %v935 = vunpack.c.l.b16 %v107
    %v936 = vunpack.c.h.b16 %v107
    %v937 = vunpack.c.l.b16 %v108
    %v938 = vunpack.c.h.b16 %v108
    %v939 = vunpack.c.l.b16 %v109
    %v940 = vunpack.c.h.b16 %v109
    %v941 = vunpack.c.l.b16 %v110
    %v942 = vunpack.c.h.b16 %v110
    %v943 = vunpack.c.l.b16 %v111
    %v944 = vunpack.c.h.b16 %v111
    %v945 = vunpack.c.l.b16 %v112
    %v946 = vunpack.c.h.b16 %v112
    %v947 = vunpack.c.l.b16 %v113
    %v948 = vunpack.c.h.b16 %v113
    %v949 = vunpack.c.l.b16 %v114
    %v950 = vunpack.c.h.b16 %v114
    %v951 = vunpack.c.l.b16 %v115
    %v952 = vunpack.c.h.b16 %v115
    %v953 = vunpack.c.l.b16 %v116
    %v954 = vunpack.c.h.b16 %v116
    %v955 = vunpack.c.l.b16 %v117
    %v956 = vunpack.c.h.b16 %v117
    %v957 = vunpack.c.l.b16 %v118
    %v958 = vunpack.c.h.b16 %v118
    %v959 = vunpack.c.l.b16 %v119
    %v960 = vunpack.c.h.b16 %v119
    %v961 = vunpack.c.l.b16 %v120
    %v962 = vunpack.c.h.b16 %v120
    %v963 = vunpack.c.l.b16 %v121
    %v964 = vunpack.c.h.b16 %v121
    %v965 = vunpack.c.l.b16 %v122
    %v966 = vunpack.c.h.b16 %v122
    %v967 = vunpack.c.l.b16 %v123
    %v968 = vunpack.c.h.b16 %v123
    %v969 = vunpack.c.l.b16 %v124
    %v970 = vunpack.c.h.b16 %v124
    %v971 = vunpack.c.l.b16 %v125
    %v972 = vunpack.c.h.b16 %v125
    %v973 = vunpack.c.l.b16 %v126
    %v974 = vunpack.c.h.b16 %v126
    %v975 = vunpack.c.l.b16 %v127
    %v976 = vunpack.c.h.b16 %v127
    %v977 = vunpack.c.l.b16 %v128
    %v978 = vunpack.c.h.b16 %v128
    %v979 = vunpack.c.l.b16 %v129
    %v980 = vunpack.c.h.b16 %v129
    %v981 = vunpack.c.l.b16 %v130
    %v982 = vunpack.c.h.b16 %v130
    %v983 = vunpack.c.l.b16 %v131
    %v984 = vunpack.c.h.b16 %v131
    %v985 = vunpack.c.l.b16 %v132
    %v986 = vunpack.c.h.b16 %v132
    %v987 = vunpack.c.l.b16 %v133
    %v988 = vunpack.c.h.b16 %v133
    %v989 = vunpack.c.l.b16 %v134
    %v990 = vunpack.c.h.b16 %v134
    %v991 = vunpack.c.l.b16 %v135
    %v992 = vunpack.c.h.b16 %v135
    %v993 = vunpack.c.l.b16 %v136
    %v994 = vunpack.c.h.b16 %v136
    %v995 = vunpack.c.l.b16 %v137
    %v996 = vunpack.c.h.b16 %v137
    %v997 = vunpack.c.l.b16 %v138
    %v998 = vunpack.c.h.b16 %v138
    %v999 = vunpack.c.l.b16 %v139
    %v1000 = vunpack.c.h.b16 %v139
    %v1001 = vunpack.c.l.b16 %v140
    %v1002 = vunpack.c.h.b16 %v140
    %v1003 = vunpack.c.l.b16 %v141
    %v1004 = vunpack.c.h.b16 %v141
    %v1005 = vunpack.c.l.b16 %v142
    %v1006 = vunpack.c.h.b16 %v142
    %v1007 = vunpack.c.l.b16 %v143
    %v1008 = vunpack.c.h.b16 %v143
    %v1009 = vunpack.c.l.b16 %v144
    %v1010 = vunpack.c.h.b16 %v144
    %v1011 = vunpack.c.l.b16 %v145
    %v1012 = vunpack.c.h.b16 %v145
    %v1013 = vunpack.c.l.b16 %v146
    %v1014 = vunpack.c.h.b16 %v146
    %v1015 = vunpack.c.l.b16 %v147
    %v1016 = vunpack.c.h.b16 %v147
    %v1017 = vunpack.c.l.b16 %v148
    %v1018 = vunpack.c.h.b16 %v148
    %v1019 = vunpack.c.l.b16 %v149
    %v1020 = vunpack.c.h.b16 %v149
    %v1021 = vunpack.c.l.b16 %v150
    %v1022 = vunpack.c.h.b16 %v150
    %v1023 = vunpack.c.l.b16 %v151
    %v1024 = vunpack.c.h.b16 %v151
    %v1025 = vunpack.c.l.b16 %v152
    %v1026 = vunpack.c.h.b16 %v152
    %v1027 = vunpack.c.l.b16 %v153
    %v1028 = vunpack.c.h.b16 %v153
    %v1029 = vunpack.c.l.b16 %v154
    %v1030 = vunpack.c.h.b16 %v154
    %v1031 = vunpack.c.l.b16 %v155
    %v1032 = vunpack.c.h.b16 %v155
    %v1033 = vunpack.c.l.b16 %v156
    %v1034 = vunpack.c.h.b16 %v156
    %v1035 = vunpack.c.l.b16 %v157
    %v1036 = vunpack.c.h.b16 %v157
    %v1037 = vunpack.c.l.b16 %v158
    %v1038 = vunpack.c.h.b16 %v158
    %v1039 = vunpack.c.l.b16 %v159
    %v1040 = vunpack.c.h.b16 %v159
    %v1041 = vunpack.c.l.b16 %v160
    %v1042 = vunpack.c.h.b16 %v160
    %v1043 = vunpack.c.l.b16 %v161
    %v1044 = vunpack.c.h.b16 %v161
    %v1045 = vunpack.c.l.b16 %v162
    %v1046 = vunpack.c.h.b16 %v162
    %v1047 = vunpack.c.l.b16 %v163
    %v1048 = vunpack.c.h.b16 %v163
    %v1049 = vunpack.c.l.b16 %v164
    %v1050 = vunpack.c.h.b16 %v164
    %v1051 = vunpack.c.l.b16 %v165
    %v1052 = vunpack.c.h.b16 %v165
    %v1053 = vunpack.c.l.b16 %v166
    %v1054 = vunpack.c.h.b16 %v166
    %v1055 = vunpack.c.l.b16 %v167
    %v1056 = vunpack.c.h.b16 %v167
    %v1057 = vunpack.c.l.b16 %v168
    %v1058 = vunpack.c.h.b16 %v168
    %v1059 = vunpack.c.l.b16 %v169
    %v1060 = vunpack.c.h.b16 %v169
    %v1061 = vunpack.c.l.b16 %v170
    %v1062 = vunpack.c.h.b16 %v170
    %v1063 = vunpack.c.l.b16 %v171
    %v1064 = vunpack.c.h.b16 %v171
    %v1065 = vunpack.c.l.b16 %v172
    %v1066 = vunpack.c.h.b16 %v172
    %v1067 = vunpack.c.l.b16 %v173
    %v1068 = vunpack.c.h.b16 %v173
    %v1069 = vunpack.c.l.b16 %v174
    %v1070 = vunpack.c.h.b16 %v174
    %v1071 = vunpack.c.l.b16 %v175
    %v1072 = vunpack.c.h.b16 %v175
    %v1073 = vunpack.c.l.b16 %v176
    %v1074 = vunpack.c.h.b16 %v176
    %v1075 = vunpack.c.l.b16 %v177
    %v1076 = vunpack.c.h.b16 %v177
    %v1077 = vunpack.c.l.b16 %v178
    %v1078 = vunpack.c.h.b16 %v178
    %v1079 = vunpack.c.l.b16 %v179
    %v1080 = vunpack.c.h.b16 %v179
    %v1081 = vunpack.c.l.b16 %v180
    %v1082 = vunpack.c.h.b16 %v180
    %v1083 = vunpack.c.l.b16 %v181
    %v1084 = vunpack.c.h.b16 %v181
    %v1085 = vunpack.c.l.b16 %v182
    %v1086 = vunpack.c.h.b16 %v182
    %v1087 = vunpack.c.l.b16 %v183
    %v1088 = vunpack.c.h.b16 %v183
    %v1089 = vunpack.c.l.b16 %v184
    %v1090 = vunpack.c.h.b16 %v184
    %v1091 = vunpack.c.l.b16 %v185
    %v1092 = vunpack.c.h.b16 %v185
    %v1093 = vunpack.c.l.b16 %v186
    %v1094 = vunpack.c.h.b16 %v186
    %v1095 = vunpack.c.l.b16 %v187
    %v1096 = vunpack.c.h.b16 %v187
    %v1097 = vunpack.c.l.b16 %v188
    %v1098 = vunpack.c.h.b16 %v188
    %v1099 = vunpack.c.l.b16 %v189
    %v1100 = vunpack.c.h.b16 %v189
    %v1101 = vunpack.c.l.b16 %v190
    %v1102 = vunpack.c.h.b16 %v190
    %v1103 = vunpack.c.l.b16 %v191
    %v1104 = vunpack.c.h.b16 %v191
    %v1105 = vunpack.c.l.b16 %v192
    %v1106 = vunpack.c.h.b16 %v192
    %v1107 = vunpack.c.l.b16 %v193
    %v1108 = vunpack.c.h.b16 %v193
    %v1109 = vunpack.c.l.b16 %v194
    %v1110 = vunpack.c.h.b16 %v194
    %v1111 = vunpack.c.l.b16 %v195
    %v1112 = vunpack.c.h.b16 %v195
    %v1113 = vunpack.c.l.b16 %v196
    %v1114 = vunpack.c.h.b16 %v196
    %v1115 = vunpack.c.l.b16 %v197
    %v1116 = vunpack.c.h.b16 %v197
    %v1117 = vunpack.c.l.b16 %v198
    %v1118 = vunpack.c.h.b16 %v198
    %v1119 = vunpack.c.l.b16 %v199
    %v1120 = vunpack.c.h.b16 %v199
    %v1121 = vunpack.c.l.b16 %v200
    %v1122 = vunpack.c.h.b16 %v200
    %v1123 = vunpack.c.l.b16 %v201
    %v1124 = vunpack.c.h.b16 %v201
    %v1125 = vunpack.c.l.b16 %v202
    %v1126 = vunpack.c.h.b16 %v202
    %v1127 = vunpack.c.l.b16 %v203
    %v1128 = vunpack.c.h.b16 %v203
    %v1129 = vunpack.c.l.b16 %v204
    %v1130 = vunpack.c.h.b16 %v204
    %v1131 = vunpack.c.l.b16 %v205
    %v1132 = vunpack.c.h.b16 %v205
    %v1133 = vunpack.c.l.b16 %v206
    %v1134 = vunpack.c.h.b16 %v206
    %v1135 = vunpack.c.l.b16 %v207
    %v1136 = vunpack.c.h.b16 %v207
    %v1137 = vunpack.c.l.b16 %v208
    %v1138 = vunpack.c.h.b16 %v208
    %v1139 = vunpack.c.l.b16 %v209
    %v1140 = vunpack.c.h.b16 %v209
    %v1141 = vunpack.c.l.b16 %v210
    %v1142 = vunpack.c.h.b16 %v210
    %v1143 = vunpack.c.l.b16 %v211
    %v1144 = vunpack.c.h.b16 %v211
    %v1145 = vunpack.c.l.b16 %v212
    %v1146 = vunpack.c.h.b16 %v212
    %v1147 = vunpack.c.l.b16 %v213
    %v1148 = vunpack.c.h.b16 %v213
    %v1149 = vunpack.c.l.b16 %v214
    %v1150 = vunpack.c.h.b16 %v214
    %v1151 = vunpack.c.l.b16 %v215
    %v1152 = vunpack.c.h.b16 %v215
    %v1153 = vunpack.c.l.b16 %v216
    %v1154 = vunpack.c.h.b16 %v216
    %v1155 = vunpack.c.l.b16 %v217
    %v1156 = vunpack.c.h.b16 %v217
    %v1157 = vunpack.c.l.b16 %v218
    %v1158 = vunpack.c.h.b16 %v218
    %v1159 = vunpack.c.l.b16 %v219
    %v1160 = vunpack.c.h.b16 %v219
    %v1161 = vunpack.c.l.b16 %v220
    %v1162 = vunpack.c.h.b16 %v220
    %v1163 = vunpack.c.l.b16 %v221
    %v1164 = vunpack.c.h.b16 %v221
    %v1165 = vunpack.c.l.b16 %v222
    %v1166 = vunpack.c.h.b16 %v222
    %v1167 = vunpack.c.l.b16 %v223
    %v1168 = vunpack.c.h.b16 %v223
    %v1169 = vunpack.c.l.b16 %v224
    %v1170 = vunpack.c.h.b16 %v224
    %v1171 = vunpack.c.l.b16 %v225
    %v1172 = vunpack.c.h.b16 %v225
    %v1173 = vunpack.c.l.b16 %v226
    %v1174 = vunpack.c.h.b16 %v226
    %v1175 = vunpack.c.l.b16 %v227
    %v1176 = vunpack.c.h.b16 %v227
    %v1177 = vunpack.c.l.b16 %v228
    %v1178 = vunpack.c.h.b16 %v228
    %v1179 = vunpack.c.l.b16 %v229
    %v1180 = vunpack.c.h.b16 %v229
    %v1181 = vunpack.c.l.b16 %v230
    %v1182 = vunpack.c.h.b16 %v230
    %v1183 = vunpack.c.l.b16 %v231
    %v1184 = vunpack.c.h.b16 %v231
    %v1185 = vunpack.c.l.b16 %v232
    %v1186 = vunpack.c.h.b16 %v232
    %v1187 = vunpack.c.l.b16 %v233
    %v1188 = vunpack.c.h.b16 %v233
    %v1189 = vunpack.c.l.b16 %v234
    %v1190 = vunpack.c.h.b16 %v234
    %v1191 = vunpack.c.l.b16 %v235
    %v1192 = vunpack.c.h.b16 %v235
    %v1193 = vunpack.c.l.b16 %v236
    %v1194 = vunpack.c.h.b16 %v236
    %v1195 = vunpack.c.l.b16 %v237
    %v1196 = vunpack.c.h.b16 %v237
    %v1197 = vunpack.c.l.b16 %v238
    %v1198 = vunpack.c.h.b16 %v238
    %v1199 = vunpack.c.l.b16 %v239
    %v1200 = vunpack.c.h.b16 %v239
    %v1201 = vunpack.c.l.b16 %v240
    %v1202 = vunpack.c.h.b16 %v240
    %v1203 = vunpack.c.l.b16 %v241
    %v1204 = vunpack.c.h.b16 %v241
    %v1205 = vunpack.c.l.b16 %v242
    %v1206 = vunpack.c.h.b16 %v242
    %v1207 = vunpack.c.l.b16 %v243
    %v1208 = vunpack.c.h.b16 %v243
    %v1209 = vunpack.c.l.b16 %v244
    %v1210 = vunpack.c.h.b16 %v244
    %v1211 = vunpack.c.l.b16 %v245
    %v1212 = vunpack.c.h.b16 %v245
    %v1213 = vunpack.c.l.b16 %v246
    %v1214 = vunpack.c.h.b16 %v246
    %v1215 = vunpack.c.l.b16 %v247
    %v1216 = vunpack.c.h.b16 %v247
    %v1217 = vunpack.c.l.b16 %v248
    %v1218 = vunpack.c.h.b16 %v248
    %v1219 = vunpack.c.l.b16 %v249
    %v1220 = vunpack.c.h.b16 %v249
    %v1221 = vunpack.c.l.b16 %v250
    %v1222 = vunpack.c.h.b16 %v250
    %v1223 = vunpack.c.l.b16 %v251
    %v1224 = vunpack.c.h.b16 %v251
    %v1225 = vunpack.c.l.b16 %v252
    %v1226 = vunpack.c.h.b16 %v252
    %v1227 = vunpack.c.l.b16 %v253
    %v1228 = vunpack.c.h.b16 %v253
    %v1229 = vunpack.c.l.b16 %v254
    %v1230 = vunpack.c.h.b16 %v254
    %v1231 = vunpack.c.l.b16 %v255
    %v1232 = vunpack.c.h.b16 %v255
    %v1233 = vunpack.c.l.b16 %v256
    %v1234 = vunpack.c.h.b16 %v256
    %v1235 = vunpack.c.l.b16 %v257
    %v1236 = vunpack.c.h.b16 %v257
    %v1237 = vunpack.c.l.b16 %v258
    %v1238 = vunpack.c.h.b16 %v258
    %v1239 = vunpack.c.l.b16 %v259
    %v1240 = vunpack.c.h.b16 %v259
    %v1241 = vunpack.c.l.b16 %v260
    %v1242 = vunpack.c.h.b16 %v260
    %v1243 = vunpack.c.l.b16 %v261
    %v1244 = vunpack.c.h.b16 %v261
    %v1245 = vunpack.c.l.b16 %v262
    %v1246 = vunpack.c.h.b16 %v262
    %v1247 = vunpack.c.l.b16 %v263
    %v1248 = vunpack.c.h.b16 %v263
    %v1249 = vunpack.c.l.b16 %v264
    %v1250 = vunpack.c.h.b16 %v264
    %v1251 = vunpack.c.l.b16 %v265
    %v1252 = vunpack.c.h.b16 %v265
    %v1253 = vunpack.c.l.b16 %v266
    %v1254 = vunpack.c.h.b16 %v266
    %v1255 = vunpack.c.l.b16 %v267
    %v1256 = vunpack.c.h.b16 %v267
    %v1257 = vunpack.c.l.b16 %v268
    %v1258 = vunpack.c.h.b16 %v268
    %v1259 = vunpack.c.l.b16 %v269
    %v1260 = vunpack.c.h.b16 %v269
    %v1261 = vunpack.c.l.b16 %v270
    %v1262 = vunpack.c.h.b16 %v270
    %v1263 = vunpack.c.l.b16 %v271
    %v1264 = vunpack.c.h.b16 %v271
    %v1265 = vunpack.c.l.b16 %v272
    %v1266 = vunpack.c.h.b16 %v272
    %v1267 = vunpack.c.l.b16 %v273
    %v1268 = vunpack.c.h.b16 %v273
    %v1269 = vunpack.c.l.b16 %v274
    %v1270 = vunpack.c.h.b16 %v274
    %v1271 = vunpack.c.l.b16 %v275
    %v1272 = vunpack.c.h.b16 %v275
    %v1273 = vunpack.c.l.b16 %v276
    %v1274 = vunpack.c.h.b16 %v276
    %v1275 = vunpack.c.l.b16 %v277
    %v1276 = vunpack.c.h.b16 %v277
    %v1277 = vunpack.c.l.b16 %v278
    %v1278 = vunpack.c.h.b16 %v278
    %v1279 = vunpack.c.l.b16 %v279
    %v1280 = vunpack.c.h.b16 %v279
    %v1281 = vunpack.c.l.b16 %v280
    %v1282 = vunpack.c.h.b16 %v280
    %v1283 = vunpack.c.l.b16 %v281
    %v1284 = vunpack.c.h.b16 %v281
    %v1285 = vunpack.c.l.b16 %v282
    %v1286 = vunpack.c.h.b16 %v282
    %v1287 = vunpack.c.l.b16 %v283
    %v1288 = vunpack.c.h.b16 %v283
    %v1289 = vunpack.c.l.b16 %v284
    %v1290 = vunpack.c.h.b16 %v284
    %v1291 = vunpack.c.l.b16 %v285
    %v1292 = vunpack.c.h.b16 %v285
    %v1293 = vunpack.c.l.b16 %v286
    %v1294 = vunpack.c.h.b16 %v286
    %v1295 = vunpack.c.l.b16 %v287
    %v1296 = vunpack.c.h.b16 %v287
    %v1297 = vunpack.c.l.b16 %v288
    %v1298 = vunpack.c.h.b16 %v288
    %v1299 = vunpack.c.l.b16 %v289
    %v1300 = vunpack.c.h.b16 %v289
    %v1301 = vunpack.c.l.b16 %v290
    %v1302 = vunpack.c.h.b16 %v290
    %v1303 = vunpack.c.l.b16 %v291
    %v1304 = vunpack.c.h.b16 %v291
    %v1305 = vunpack.c.l.b16 %v292
    %v1306 = vunpack.c.h.b16 %v292
    %v1307 = vunpack.c.l.b16 %v293
    %v1308 = vunpack.c.h.b16 %v293
    %v1309 = vunpack.c.l.b16 %v294
    %v1310 = vunpack.c.h.b16 %v294
    %v1311 = vunpack.c.l.b16 %v295
    %v1312 = vunpack.c.h.b16 %v295
    %v1313 = vunpack.c.l.b16 %v296
    %v1314 = vunpack.c.h.b16 %v296
    %v1315 = vunpack.c.l.b16 %v297
    %v1316 = vunpack.c.h.b16 %v297
    %v1317 = vunpack.c.l.b16 %v298
    %v1318 = vunpack.c.h.b16 %v298
    %v1319 = vunpack.c.l.b16 %v299
    %v1320 = vunpack.c.h.b16 %v299
    %v1321 = vunpack.c.l.b16 %v300
    %v1322 = vunpack.c.h.b16 %v300
    %v1323 = vunpack.c.l.b16 %v301
    %v1324 = vunpack.c.h.b16 %v301
    %v1325 = vunpack.c.l.b16 %v302
    %v1326 = vunpack.c.h.b16 %v302
    %v1327 = vunpack.c.l.b16 %v303
    %v1328 = vunpack.c.h.b16 %v303
    %v1329 = vunpack.c.l.b16 %v304
    %v1330 = vunpack.c.h.b16 %v304
    %v1331 = vunpack.c.l.b16 %v305
    %v1332 = vunpack.c.h.b16 %v305
    %v1333 = vunpack.c.l.b16 %v306
    %v1334 = vunpack.c.h.b16 %v306
    %v1335 = vunpack.c.l.b16 %v307
    %v1336 = vunpack.c.h.b16 %v307
    %v1337 = vunpack.c.l.b16 %v308
    %v1338 = vunpack.c.h.b16 %v308
    %v1339 = vunpack.c.l.b16 %v309
    %v1340 = vunpack.c.h.b16 %v309
    %v1341 = vunpack.c.l.b16 %v310
    %v1342 = vunpack.c.h.b16 %v310
    %v1343 = vunpack.c.l.b16 %v311
    %v1344 = vunpack.c.h.b16 %v311
    %v1345 = vunpack.c.l.b16 %v312
    %v1346 = vunpack.c.h.b16 %v312
    %v1347 = vunpack.c.l.b16 %v313
    %v1348 = vunpack.c.h.b16 %v313
    %v1349 = vunpack.c.l.b16 %v314
    %v1350 = vunpack.c.h.b16 %v314
    %v1351 = vunpack.c.l.b16 %v315
    %v1352 = vunpack.c.h.b16 %v315
    %v1353 = vunpack.c.l.b16 %v316
    %v1354 = vunpack.c.h.b16 %v316
    %v1355 = vunpack.c.l.b16 %v317
    %v1356 = vunpack.c.h.b16 %v317
    %v1357 = vunpack.c.l.b16 %v318
    %v1358 = vunpack.c.h.b16 %v318
    %v1359 = vunpack.c.l.b16 %v319
    %v1360 = vunpack.c.h.b16 %v319
    %v1361 = vunpack.c.l.b16 %v320
    %v1362 = vunpack.c.h.b16 %v320
    %v1363 = vunpack.c.l.b16 %v321
    %v1364 = vunpack.c.h.b16 %v321
    %v1365 = vunpack.c.l.b16 %v322
    %v1366 = vunpack.c.h.b16 %v322
    %v1367 = vunpack.c.l.b16 %v323
    %v1368 = vunpack.c.h.b16 %v323
    %v1369 = vunpack.c.l.b16 %v324
    %v1370 = vunpack.c.h.b16 %v324
    %v1371 = vunpack.c.l.b16 %v325
    %v1372 = vunpack.c.h.b16 %v325
    %v1373 = vunpack.c.l.b16 %v326
    %v1374 = vunpack.c.h.b16 %v326
    %v1375 = vunpack.c.l.b16 %v327
    %v1376 = vunpack.c.h.b16 %v327
    %v1377 = vunpack.c.l.b16 %v328
    %v1378 = vunpack.c.h.b16 %v328
    %v1379 = vunpack.c.l.b16 %v329
    %v1380 = vunpack.c.h.b16 %v329
    %v1381 = vunpack.c.l.b16 %v330
    %v1382 = vunpack.c.h.b16 %v330
    %v1383 = vunpack.c.l.b16 %v331
    %v1384 = vunpack.c.h.b16 %v331
    %v1385 = vunpack.c.l.b16 %v332
    %v1386 = vunpack.c.h.b16 %v332
    %v1387 = vunpack.c.l.b16 %v333
    %v1388 = vunpack.c.h.b16 %v333
    %v1389 = vunpack.c.l.b16 %v334
    %v1390 = vunpack.c.h.b16 %v334
    %v1391 = vunpack.c.l.b16 %v335
    %v1392 = vunpack.c.h.b16 %v335
    %v1393 = vunpack.c.l.b16 %v336
    %v1394 = vunpack.c.h.b16 %v336
    %v1395 = vunpack.c.l.b16 %v337
    %v1396 = vunpack.c.h.b16 %v337
    %v1397 = vunpack.c.l.b16 %v338
    %v1398 = vunpack.c.h.b16 %v338
    %v1399 = vunpack.c.l.b16 %v339
    %v1400 = vunpack.c.h.b16 %v339
    %v1401 = vunpack.c.l.b16 %v340
    %v1402 = vunpack.c.h.b16 %v340
    %v1403 = vunpack.c.l.b16 %v341
    %v1404 = vunpack.c.h.b16 %v341
    %v1405 = vunpack.c.l.b16 %v342
    %v1406 = vunpack.c.h.b16 %v342
    %v1407 = vunpack.c.l.b16 %v343
    %v1408 = vunpack.c.h.b16 %v343
    %v1409 = vunpack.c.l.b16 %v344
    %v1410 = vunpack.c.h.b16 %v344
    %v1411 = vunpack.c.l.b16 %v345
    %v1412 = vunpack.c.h.b16 %v345
    %v1413 = vunpack.c.l.b16 %v346
    %v1414 = vunpack.c.h.b16 %v346
    %v1415 = vunpack.c.l.b16 %v347
    %v1416 = vunpack.c.h.b16 %v347
    %v1417 = vunpack.c.l.b16 %v348
    %v1418 = vunpack.c.h.b16 %v348
    %v1419 = vunpack.c.l.b16 %v349
    %v1420 = vunpack.c.h.b16 %v349
    %v1421 = vunpack.c.l.b16 %v350
    %v1422 = vunpack.c.h.b16 %v350
    %v1423 = vunpack.c.l.b16 %v351
    %v1424 = vunpack.c.h.b16 %v351
    %v1425 = vunpack.c.l.b16 %v352
    %v1426 = vunpack.c.h.b16 %v352
    %v1427 = vunpack.c.l.b16 %v353
    %v1428 = vunpack.c.h.b16 %v353
    %v1429 = vunpack.c.l.b16 %v354
    %v1430 = vunpack.c.h.b16 %v354
    %v1431 = vunpack.c.l.b16 %v355
    %v1432 = vunpack.c.h.b16 %v355
    %v1433 = vunpack.c.l.b16 %v356
    %v1434 = vunpack.c.h.b16 %v356
    %v1435 = vunpack.c.l.b16 %v357
    %v1436 = vunpack.c.h.b16 %v357
    %v1437 = vunpack.c.l.b16 %v358
    %v1438 = vunpack.c.h.b16 %v358
    %v1439 = vunpack.c.l.b16 %v359
    %v1440 = vunpack.c.h.b16 %v359
    %v1441 = vunpack.c.l.b16 %v360
    %v1442 = vunpack.c.h.b16 %v360
    %v1443 = vunpack.c.l.b16 %v361
    %v1444 = vunpack.c.h.b16 %v361
    %v1445 = vunpack.c.l.b16 %v362
    %v1446 = vunpack.c.h.b16 %v362
    %v1447 = vunpack.c.l.b16 %v363
    %v1448 = vunpack.c.h.b16 %v363
    %v1449 = vunpack.c.l.b16 %v364
    %v1450 = vunpack.c.h.b16 %v364
    %v1451 = vunpack.c.l.b16 %v365
    %v1452 = vunpack.c.h.b16 %v365
    %v1453 = vunpack.c.l.b16 %v366
    %v1454 = vunpack.c.h.b16 %v366
    %v1455 = vunpack.c.l.b16 %v367
    %v1456 = vunpack.c.h.b16 %v367
    %v1457 = vunpack.c.l.b16 %v368
    %v1458 = vunpack.c.h.b16 %v368
    %v1459 = vunpack.c.l.b16 %v369
    %v1460 = vunpack.c.h.b16 %v369
    %v1461 = vunpack.c.l.b16 %v370
    %v1462 = vunpack.c.h.b16 %v370
    %v1463 = vunpack.c.l.b16 %v371
    %v1464 = vunpack.c.h.b16 %v371
    %v1465 = vunpack.c.l.b16 %v372
    %v1466 = vunpack.c.h.b16 %v372
    %v1467 = vunpack.c.l.b16 %v373
    %v1468 = vunpack.c.h.b16 %v373
    %v1469 = vunpack.c.l.b16 %v374
    %v1470 = vunpack.c.h.b16 %v374
    %v1471 = vunpack.c.l.b16 %v375
    %v1472 = vunpack.c.h.b16 %v375
    %v1473 = vunpack.c.l.b16 %v376
    %v1474 = vunpack.c.h.b16 %v376
    %v1475 = vunpack.c.l.b16 %v377
    %v1476 = vunpack.c.h.b16 %v377
    %v1477 = vunpack.c.l.b16 %v378
    %v1478 = vunpack.c.h.b16 %v378
    %v1479 = vunpack.c.l.b16 %v379
    %v1480 = vunpack.c.h.b16 %v379
    %v1481 = vunpack.c.l.b16 %v380
    %v1482 = vunpack.c.h.b16 %v380
    %v1483 = vunpack.c.l.b16 %v381
    %v1484 = vunpack.c.h.b16 %v381
    %v1485 = vunpack.c.l.b16 %v382
    %v1486 = vunpack.c.h.b16 %v382
    %v1487 = vunpack.c.l.b16 %v383
    %v1488 = vunpack.c.h.b16 %v383
    %v1489 = vunpack.c.l.b16 %v384
    %v1490 = vunpack.c.h.b16 %v384
    %v1491 = vunpack.c.l.b16 %v385
    %v1492 = vunpack.c.h.b16 %v385
    %v1493 = vunpack.c.l.b16 %v386
    %v1494 = vunpack.c.h.b16 %v386
    %v1495 = vunpack.c.l.b16 %v387
    %v1496 = vunpack.c.h.b16 %v387
    %v1497 = vunpack.c.l.b16 %v388
    %v1498 = vunpack.c.h.b16 %v388
    %v1499 = vunpack.c.l.b16 %v389
    %v1500 = vunpack.c.h.b16 %v389
    %v1501 = vunpack.c.l.b16 %v390
    %v1502 = vunpack.c.h.b16 %v390
    %v1503 = vunpack.c.l.b16 %v391
    %v1504 = vunpack.c.h.b16 %v391
    %v1505 = vunpack.c.l.b16 %v392
    %v1506 = vunpack.c.h.b16 %v392
    %v1507 = vunpack.c.l.b16 %v393
    %v1508 = vunpack.c.h.b16 %v393
    %v1509 = vunpack.c.l.b16 %v394
    %v1510 = vunpack.c.h.b16 %v394
    %v1511 = vunpack.c.l.b16 %v395
    %v1512 = vunpack.c.h.b16 %v395
    %v1513 = vunpack.c.l.b16 %v396
    %v1514 = vunpack.c.h.b16 %v396
    %v1515 = vunpack.c.l.b16 %v397
    %v1516 = vunpack.c.h.b16 %v397
    %v1517 = vunpack.c.l.b16 %v398
    %v1518 = vunpack.c.h.b16 %v398
    %v1519 = vunpack.c.l.b16 %v399
    %v1520 = vunpack.c.h.b16 %v399
    %v1521 = vunpack.c.l.b16 %v400
    %v1522 = vunpack.c.h.b16 %v400
    %v1523 = vunpack.c.l.b16 %v401
    %v1524 = vunpack.c.h.b16 %v401
    %v1525 = vunpack.c.l.b16 %v402
    %v1526 = vunpack.c.h.b16 %v402
    %v1527 = vunpack.c.l.b16 %v403
    %v1528 = vunpack.c.h.b16 %v403
    %v1529 = vunpack.c.l.b16 %v404
    %v1530 = vunpack.c.h.b16 %v404
    %v1531 = vunpack.c.l.b16 %v405
    %v1532 = vunpack.c.h.b16 %v405
    %v1533 = vunpack.c.l.b16 %v406
    %v1534 = vunpack.c.h.b16 %v406
    %v1535 = vunpack.c.l.b16 %v407
    %v1536 = vunpack.c.h.b16 %v407
    %v1537 = vunpack.c.l.b16 %v408
    %v1538 = vunpack.c.h.b16 %v408
    %v1539 = vunpack.c.l.b16 %v409
    %v1540 = vunpack.c.h.b16 %v409
    %v1541 = vunpack.c.l.b16 %v410
    %v1542 = vunpack.c.h.b16 %v410
    %v1543 = vunpack.c.l.b16 %v411
    %v1544 = vunpack.c.h.b16 %v411
    %v1545 = vunpack.c.l.b16 %v412
    %v1546 = vunpack.c.h.b16 %v412
    %v1547 = vunpack.c.l.b16 %v413
    %v1548 = vunpack.c.h.b16 %v413
    %v1549 = vunpack.c.l.b16 %v414
    %v1550 = vunpack.c.h.b16 %v414
    %v1551 = vunpack.c.l.b16 %v415
    %v1552 = vunpack.c.h.b16 %v415
    %v1553 = vunpack.c.l.b16 %v416
    %v1554 = vunpack.c.h.b16 %v416
    %v1555 = vunpack.c.l.b16 %v417
    %v1556 = vunpack.c.h.b16 %v417
    %v1557 = vunpack.c.l.b16 %v418
    %v1558 = vunpack.c.h.b16 %v418
    %v1559 = vunpack.c.l.b16 %v419
    %v1560 = vunpack.c.h.b16 %v419
    %v1561 = vunpack.c.l.b16 %v420
    %v1562 = vunpack.c.h.b16 %v420
    %v1563 = vunpack.c.l.b16 %v421
    %v1564 = vunpack.c.h.b16 %v421
    %v1565 = vunpack.c.l.b16 %v422
    %v1566 = vunpack.c.h.b16 %v422
    %v1567 = vunpack.c.l.b16 %v423
    %v1568 = vunpack.c.h.b16 %v423
    %v1569 = vunpack.c.l.b16 %v424
    %v1570 = vunpack.c.h.b16 %v424
    %v1571 = vunpack.c.l.b16 %v425
    %v1572 = vunpack.c.h.b16 %v425
    %v1573 = vunpack.c.l.b16 %v426
    %v1574 = vunpack.c.h.b16 %v426
    %v1575 = vunpack.c.l.b16 %v427
    %v1576 = vunpack.c.h.b16 %v427
    %v1577 = vunpack.c.l.b16 %v428
    %v1578 = vunpack.c.h.b16 %v428
    %v1579 = vunpack.c.l.b16 %v429
    %v1580 = vunpack.c.h.b16 %v429
    %v1581 = vunpack.c.l.b16 %v430
    %v1582 = vunpack.c.h.b16 %v430
    %v1583 = vunpack.c.l.b16 %v431
    %v1584 = vunpack.c.h.b16 %v431
    %v1585 = vunpack.c.l.b16 %v432
    %v1586 = vunpack.c.h.b16 %v432
    %v1587 = vunpack.c.l.b16 %v433
    %v1588 = vunpack.c.h.b16 %v433
    %v1589 = vunpack.c.l.b16 %v434
    %v1590 = vunpack.c.h.b16 %v434
    %v1591 = vunpack.c.l.b16 %v435
    %v1592 = vunpack.c.h.b16 %v435
    %v1593 = vunpack.c.l.b16 %v436
    %v1594 = vunpack.c.h.b16 %v436
    %v1595 = vunpack.c.l.b16 %v437
    %v1596 = vunpack.c.h.b16 %v437
    %v1597 = vunpack.c.l.b16 %v438
    %v1598 = vunpack.c.h.b16 %v438
    %v1599 = vunpack.c.l.b16 %v439
    %v1600 = vunpack.c.h.b16 %v439
    %v1601 = vunpack.c.l.b16 %v440
    %v1602 = vunpack.c.h.b16 %v440
    %v1603 = vunpack.c.l.b16 %v441
    %v1604 = vunpack.c.h.b16 %v441
    %v1605 = vunpack.c.l.b16 %v442
    %v1606 = vunpack.c.h.b16 %v442
    %v1607 = vunpack.c.l.b16 %v443
    %v1608 = vunpack.c.h.b16 %v443
    %v1609 = vunpack.c.l.b16 %v444
    %v1610 = vunpack.c.h.b16 %v444
    %v1611 = vunpack.c.l.b16 %v445
    %v1612 = vunpack.c.h.b16 %v445
    %v1613 = vunpack.c.l.b16 %v446
    %v1614 = vunpack.c.h.b16 %v446
    %v1615 = vunpack.c.l.b16 %v447
    %v1616 = vunpack.c.h.b16 %v447
    %v1617 = vunpack.c.l.b16 %v448
    %v1618 = vunpack.c.h.b16 %v448
    %v1619 = vunpack.c.l.b16 %v449
    %v1620 = vunpack.c.h.b16 %v449
    %v1621 = vunpack.c.l.b16 %v450
    %v1622 = vunpack.c.h.b16 %v450
    %v1623 = vunpack.c.l.b16 %v451
    %v1624 = vunpack.c.h.b16 %v451
    %v1625 = vunpack.c.l.b16 %v452
    %v1626 = vunpack.c.h.b16 %v452
    %v1627 = vunpack.c.l.b16 %v453
    %v1628 = vunpack.c.h.b16 %v453
    %v1629 = vunpack.c.l.b16 %v454
    %v1630 = vunpack.c.h.b16 %v454
    %v1631 = vunpack.c.l.b16 %v455
    %v1632 = vunpack.c.h.b16 %v455
    %v1633 = vunpack.c.l.b16 %v456
    %v1634 = vunpack.c.h.b16 %v456
    %v1635 = vunpack.c.l.b16 %v457
    %v1636 = vunpack.c.h.b16 %v457
    %v1637 = vunpack.c.l.b16 %v458
    %v1638 = vunpack.c.h.b16 %v458
    %v1639 = vunpack.c.l.b16 %v459
    %v1640 = vunpack.c.h.b16 %v459
    %v1641 = vunpack.c.l.b16 %v460
    %v1642 = vunpack.c.h.b16 %v460
    %v1643 = vunpack.c.l.b16 %v461
    %v1644 = vunpack.c.h.b16 %v461
    %v1645 = vunpack.c.l.b16 %v462
    %v1646 = vunpack.c.h.b16 %v462
    %v1647 = vunpack.c.l.b16 %v463
    %v1648 = vunpack.c.h.b16 %v463
    %v1649 = vunpack.c.l.b16 %v464
    %v1650 = vunpack.c.h.b16 %v464
    %v1651 = vunpack.c.l.b16 %v465
    %v1652 = vunpack.c.h.b16 %v465
    %v1653 = vunpack.c.l.b16 %v466
    %v1654 = vunpack.c.h.b16 %v466
    %v1655 = vunpack.c.l.b16 %v467
    %v1656 = vunpack.c.h.b16 %v467
    %v1657 = vunpack.c.l.b16 %v468
    %v1658 = vunpack.c.h.b16 %v468
    %v1659 = vunpack.c.l.b16 %v469
    %v1660 = vunpack.c.h.b16 %v469
    %v1661 = vunpack.c.l.b16 %v470
    %v1662 = vunpack.c.h.b16 %v470
    %v1663 = vunpack.c.l.b16 %v471
    %v1664 = vunpack.c.h.b16 %v471
    %v1665 = vunpack.c.l.b16 %v472
    %v1666 = vunpack.c.h.b16 %v472
    %v1667 = vunpack.c.l.b16 %v473
    %v1668 = vunpack.c.h.b16 %v473
    %v1669 = vunpack.c.l.b16 %v474
    %v1670 = vunpack.c.h.b16 %v474
    %v1671 = vunpack.c.l.b16 %v475
    %v1672 = vunpack.c.h.b16 %v475
    %v1673 = vunpack.c.l.b16 %v476
    %v1674 = vunpack.c.h.b16 %v476
    %v1675 = vunpack.c.l.b16 %v477
    %v1676 = vunpack.c.h.b16 %v477
    %v1677 = vunpack.c.l.b16 %v478
    %v1678 = vunpack.c.h.b16 %v478
    %v1679 = vunpack.c.l.b16 %v479
    %v1680 = vunpack.c.h.b16 %v479
    %v1681 = vunpack.c.l.b16 %v480
    %v1682 = vunpack.c.h.b16 %v480
    %v1683 = vunpack.c.l.b16 %v481
    %v1684 = vunpack.c.h.b16 %v481
    %v1685 = vunpack.c.l.b16 %v482
    %v1686 = vunpack.c.h.b16 %v482
    %v1687 = vunpack.c.l.b16 %v483
    %v1688 = vunpack.c.h.b16 %v483
    %v1689 = vunpack.c.l.b16 %v484
    %v1690 = vunpack.c.h.b16 %v484
    %v1691 = vunpack.c.l.b16 %v485
    %v1692 = vunpack.c.h.b16 %v485
    %v1693 = vunpack.c.l.b16 %v486
    %v1694 = vunpack.c.h.b16 %v486
    %v1695 = vunpack.c.l.b16 %v487
    %v1696 = vunpack.c.h.b16 %v487
    %v1697 = vunpack.c.l.b16 %v488
    %v1698 = vunpack.c.h.b16 %v488
    %v1699 = vunpack.c.l.b16 %v489
    %v1700 = vunpack.c.h.b16 %v489
    %v1701 = vunpack.c.l.b16 %v490
    %v1702 = vunpack.c.h.b16 %v490
    %v1703 = vunpack.c.l.b16 %v491
    %v1704 = vunpack.c.h.b16 %v491
    %v1705 = vunpack.c.l.b16 %v492
    %v1706 = vunpack.c.h.b16 %v492
    %v1707 = vunpack.c.l.b16 %v493
    %v1708 = vunpack.c.h.b16 %v493
    %v1709 = vunpack.c.l.b16 %v494
    %v1710 = vunpack.c.h.b16 %v494
    %v1711 = vunpack.c.l.b16 %v495
    %v1712 = vunpack.c.h.b16 %v495
    %v1713 = vunpack.c.l.b16 %v496
    %v1714 = vunpack.c.h.b16 %v496
    %v1715 = vpack.c.b16 %v939, %v931
    %v1716 = vpack.c.b16 %v940, %v932
    %v1717 = vpack.c.b16 %v941, %v933
    %v1718 = vpack.c.b16 %v942, %v934
    %v1719 = vpack.c.b16 %v943, %v935
    %v1720 = vpack.c.b16 %v944, %v936
    %v1721 = vpack.c.b16 %v945, %v937
    %v1722 = vpack.c.b16 %v946, %v938
    %v1723 = vpack.c.b16 %v955, %v947
    %v1724 = vpack.c.b16 %v956, %v948
    %v1725 = vpack.c.b16 %v957, %v949
    %v1726 = vpack.c.b16 %v958, %v950
    %v1727 = vpack.c.b16 %v959, %v951
    %v1728 = vpack.c.b16 %v960, %v952
    %v1729 = vpack.c.b16 %v961, %v953
    %v1730 = vpack.c.b16 %v962, %v954
    %v1731 = vpack.c.b16 %v971, %v963
    %v1732 = vpack.c.b16 %v972, %v964
    %v1733 = vpack.c.b16 %v973, %v965
    %v1734 = vpack.c.b16 %v974, %v966
    %v1735 = vpack.c.b16 %v975, %v967
    %v1736 = vpack.c.b16 %v976, %v968
    %v1737 = vpack.c.b16 %v977, %v969
    %v1738 = vpack.c.b16 %v978, %v970
    %v1739 = vpack.c.b16 %v987, %v979
    %v1740 = vpack.c.b16 %v988, %v980
    %v1741 = vpack.c.b16 %v989, %v981
    %v1742 = vpack.c.b16 %v990, %v982
    %v1743 = vpack.c.b16 %v991, %v983
    %v1744 = vpack.c.b16 %v992, %v984
    %v1745 = vpack.c.b16 %v993, %v985
    %v1746 = vpack.c.b16 %v994, %v986
    %v1747 = vpack.c.b16 %v1003, %v995
    %v1748 = vpack.c.b16 %v1004, %v996
    %v1749 = vpack.c.b16 %v1005, %v997
    %v1750 = vpack.c.b16 %v1006, %v998
    %v1751 = vpack.c.b16 %v1007, %v999
    %v1752 = vpack.c.b16 %v1008, %v1000
    %v1753 = vpack.c.b16 %v1009, %v1001
    %v1754 = vpack.c.b16 %v1010, %v1002
    %v1755 = vpack.c.b16 %v1019, %v1011
    %v1756 = vpack.c.b16 %v1020, %v1012
    %v1757 = vpack.c.b16 %v1021, %v1013
    %v1758 = vpack.c.b16 %v1022, %v1014
    %v1759 = vpack.c.b16 %v1023, %v1015
    %v1760 = vpack.c.b16 %v1024, %v1016
    %v1761 = vpack.c.b16 %v1025, %v1017
    %v1762 = vpack.c.b16 %v1026, %v1018
    %v1763 = vpack.c.b16 %v1035, %v1027
    %v1764 = vpack.c.b16 %v1036, %v1028
    %v1765 = vpack.c.b16 %v1037, %v1029
    %v1766 = vpack.c.b16 %v1038, %v1030
    %v1767 = vpack.c.b16 %v1039, %v1031
    %v1768 = vpack.c.b16 %v1040, %v1032
    %v1769 = vpack.c.b16 %v1041, %v1033
    %v1770 = vpack.c.b16 %v1042, %v1034
    %v1771 = vpack.c.b16 %v1051, %v1043
    %v1772 = vpack.c.b16 %v1052, %v1044
    %v1773 = vpack.c.b16 %v1053, %v1045
    %v1774 = vpack.c.b16 %v1054, %v1046
    %v1775 = vpack.c.b16 %v1055, %v1047
    %v1776 = vpack.c.b16 %v1056, %v1048
    %v1777 = vpack.c.b16 %v1057, %v1049
    %v1778 = vpack.c.b16 %v1058, %v1050
    %v1779 = vpack.c.b16 %v1067, %v1059
    %v1780 = vpack.c.b16 %v1068, %v1060
    %v1781 = vpack.c.b16 %v1069, %v1061
    %v1782 = vpack.c.b16 %v1070, %v1062
    %v1783 = vpack.c.b16 %v1071, %v1063
    %v1784 = vpack.c.b16 %v1072, %v1064
    %v1785 = vpack.c.b16 %v1073, %v1065
    %v1786 = vpack.c.b16 %v1074, %v1066
    %v1787 = vpack.c.b16 %v1083, %v1075
    %v1788 = vpack.c.b16 %v1084, %v1076
    %v1789 = vpack.c.b16 %v1085, %v1077
    %v1790 = vpack.c.b16 %v1086, %v1078
    %v1791 = vpack.c.b16 %v1087, %v1079
    %v1792 = vpack.c.b16 %v1088, %v1080
    %v1793 = vpack.c.b16 %v1089, %v1081
    %v1794 = vpack.c.b16 %v1090, %v1082
    %v1795 = vpack.c.b16 %v1099, %v1091
    %v1796 = vpack.c.b16 %v1100, %v1092
    %v1797 = vpack.c.b16 %v1101, %v1093
    %v1798 = vpack.c.b16 %v1102, %v1094
    %v1799 = vpack.c.b16 %v1103, %v1095
    %v1800 = vpack.c.b16 %v1104, %v1096
    %v1801 = vpack.c.b16 %v1105, %v1097
    %v1802 = vpack.c.b16 %v1106, %v1098
    %v1803 = vpack.c.b16 %v1115, %v1107
    %v1804 = vpack.c.b16 %v1116, %v1108
    %v1805 = vpack.c.b16 %v1117, %v1109
    %v1806 = vpack.c.b16 %v1118, %v1110
    %v1807 = vpack.c.b16 %v1119, %v1111
    %v1808 = vpack.c.b16 %v1120, %v1112
    %v1809 = vpack.c.b16 %v1121, %v1113
    %v1810 = vpack.c.b16 %v1122, %v1114
    %v1811 = vpack.c.b16 %v1131, %v1123
    %v1812 = vpack.c.b16 %v1132, %v1124
    %v1813 = vpack.c.b16 %v1133, %v1125
    %v1814 = vpack.c.b16 %v1134, %v1126
    %v1815 = vpack.c.b16 %v1135, %v1127
    %v1816 = vpack.c.b16 %v1136, %v1128
    %v1817 = vpack.c.b16 %v1137, %v1129
    %v1818 = vpack.c.b16 %v1138, %v1130
    %v1819 = vpack.c.b16 %v1147, %v1139
    %v1820 = vpack.c.b16 %v1148, %v1140
    %v1821 = vpack.c.b16 %v1149, %v1141
    %v1822 = vpack.c.b16 %v1150, %v1142
    %v1823 = vpack.c.b16 %v1151, %v1143
    %v1824 = vpack.c.b16 %v1152, %v1144
    %v1825 = vpack.c.b16 %v1153, %v1145
    %v1826 = vpack.c.b16 %v1154, %v1146
    %v1827 = vpack.c.b16 %v1163, %v1155
    %v1828 = vpack.c.b16 %v1164, %v1156
    %v1829 = vpack.c.b16 %v1165, %v1157
    %v1830 = vpack.c.b16 %v1166, %v1158
    %v1831 = vpack.c.b16 %v1167, %v1159
    %v1832 = vpack.c.b16 %v1168, %v1160
    %v1833 = vpack.c.b16 %v1169, %v1161
    %v1834 = vpack.c.b16 %v1170, %v1162
    %v1835 = vpack.c.b16 %v1179, %v1171
    %v1836 = vpack.c.b16 %v1180, %v1172
    %v1837 = vpack.c.b16 %v1181, %v1173
    %v1838 = vpack.c.b16 %v1182, %v1174
    %v1839 = vpack.c.b16 %v1183, %v1175
    %v1840 = vpack.c.b16 %v1184, %v1176
    %v1841 = vpack.c.b16 %v1185, %v1177
    %v1842 = vpack.c.b16 %v1186, %v1178
    %v1843 = vpack.c.b16 %v1195, %v1187
    %v1844 = vpack.c.b16 %v1196, %v1188
    %v1845 = vpack.c.b16 %v1197, %v1189
    %v1846 = vpack.c.b16 %v1198, %v1190
    %v1847 = vpack.c.b16 %v1199, %v1191
    %v1848 = vpack.c.b16 %v1200, %v1192
    %v1849 = vpack.c.b16 %v1201, %v1193
    %v1850 = vpack.c.b16 %v1202, %v1194
    %v1851 = vpack.c.b16 %v1211, %v1203
    %v1852 = vpack.c.b16 %v1212, %v1204
    %v1853 = vpack.c.b16 %v1213, %v1205
    %v1854 = vpack.c.b16 %v1214, %v1206
    %v1855 = vpack.c.b16 %v1215, %v1207
    %v1856 = vpack.c.b16 %v1216, %v1208
    %v1857 = vpack.c.b16 %v1217, %v1209
    %v1858 = vpack.c.b16 %v1218, %v1210
    %v1859 = vpack.c.b16 %v1227, %v1219
    %v1860 = vpack.c.b16 %v1228, %v1220
    %v1861 = vpack.c.b16 %v1229, %v1221
    %v1862 = vpack.c.b16 %v1230, %v1222
    %v1863 = vpack.c.b16 %v1231, %v1223
    %v1864 = vpack.c.b16 %v1232, %v1224
    %v1865 = vpack.c.b16 %v1233, %v1225
    %v1866 = vpack.c.b16 %v1234, %v1226
    %v1867 = vpack.c.b16 %v1243, %v1235
    %v1868 = vpack.c.b16 %v1244, %v1236
    %v1869 = vpack.c.b16 %v1245, %v1237
    %v1870 = vpack.c.b16 %v1246, %v1238
    %v1871 = vpack.c.b16 %v1247, %v1239
    %v1872 = vpack.c.b16 %v1248, %v1240
    %v1873 = vpack.c.b16 %v1249, %v1241
    %v1874 = vpack.c.b16 %v1250, %v1242
    %v1875 = vpack.c.b16 %v1259, %v1251
    %v1876 = vpack.c.b16 %v1260, %v1252
    %v1877 = vpack.c.b16 %v1261, %v1253
    %v1878 = vpack.c.b16 %v1262, %v1254
    %v1879 = vpack.c.b16 %v1263, %v1255
    %v1880 = vpack.c.b16 %v1264, %v1256
    %v1881 = vpack.c.b16 %v1265, %v1257
    %v1882 = vpack.c.b16 %v1266, %v1258
    %v1883 = vpack.c.b16 %v1275, %v1267
    %v1884 = vpack.c.b16 %v1276, %v1268
    %v1885 = vpack.c.b16 %v1277, %v1269
    %v1886 = vpack.c.b16 %v1278, %v1270
    %v1887 = vpack.c.b16 %v1279, %v1271
    %v1888 = vpack.c.b16 %v1280, %v1272
    %v1889 = vpack.c.b16 %v1281, %v1273
    %v1890 = vpack.c.b16 %v1282, %v1274
    %v1891 = vpack.c.b16 %v1291, %v1283
    %v1892 = vpack.c.b16 %v1292, %v1284
    %v1893 = vpack.c.b16 %v1293, %v1285
    %v1894 = vpack.c.b16 %v1294, %v1286
    %v1895 = vpack.c.b16 %v1295, %v1287
    %v1896 = vpack.c.b16 %v1296, %v1288
    %v1897 = vpack.c.b16 %v1297, %v1289
    %v1898 = vpack.c.b16 %v1298, %v1290
    %v1899 = vpack.c.b16 %v1307, %v1299
    %v1900 = vpack.c.b16 %v1308, %v1300
    %v1901 = vpack.c.b16 %v1309, %v1301
    %v1902 = vpack.c.b16 %v1310, %v1302
    %v1903 = vpack.c.b16 %v1311, %v1303
    %v1904 = vpack.c.b16 %v1312, %v1304
    %v1905 = vpack.c.b16 %v1313, %v1305
    %v1906 = vpack.c.b16 %v1314, %v1306
    %v1907 = vpack.c.b16 %v1323, %v1315
    %v1908 = vpack.c.b16 %v1324, %v1316
    %v1909 = vpack.c.b16 %v1325, %v1317
    %v1910 = vpack.c.b16 %v1326, %v1318
    %v1911 = vpack.c.b16 %v1327, %v1319
    %v1912 = vpack.c.b16 %v1328, %v1320
    %v1913 = vpack.c.b16 %v1329, %v1321
    %v1914 = vpack.c.b16 %v1330, %v1322
    %v1915 = vpack.c.b16 %v1339, %v1331
    %v1916 = vpack.c.b16 %v1340, %v1332
    %v1917 = vpack.c.b16 %v1341, %v1333
    %v1918 = vpack.c.b16 %v1342, %v1334
    %v1919 = vpack.c.b16 %v1343, %v1335
    %v1920 = vpack.c.b16 %v1344, %v1336
    %v1921 = vpack.c.b16 %v1345, %v1337
    %v1922 = vpack.c.b16 %v1346, %v1338
    %v1923 = vpack.c.b16 %v1355, %v1347
    %v1924 = vpack.c.b16 %v1356, %v1348
    %v1925 = vpack.c.b16 %v1357, %v1349
    %v1926 = vpack.c.b16 %v1358, %v1350
    %v1927 = vpack.c.b16 %v1359, %v1351
    %v1928 = vpack.c.b16 %v1360, %v1352
    %v1929 = vpack.c.b16 %v1361, %v1353
    %v1930 = vpack.c.b16 %v1362, %v1354
    %v1931 = vpack.c.b16 %v1371, %v1363
    %v1932 = vpack.c.b16 %v1372, %v1364
    %v1933 = vpack.c.b16 %v1373, %v1365
    %v1934 = vpack.c.b16 %v1374, %v1366
    %v1935 = vpack.c.b16 %v1375, %v1367
    %v1936 = vpack.c.b16 %v1376, %v1368
    %v1937 = vpack.c.b16 %v1377, %v1369
    %v1938 = vpack.c.b16 %v1378, %v1370
    %v1939 = vpack.c.b16 %v1387, %v1379
    %v1940 = vpack.c.b16 %v1388, %v1380
    %v1941 = vpack.c.b16 %v1389, %v1381
    %v1942 = vpack.c.b16 %v1390, %v1382
    %v1943 = vpack.c.b16 %v1391, %v1383
    %v1944 = vpack.c.b16 %v1392, %v1384
    %v1945 = vpack.c.b16 %v1393, %v1385
    %v1946 = vpack.c.b16 %v1394, %v1386
    %v1947 = vpack.c.b16 %v1403, %v1395
    %v1948 = vpack.c.b16 %v1404, %v1396
    %v1949 = vpack.c.b16 %v1405, %v1397
    %v1950 = vpack.c.b16 %v1406, %v1398
    %v1951 = vpack.c.b16 %v1407, %v1399
    %v1952 = vpack.c.b16 %v1408, %v1400
    %v1953 = vpack.c.b16 %v1409, %v1401
    %v1954 = vpack.c.b16 %v1410, %v1402
    %v1955 = vpack.c.b16 %v1419, %v1411
    %v1956 = vpack.c.b16 %v1420, %v1412
    %v1957 = vpack.c.b16 %v1421, %v1413
    %v1958 = vpack.c.b16 %v1422, %v1414
    %v1959 = vpack.c.b16 %v1423, %v1415
    %v1960 = vpack.c.b16 %v1424, %v1416
    %v1961 = vpack.c.b16 %v1425, %v1417
    %v1962 = vpack.c.b16 %v1426, %v1418
    %v1963 = vpack.c.b16 %v1435, %v1427
    %v1964 = vpack.c.b16 %v1436, %v1428
    %v1965 = vpack.c.b16 %v1437, %v1429
    %v1966 = vpack.c.b16 %v1438, %v1430
    %v1967 = vpack.c.b16 %v1439, %v1431
    %v1968 = vpack.c.b16 %v1440, %v1432
    %v1969 = vpack.c.b16 %v1441, %v1433
    %v1970 = vpack.c.b16 %v1442, %v1434
    %v1971 = vpack.c.b16 %v1451, %v1443
    %v1972 = vpack.c.b16 %v1452, %v1444
    %v1973 = vpack.c.b16 %v1453, %v1445
    %v1974 = vpack.c.b16 %v1454, %v1446
    %v1975 = vpack.c.b16 %v1455, %v1447
    %v1976 = vpack.c.b16 %v1456, %v1448
    %v1977 = vpack.c.b16 %v1457, %v1449
    %v1978 = vpack.c.b16 %v1458, %v1450
    %v1979 = vpack.c.b16 %v1467, %v1459
    %v1980 = vpack.c.b16 %v1468, %v1460
    %v1981 = vpack.c.b16 %v1469, %v1461
    %v1982 = vpack.c.b16 %v1470, %v1462
    %v1983 = vpack.c.b16 %v1471, %v1463
    %v1984 = vpack.c.b16 %v1472, %v1464
    %v1985 = vpack.c.b16 %v1473, %v1465
    %v1986 = vpack.c.b16 %v1474, %v1466
    %v1987 = vpack.c.b16 %v1483, %v1475
    %v1988 = vpack.c.b16 %v1484, %v1476
    %v1989 = vpack.c.b16 %v1485, %v1477
    %v1990 = vpack.c.b16 %v1486, %v1478
    %v1991 = vpack.c.b16 %v1487, %v1479
    %v1992 = vpack.c.b16 %v1488, %v1480
    %v1993 = vpack.c.b16 %v1489, %v1481
    %v1994 = vpack.c.b16 %v1490, %v1482
    %v1995 = vpack.c.b16 %v1499, %v1491
    %v1996 = vpack.c.b16 %v1500, %v1492
    %v1997 = vpack.c.b16 %v1501, %v1493
    %v1998 = vpack.c.b16 %v1502, %v1494
    %v1999 = vpack.c.b16 %v1503, %v1495
    %v2000 = vpack.c.b16 %v1504, %v1496
    %v2001 = vpack.c.b16 %v1505, %v1497
    %v2002 = vpack.c.b16 %v1506, %v1498
    %v2003 = vpack.c.b16 %v1515, %v1507
    %v2004 = vpack.c.b16 %v1516, %v1508
    %v2005 = vpack.c.b16 %v1517, %v1509
    %v2006 = vpack.c.b16 %v1518, %v1510
    %v2007 = vpack.c.b16 %v1519, %v1511
    %v2008 = vpack.c.b16 %v1520, %v1512
    %v2009 = vpack.c.b16 %v1521, %v1513
    %v2010 = vpack.c.b16 %v1522, %v1514
    %v2011 = vpack.c.b16 %v1531, %v1523
    %v2012 = vpack.c.b16 %v1532, %v1524
    %v2013 = vpack.c.b16 %v1533, %v1525
    %v2014 = vpack.c.b16 %v1534, %v1526
    %v2015 = vpack.c.b16 %v1535, %v1527
    %v2016 = vpack.c.b16 %v1536, %v1528
    %v2017 = vpack.c.b16 %v1537, %v1529
    %v2018 = vpack.c.b16 %v1538, %v1530
    %v2019 = vpack.c.b16 %v1547, %v1539
    %v2020 = vpack.c.b16 %v1548, %v1540
    %v2021 = vpack.c.b16 %v1549, %v1541
    %v2022 = vpack.c.b16 %v1550, %v1542
    %v2023 = vpack.c.b16 %v1551, %v1543
    %v2024 = vpack.c.b16 %v1552, %v1544
    %v2025 = vpack.c.b16 %v1553, %v1545
    %v2026 = vpack.c.b16 %v1554, %v1546
    %v2027 = vpack.c.b16 %v1563, %v1555
    %v2028 = vpack.c.b16 %v1564, %v1556
    %v2029 = vpack.c.b16 %v1565, %v1557
    %v2030 = vpack.c.b16 %v1566, %v1558
    %v2031 = vpack.c.b16 %v1567, %v1559
    %v2032 = vpack.c.b16 %v1568, %v1560
    %v2033 = vpack.c.b16 %v1569, %v1561
    %v2034 = vpack.c.b16 %v1570, %v1562
    %v2035 = vpack.c.b16 %v1579, %v1571
    %v2036 = vpack.c.b16 %v1580, %v1572
    %v2037 = vpack.c.b16 %v1581, %v1573
    %v2038 = vpack.c.b16 %v1582, %v1574
    %v2039 = vpack.c.b16 %v1583, %v1575
    %v2040 = vpack.c.b16 %v1584, %v1576
    %v2041 = vpack.c.b16 %v1585, %v1577
    %v2042 = vpack.c.b16 %v1586, %v1578
    %v2043 = vpack.c.b16 %v1595, %v1587
    %v2044 = vpack.c.b16 %v1596, %v1588
    %v2045 = vpack.c.b16 %v1597, %v1589
    %v2046 = vpack.c.b16 %v1598, %v1590
    %v2047 = vpack.c.b16 %v1599, %v1591
    %v2048 = vpack.c.b16 %v1600, %v1592
    %v2049 = vpack.c.b16 %v1601, %v1593
    %v2050 = vpack.c.b16 %v1602, %v1594
    %v2051 = vpack.c.b16 %v1611, %v1603
    %v2052 = vpack.c.b16 %v1612, %v1604
    %v2053 = vpack.c.b16 %v1613, %v1605
    %v2054 = vpack.c.b16 %v1614, %v1606
    %v2055 = vpack.c.b16 %v1615, %v1607
    %v2056 = vpack.c.b16 %v1616, %v1608
    %v2057 = vpack.c.b16 %v1617, %v1609
    %v2058 = vpack.c.b16 %v1618, %v1610
    %v2059 = vpack.c.b16 %v1627, %v1619
    %v2060 = vpack.c.b16 %v1628, %v1620
    %v2061 = vpack.c.b16 %v1629, %v1621
    %v2062 = vpack.c.b16 %v1630, %v1622
    %v2063 = vpack.c.b16 %v1631, %v1623
    %v2064 = vpack.c.b16 %v1632, %v1624
    %v2065 = vpack.c.b16 %v1633, %v1625
    %v2066 = vpack.c.b16 %v1634, %v1626
    %v2067 = vpack.c.b16 %v1643, %v1635
    %v2068 = vpack.c.b16 %v1644, %v1636
    %v2069 = vpack.c.b16 %v1645, %v1637
    %v2070 = vpack.c.b16 %v1646, %v1638
    %v2071 = vpack.c.b16 %v1647, %v1639
    %v2072 = vpack.c.b16 %v1648, %v1640
    %v2073 = vpack.c.b16 %v1649, %v1641
    %v2074 = vpack.c.b16 %v1650, %v1642
    %v2075 = vpack.c.b16 %v1659, %v1651
    %v2076 = vpack.c.b16 %v1660, %v1652
    %v2077 = vpack.c.b16 %v1661, %v1653
    %v2078 = vpack.c.b16 %v1662, %v1654
    %v2079 = vpack.c.b16 %v1663, %v1655
    %v2080 = vpack.c.b16 %v1664, %v1656
    %v2081 = vpack.c.b16 %v1665, %v1657
    %v2082 = vpack.c.b16 %v1666, %v1658
    %v2083 = vpack.c.b16 %v1675, %v1667
    %v2084 = vpack.c.b16 %v1676, %v1668
    %v2085 = vpack.c.b16 %v1677, %v1669
    %v2086 = vpack.c.b16 %v1678, %v1670
    %v2087 = vpack.c.b16 %v1679, %v1671
    %v2088 = vpack.c.b16 %v1680, %v1672
    %v2089 = vpack.c.b16 %v1681, %v1673
    %v2090 = vpack.c.b16 %v1682, %v1674
    %v2091 = vpack.c.b16 %v1691, %v1683
    %v2092 = vpack.c.b16 %v1692, %v1684
    %v2093 = vpack.c.b16 %v1693, %v1685
    %v2094 = vpack.c.b16 %v1694, %v1686
    %v2095 = vpack.c.b16 %v1695, %v1687
    %v2096 = vpack.c.b16 %v1696, %v1688
    %v2097 = vpack.c.b16 %v1697, %v1689
    %v2098 = vpack.c.b16 %v1698, %v1690
    %v2099 = vpack.c.b16 %v1707, %v1699
    %v2100 = vpack.c.b16 %v1708, %v1700
    %v2101 = vpack.c.b16 %v1709, %v1701
    %v2102 = vpack.c.b16 %v1710, %v1702
    %v2103 = vpack.c.b16 %v1711, %v1703
    %v2104 = vpack.c.b16 %v1712, %v1704
    %v2105 = vpack.c.b16 %v1713, %v1705
    %v2106 = vpack.c.b16 %v1714, %v1706
    %vm2499 = vcmask 130048
    %v2501 = vsel %vm2499, %v104, 0
    %2503 = vmatprep.subr.bf16.mxu0 %v1716
    %2504 = vmatpush1.bf16.msra.mxu0 %v1715
    %2505 = vmatprep.subr.bf16.mxu0 %v1724
    %2506 = vmatpush1.bf16.msra.mxu0 %v1723
    %2507 = vmatprep.subr.bf16.mxu0 %v1732
    %2508 = vmatpush1.bf16.msra.mxu0 %v1731
    %2509 = vmatprep.subr.bf16.mxu0 %v1740
    %2510 = vmatpush1.bf16.msra.mxu0 %v1739
    %2511 = vmatprep.subr.bf16.mxu0 %v1748
    %2512 = vmatpush1.bf16.msra.mxu0 %v1747
    %2513 = vmatprep.subr.bf16.mxu0 %v1756
    %2514 = vmatpush1.bf16.msra.mxu0 %v1755
    %2515 = vmatprep.subr.bf16.mxu0 %v1764
    %2516 = vmatpush1.bf16.msra.mxu0 %v1763
    %2517 = vmatprep.subr.bf16.mxu0 %v1772
    %2518 = vmatpush1.bf16.msra.mxu0 %v1771
    %2519 = vmatprep.subr.bf16.mxu0 %v1780
    %2520 = vmatpush1.bf16.msra.mxu0 %v1779
    %2521 = vmatprep.subr.bf16.mxu0 %v1788
    %2522 = vmatpush1.bf16.msra.mxu0 %v1787
    %2523 = vmatprep.subr.bf16.mxu0 %v1796
    %2524 = vmatpush1.bf16.msra.mxu0 %v1795
    %2525 = vmatprep.subr.bf16.mxu0 %v1804
    %2526 = vmatpush1.bf16.msra.mxu0 %v1803
    %2527 = vmatprep.subr.bf16.mxu0 %v1812
    %2528 = vmatpush1.bf16.msra.mxu0 %v1811
    %2529 = vmatprep.subr.bf16.mxu0 %v1820
    %2530 = vmatpush1.bf16.msra.mxu0 %v1819
    %2531 = vmatprep.subr.bf16.mxu0 %v1828
    %2532 = vmatpush1.bf16.msra.mxu0 %v1827
    %2533 = vmatprep.subr.bf16.mxu0 %v1836
    %2534 = vmatpush1.bf16.msra.mxu0 %v1835
    %2535 = vmatprep.mubr.bf16.mxu0 %v99
    %2536 = vmatmul.mubr.bf16.gmra.mrb[0].mxu0 %v98
    %v2537 = vpop.f32.mrb[0].mxu0
    %v2538 = vadd.f32 %v502, %v2537
    %v2539 = vpop.f32.mrb[0].mxu0
    %v2540 = vadd.f32 %v506, %v2539
    %v2541 = vpop.f32.mrb[0].mxu0
    %v2542 = vpop.f32.mrb[0].mxu0
    %2543 = vdwg.mxu0
    %2544 = vmatprep.subr.bf16.mxu0 %v1844
    %2545 = vmatpush1.bf16.msra.mxu0 %v1843
    %2546 = vmatprep.subr.bf16.mxu0 %v1852
    %2547 = vmatpush1.bf16.msra.mxu0 %v1851
    %2548 = vmatprep.subr.bf16.mxu0 %v1860
    %2549 = vmatpush1.bf16.msra.mxu0 %v1859
    %2550 = vmatprep.subr.bf16.mxu0 %v1868
    %2551 = vmatpush1.bf16.msra.mxu0 %v1867
    %2552 = vmatprep.subr.bf16.mxu0 %v1876
    %2553 = vmatpush1.bf16.msra.mxu0 %v1875
    %2554 = vmatprep.subr.bf16.mxu0 %v1884
    %2555 = vmatpush1.bf16.msra.mxu0 %v1883
    %2556 = vmatprep.subr.bf16.mxu0 %v1892
    %2557 = vmatpush1.bf16.msra.mxu0 %v1891
    %2558 = vmatprep.subr.bf16.mxu0 %v1900
    %2559 = vmatpush1.bf16.msra.mxu0 %v1899
    %2560 = vmatprep.subr.bf16.mxu0 %v1908
    %2561 = vmatpush1.bf16.msra.mxu0 %v1907
    %2562 = vmatprep.subr.bf16.mxu0 %v1916
    %2563 = vmatpush1.bf16.msra.mxu0 %v1915
    %2564 = vmatprep.subr.bf16.mxu0 %v1924
    %2565 = vmatpush1.bf16.msra.mxu0 %v1923
    %2566 = vmatprep.subr.bf16.mxu0 %v1932
    %2567 = vmatpush1.bf16.msra.mxu0 %v1931
    %2568 = vmatprep.subr.bf16.mxu0 %v1940
    %2569 = vmatpush1.bf16.msra.mxu0 %v1939
    %2570 = vmatprep.subr.bf16.mxu0 %v1948
    %2571 = vmatpush1.bf16.msra.mxu0 %v1947
    %2572 = vmatprep.subr.bf16.mxu0 %v1956
    %2573 = vmatpush1.bf16.msra.mxu0 %v1955
    %2574 = vmatprep.subr.bf16.mxu0 %v1964
    %2575 = vmatpush1.bf16.msra.mxu0 %v1963
    %2576 = vmatprep.mubr.bf16.mxu0 %v101
    %2577 = vmatmul.mubr.bf16.gmra.mrb[0].mxu0 %v100
    %v2578 = vpop.f32.mrb[0].mxu0
    %v2579 = vadd.f32 %v2538, %v2578
    %v2580 = vpop.f32.mrb[0].mxu0
    %v2581 = vadd.f32 %v2540, %v2580
    %v2582 = vpop.f32.mrb[0].mxu0
    %v2583 = vpop.f32.mrb[0].mxu0
    %2584 = vdwg.mxu0
    %2585 = vmatprep.subr.bf16.mxu0 %v1972
    %2586 = vmatpush1.bf16.msra.mxu0 %v1971
    %2587 = vmatprep.subr.bf16.mxu0 %v1980
    %2588 = vmatpush1.bf16.msra.mxu0 %v1979
    %2589 = vmatprep.subr.bf16.mxu0 %v1988
    %2590 = vmatpush1.bf16.msra.mxu0 %v1987
    %2591 = vmatprep.subr.bf16.mxu0 %v1996
    %2592 = vmatpush1.bf16.msra.mxu0 %v1995
    %2593 = vmatprep.subr.bf16.mxu0 %v2004
    %2594 = vmatpush1.bf16.msra.mxu0 %v2003
    %2595 = vmatprep.subr.bf16.mxu0 %v2012
    %2596 = vmatpush1.bf16.msra.mxu0 %v2011
    %2597 = vmatprep.subr.bf16.mxu0 %v2020
    %2598 = vmatpush1.bf16.msra.mxu0 %v2019
    %2599 = vmatprep.subr.bf16.mxu0 %v2028
    %2600 = vmatpush1.bf16.msra.mxu0 %v2027
    %2601 = vmatprep.subr.bf16.mxu0 %v2036
    %2602 = vmatpush1.bf16.msra.mxu0 %v2035
    %2603 = vmatprep.subr.bf16.mxu0 %v2044
    %2604 = vmatpush1.bf16.msra.mxu0 %v2043
    %2605 = vmatprep.subr.bf16.mxu0 %v2052
    %2606 = vmatpush1.bf16.msra.mxu0 %v2051
    %2607 = vmatprep.subr.bf16.mxu0 %v2060
    %2608 = vmatpush1.bf16.msra.mxu0 %v2059
    %2609 = vmatprep.subr.bf16.mxu0 %v2068
    %2610 = vmatpush1.bf16.msra.mxu0 %v2067
    %2611 = vmatprep.subr.bf16.mxu0 %v2076
    %2612 = vmatpush1.bf16.msra.mxu0 %v2075
    %2613 = vmatprep.subr.bf16.mxu0 %v2084
    %2614 = vmatpush1.bf16.msra.mxu0 %v2083
    %2615 = vmatprep.subr.bf16.mxu0 %v2092
    %2616 = vmatpush1.bf16.msra.mxu0 %v2091
    %2617 = vmatprep.mubr.bf16.mxu0 %v103
    %2618 = vmatmul.mubr.bf16.gmra.mrb[0].mxu0 %v102
    %v2619 = vpop.f32.mrb[0].mxu0
    %v2620 = vadd.f32 %v2579, %v2619
    %v2621 = vpop.f32.mrb[0].mxu0
    %v2622 = vadd.f32 %v2581, %v2621
    %v2623 = vpop.f32.mrb[0].mxu0
    %v2624 = vpop.f32.mrb[0].mxu0
    %2625 = vdwg.mxu0
    %2626 = vmatprep.subr.bf16.mxu0 %v2100
    %2627 = vmatpush1.bf16.msra.mxu0 %v2099
    %2628 = vmatprep.subr.bf16.mxu0 0
    %2629 = vmatpush1.bf16.msra.mxu0 0
    %2630 = vmatprep.subr.bf16.mxu0 0
    %2631 = vmatpush1.bf16.msra.mxu0 0
    %2632 = vmatprep.subr.bf16.mxu0 0
    %2633 = vmatpush1.bf16.msra.mxu0 0
    %2634 = vmatprep.subr.bf16.mxu0 0
    %2635 = vmatpush1.bf16.msra.mxu0 0
    %2636 = vmatprep.subr.bf16.mxu0 0
    %2637 = vmatpush1.bf16.msra.mxu0 0
    %2638 = vmatprep.subr.bf16.mxu0 0
    %2639 = vmatpush1.bf16.msra.mxu0 0
    %2640 = vmatprep.subr.bf16.mxu0 0
    %2641 = vmatpush1.bf16.msra.mxu0 0
    %2642 = vmatprep.subr.bf16.mxu0 0
    %2643 = vmatpush1.bf16.msra.mxu0 0
    %2644 = vmatprep.subr.bf16.mxu0 0
    %2645 = vmatpush1.bf16.msra.mxu0 0
    %2646 = vmatprep.subr.bf16.mxu0 0
    %2647 = vmatpush1.bf16.msra.mxu0 0
    %2648 = vmatprep.subr.bf16.mxu0 0
    %2649 = vmatpush1.bf16.msra.mxu0 0
    %2650 = vmatprep.subr.bf16.mxu0 0
    %2651 = vmatpush1.bf16.msra.mxu0 0
    %2652 = vmatprep.subr.bf16.mxu0 0
    %2653 = vmatpush1.bf16.msra.mxu0 0
    %2654 = vmatprep.subr.bf16.mxu0 0
    %2655 = vmatpush1.bf16.msra.mxu0 0
    %2656 = vmatprep.subr.bf16.mxu0 0
    %2657 = vmatpush1.bf16.msra.mxu0 0
    %2658 = vmatprep.mubr.bf16.mxu0 0
    %2659 = vmatmul.mubr.bf16.gmra.mrb[0].mxu0 %v2501
    %v2660 = vpop.f32.mrb[0].mxu0
    %v2661 = vadd.f32 %v2620, %v2660
    %v2662 = vpop.f32.mrb[0].mxu0
    %v2663 = vadd.f32 %v2622, %v2662
    %v2664 = vpop.f32.mrb[0].mxu0
    %v2665 = vpop.f32.mrb[0].mxu0
    %2666 = vdwg.mxu0
    %2667 = vmatprep.subr.bf16.mxu0 %v1718
    %2668 = vmatpush1.bf16.msra.mxu0 %v1717
    %2669 = vmatprep.subr.bf16.mxu0 %v1726
    %2670 = vmatpush1.bf16.msra.mxu0 %v1725
    %2671 = vmatprep.subr.bf16.mxu0 %v1734
    %2672 = vmatpush1.bf16.msra.mxu0 %v1733
    %2673 = vmatprep.subr.bf16.mxu0 %v1742
    %2674 = vmatpush1.bf16.msra.mxu0 %v1741
    %2675 = vmatprep.subr.bf16.mxu0 %v1750
    %2676 = vmatpush1.bf16.msra.mxu0 %v1749
    %2677 = vmatprep.subr.bf16.mxu0 %v1758
    %2678 = vmatpush1.bf16.msra.mxu0 %v1757
    %2679 = vmatprep.subr.bf16.mxu0 %v1766
    %2680 = vmatpush1.bf16.msra.mxu0 %v1765
    %2681 = vmatprep.subr.bf16.mxu0 %v1774
    %2682 = vmatpush1.bf16.msra.mxu0 %v1773
    %2683 = vmatprep.subr.bf16.mxu0 %v1782
    %2684 = vmatpush1.bf16.msra.mxu0 %v1781
    %2685 = vmatprep.subr.bf16.mxu0 %v1790
    %2686 = vmatpush1.bf16.msra.mxu0 %v1789
    %2687 = vmatprep.subr.bf16.mxu0 %v1798
    %2688 = vmatpush1.bf16.msra.mxu0 %v1797
    %2689 = vmatprep.subr.bf16.mxu0 %v1806
    %2690 = vmatpush1.bf16.msra.mxu0 %v1805
    %2691 = vmatprep.subr.bf16.mxu0 %v1814
    %2692 = vmatpush1.bf16.msra.mxu0 %v1813
    %2693 = vmatprep.subr.bf16.mxu0 %v1822
    %2694 = vmatpush1.bf16.msra.mxu0 %v1821
    %2695 = vmatprep.subr.bf16.mxu0 %v1830
    %2696 = vmatpush1.bf16.msra.mxu0 %v1829
    %2697 = vmatprep.subr.bf16.mxu0 %v1838
    %2698 = vmatpush1.bf16.msra.mxu0 %v1837
    %2699 = vmatprep.mubr.bf16.mxu0 %v99
    %2700 = vmatmul.mubr.bf16.gmra.mrb[0].mxu0 %v98
    %v2701 = vpop.f32.mrb[0].mxu0
    %v2702 = vadd.f32 %v510, %v2701
    %v2703 = vpop.f32.mrb[0].mxu0
    %v2704 = vadd.f32 %v514, %v2703
    %v2705 = vpop.f32.mrb[0].mxu0
    %v2706 = vpop.f32.mrb[0].mxu0
    %2707 = vdwg.mxu0
    %2708 = vmatprep.subr.bf16.mxu0 %v1846
    %2709 = vmatpush1.bf16.msra.mxu0 %v1845
    %2710 = vmatprep.subr.bf16.mxu0 %v1854
    %2711 = vmatpush1.bf16.msra.mxu0 %v1853
    %2712 = vmatprep.subr.bf16.mxu0 %v1862
    %2713 = vmatpush1.bf16.msra.mxu0 %v1861
    %2714 = vmatprep.subr.bf16.mxu0 %v1870
    %2715 = vmatpush1.bf16.msra.mxu0 %v1869
    %2716 = vmatprep.subr.bf16.mxu0 %v1878
    %2717 = vmatpush1.bf16.msra.mxu0 %v1877
    %2718 = vmatprep.subr.bf16.mxu0 %v1886
    %2719 = vmatpush1.bf16.msra.mxu0 %v1885
    %2720 = vmatprep.subr.bf16.mxu0 %v1894
    %2721 = vmatpush1.bf16.msra.mxu0 %v1893
    %2722 = vmatprep.subr.bf16.mxu0 %v1902
    %2723 = vmatpush1.bf16.msra.mxu0 %v1901
    %2724 = vmatprep.subr.bf16.mxu0 %v1910
    %2725 = vmatpush1.bf16.msra.mxu0 %v1909
    %2726 = vmatprep.subr.bf16.mxu0 %v1918
    %2727 = vmatpush1.bf16.msra.mxu0 %v1917
    %2728 = vmatprep.subr.bf16.mxu0 %v1926
    %2729 = vmatpush1.bf16.msra.mxu0 %v1925
    %2730 = vmatprep.subr.bf16.mxu0 %v1934
    %2731 = vmatpush1.bf16.msra.mxu0 %v1933
    %2732 = vmatprep.subr.bf16.mxu0 %v1942
    %2733 = vmatpush1.bf16.msra.mxu0 %v1941
    %2734 = vmatprep.subr.bf16.mxu0 %v1950
    %2735 = vmatpush1.bf16.msra.mxu0 %v1949
    %2736 = vmatprep.subr.bf16.mxu0 %v1958
    %2737 = vmatpush1.bf16.msra.mxu0 %v1957
    %2738 = vmatprep.subr.bf16.mxu0 %v1966
    %2739 = vmatpush1.bf16.msra.mxu0 %v1965
    %2740 = vmatprep.mubr.bf16.mxu0 %v101
    %2741 = vmatmul.mubr.bf16.gmra.mrb[0].mxu0 %v100
    %v2742 = vpop.f32.mrb[0].mxu0
    %v2743 = vadd.f32 %v2702, %v2742
    %v2744 = vpop.f32.mrb[0].mxu0
    %v2745 = vadd.f32 %v2704, %v2744
    %v2746 = vpop.f32.mrb[0].mxu0
    %v2747 = vpop.f32.mrb[0].mxu0
    %2748 = vdwg.mxu0
    %2749 = vmatprep.subr.bf16.mxu0 %v1974
    %2750 = vmatpush1.bf16.msra.mxu0 %v1973
    %2751 = vmatprep.subr.bf16.mxu0 %v1982
    %2752 = vmatpush1.bf16.msra.mxu0 %v1981
    %2753 = vmatprep.subr.bf16.mxu0 %v1990
    %2754 = vmatpush1.bf16.msra.mxu0 %v1989
    %2755 = vmatprep.subr.bf16.mxu0 %v1998
    %2756 = vmatpush1.bf16.msra.mxu0 %v1997
    %2757 = vmatprep.subr.bf16.mxu0 %v2006
    %2758 = vmatpush1.bf16.msra.mxu0 %v2005
    %2759 = vmatprep.subr.bf16.mxu0 %v2014
    %2760 = vmatpush1.bf16.msra.mxu0 %v2013
    %2761 = vmatprep.subr.bf16.mxu0 %v2022
    %2762 = vmatpush1.bf16.msra.mxu0 %v2021
    %2763 = vmatprep.subr.bf16.mxu0 %v2030
    %2764 = vmatpush1.bf16.msra.mxu0 %v2029
    %2765 = vmatprep.subr.bf16.mxu0 %v2038
    %2766 = vmatpush1.bf16.msra.mxu0 %v2037
    %2767 = vmatprep.subr.bf16.mxu0 %v2046
    %2768 = vmatpush1.bf16.msra.mxu0 %v2045
    %2769 = vmatprep.subr.bf16.mxu0 %v2054
    %2770 = vmatpush1.bf16.msra.mxu0 %v2053
    %2771 = vmatprep.subr.bf16.mxu0 %v2062
    %2772 = vmatpush1.bf16.msra.mxu0 %v2061
    %2773 = vmatprep.subr.bf16.mxu0 %v2070
    %2774 = vmatpush1.bf16.msra.mxu0 %v2069
    %2775 = vmatprep.subr.bf16.mxu0 %v2078
    %2776 = vmatpush1.bf16.msra.mxu0 %v2077
    %2777 = vmatprep.subr.bf16.mxu0 %v2086
    %2778 = vmatpush1.bf16.msra.mxu0 %v2085
    %2779 = vmatprep.subr.bf16.mxu0 %v2094
    %2780 = vmatpush1.bf16.msra.mxu0 %v2093
    %2781 = vmatprep.mubr.bf16.mxu0 %v103
    %2782 = vmatmul.mubr.bf16.gmra.mrb[0].mxu0 %v102
    %v2783 = vpop.f32.mrb[0].mxu0
    %v2784 = vadd.f32 %v2743, %v2783
    %v2785 = vpop.f32.mrb[0].mxu0
    %v2786 = vadd.f32 %v2745, %v2785
    %v2787 = vpop.f32.mrb[0].mxu0
    %v2788 = vpop.f32.mrb[0].mxu0
    %2789 = vdwg.mxu0
    %2790 = vmatprep.subr.bf16.mxu0 %v2102
    %2791 = vmatpush1.bf16.msra.mxu0 %v2101
    %2792 = vmatprep.subr.bf16.mxu0 0
    %2793 = vmatpush1.bf16.msra.mxu0 0
    %2794 = vmatprep.subr.bf16.mxu0 0
    %2795 = vmatpush1.bf16.msra.mxu0 0
    %2796 = vmatprep.subr.bf16.mxu0 0
    %2797 = vmatpush1.bf16.msra.mxu0 0
    %2798 = vmatprep.subr.bf16.mxu0 0
    %2799 = vmatpush1.bf16.msra.mxu0 0
    %2800 = vmatprep.subr.bf16.mxu0 0
    %2801 = vmatpush1.bf16.msra.mxu0 0
    %2802 = vmatprep.subr.bf16.mxu0 0
    %2803 = vmatpush1.bf16.msra.mxu0 0
    %2804 = vmatprep.subr.bf16.mxu0 0
    %2805 = vmatpush1.bf16.msra.mxu0 0
    %2806 = vmatprep.subr.bf16.mxu0 0
    %2807 = vmatpush1.bf16.msra.mxu0 0
    %2808 = vmatprep.subr.bf16.mxu0 0
    %2809 = vmatpush1.bf16.msra.mxu0 0
    %2810 = vmatprep.subr.bf16.mxu0 0
    %2811 = vmatpush1.bf16.msra.mxu0 0
    %2812 = vmatprep.subr.bf16.mxu0 0
    %2813 = vmatpush1.bf16.msra.mxu0 0
    %2814 = vmatprep.subr.bf16.mxu0 0
    %2815 = vmatpush1.bf16.msra.mxu0 0
    %2816 = vmatprep.subr.bf16.mxu0 0
    %2817 = vmatpush1.bf16.msra.mxu0 0
    %2818 = vmatprep.subr.bf16.mxu0 0
    %2819 = vmatpush1.bf16.msra.mxu0 0
    %2820 = vmatprep.subr.bf16.mxu0 0
    %2821 = vmatpush1.bf16.msra.mxu0 0
    %2822 = vmatprep.mubr.bf16.mxu0 0
    %2823 = vmatmul.mubr.bf16.gmra.mrb[0].mxu0 %v2501
    %v2824 = vpop.f32.mrb[0].mxu0
    %v2825 = vadd.f32 %v2784, %v2824
    %v2826 = vpop.f32.mrb[0].mxu0
    %v2827 = vadd.f32 %v2786, %v2826
    %v2828 = vpop.f32.mrb[0].mxu0
    %v2829 = vpop.f32.mrb[0].mxu0
    %2830 = vdwg.mxu0
    %2831 = vmatprep.subr.bf16.mxu0 %v1720
    %2832 = vmatpush1.bf16.msra.mxu0 %v1719
    %2833 = vmatprep.subr.bf16.mxu0 %v1728
    %2834 = vmatpush1.bf16.msra.mxu0 %v1727
    %2835 = vmatprep.subr.bf16.mxu0 %v1736
    %2836 = vmatpush1.bf16.msra.mxu0 %v1735
    %2837 = vmatprep.subr.bf16.mxu0 %v1744
    %2838 = vmatpush1.bf16.msra.mxu0 %v1743
    %2839 = vmatprep.subr.bf16.mxu0 %v1752
    %2840 = vmatpush1.bf16.msra.mxu0 %v1751
    %2841 = vmatprep.subr.bf16.mxu0 %v1760
    %2842 = vmatpush1.bf16.msra.mxu0 %v1759
    %2843 = vmatprep.subr.bf16.mxu0 %v1768
    %2844 = vmatpush1.bf16.msra.mxu0 %v1767
    %2845 = vmatprep.subr.bf16.mxu0 %v1776
    %2846 = vmatpush1.bf16.msra.mxu0 %v1775
    %2847 = vmatprep.subr.bf16.mxu0 %v1784
    %2848 = vmatpush1.bf16.msra.mxu0 %v1783
    %2849 = vmatprep.subr.bf16.mxu0 %v1792
    %2850 = vmatpush1.bf16.msra.mxu0 %v1791
    %2851 = vmatprep.subr.bf16.mxu0 %v1800
    %2852 = vmatpush1.bf16.msra.mxu0 %v1799
    %2853 = vmatprep.subr.bf16.mxu0 %v1808
    %2854 = vmatpush1.bf16.msra.mxu0 %v1807
    %2855 = vmatprep.subr.bf16.mxu0 %v1816
    %2856 = vmatpush1.bf16.msra.mxu0 %v1815
    %2857 = vmatprep.subr.bf16.mxu0 %v1824
    %2858 = vmatpush1.bf16.msra.mxu0 %v1823
    %2859 = vmatprep.subr.bf16.mxu0 %v1832
    %2860 = vmatpush1.bf16.msra.mxu0 %v1831
    %2861 = vmatprep.subr.bf16.mxu0 %v1840
    %2862 = vmatpush1.bf16.msra.mxu0 %v1839
    %2863 = vmatprep.mubr.bf16.mxu0 %v99
    %2864 = vmatmul.mubr.bf16.gmra.mrb[0].mxu0 %v98
    %v2865 = vpop.f32.mrb[0].mxu0
    %v2866 = vadd.f32 %v518, %v2865
    %v2867 = vpop.f32.mrb[0].mxu0
    %v2868 = vadd.f32 %v522, %v2867
    %v2869 = vpop.f32.mrb[0].mxu0
    %v2870 = vpop.f32.mrb[0].mxu0
    %2871 = vdwg.mxu0
    %2872 = vmatprep.subr.bf16.mxu0 %v1848
    %2873 = vmatpush1.bf16.msra.mxu0 %v1847
    %2874 = vmatprep.subr.bf16.mxu0 %v1856
    %2875 = vmatpush1.bf16.msra.mxu0 %v1855
    %2876 = vmatprep.subr.bf16.mxu0 %v1864
    %2877 = vmatpush1.bf16.msra.mxu0 %v1863
    %2878 = vmatprep.subr.bf16.mxu0 %v1872
    %2879 = vmatpush1.bf16.msra.mxu0 %v1871
    %2880 = vmatprep.subr.bf16.mxu0 %v1880
    %2881 = vmatpush1.bf16.msra.mxu0 %v1879
    %2882 = vmatprep.subr.bf16.mxu0 %v1888
    %2883 = vmatpush1.bf16.msra.mxu0 %v1887
    %2884 = vmatprep.subr.bf16.mxu0 %v1896
    %2885 = vmatpush1.bf16.msra.mxu0 %v1895
    %2886 = vmatprep.subr.bf16.mxu0 %v1904
    %2887 = vmatpush1.bf16.msra.mxu0 %v1903
    %2888 = vmatprep.subr.bf16.mxu0 %v1912
    %2889 = vmatpush1.bf16.msra.mxu0 %v1911
    %2890 = vmatprep.subr.bf16.mxu0 %v1920
    %2891 = vmatpush1.bf16.msra.mxu0 %v1919
    %2892 = vmatprep.subr.bf16.mxu0 %v1928
    %2893 = vmatpush1.bf16.msra.mxu0 %v1927
    %2894 = vmatprep.subr.bf16.mxu0 %v1936
    %2895 = vmatpush1.bf16.msra.mxu0 %v1935
    %2896 = vmatprep.subr.bf16.mxu0 %v1944
    %2897 = vmatpush1.bf16.msra.mxu0 %v1943
    %2898 = vmatprep.subr.bf16.mxu0 %v1952
    %2899 = vmatpush1.bf16.msra.mxu0 %v1951
    %2900 = vmatprep.subr.bf16.mxu0 %v1960
    %2901 = vmatpush1.bf16.msra.mxu0 %v1959
    %2902 = vmatprep.subr.bf16.mxu0 %v1968
    %2903 = vmatpush1.bf16.msra.mxu0 %v1967
    %2904 = vmatprep.mubr.bf16.mxu0 %v101
    %2905 = vmatmul.mubr.bf16.gmra.mrb[0].mxu0 %v100
    %v2906 = vpop.f32.mrb[0].mxu0
    %v2907 = vadd.f32 %v2866, %v2906
    %v2908 = vpop.f32.mrb[0].mxu0
    %v2909 = vadd.f32 %v2868, %v2908
    %v2910 = vpop.f32.mrb[0].mxu0
    %v2911 = vpop.f32.mrb[0].mxu0
    %2912 = vdwg.mxu0
    %2913 = vmatprep.subr.bf16.mxu0 %v1976
    %2914 = vmatpush1.bf16.msra.mxu0 %v1975
    %2915 = vmatprep.subr.bf16.mxu0 %v1984
    %2916 = vmatpush1.bf16.msra.mxu0 %v1983
    %2917 = vmatprep.subr.bf16.mxu0 %v1992
    %2918 = vmatpush1.bf16.msra.mxu0 %v1991
    %2919 = vmatprep.subr.bf16.mxu0 %v2000
    %2920 = vmatpush1.bf16.msra.mxu0 %v1999
    %2921 = vmatprep.subr.bf16.mxu0 %v2008
    %2922 = vmatpush1.bf16.msra.mxu0 %v2007
    %2923 = vmatprep.subr.bf16.mxu0 %v2016
    %2924 = vmatpush1.bf16.msra.mxu0 %v2015
    %2925 = vmatprep.subr.bf16.mxu0 %v2024
    %2926 = vmatpush1.bf16.msra.mxu0 %v2023
    %2927 = vmatprep.subr.bf16.mxu0 %v2032
    %2928 = vmatpush1.bf16.msra.mxu0 %v2031
    %2929 = vmatprep.subr.bf16.mxu0 %v2040
    %2930 = vmatpush1.bf16.msra.mxu0 %v2039
    %2931 = vmatprep.subr.bf16.mxu0 %v2048
    %2932 = vmatpush1.bf16.msra.mxu0 %v2047
    %2933 = vmatprep.subr.bf16.mxu0 %v2056
    %2934 = vmatpush1.bf16.msra.mxu0 %v2055
    %2935 = vmatprep.subr.bf16.mxu0 %v2064
    %2936 = vmatpush1.bf16.msra.mxu0 %v2063
    %2937 = vmatprep.subr.bf16.mxu0 %v2072
    %2938 = vmatpush1.bf16.msra.mxu0 %v2071
    %2939 = vmatprep.subr.bf16.mxu0 %v2080
    %2940 = vmatpush1.bf16.msra.mxu0 %v2079
    %2941 = vmatprep.subr.bf16.mxu0 %v2088
    %2942 = vmatpush1.bf16.msra.mxu0 %v2087
    %2943 = vmatprep.subr.bf16.mxu0 %v2096
    %2944 = vmatpush1.bf16.msra.mxu0 %v2095
    %2945 = vmatprep.mubr.bf16.mxu0 %v103
    %2946 = vmatmul.mubr.bf16.gmra.mrb[0].mxu0 %v102
    %v2947 = vpop.f32.mrb[0].mxu0
    %v2948 = vadd.f32 %v2907, %v2947
    %v2949 = vpop.f32.mrb[0].mxu0
    %v2950 = vadd.f32 %v2909, %v2949
    %v2951 = vpop.f32.mrb[0].mxu0
    %v2952 = vpop.f32.mrb[0].mxu0
    %2953 = vdwg.mxu0
    %2954 = vmatprep.subr.bf16.mxu0 %v2104
    %2955 = vmatpush1.bf16.msra.mxu0 %v2103
    %2956 = vmatprep.subr.bf16.mxu0 0
    %2957 = vmatpush1.bf16.msra.mxu0 0
    %2958 = vmatprep.subr.bf16.mxu0 0
    %2959 = vmatpush1.bf16.msra.mxu0 0
    %2960 = vmatprep.subr.bf16.mxu0 0
    %2961 = vmatpush1.bf16.msra.mxu0 0
    %2962 = vmatprep.subr.bf16.mxu0 0
    %2963 = vmatpush1.bf16.msra.mxu0 0
    %2964 = vmatprep.subr.bf16.mxu0 0
    %2965 = vmatpush1.bf16.msra.mxu0 0
    %2966 = vmatprep.subr.bf16.mxu0 0
    %2967 = vmatpush1.bf16.msra.mxu0 0
    %2968 = vmatprep.subr.bf16.mxu0 0
    %2969 = vmatpush1.bf16.msra.mxu0 0
    %2970 = vmatprep.subr.bf16.mxu0 0
    %2971 = vmatpush1.bf16.msra.mxu0 0
    %2972 = vmatprep.subr.bf16.mxu0 0
    %2973 = vmatpush1.bf16.msra.mxu0 0
    %2974 = vmatprep.subr.bf16.mxu0 0
    %2975 = vmatpush1.bf16.msra.mxu0 0
    %2976 = vmatprep.subr.bf16.mxu0 0
    %2977 = vmatpush1.bf16.msra.mxu0 0
    %2978 = vmatprep.subr.bf16.mxu0 0
    %2979 = vmatpush1.bf16.msra.mxu0 0
    %2980 = vmatprep.subr.bf16.mxu0 0
    %2981 = vmatpush1.bf16.msra.mxu0 0
    %2982 = vmatprep.subr.bf16.mxu0 0
    %2983 = vmatpush1.bf16.msra.mxu0 0
    %2984 = vmatprep.subr.bf16.mxu0 0
    %2985 = vmatpush1.bf16.msra.mxu0 0
    %2986 = vmatprep.mubr.bf16.mxu0 0
    %2987 = vmatmul.mubr.bf16.gmra.mrb[0].mxu0 %v2501
    %v2988 = vpop.f32.mrb[0].mxu0
    %v2989 = vadd.f32 %v2948, %v2988
    %v2990 = vpop.f32.mrb[0].mxu0
    %v2991 = vadd.f32 %v2950, %v2990
    %v2992 = vpop.f32.mrb[0].mxu0
    %v2993 = vpop.f32.mrb[0].mxu0
    %2994 = vdwg.mxu0
    %2995 = vmatprep.subr.bf16.mxu0 %v1722
    %2996 = vmatpush1.bf16.msra.mxu0 %v1721
    %2997 = vmatprep.subr.bf16.mxu0 %v1730
    %2998 = vmatpush1.bf16.msra.mxu0 %v1729
    %2999 = vmatprep.subr.bf16.mxu0 %v1738
    %3000 = vmatpush1.bf16.msra.mxu0 %v1737
    %3001 = vmatprep.subr.bf16.mxu0 %v1746
    %3002 = vmatpush1.bf16.msra.mxu0 %v1745
    %3003 = vmatprep.subr.bf16.mxu0 %v1754
    %3004 = vmatpush1.bf16.msra.mxu0 %v1753
    %3005 = vmatprep.subr.bf16.mxu0 %v1762
    %3006 = vmatpush1.bf16.msra.mxu0 %v1761
    %3007 = vmatprep.subr.bf16.mxu0 %v1770
    %3008 = vmatpush1.bf16.msra.mxu0 %v1769
    %3009 = vmatprep.subr.bf16.mxu0 %v1778
    %3010 = vmatpush1.bf16.msra.mxu0 %v1777
    %3011 = vmatprep.subr.bf16.mxu0 %v1786
    %3012 = vmatpush1.bf16.msra.mxu0 %v1785
    %3013 = vmatprep.subr.bf16.mxu0 %v1794
    %3014 = vmatpush1.bf16.msra.mxu0 %v1793
    %3015 = vmatprep.subr.bf16.mxu0 %v1802
    %3016 = vmatpush1.bf16.msra.mxu0 %v1801
    %3017 = vmatprep.subr.bf16.mxu0 %v1810
    %3018 = vmatpush1.bf16.msra.mxu0 %v1809
    %3019 = vmatprep.subr.bf16.mxu0 %v1818
    %3020 = vmatpush1.bf16.msra.mxu0 %v1817
    %3021 = vmatprep.subr.bf16.mxu0 %v1826
    %3022 = vmatpush1.bf16.msra.mxu0 %v1825
    %3023 = vmatprep.subr.bf16.mxu0 %v1834
    %3024 = vmatpush1.bf16.msra.mxu0 %v1833
    %3025 = vmatprep.subr.bf16.mxu0 %v1842
    %3026 = vmatpush1.bf16.msra.mxu0 %v1841
    %3027 = vmatprep.mubr.bf16.mxu0 %v99
    %3028 = vmatmul.mubr.bf16.gmra.mrb[0].mxu0 %v98
    %v3029 = vpop.f32.mrb[0].mxu0
    %v3030 = vadd.f32 %v526, %v3029
    %v3031 = vpop.f32.mrb[0].mxu0
    %v3032 = vadd.f32 %v530, %v3031
    %v3033 = vpop.f32.mrb[0].mxu0
    %v3034 = vpop.f32.mrb[0].mxu0
    %3035 = vdwg.mxu0
    %3036 = vmatprep.subr.bf16.mxu0 %v1850
    %3037 = vmatpush1.bf16.msra.mxu0 %v1849
    %3038 = vmatprep.subr.bf16.mxu0 %v1858
    %3039 = vmatpush1.bf16.msra.mxu0 %v1857
    %3040 = vmatprep.subr.bf16.mxu0 %v1866
    %3041 = vmatpush1.bf16.msra.mxu0 %v1865
    %3042 = vmatprep.subr.bf16.mxu0 %v1874
    %3043 = vmatpush1.bf16.msra.mxu0 %v1873
    %3044 = vmatprep.subr.bf16.mxu0 %v1882
    %3045 = vmatpush1.bf16.msra.mxu0 %v1881
    %3046 = vmatprep.subr.bf16.mxu0 %v1890
    %3047 = vmatpush1.bf16.msra.mxu0 %v1889
    %3048 = vmatprep.subr.bf16.mxu0 %v1898
    %3049 = vmatpush1.bf16.msra.mxu0 %v1897
    %3050 = vmatprep.subr.bf16.mxu0 %v1906
    %3051 = vmatpush1.bf16.msra.mxu0 %v1905
    %3052 = vmatprep.subr.bf16.mxu0 %v1914
    %3053 = vmatpush1.bf16.msra.mxu0 %v1913
    %3054 = vmatprep.subr.bf16.mxu0 %v1922
    %3055 = vmatpush1.bf16.msra.mxu0 %v1921
    %3056 = vmatprep.subr.bf16.mxu0 %v1930
    %3057 = vmatpush1.bf16.msra.mxu0 %v1929
    %3058 = vmatprep.subr.bf16.mxu0 %v1938
    %3059 = vmatpush1.bf16.msra.mxu0 %v1937
    %3060 = vmatprep.subr.bf16.mxu0 %v1946
    %3061 = vmatpush1.bf16.msra.mxu0 %v1945
    %3062 = vmatprep.subr.bf16.mxu0 %v1954
    %3063 = vmatpush1.bf16.msra.mxu0 %v1953
    %3064 = vmatprep.subr.bf16.mxu0 %v1962
    %3065 = vmatpush1.bf16.msra.mxu0 %v1961
    %3066 = vmatprep.subr.bf16.mxu0 %v1970
    %3067 = vmatpush1.bf16.msra.mxu0 %v1969
    %3068 = vmatprep.mubr.bf16.mxu0 %v101
    %3069 = vmatmul.mubr.bf16.gmra.mrb[0].mxu0 %v100
    %v3070 = vpop.f32.mrb[0].mxu0
    %v3071 = vadd.f32 %v3030, %v3070
    %v3072 = vpop.f32.mrb[0].mxu0
    %v3073 = vadd.f32 %v3032, %v3072
    %v3074 = vpop.f32.mrb[0].mxu0
    %v3075 = vpop.f32.mrb[0].mxu0
    %3076 = vdwg.mxu0
    %3077 = vmatprep.subr.bf16.mxu0 %v1978
    %3078 = vmatpush1.bf16.msra.mxu0 %v1977
    %3079 = vmatprep.subr.bf16.mxu0 %v1986
    %3080 = vmatpush1.bf16.msra.mxu0 %v1985
    %3081 = vmatprep.subr.bf16.mxu0 %v1994
    %3082 = vmatpush1.bf16.msra.mxu0 %v1993
    %3083 = vmatprep.subr.bf16.mxu0 %v2002
    %3084 = vmatpush1.bf16.msra.mxu0 %v2001
    %3085 = vmatprep.subr.bf16.mxu0 %v2010
    %3086 = vmatpush1.bf16.msra.mxu0 %v2009
    %3087 = vmatprep.subr.bf16.mxu0 %v2018
    %3088 = vmatpush1.bf16.msra.mxu0 %v2017
    %3089 = vmatprep.subr.bf16.mxu0 %v2026
    %3090 = vmatpush1.bf16.msra.mxu0 %v2025
    %3091 = vmatprep.subr.bf16.mxu0 %v2034
    %3092 = vmatpush1.bf16.msra.mxu0 %v2033
    %3093 = vmatprep.subr.bf16.mxu0 %v2042
    %3094 = vmatpush1.bf16.msra.mxu0 %v2041
    %3095 = vmatprep.subr.bf16.mxu0 %v2050
    %3096 = vmatpush1.bf16.msra.mxu0 %v2049
    %3097 = vmatprep.subr.bf16.mxu0 %v2058
    %3098 = vmatpush1.bf16.msra.mxu0 %v2057
    %3099 = vmatprep.subr.bf16.mxu0 %v2066
    %3100 = vmatpush1.bf16.msra.mxu0 %v2065
    %3101 = vmatprep.subr.bf16.mxu0 %v2074
    %3102 = vmatpush1.bf16.msra.mxu0 %v2073
    %3103 = vmatprep.subr.bf16.mxu0 %v2082
    %3104 = vmatpush1.bf16.msra.mxu0 %v2081
    %3105 = vmatprep.subr.bf16.mxu0 %v2090
    %3106 = vmatpush1.bf16.msra.mxu0 %v2089
    %3107 = vmatprep.subr.bf16.mxu0 %v2098
    %3108 = vmatpush1.bf16.msra.mxu0 %v2097
    %3109 = vmatprep.mubr.bf16.mxu0 %v103
    %3110 = vmatmul.mubr.bf16.gmra.mrb[0].mxu0 %v102
    %v3111 = vpop.f32.mrb[0].mxu0
    %v3112 = vadd.f32 %v3071, %v3111
    %v3113 = vpop.f32.mrb[0].mxu0
    %v3114 = vadd.f32 %v3073, %v3113
    %v3115 = vpop.f32.mrb[0].mxu0
    %v3116 = vpop.f32.mrb[0].mxu0
    %3117 = vdwg.mxu0
    %3118 = vmatprep.subr.bf16.mxu0 %v2106
    %3119 = vmatpush1.bf16.msra.mxu0 %v2105
    %3120 = vmatprep.subr.bf16.mxu0 0
    %3121 = vmatpush1.bf16.msra.mxu0 0
    %3122 = vmatprep.subr.bf16.mxu0 0
    %3123 = vmatpush1.bf16.msra.mxu0 0
    %3124 = vmatprep.subr.bf16.mxu0 0
    %3125 = vmatpush1.bf16.msra.mxu0 0
    %3126 = vmatprep.subr.bf16.mxu0 0
    %3127 = vmatpush1.bf16.msra.mxu0 0
    %3128 = vmatprep.subr.bf16.mxu0 0
    %3129 = vmatpush1.bf16.msra.mxu0 0
    %3130 = vmatprep.subr.bf16.mxu0 0
    %3131 = vmatpush1.bf16.msra.mxu0 0
    %3132 = vmatprep.subr.bf16.mxu0 0
    %3133 = vmatpush1.bf16.msra.mxu0 0
    %3134 = vmatprep.subr.bf16.mxu0 0
    %3135 = vmatpush1.bf16.msra.mxu0 0
    %3136 = vmatprep.subr.bf16.mxu0 0
    %3137 = vmatpush1.bf16.msra.mxu0 0
    %3138 = vmatprep.subr.bf16.mxu0 0
    %3139 = vmatpush1.bf16.msra.mxu0 0
    %3140 = vmatprep.subr.bf16.mxu0 0
    %3141 = vmatpush1.bf16.msra.mxu0 0
    %3142 = vmatprep.subr.bf16.mxu0 0
    %3143 = vmatpush1.bf16.msra.mxu0 0
    %3144 = vmatprep.subr.bf16.mxu0 0
    %3145 = vmatpush1.bf16.msra.mxu0 0
    %3146 = vmatprep.subr.bf16.mxu0 0
    %3147 = vmatpush1.bf16.msra.mxu0 0
    %3148 = vmatprep.subr.bf16.mxu0 0
    %3149 = vmatpush1.bf16.msra.mxu0 0
    %3150 = vmatprep.mubr.bf16.mxu0 0
    %3151 = vmatmul.mubr.bf16.gmra.mrb[0].mxu0 %v2501
    %v3152 = vpop.f32.mrb[0].mxu0
    %v3153 = vadd.f32 %v3112, %v3152
    %v3154 = vpop.f32.mrb[0].mxu0
    %v3155 = vadd.f32 %v3114, %v3154
    %v3156 = vpop.f32.mrb[0].mxu0
    %v3157 = vpop.f32.mrb[0].mxu0
    %3158 = vdwg.mxu0
    %v3159 = vmax.f32 %v2661, 0.0
    %v3160 = vmax.f32 %v2663, 0.0
    %v3161 = vmax.f32 %v2825, 0.0
    %v3162 = vmax.f32 %v2827, 0.0
    %v3163 = vmax.f32 %v2989, 0.0
    %v3164 = vmax.f32 %v2991, 0.0
    %v3165 = vmax.f32 %v3153, 0.0
    %v3166 = vmax.f32 %v3155, 0.0
    %v3167 = vpack.c.bf16 %v3159, %v3159
    %v3168 = vpack.c.bf16 %v3160, %v3160
    %v3169 = vpack.c.bf16 %v3161, %v3161
    %v3170 = vpack.c.bf16 %v3162, %v3162
    %v3171 = vpack.c.bf16 %v3163, %v3163
    %v3172 = vpack.c.bf16 %v3164, %v3164
    %v3173 = vpack.c.bf16 %v3165, %v3165
    %v3174 = vpack.c.bf16 %v3166, %v3166
    %v3175 = vld [vmem:[%s4] sm:$0xff]
    %v3176 = vld [vmem:[%s4 + $0x8] sm:$0xff]
    %v3177 = vld [vmem:[%s4 + $0x10] sm:$0xff]
    %v3178 = vld [vmem:[%s4 + $0x18] sm:$0xff]
    %v3179 = vld [vmem:[%s4 + $0x20] sm:$0xff]
    %v3180 = vld [vmem:[%s4 + $0x28] sm:$0xff]
    %v3181 = vld [vmem:[%s4 + $0x30] sm:$0xff]
    %v3182 = vld [vmem:[%s4 + $0x38] sm:$0xff]
    %v3183 = vld [vmem:[%s4 + $0x40] sm:$0xff]
    %v3184 = vld [vmem:[%s4 + $0x48] sm:$0xff]
    %v3185 = vld [vmem:[%s4 + $0x50] sm:$0xff]
    %v3186 = vld [vmem:[%s4 + $0x58] sm:$0xff]
    %v3187 = vld [vmem:[%s4 + $0x60] sm:$0xff]
    %v3188 = vld [vmem:[%s4 + $0x68] sm:$0xff]
    %v3189 = vld [vmem:[%s4 + $0x70] sm:$0xff]
    %v3190 = vld [vmem:[%s4 + $0x78] sm:$0xff]
    %v3191 = vld [vmem:[%s4 + $0x80] sm:$0xff]
    %v3192 = vld [vmem:[%s4 + $0x88] sm:$0xff]
    %v3193 = vld [vmem:[%s4 + $0x90] sm:$0xff]
    %v3194 = vld [vmem:[%s4 + $0x98] sm:$0xff]
    %v3195 = vld [vmem:[%s4 + $0xa0] sm:$0xff]
    %v3196 = vld [vmem:[%s4 + $0xa8] sm:$0xff]
    %v3197 = vld [vmem:[%s4 + $0xb0] sm:$0xff]
    %v3198 = vld [vmem:[%s4 + $0xb8] sm:$0xff]
    %v3199 = vld [vmem:[%s4 + $0xc0] sm:$0xff]
    %v3200 = vld [vmem:[%s4 + $0xc8] sm:$0xff]
    %v3201 = vld [vmem:[%s4 + $0xd0] sm:$0xff]
    %v3202 = vld [vmem:[%s4 + $0xd8] sm:$0xff]
    %v3203 = vld [vmem:[%s4 + $0xe0] sm:$0xff]
    %v3204 = vld [vmem:[%s4 + $0xe8] sm:$0xff]
    %v3205 = vld [vmem:[%s4 + $0xf0] sm:$0xff]
    %v3206 = vld [vmem:[%s4 + $0xf8] sm:$0xff]
    %v3207 = vld [vmem:[%s4 + $0x100] sm:$0xff]
    %v3208 = vld [vmem:[%s4 + $0x108] sm:$0xff]
    %v3209 = vld [vmem:[%s4 + $0x110] sm:$0xff]
    %v3210 = vld [vmem:[%s4 + $0x118] sm:$0xff]
    %v3211 = vld [vmem:[%s4 + $0x120] sm:$0xff]
    %v3212 = vld [vmem:[%s4 + $0x128] sm:$0xff]
    %v3213 = vld [vmem:[%s4 + $0x130] sm:$0xff]
    %v3214 = vld [vmem:[%s4 + $0x138] sm:$0xff]
    %v3215 = vld [vmem:[%s4 + $0x140] sm:$0xff]
    %v3216 = vld [vmem:[%s4 + $0x148] sm:$0xff]
    %v3217 = vld [vmem:[%s4 + $0x150] sm:$0xff]
    %v3218 = vld [vmem:[%s4 + $0x158] sm:$0xff]
    %v3219 = vld [vmem:[%s4 + $0x160] sm:$0xff]
    %v3220 = vld [vmem:[%s4 + $0x168] sm:$0xff]
    %v3221 = vld [vmem:[%s4 + $0x170] sm:$0xff]
    %v3222 = vld [vmem:[%s4 + $0x178] sm:$0xff]
    %v3223 = vld [vmem:[%s4 + $0x180] sm:$0xff]
    %v3224 = vld [vmem:[%s4 + $0x188] sm:$0xff]
    %v3225 = vld [vmem:[%s4 + $0x190] sm:$0xff]
    %v3226 = vld [vmem:[%s4 + $0x198] sm:$0xff]
    %v3227 = vld [vmem:[%s4 + $0x1a0] sm:$0xff]
    %v3228 = vld [vmem:[%s4 + $0x1a8] sm:$0xff]
    %v3229 = vld [vmem:[%s4 + $0x1b0] sm:$0xff]
    %v3230 = vld [vmem:[%s4 + $0x1b8] sm:$0xff]
    %v3231 = vld [vmem:[%s4 + $0x1c0] sm:$0xff]
    %v3232 = vld [vmem:[%s4 + $0x1c8] sm:$0xff]
    %v3233 = vld [vmem:[%s4 + $0x1d0] sm:$0xff]
    %v3234 = vld [vmem:[%s4 + $0x1d8] sm:$0xff]
    %v3235 = vld [vmem:[%s4 + $0x1e0] sm:$0xff]
    %v3236 = vld [vmem:[%s4 + $0x1e8] sm:$0xff]
    %v3237 = vld [vmem:[%s4 + $0x1f0] sm:$0xff]
    %v3238 = vld [vmem:[%s4 + $0x1f8] sm:$0xff]
    %v3239 = vld [vmem:[%s5] sm:$0x3]
    %v3241 = vlaneseq
    %v3242 = vshrl.u32 %v3241, 7
    %v3243 = vsub.s32 0, %v3242
    %v3244 = vrot.slane %v3239, %v3243
    %v3245 = vlaneseq
    %v3246 = vshrl.u32 %v3245, 7
    %v3247 = vsub.s32 1, %v3246
    %v3248 = vrot.slane %v3239, %v3247
    %v3315 = vunpack.c.l.b16 %v3175
    %v3316 = vunpack.c.h.b16 %v3175
    %v3317 = vunpack.c.l.b16 %v3176
    %v3318 = vunpack.c.h.b16 %v3176
    %v3319 = vunpack.c.l.b16 %v3177
    %v3320 = vunpack.c.h.b16 %v3177
    %v3321 = vunpack.c.l.b16 %v3178
    %v3322 = vunpack.c.h.b16 %v3178
    %v3323 = vunpack.c.l.b16 %v3179
    %v3324 = vunpack.c.h.b16 %v3179
    %v3325 = vunpack.c.l.b16 %v3180
    %v3326 = vunpack.c.h.b16 %v3180
    %v3327 = vunpack.c.l.b16 %v3181
    %v3328 = vunpack.c.h.b16 %v3181
    %v3329 = vunpack.c.l.b16 %v3182
    %v3330 = vunpack.c.h.b16 %v3182
    %v3331 = vunpack.c.l.b16 %v3183
    %v3332 = vunpack.c.h.b16 %v3183
    %v3333 = vunpack.c.l.b16 %v3184
    %v3334 = vunpack.c.h.b16 %v3184
    %v3335 = vunpack.c.l.b16 %v3185
    %v3336 = vunpack.c.h.b16 %v3185
    %v3337 = vunpack.c.l.b16 %v3186
    %v3338 = vunpack.c.h.b16 %v3186
    %v3339 = vunpack.c.l.b16 %v3187
    %v3340 = vunpack.c.h.b16 %v3187
    %v3341 = vunpack.c.l.b16 %v3188
    %v3342 = vunpack.c.h.b16 %v3188
    %v3343 = vunpack.c.l.b16 %v3189
    %v3344 = vunpack.c.h.b16 %v3189
    %v3345 = vunpack.c.l.b16 %v3190
    %v3346 = vunpack.c.h.b16 %v3190
    %v3347 = vunpack.c.l.b16 %v3191
    %v3348 = vunpack.c.h.b16 %v3191
    %v3349 = vunpack.c.l.b16 %v3192
    %v3350 = vunpack.c.h.b16 %v3192
    %v3351 = vunpack.c.l.b16 %v3193
    %v3352 = vunpack.c.h.b16 %v3193
    %v3353 = vunpack.c.l.b16 %v3194
    %v3354 = vunpack.c.h.b16 %v3194
    %v3355 = vunpack.c.l.b16 %v3195
    %v3356 = vunpack.c.h.b16 %v3195
    %v3357 = vunpack.c.l.b16 %v3196
    %v3358 = vunpack.c.h.b16 %v3196
    %v3359 = vunpack.c.l.b16 %v3197
    %v3360 = vunpack.c.h.b16 %v3197
    %v3361 = vunpack.c.l.b16 %v3198
    %v3362 = vunpack.c.h.b16 %v3198
    %v3363 = vunpack.c.l.b16 %v3199
    %v3364 = vunpack.c.h.b16 %v3199
    %v3365 = vunpack.c.l.b16 %v3200
    %v3366 = vunpack.c.h.b16 %v3200
    %v3367 = vunpack.c.l.b16 %v3201
    %v3368 = vunpack.c.h.b16 %v3201
    %v3369 = vunpack.c.l.b16 %v3202
    %v3370 = vunpack.c.h.b16 %v3202
    %v3371 = vunpack.c.l.b16 %v3203
    %v3372 = vunpack.c.h.b16 %v3203
    %v3373 = vunpack.c.l.b16 %v3204
    %v3374 = vunpack.c.h.b16 %v3204
    %v3375 = vunpack.c.l.b16 %v3205
    %v3376 = vunpack.c.h.b16 %v3205
    %v3377 = vunpack.c.l.b16 %v3206
    %v3378 = vunpack.c.h.b16 %v3206
    %v3379 = vunpack.c.l.b16 %v3207
    %v3380 = vunpack.c.h.b16 %v3207
    %v3381 = vunpack.c.l.b16 %v3208
    %v3382 = vunpack.c.h.b16 %v3208
    %v3383 = vunpack.c.l.b16 %v3209
    %v3384 = vunpack.c.h.b16 %v3209
    %v3385 = vunpack.c.l.b16 %v3210
    %v3386 = vunpack.c.h.b16 %v3210
    %v3387 = vunpack.c.l.b16 %v3211
    %v3388 = vunpack.c.h.b16 %v3211
    %v3389 = vunpack.c.l.b16 %v3212
    %v3390 = vunpack.c.h.b16 %v3212
    %v3391 = vunpack.c.l.b16 %v3213
    %v3392 = vunpack.c.h.b16 %v3213
    %v3393 = vunpack.c.l.b16 %v3214
    %v3394 = vunpack.c.h.b16 %v3214
    %v3395 = vunpack.c.l.b16 %v3215
    %v3396 = vunpack.c.h.b16 %v3215
    %v3397 = vunpack.c.l.b16 %v3216
    %v3398 = vunpack.c.h.b16 %v3216
    %v3399 = vunpack.c.l.b16 %v3217
    %v3400 = vunpack.c.h.b16 %v3217
    %v3401 = vunpack.c.l.b16 %v3218
    %v3402 = vunpack.c.h.b16 %v3218
    %v3403 = vunpack.c.l.b16 %v3219
    %v3404 = vunpack.c.h.b16 %v3219
    %v3405 = vunpack.c.l.b16 %v3220
    %v3406 = vunpack.c.h.b16 %v3220
    %v3407 = vunpack.c.l.b16 %v3221
    %v3408 = vunpack.c.h.b16 %v3221
    %v3409 = vunpack.c.l.b16 %v3222
    %v3410 = vunpack.c.h.b16 %v3222
    %v3411 = vunpack.c.l.b16 %v3223
    %v3412 = vunpack.c.h.b16 %v3223
    %v3413 = vunpack.c.l.b16 %v3224
    %v3414 = vunpack.c.h.b16 %v3224
    %v3415 = vunpack.c.l.b16 %v3225
    %v3416 = vunpack.c.h.b16 %v3225
    %v3417 = vunpack.c.l.b16 %v3226
    %v3418 = vunpack.c.h.b16 %v3226
    %v3419 = vunpack.c.l.b16 %v3227
    %v3420 = vunpack.c.h.b16 %v3227
    %v3421 = vunpack.c.l.b16 %v3228
    %v3422 = vunpack.c.h.b16 %v3228
    %v3423 = vunpack.c.l.b16 %v3229
    %v3424 = vunpack.c.h.b16 %v3229
    %v3425 = vunpack.c.l.b16 %v3230
    %v3426 = vunpack.c.h.b16 %v3230
    %v3427 = vunpack.c.l.b16 %v3231
    %v3428 = vunpack.c.h.b16 %v3231
    %v3429 = vunpack.c.l.b16 %v3232
    %v3430 = vunpack.c.h.b16 %v3232
    %v3431 = vunpack.c.l.b16 %v3233
    %v3432 = vunpack.c.h.b16 %v3233
    %v3433 = vunpack.c.l.b16 %v3234
    %v3434 = vunpack.c.h.b16 %v3234
    %v3435 = vunpack.c.l.b16 %v3235
    %v3436 = vunpack.c.h.b16 %v3235
    %v3437 = vunpack.c.l.b16 %v3236
    %v3438 = vunpack.c.h.b16 %v3236
    %v3439 = vunpack.c.l.b16 %v3237
    %v3440 = vunpack.c.h.b16 %v3237
    %v3441 = vunpack.c.l.b16 %v3238
    %v3442 = vunpack.c.h.b16 %v3238
    %v3443 = vpack.c.b16 %v3317, %v3315
    %v3444 = vpack.c.b16 %v3318, %v3316
    %v3445 = vpack.c.b16 %v3321, %v3319
    %v3446 = vpack.c.b16 %v3322, %v3320
    %v3447 = vpack.c.b16 %v3325, %v3323
    %v3448 = vpack.c.b16 %v3326, %v3324
    %v3449 = vpack.c.b16 %v3329, %v3327
    %v3450 = vpack.c.b16 %v3330, %v3328
    %v3451 = vpack.c.b16 %v3333, %v3331
    %v3452 = vpack.c.b16 %v3334, %v3332
    %v3453 = vpack.c.b16 %v3337, %v3335
    %v3454 = vpack.c.b16 %v3338, %v3336
    %v3455 = vpack.c.b16 %v3341, %v3339
    %v3456 = vpack.c.b16 %v3342, %v3340
    %v3457 = vpack.c.b16 %v3345, %v3343
    %v3458 = vpack.c.b16 %v3346, %v3344
    %v3459 = vpack.c.b16 %v3349, %v3347
    %v3460 = vpack.c.b16 %v3350, %v3348
    %v3461 = vpack.c.b16 %v3353, %v3351
    %v3462 = vpack.c.b16 %v3354, %v3352
    %v3463 = vpack.c.b16 %v3357, %v3355
    %v3464 = vpack.c.b16 %v3358, %v3356
    %v3465 = vpack.c.b16 %v3361, %v3359
    %v3466 = vpack.c.b16 %v3362, %v3360
    %v3467 = vpack.c.b16 %v3365, %v3363
    %v3468 = vpack.c.b16 %v3366, %v3364
    %v3469 = vpack.c.b16 %v3369, %v3367
    %v3470 = vpack.c.b16 %v3370, %v3368
    %v3471 = vpack.c.b16 %v3373, %v3371
    %v3472 = vpack.c.b16 %v3374, %v3372
    %v3473 = vpack.c.b16 %v3377, %v3375
    %v3474 = vpack.c.b16 %v3378, %v3376
    %v3475 = vpack.c.b16 %v3381, %v3379
    %v3476 = vpack.c.b16 %v3382, %v3380
    %v3477 = vpack.c.b16 %v3385, %v3383
    %v3478 = vpack.c.b16 %v3386, %v3384
    %v3479 = vpack.c.b16 %v3389, %v3387
    %v3480 = vpack.c.b16 %v3390, %v3388
    %v3481 = vpack.c.b16 %v3393, %v3391
    %v3482 = vpack.c.b16 %v3394, %v3392
    %v3483 = vpack.c.b16 %v3397, %v3395
    %v3484 = vpack.c.b16 %v3398, %v3396
    %v3485 = vpack.c.b16 %v3401, %v3399
    %v3486 = vpack.c.b16 %v3402, %v3400
    %v3487 = vpack.c.b16 %v3405, %v3403
    %v3488 = vpack.c.b16 %v3406, %v3404
    %v3489 = vpack.c.b16 %v3409, %v3407
    %v3490 = vpack.c.b16 %v3410, %v3408
    %v3491 = vpack.c.b16 %v3413, %v3411
    %v3492 = vpack.c.b16 %v3414, %v3412
    %v3493 = vpack.c.b16 %v3417, %v3415
    %v3494 = vpack.c.b16 %v3418, %v3416
    %v3495 = vpack.c.b16 %v3421, %v3419
    %v3496 = vpack.c.b16 %v3422, %v3420
    %v3497 = vpack.c.b16 %v3425, %v3423
    %v3498 = vpack.c.b16 %v3426, %v3424
    %v3499 = vpack.c.b16 %v3429, %v3427
    %v3500 = vpack.c.b16 %v3430, %v3428
    %v3501 = vpack.c.b16 %v3433, %v3431
    %v3502 = vpack.c.b16 %v3434, %v3432
    %v3503 = vpack.c.b16 %v3437, %v3435
    %v3504 = vpack.c.b16 %v3438, %v3436
    %v3505 = vpack.c.b16 %v3441, %v3439
    %v3506 = vpack.c.b16 %v3442, %v3440
    %3571 = vmatprep.subr.bf16.mxu0 %v3444
    %3572 = vmatpush1.bf16.msra.mxu0 %v3443
    %3573 = vmatprep.subr.bf16.mxu0 %v3446
    %3574 = vmatpush1.bf16.msra.mxu0 %v3445
    %3575 = vmatprep.subr.bf16.mxu0 %v3448
    %3576 = vmatpush1.bf16.msra.mxu0 %v3447
    %3577 = vmatprep.subr.bf16.mxu0 %v3450
    %3578 = vmatpush1.bf16.msra.mxu0 %v3449
    %3579 = vmatprep.subr.bf16.mxu0 %v3452
    %3580 = vmatpush1.bf16.msra.mxu0 %v3451
    %3581 = vmatprep.subr.bf16.mxu0 %v3454
    %3582 = vmatpush1.bf16.msra.mxu0 %v3453
    %3583 = vmatprep.subr.bf16.mxu0 %v3456
    %3584 = vmatpush1.bf16.msra.mxu0 %v3455
    %3585 = vmatprep.subr.bf16.mxu0 %v3458
    %3586 = vmatpush1.bf16.msra.mxu0 %v3457
    %3587 = vmatprep.subr.bf16.mxu0 %v3460
    %3588 = vmatpush1.bf16.msra.mxu0 %v3459
    %3589 = vmatprep.subr.bf16.mxu0 %v3462
    %3590 = vmatpush1.bf16.msra.mxu0 %v3461
    %3591 = vmatprep.subr.bf16.mxu0 %v3464
    %3592 = vmatpush1.bf16.msra.mxu0 %v3463
    %3593 = vmatprep.subr.bf16.mxu0 %v3466
    %3594 = vmatpush1.bf16.msra.mxu0 %v3465
    %3595 = vmatprep.subr.bf16.mxu0 %v3468
    %3596 = vmatpush1.bf16.msra.mxu0 %v3467
    %3597 = vmatprep.subr.bf16.mxu0 %v3470
    %3598 = vmatpush1.bf16.msra.mxu0 %v3469
    %3599 = vmatprep.subr.bf16.mxu0 %v3472
    %3600 = vmatpush1.bf16.msra.mxu0 %v3471
    %3601 = vmatprep.subr.bf16.mxu0 %v3474
    %3602 = vmatpush1.bf16.msra.mxu0 %v3473
    %3603 = vmatprep.mubr.bf16.mxu0 %v3168
    %3604 = vmatmul.mubr.bf16.gmra.mrb[0].mxu0 %v3167
    %v3605 = vpop.f32.mrb[0].mxu0
    %v3606 = vadd.f32 %v3244, %v3605
    %v3607 = vpop.f32.mrb[0].mxu0
    %v3608 = vadd.f32 %v3248, %v3607
    %v3609 = vpop.f32.mrb[0].mxu0
    %v3610 = vpop.f32.mrb[0].mxu0
    %3611 = vdwg.mxu0
    %3612 = vmatprep.subr.bf16.mxu0 %v3476
    %3613 = vmatpush1.bf16.msra.mxu0 %v3475
    %3614 = vmatprep.subr.bf16.mxu0 %v3478
    %3615 = vmatpush1.bf16.msra.mxu0 %v3477
    %3616 = vmatprep.subr.bf16.mxu0 %v3480
    %3617 = vmatpush1.bf16.msra.mxu0 %v3479
    %3618 = vmatprep.subr.bf16.mxu0 %v3482
    %3619 = vmatpush1.bf16.msra.mxu0 %v3481
    %3620 = vmatprep.subr.bf16.mxu0 %v3484
    %3621 = vmatpush1.bf16.msra.mxu0 %v3483
    %3622 = vmatprep.subr.bf16.mxu0 %v3486
    %3623 = vmatpush1.bf16.msra.mxu0 %v3485
    %3624 = vmatprep.subr.bf16.mxu0 %v3488
    %3625 = vmatpush1.bf16.msra.mxu0 %v3487
    %3626 = vmatprep.subr.bf16.mxu0 %v3490
    %3627 = vmatpush1.bf16.msra.mxu0 %v3489
    %3628 = vmatprep.subr.bf16.mxu0 %v3492
    %3629 = vmatpush1.bf16.msra.mxu0 %v3491
    %3630 = vmatprep.subr.bf16.mxu0 %v3494
    %3631 = vmatpush1.bf16.msra.mxu0 %v3493
    %3632 = vmatprep.subr.bf16.mxu0 %v3496
    %3633 = vmatpush1.bf16.msra.mxu0 %v3495
    %3634 = vmatprep.subr.bf16.mxu0 %v3498
    %3635 = vmatpush1.bf16.msra.mxu0 %v3497
    %3636 = vmatprep.subr.bf16.mxu0 %v3500
    %3637 = vmatpush1.bf16.msra.mxu0 %v3499
    %3638 = vmatprep.subr.bf16.mxu0 %v3502
    %3639 = vmatpush1.bf16.msra.mxu0 %v3501
    %3640 = vmatprep.subr.bf16.mxu0 %v3504
    %3641 = vmatpush1.bf16.msra.mxu0 %v3503
    %3642 = vmatprep.subr.bf16.mxu0 %v3506
    %3643 = vmatpush1.bf16.msra.mxu0 %v3505
    %3644 = vmatprep.mubr.bf16.mxu0 %v3170
    %3645 = vmatmul.mubr.bf16.gmra.mrb[0].mxu0 %v3169
    %v3646 = vpop.f32.mrb[0].mxu0
    %v3647 = vadd.f32 %v3606, %v3646
    %v3648 = vpop.f32.mrb[0].mxu0
    %v3649 = vadd.f32 %v3608, %v3648
    %v3650 = vpop.f32.mrb[0].mxu0
    %v3651 = vpop.f32.mrb[0].mxu0
    %3652 = vdwg.mxu0
    %v3653 = vmax.f32 %v3647, 0.0
    %v3654 = vmax.f32 %v3649, 0.0
    %v3655 = vpack.c.bf16 %v3653, %v3653
    %v3656 = vpack.c.bf16 %v3654, %v3654
    %v3657 = vld [vmem:[%s6] sm:$0xff]
    %v3658 = vld [vmem:[%s6 + $0x8] sm:$0xff]
    %v3659 = vld [vmem:[%s6 + $0x10] sm:$0xff]
    %v3660 = vld [vmem:[%s6 + $0x18] sm:$0xff]
    %v3661 = vld [vmem:[%s6 + $0x20] sm:$0xff]
    %v3662 = vld [vmem:[%s6 + $0x28] sm:$0xff]
    %v3663 = vld [vmem:[%s6 + $0x30] sm:$0xff]
    %v3664 = vld [vmem:[%s6 + $0x38] sm:$0xff]
    %v3665 = vld [vmem:[%s6 + $0x40] sm:$0xff]
    %v3666 = vld [vmem:[%s6 + $0x48] sm:$0xff]
    %v3667 = vld [vmem:[%s6 + $0x50] sm:$0xff]
    %v3668 = vld [vmem:[%s6 + $0x58] sm:$0xff]
    %v3669 = vld [vmem:[%s6 + $0x60] sm:$0xff]
    %v3670 = vld [vmem:[%s6 + $0x68] sm:$0xff]
    %v3671 = vld [vmem:[%s6 + $0x70] sm:$0xff]
    %v3672 = vld [vmem:[%s6 + $0x78] sm:$0xff]
    %v3673 = vld [vmem:[%s6 + $0x80] sm:$0xff]
    %v3674 = vld [vmem:[%s6 + $0x88] sm:$0xff]
    %v3675 = vld [vmem:[%s6 + $0x90] sm:$0xff]
    %v3676 = vld [vmem:[%s6 + $0x98] sm:$0xff]
    %v3677 = vld [vmem:[%s6 + $0xa0] sm:$0xff]
    %v3678 = vld [vmem:[%s6 + $0xa8] sm:$0xff]
    %v3679 = vld [vmem:[%s6 + $0xb0] sm:$0xff]
    %v3680 = vld [vmem:[%s6 + $0xb8] sm:$0xff]
    %v3681 = vld [vmem:[%s6 + $0xc0] sm:$0xff]
    %v3682 = vld [vmem:[%s6 + $0xc8] sm:$0xff]
    %v3683 = vld [vmem:[%s6 + $0xd0] sm:$0xff]
    %v3684 = vld [vmem:[%s6 + $0xd8] sm:$0xff]
    %v3685 = vld [vmem:[%s6 + $0xe0] sm:$0xff]
    %v3686 = vld [vmem:[%s6 + $0xe8] sm:$0xff]
    %v3687 = vld [vmem:[%s6 + $0xf0] sm:$0xff]
    %v3688 = vld [vmem:[%s6 + $0xf8] sm:$0xff]
    %v3689 = vld [vmem:[%s6 + $0x100] sm:$0xff]
    %v3690 = vld [vmem:[%s6 + $0x108] sm:$0xff]
    %v3691 = vld [vmem:[%s6 + $0x110] sm:$0xff]
    %v3692 = vld [vmem:[%s6 + $0x118] sm:$0xff]
    %v3693 = vld [vmem:[%s6 + $0x120] sm:$0xff]
    %v3694 = vld [vmem:[%s6 + $0x128] sm:$0xff]
    %v3695 = vld [vmem:[%s6 + $0x130] sm:$0xff]
    %v3696 = vld [vmem:[%s6 + $0x138] sm:$0xff]
    %v3697 = vld [vmem:[%s6 + $0x140] sm:$0xff]
    %v3698 = vld [vmem:[%s6 + $0x148] sm:$0xff]
    %v3699 = vld [vmem:[%s6 + $0x150] sm:$0xff]
    %v3700 = vld [vmem:[%s6 + $0x158] sm:$0xff]
    %v3701 = vld [vmem:[%s6 + $0x160] sm:$0xff]
    %v3702 = vld [vmem:[%s6 + $0x168] sm:$0xff]
    %v3703 = vld [vmem:[%s6 + $0x170] sm:$0xff]
    %v3704 = vld [vmem:[%s6 + $0x178] sm:$0xff]
    %v3705 = vld [vmem:[%s6 + $0x180] sm:$0xff]
    %v3706 = vld [vmem:[%s6 + $0x188] sm:$0xff]
    %v3707 = vld [vmem:[%s6 + $0x190] sm:$0xff]
    %v3708 = vld [vmem:[%s6 + $0x198] sm:$0xff]
    %v3709 = vld [vmem:[%s6 + $0x1a0] sm:$0xff]
    %v3710 = vld [vmem:[%s6 + $0x1a8] sm:$0xff]
    %v3711 = vld [vmem:[%s6 + $0x1b0] sm:$0xff]
    %v3712 = vld [vmem:[%s6 + $0x1b8] sm:$0xff]
    %v3713 = vld [vmem:[%s6 + $0x1c0] sm:$0xff]
    %v3714 = vld [vmem:[%s6 + $0x1c8] sm:$0xff]
    %v3715 = vld [vmem:[%s6 + $0x1d0] sm:$0xff]
    %v3716 = vld [vmem:[%s6 + $0x1d8] sm:$0xff]
    %v3717 = vld [vmem:[%s6 + $0x1e0] sm:$0xff]
    %v3718 = vld [vmem:[%s6 + $0x1e8] sm:$0xff]
    %v3719 = vld [vmem:[%s6 + $0x1f0] sm:$0xff]
    %v3720 = vld [vmem:[%s6 + $0x1f8] sm:$0xff]
    %v3721 = vld [vmem:[%s7] sm:$0x3]
    %v3723 = vlaneseq
    %v3724 = vshrl.u32 %v3723, 7
    %v3725 = vsub.s32 0, %v3724
    %v3726 = vrot.slane %v3721, %v3725
    %v3727 = vlaneseq
    %v3728 = vshrl.u32 %v3727, 7
    %v3729 = vsub.s32 1, %v3728
    %v3730 = vrot.slane %v3721, %v3729
    %v3797 = vunpack.c.l.b16 %v3657
    %v3798 = vunpack.c.h.b16 %v3657
    %v3799 = vunpack.c.l.b16 %v3658
    %v3800 = vunpack.c.h.b16 %v3658
    %v3801 = vunpack.c.l.b16 %v3659
    %v3802 = vunpack.c.h.b16 %v3659
    %v3803 = vunpack.c.l.b16 %v3660
    %v3804 = vunpack.c.h.b16 %v3660
    %v3805 = vunpack.c.l.b16 %v3661
    %v3806 = vunpack.c.h.b16 %v3661
    %v3807 = vunpack.c.l.b16 %v3662
    %v3808 = vunpack.c.h.b16 %v3662
    %v3809 = vunpack.c.l.b16 %v3663
    %v3810 = vunpack.c.h.b16 %v3663
    %v3811 = vunpack.c.l.b16 %v3664
    %v3812 = vunpack.c.h.b16 %v3664
    %v3813 = vunpack.c.l.b16 %v3665
    %v3814 = vunpack.c.h.b16 %v3665
    %v3815 = vunpack.c.l.b16 %v3666
    %v3816 = vunpack.c.h.b16 %v3666
    %v3817 = vunpack.c.l.b16 %v3667
    %v3818 = vunpack.c.h.b16 %v3667
    %v3819 = vunpack.c.l.b16 %v3668
    %v3820 = vunpack.c.h.b16 %v3668
    %v3821 = vunpack.c.l.b16 %v3669
    %v3822 = vunpack.c.h.b16 %v3669
    %v3823 = vunpack.c.l.b16 %v3670
    %v3824 = vunpack.c.h.b16 %v3670
    %v3825 = vunpack.c.l.b16 %v3671
    %v3826 = vunpack.c.h.b16 %v3671
    %v3827 = vunpack.c.l.b16 %v3672
    %v3828 = vunpack.c.h.b16 %v3672
    %v3829 = vunpack.c.l.b16 %v3673
    %v3830 = vunpack.c.h.b16 %v3673
    %v3831 = vunpack.c.l.b16 %v3674
    %v3832 = vunpack.c.h.b16 %v3674
    %v3833 = vunpack.c.l.b16 %v3675
    %v3834 = vunpack.c.h.b16 %v3675
    %v3835 = vunpack.c.l.b16 %v3676
    %v3836 = vunpack.c.h.b16 %v3676
    %v3837 = vunpack.c.l.b16 %v3677
    %v3838 = vunpack.c.h.b16 %v3677
    %v3839 = vunpack.c.l.b16 %v3678
    %v3840 = vunpack.c.h.b16 %v3678
    %v3841 = vunpack.c.l.b16 %v3679
    %v3842 = vunpack.c.h.b16 %v3679
    %v3843 = vunpack.c.l.b16 %v3680
    %v3844 = vunpack.c.h.b16 %v3680
    %v3845 = vunpack.c.l.b16 %v3681
    %v3846 = vunpack.c.h.b16 %v3681
    %v3847 = vunpack.c.l.b16 %v3682
    %v3848 = vunpack.c.h.b16 %v3682
    %v3849 = vunpack.c.l.b16 %v3683
    %v3850 = vunpack.c.h.b16 %v3683
    %v3851 = vunpack.c.l.b16 %v3684
    %v3852 = vunpack.c.h.b16 %v3684
    %v3853 = vunpack.c.l.b16 %v3685
    %v3854 = vunpack.c.h.b16 %v3685
    %v3855 = vunpack.c.l.b16 %v3686
    %v3856 = vunpack.c.h.b16 %v3686
    %v3857 = vunpack.c.l.b16 %v3687
    %v3858 = vunpack.c.h.b16 %v3687
    %v3859 = vunpack.c.l.b16 %v3688
    %v3860 = vunpack.c.h.b16 %v3688
    %v3861 = vunpack.c.l.b16 %v3689
    %v3862 = vunpack.c.h.b16 %v3689
    %v3863 = vunpack.c.l.b16 %v3690
    %v3864 = vunpack.c.h.b16 %v3690
    %v3865 = vunpack.c.l.b16 %v3691
    %v3866 = vunpack.c.h.b16 %v3691
    %v3867 = vunpack.c.l.b16 %v3692
    %v3868 = vunpack.c.h.b16 %v3692
    %v3869 = vunpack.c.l.b16 %v3693
    %v3870 = vunpack.c.h.b16 %v3693
    %v3871 = vunpack.c.l.b16 %v3694
    %v3872 = vunpack.c.h.b16 %v3694
    %v3873 = vunpack.c.l.b16 %v3695
    %v3874 = vunpack.c.h.b16 %v3695
    %v3875 = vunpack.c.l.b16 %v3696
    %v3876 = vunpack.c.h.b16 %v3696
    %v3877 = vunpack.c.l.b16 %v3697
    %v3878 = vunpack.c.h.b16 %v3697
    %v3879 = vunpack.c.l.b16 %v3698
    %v3880 = vunpack.c.h.b16 %v3698
    %v3881 = vunpack.c.l.b16 %v3699
    %v3882 = vunpack.c.h.b16 %v3699
    %v3883 = vunpack.c.l.b16 %v3700
    %v3884 = vunpack.c.h.b16 %v3700
    %v3885 = vunpack.c.l.b16 %v3701
    %v3886 = vunpack.c.h.b16 %v3701
    %v3887 = vunpack.c.l.b16 %v3702
    %v3888 = vunpack.c.h.b16 %v3702
    %v3889 = vunpack.c.l.b16 %v3703
    %v3890 = vunpack.c.h.b16 %v3703
    %v3891 = vunpack.c.l.b16 %v3704
    %v3892 = vunpack.c.h.b16 %v3704
    %v3893 = vunpack.c.l.b16 %v3705
    %v3894 = vunpack.c.h.b16 %v3705
    %v3895 = vunpack.c.l.b16 %v3706
    %v3896 = vunpack.c.h.b16 %v3706
    %v3897 = vunpack.c.l.b16 %v3707
    %v3898 = vunpack.c.h.b16 %v3707
    %v3899 = vunpack.c.l.b16 %v3708
    %v3900 = vunpack.c.h.b16 %v3708
    %v3901 = vunpack.c.l.b16 %v3709
    %v3902 = vunpack.c.h.b16 %v3709
    %v3903 = vunpack.c.l.b16 %v3710
    %v3904 = vunpack.c.h.b16 %v3710
    %v3905 = vunpack.c.l.b16 %v3711
    %v3906 = vunpack.c.h.b16 %v3711
    %v3907 = vunpack.c.l.b16 %v3712
    %v3908 = vunpack.c.h.b16 %v3712
    %v3909 = vunpack.c.l.b16 %v3713
    %v3910 = vunpack.c.h.b16 %v3713
    %v3911 = vunpack.c.l.b16 %v3714
    %v3912 = vunpack.c.h.b16 %v3714
    %v3913 = vunpack.c.l.b16 %v3715
    %v3914 = vunpack.c.h.b16 %v3715
    %v3915 = vunpack.c.l.b16 %v3716
    %v3916 = vunpack.c.h.b16 %v3716
    %v3917 = vunpack.c.l.b16 %v3717
    %v3918 = vunpack.c.h.b16 %v3717
    %v3919 = vunpack.c.l.b16 %v3718
    %v3920 = vunpack.c.h.b16 %v3718
    %v3921 = vunpack.c.l.b16 %v3719
    %v3922 = vunpack.c.h.b16 %v3719
    %v3923 = vunpack.c.l.b16 %v3720
    %v3924 = vunpack.c.h.b16 %v3720
    %v3925 = vpack.c.b16 %v3799, %v3797
    %v3926 = vpack.c.b16 %v3800, %v3798
    %v3927 = vpack.c.b16 %v3803, %v3801
    %v3928 = vpack.c.b16 %v3804, %v3802
    %v3929 = vpack.c.b16 %v3807, %v3805
    %v3930 = vpack.c.b16 %v3808, %v3806
    %v3931 = vpack.c.b16 %v3811, %v3809
    %v3932 = vpack.c.b16 %v3812, %v3810
    %v3933 = vpack.c.b16 %v3815, %v3813
    %v3934 = vpack.c.b16 %v3816, %v3814
    %v3935 = vpack.c.b16 %v3819, %v3817
    %v3936 = vpack.c.b16 %v3820, %v3818
    %v3937 = vpack.c.b16 %v3823, %v3821
    %v3938 = vpack.c.b16 %v3824, %v3822
    %v3939 = vpack.c.b16 %v3827, %v3825
    %v3940 = vpack.c.b16 %v3828, %v3826
    %v3941 = vpack.c.b16 %v3831, %v3829
    %v3942 = vpack.c.b16 %v3832, %v3830
    %v3943 = vpack.c.b16 %v3835, %v3833
    %v3944 = vpack.c.b16 %v3836, %v3834
    %v3945 = vpack.c.b16 %v3839, %v3837
    %v3946 = vpack.c.b16 %v3840, %v3838
    %v3947 = vpack.c.b16 %v3843, %v3841
    %v3948 = vpack.c.b16 %v3844, %v3842
    %v3949 = vpack.c.b16 %v3847, %v3845
    %v3950 = vpack.c.b16 %v3848, %v3846
    %v3951 = vpack.c.b16 %v3851, %v3849
    %v3952 = vpack.c.b16 %v3852, %v3850
    %v3953 = vpack.c.b16 %v3855, %v3853
    %v3954 = vpack.c.b16 %v3856, %v3854
    %v3955 = vpack.c.b16 %v3859, %v3857
    %v3956 = vpack.c.b16 %v3860, %v3858
    %v3957 = vpack.c.b16 %v3863, %v3861
    %v3958 = vpack.c.b16 %v3864, %v3862
    %v3959 = vpack.c.b16 %v3867, %v3865
    %v3960 = vpack.c.b16 %v3868, %v3866
    %v3961 = vpack.c.b16 %v3871, %v3869
    %v3962 = vpack.c.b16 %v3872, %v3870
    %v3963 = vpack.c.b16 %v3875, %v3873
    %v3964 = vpack.c.b16 %v3876, %v3874
    %v3965 = vpack.c.b16 %v3879, %v3877
    %v3966 = vpack.c.b16 %v3880, %v3878
    %v3967 = vpack.c.b16 %v3883, %v3881
    %v3968 = vpack.c.b16 %v3884, %v3882
    %v3969 = vpack.c.b16 %v3887, %v3885
    %v3970 = vpack.c.b16 %v3888, %v3886
    %v3971 = vpack.c.b16 %v3891, %v3889
    %v3972 = vpack.c.b16 %v3892, %v3890
    %v3973 = vpack.c.b16 %v3895, %v3893
    %v3974 = vpack.c.b16 %v3896, %v3894
    %v3975 = vpack.c.b16 %v3899, %v3897
    %v3976 = vpack.c.b16 %v3900, %v3898
    %v3977 = vpack.c.b16 %v3903, %v3901
    %v3978 = vpack.c.b16 %v3904, %v3902
    %v3979 = vpack.c.b16 %v3907, %v3905
    %v3980 = vpack.c.b16 %v3908, %v3906
    %v3981 = vpack.c.b16 %v3911, %v3909
    %v3982 = vpack.c.b16 %v3912, %v3910
    %v3983 = vpack.c.b16 %v3915, %v3913
    %v3984 = vpack.c.b16 %v3916, %v3914
    %v3985 = vpack.c.b16 %v3919, %v3917
    %v3986 = vpack.c.b16 %v3920, %v3918
    %v3987 = vpack.c.b16 %v3923, %v3921
    %v3988 = vpack.c.b16 %v3924, %v3922
    %4053 = vmatprep.subr.bf16.mxu0 %v3926
    %4054 = vmatpush1.bf16.msra.mxu0 %v3925
    %4055 = vmatprep.subr.bf16.mxu0 %v3928
    %4056 = vmatpush1.bf16.msra.mxu0 %v3927
    %4057 = vmatprep.subr.bf16.mxu0 %v3930
    %4058 = vmatpush1.bf16.msra.mxu0 %v3929
    %4059 = vmatprep.subr.bf16.mxu0 %v3932
    %4060 = vmatpush1.bf16.msra.mxu0 %v3931
    %4061 = vmatprep.subr.bf16.mxu0 %v3934
    %4062 = vmatpush1.bf16.msra.mxu0 %v3933
    %4063 = vmatprep.subr.bf16.mxu0 %v3936
    %4064 = vmatpush1.bf16.msra.mxu0 %v3935
    %4065 = vmatprep.subr.bf16.mxu0 %v3938
    %4066 = vmatpush1.bf16.msra.mxu0 %v3937
    %4067 = vmatprep.subr.bf16.mxu0 %v3940
    %4068 = vmatpush1.bf16.msra.mxu0 %v3939
    %4069 = vmatprep.subr.bf16.mxu0 %v3942
    %4070 = vmatpush1.bf16.msra.mxu0 %v3941
    %4071 = vmatprep.subr.bf16.mxu0 %v3944
    %4072 = vmatpush1.bf16.msra.mxu0 %v3943
    %4073 = vmatprep.subr.bf16.mxu0 %v3946
    %4074 = vmatpush1.bf16.msra.mxu0 %v3945
    %4075 = vmatprep.subr.bf16.mxu0 %v3948
    %4076 = vmatpush1.bf16.msra.mxu0 %v3947
    %4077 = vmatprep.subr.bf16.mxu0 %v3950
    %4078 = vmatpush1.bf16.msra.mxu0 %v3949
    %4079 = vmatprep.subr.bf16.mxu0 %v3952
    %4080 = vmatpush1.bf16.msra.mxu0 %v3951
    %4081 = vmatprep.subr.bf16.mxu0 %v3954
    %4082 = vmatpush1.bf16.msra.mxu0 %v3953
    %4083 = vmatprep.subr.bf16.mxu0 %v3956
    %4084 = vmatpush1.bf16.msra.mxu0 %v3955
    %4085 = vmatprep.mubr.bf16.mxu0 %v3172
    %4086 = vmatmul.mubr.bf16.gmra.mrb[0].mxu0 %v3171
    %v4087 = vpop.f32.mrb[0].mxu0
    %v4088 = vadd.f32 %v3726, %v4087
    %v4089 = vpop.f32.mrb[0].mxu0
    %v4090 = vadd.f32 %v3730, %v4089
    %v4091 = vpop.f32.mrb[0].mxu0
    %v4092 = vpop.f32.mrb[0].mxu0
    %4093 = vdwg.mxu0
    %4094 = vmatprep.subr.bf16.mxu0 %v3958
    %4095 = vmatpush1.bf16.msra.mxu0 %v3957
    %4096 = vmatprep.subr.bf16.mxu0 %v3960
    %4097 = vmatpush1.bf16.msra.mxu0 %v3959
    %4098 = vmatprep.subr.bf16.mxu0 %v3962
    %4099 = vmatpush1.bf16.msra.mxu0 %v3961
    %4100 = vmatprep.subr.bf16.mxu0 %v3964
    %4101 = vmatpush1.bf16.msra.mxu0 %v3963
    %4102 = vmatprep.subr.bf16.mxu0 %v3966
    %4103 = vmatpush1.bf16.msra.mxu0 %v3965
    %4104 = vmatprep.subr.bf16.mxu0 %v3968
    %4105 = vmatpush1.bf16.msra.mxu0 %v3967
    %4106 = vmatprep.subr.bf16.mxu0 %v3970
    %4107 = vmatpush1.bf16.msra.mxu0 %v3969
    %4108 = vmatprep.subr.bf16.mxu0 %v3972
    %4109 = vmatpush1.bf16.msra.mxu0 %v3971
    %4110 = vmatprep.subr.bf16.mxu0 %v3974
    %4111 = vmatpush1.bf16.msra.mxu0 %v3973
    %4112 = vmatprep.subr.bf16.mxu0 %v3976
    %4113 = vmatpush1.bf16.msra.mxu0 %v3975
    %4114 = vmatprep.subr.bf16.mxu0 %v3978
    %4115 = vmatpush1.bf16.msra.mxu0 %v3977
    %4116 = vmatprep.subr.bf16.mxu0 %v3980
    %4117 = vmatpush1.bf16.msra.mxu0 %v3979
    %4118 = vmatprep.subr.bf16.mxu0 %v3982
    %4119 = vmatpush1.bf16.msra.mxu0 %v3981
    %4120 = vmatprep.subr.bf16.mxu0 %v3984
    %4121 = vmatpush1.bf16.msra.mxu0 %v3983
    %4122 = vmatprep.subr.bf16.mxu0 %v3986
    %4123 = vmatpush1.bf16.msra.mxu0 %v3985
    %4124 = vmatprep.subr.bf16.mxu0 %v3988
    %4125 = vmatpush1.bf16.msra.mxu0 %v3987
    %4126 = vmatprep.mubr.bf16.mxu0 %v3174
    %4127 = vmatmul.mubr.bf16.gmra.mrb[0].mxu0 %v3173
    %v4128 = vpop.f32.mrb[0].mxu0
    %v4129 = vadd.f32 %v4088, %v4128
    %v4130 = vpop.f32.mrb[0].mxu0
    %v4131 = vadd.f32 %v4090, %v4130
    %v4132 = vpop.f32.mrb[0].mxu0
    %v4133 = vpop.f32.mrb[0].mxu0
    %4134 = vdwg.mxu0
    %v4135 = vmax.f32 %v4129, 0.0
    %v4136 = vmax.f32 %v4131, 0.0
    %v4137 = vpack.c.bf16 %v4135, %v4135
    %v4138 = vpack.c.bf16 %v4136, %v4136
    %v4139 = vld [vmem:[%s8] sm:$0xf]
    %v4140 = vld [vmem:[%s8 + $0x4] sm:$0xf]
    %v4141 = vld [vmem:[%s8 + $0x8] sm:$0xf]
    %v4142 = vld [vmem:[%s8 + $0xc] sm:$0xf]
    %v4143 = vld [vmem:[%s8 + $0x10] sm:$0xf]
    %v4144 = vld [vmem:[%s8 + $0x14] sm:$0xf]
    %v4145 = vld [vmem:[%s8 + $0x18] sm:$0xf]
    %v4146 = vld [vmem:[%s8 + $0x1c] sm:$0xf]
    %v4147 = vld [vmem:[%s8 + $0x20] sm:$0xf]
    %v4148 = vld [vmem:[%s8 + $0x24] sm:$0xf]
    %v4149 = vld [vmem:[%s8 + $0x28] sm:$0xf]
    %v4150 = vld [vmem:[%s8 + $0x2c] sm:$0xf]
    %v4151 = vld [vmem:[%s8 + $0x30] sm:$0xf]
    %v4152 = vld [vmem:[%s8 + $0x34] sm:$0xf]
    %v4153 = vld [vmem:[%s8 + $0x38] sm:$0xf]
    %v4154 = vld [vmem:[%s8 + $0x3c] sm:$0xf]
    %v4155 = vld [vmem:[%s8 + $0x40] sm:$0xf]
    %v4156 = vld [vmem:[%s8 + $0x44] sm:$0xf]
    %v4157 = vld [vmem:[%s8 + $0x48] sm:$0xf]
    %v4158 = vld [vmem:[%s8 + $0x4c] sm:$0xf]
    %v4159 = vld [vmem:[%s8 + $0x50] sm:$0xf]
    %v4160 = vld [vmem:[%s8 + $0x54] sm:$0xf]
    %v4161 = vld [vmem:[%s8 + $0x58] sm:$0xf]
    %v4162 = vld [vmem:[%s8 + $0x5c] sm:$0xf]
    %v4163 = vld [vmem:[%s8 + $0x60] sm:$0xf]
    %v4164 = vld [vmem:[%s8 + $0x64] sm:$0xf]
    %v4165 = vld [vmem:[%s8 + $0x68] sm:$0xf]
    %v4166 = vld [vmem:[%s8 + $0x6c] sm:$0xf]
    %v4167 = vld [vmem:[%s8 + $0x70] sm:$0xf]
    %v4168 = vld [vmem:[%s8 + $0x74] sm:$0xf]
    %v4169 = vld [vmem:[%s8 + $0x78] sm:$0xf]
    %v4170 = vld [vmem:[%s8 + $0x7c] sm:$0xf]
    %v4171 = vld [vmem:[%s9] sm:$0x1]
    %v4173 = vlaneseq
    %v4174 = vshrl.u32 %v4173, 7
    %v4175 = vsub.s32 0, %v4174
    %v4176 = vrot.slane %v4171, %v4175
    %v4210 = vunpack.c.l.b16 %v4139
    %v4211 = vunpack.c.l.b16 %v4140
    %v4212 = vunpack.c.l.b16 %v4141
    %v4213 = vunpack.c.l.b16 %v4142
    %v4214 = vunpack.c.l.b16 %v4143
    %v4215 = vunpack.c.l.b16 %v4144
    %v4216 = vunpack.c.l.b16 %v4145
    %v4217 = vunpack.c.l.b16 %v4146
    %v4218 = vunpack.c.l.b16 %v4147
    %v4219 = vunpack.c.l.b16 %v4148
    %v4220 = vunpack.c.l.b16 %v4149
    %v4221 = vunpack.c.l.b16 %v4150
    %v4222 = vunpack.c.l.b16 %v4151
    %v4223 = vunpack.c.l.b16 %v4152
    %v4224 = vunpack.c.l.b16 %v4153
    %v4225 = vunpack.c.l.b16 %v4154
    %v4226 = vunpack.c.l.b16 %v4155
    %v4227 = vunpack.c.l.b16 %v4156
    %v4228 = vunpack.c.l.b16 %v4157
    %v4229 = vunpack.c.l.b16 %v4158
    %v4230 = vunpack.c.l.b16 %v4159
    %v4231 = vunpack.c.l.b16 %v4160
    %v4232 = vunpack.c.l.b16 %v4161
    %v4233 = vunpack.c.l.b16 %v4162
    %v4234 = vunpack.c.l.b16 %v4163
    %v4235 = vunpack.c.l.b16 %v4164
    %v4236 = vunpack.c.l.b16 %v4165
    %v4237 = vunpack.c.l.b16 %v4166
    %v4238 = vunpack.c.l.b16 %v4167
    %v4239 = vunpack.c.l.b16 %v4168
    %v4240 = vunpack.c.l.b16 %v4169
    %v4241 = vunpack.c.l.b16 %v4170
    %v4242 = vpack.c.b16 %v4211, %v4210
    %v4243 = vpack.c.b16 %v4213, %v4212
    %v4244 = vpack.c.b16 %v4215, %v4214
    %v4245 = vpack.c.b16 %v4217, %v4216
    %v4246 = vpack.c.b16 %v4219, %v4218
    %v4247 = vpack.c.b16 %v4221, %v4220
    %v4248 = vpack.c.b16 %v4223, %v4222
    %v4249 = vpack.c.b16 %v4225, %v4224
    %v4250 = vpack.c.b16 %v4227, %v4226
    %v4251 = vpack.c.b16 %v4229, %v4228
    %v4252 = vpack.c.b16 %v4231, %v4230
    %v4253 = vpack.c.b16 %v4233, %v4232
    %v4254 = vpack.c.b16 %v4235, %v4234
    %v4255 = vpack.c.b16 %v4237, %v4236
    %v4256 = vpack.c.b16 %v4239, %v4238
    %v4257 = vpack.c.b16 %v4241, %v4240
    %4274 = vmatprep.subr.bf16.mxu0 0
    %4275 = vmatpush1.bf16.msra.mxu0 %v4242
    %4276 = vmatprep.subr.bf16.mxu0 0
    %4277 = vmatpush1.bf16.msra.mxu0 %v4243
    %4278 = vmatprep.subr.bf16.mxu0 0
    %4279 = vmatpush1.bf16.msra.mxu0 %v4244
    %4280 = vmatprep.subr.bf16.mxu0 0
    %4281 = vmatpush1.bf16.msra.mxu0 %v4245
    %4282 = vmatprep.subr.bf16.mxu0 0
    %4283 = vmatpush1.bf16.msra.mxu0 %v4246
    %4284 = vmatprep.subr.bf16.mxu0 0
    %4285 = vmatpush1.bf16.msra.mxu0 %v4247
    %4286 = vmatprep.subr.bf16.mxu0 0
    %4287 = vmatpush1.bf16.msra.mxu0 %v4248
    %4288 = vmatprep.subr.bf16.mxu0 0
    %4289 = vmatpush1.bf16.msra.mxu0 %v4249
    %4290 = vmatprep.subr.bf16.mxu0 0
    %4291 = vmatpush1.bf16.msra.mxu0 %v4250
    %4292 = vmatprep.subr.bf16.mxu0 0
    %4293 = vmatpush1.bf16.msra.mxu0 %v4251
    %4294 = vmatprep.subr.bf16.mxu0 0
    %4295 = vmatpush1.bf16.msra.mxu0 %v4252
    %4296 = vmatprep.subr.bf16.mxu0 0
    %4297 = vmatpush1.bf16.msra.mxu0 %v4253
    %4298 = vmatprep.subr.bf16.mxu0 0
    %4299 = vmatpush1.bf16.msra.mxu0 %v4254
    %4300 = vmatprep.subr.bf16.mxu0 0
    %4301 = vmatpush1.bf16.msra.mxu0 %v4255
    %4302 = vmatprep.subr.bf16.mxu0 0
    %4303 = vmatpush1.bf16.msra.mxu0 %v4256
    %4304 = vmatprep.subr.bf16.mxu0 0
    %4305 = vmatpush1.bf16.msra.mxu0 %v4257
    %4306 = vmatprep.mubr.bf16.mxu0 %v3656
    %4307 = vmatmul.mubr.bf16.gmra.mrb[0].mxu0 %v3655
    %v4308 = vpop.f32.mrb[0].mxu0
    %v4309 = vadd.f32 %v4176, %v4308
    %v4310 = vpop.f32.mrb[0].mxu0
    %v4311 = vpop.f32.mrb[0].mxu0
    %v4312 = vpop.f32.mrb[0].mxu0
    %4313 = vdwg.mxu0
    %v4314 = vld [vmem:[%s10] sm:$0xf]
    %v4315 = vld [vmem:[%s10 + $0x4] sm:$0xf]
    %v4316 = vld [vmem:[%s10 + $0x8] sm:$0xf]
    %v4317 = vld [vmem:[%s10 + $0xc] sm:$0xf]
    %v4318 = vld [vmem:[%s10 + $0x10] sm:$0xf]
    %v4319 = vld [vmem:[%s10 + $0x14] sm:$0xf]
    %v4320 = vld [vmem:[%s10 + $0x18] sm:$0xf]
    %v4321 = vld [vmem:[%s10 + $0x1c] sm:$0xf]
    %v4322 = vld [vmem:[%s10 + $0x20] sm:$0xf]
    %v4323 = vld [vmem:[%s10 + $0x24] sm:$0xf]
    %v4324 = vld [vmem:[%s10 + $0x28] sm:$0xf]
    %v4325 = vld [vmem:[%s10 + $0x2c] sm:$0xf]
    %v4326 = vld [vmem:[%s10 + $0x30] sm:$0xf]
    %v4327 = vld [vmem:[%s10 + $0x34] sm:$0xf]
    %v4328 = vld [vmem:[%s10 + $0x38] sm:$0xf]
    %v4329 = vld [vmem:[%s10 + $0x3c] sm:$0xf]
    %v4330 = vld [vmem:[%s10 + $0x40] sm:$0xf]
    %v4331 = vld [vmem:[%s10 + $0x44] sm:$0xf]
    %v4332 = vld [vmem:[%s10 + $0x48] sm:$0xf]
    %v4333 = vld [vmem:[%s10 + $0x4c] sm:$0xf]
    %v4334 = vld [vmem:[%s10 + $0x50] sm:$0xf]
    %v4335 = vld [vmem:[%s10 + $0x54] sm:$0xf]
    %v4336 = vld [vmem:[%s10 + $0x58] sm:$0xf]
    %v4337 = vld [vmem:[%s10 + $0x5c] sm:$0xf]
    %v4338 = vld [vmem:[%s10 + $0x60] sm:$0xf]
    %v4339 = vld [vmem:[%s10 + $0x64] sm:$0xf]
    %v4340 = vld [vmem:[%s10 + $0x68] sm:$0xf]
    %v4341 = vld [vmem:[%s10 + $0x6c] sm:$0xf]
    %v4342 = vld [vmem:[%s10 + $0x70] sm:$0xf]
    %v4343 = vld [vmem:[%s10 + $0x74] sm:$0xf]
    %v4344 = vld [vmem:[%s10 + $0x78] sm:$0xf]
    %v4345 = vld [vmem:[%s10 + $0x7c] sm:$0xf]
    %v4346 = vld [vmem:[%s11] sm:$0x1]
    %v4348 = vlaneseq
    %v4349 = vshrl.u32 %v4348, 7
    %v4350 = vsub.s32 0, %v4349
    %v4351 = vrot.slane %v4346, %v4350
    %v4385 = vunpack.c.l.b16 %v4314
    %v4386 = vunpack.c.l.b16 %v4315
    %v4387 = vunpack.c.l.b16 %v4316
    %v4388 = vunpack.c.l.b16 %v4317
    %v4389 = vunpack.c.l.b16 %v4318
    %v4390 = vunpack.c.l.b16 %v4319
    %v4391 = vunpack.c.l.b16 %v4320
    %v4392 = vunpack.c.l.b16 %v4321
    %v4393 = vunpack.c.l.b16 %v4322
    %v4394 = vunpack.c.l.b16 %v4323
    %v4395 = vunpack.c.l.b16 %v4324
    %v4396 = vunpack.c.l.b16 %v4325
    %v4397 = vunpack.c.l.b16 %v4326
    %v4398 = vunpack.c.l.b16 %v4327
    %v4399 = vunpack.c.l.b16 %v4328
    %v4400 = vunpack.c.l.b16 %v4329
    %v4401 = vunpack.c.l.b16 %v4330
    %v4402 = vunpack.c.l.b16 %v4331
    %v4403 = vunpack.c.l.b16 %v4332
    %v4404 = vunpack.c.l.b16 %v4333
    %v4405 = vunpack.c.l.b16 %v4334
    %v4406 = vunpack.c.l.b16 %v4335
    %v4407 = vunpack.c.l.b16 %v4336
    %v4408 = vunpack.c.l.b16 %v4337
    %v4409 = vunpack.c.l.b16 %v4338
    %v4410 = vunpack.c.l.b16 %v4339
    %v4411 = vunpack.c.l.b16 %v4340
    %v4412 = vunpack.c.l.b16 %v4341
    %v4413 = vunpack.c.l.b16 %v4342
    %v4414 = vunpack.c.l.b16 %v4343
    %v4415 = vunpack.c.l.b16 %v4344
    %v4416 = vunpack.c.l.b16 %v4345
    %v4417 = vpack.c.b16 %v4386, %v4385
    %v4418 = vpack.c.b16 %v4388, %v4387
    %v4419 = vpack.c.b16 %v4390, %v4389
    %v4420 = vpack.c.b16 %v4392, %v4391
    %v4421 = vpack.c.b16 %v4394, %v4393
    %v4422 = vpack.c.b16 %v4396, %v4395
    %v4423 = vpack.c.b16 %v4398, %v4397
    %v4424 = vpack.c.b16 %v4400, %v4399
    %v4425 = vpack.c.b16 %v4402, %v4401
    %v4426 = vpack.c.b16 %v4404, %v4403
    %v4427 = vpack.c.b16 %v4406, %v4405
    %v4428 = vpack.c.b16 %v4408, %v4407
    %v4429 = vpack.c.b16 %v4410, %v4409
    %v4430 = vpack.c.b16 %v4412, %v4411
    %v4431 = vpack.c.b16 %v4414, %v4413
    %v4432 = vpack.c.b16 %v4416, %v4415
    %4449 = vmatprep.subr.bf16.mxu0 0
    %4450 = vmatpush1.bf16.msra.mxu0 %v4417
    %4451 = vmatprep.subr.bf16.mxu0 0
    %4452 = vmatpush1.bf16.msra.mxu0 %v4418
    %4453 = vmatprep.subr.bf16.mxu0 0
    %4454 = vmatpush1.bf16.msra.mxu0 %v4419
    %4455 = vmatprep.subr.bf16.mxu0 0
    %4456 = vmatpush1.bf16.msra.mxu0 %v4420
    %4457 = vmatprep.subr.bf16.mxu0 0
    %4458 = vmatpush1.bf16.msra.mxu0 %v4421
    %4459 = vmatprep.subr.bf16.mxu0 0
    %4460 = vmatpush1.bf16.msra.mxu0 %v4422
    %4461 = vmatprep.subr.bf16.mxu0 0
    %4462 = vmatpush1.bf16.msra.mxu0 %v4423
    %4463 = vmatprep.subr.bf16.mxu0 0
    %4464 = vmatpush1.bf16.msra.mxu0 %v4424
    %4465 = vmatprep.subr.bf16.mxu0 0
    %4466 = vmatpush1.bf16.msra.mxu0 %v4425
    %4467 = vmatprep.subr.bf16.mxu0 0
    %4468 = vmatpush1.bf16.msra.mxu0 %v4426
    %4469 = vmatprep.subr.bf16.mxu0 0
    %4470 = vmatpush1.bf16.msra.mxu0 %v4427
    %4471 = vmatprep.subr.bf16.mxu0 0
    %4472 = vmatpush1.bf16.msra.mxu0 %v4428
    %4473 = vmatprep.subr.bf16.mxu0 0
    %4474 = vmatpush1.bf16.msra.mxu0 %v4429
    %4475 = vmatprep.subr.bf16.mxu0 0
    %4476 = vmatpush1.bf16.msra.mxu0 %v4430
    %4477 = vmatprep.subr.bf16.mxu0 0
    %4478 = vmatpush1.bf16.msra.mxu0 %v4431
    %4479 = vmatprep.subr.bf16.mxu0 0
    %4480 = vmatpush1.bf16.msra.mxu0 %v4432
    %4481 = vmatprep.mubr.bf16.mxu0 %v4138
    %4482 = vmatmul.mubr.bf16.gmra.mrb[0].mxu0 %v4137
    %v4483 = vpop.f32.mrb[0].mxu0
    %v4484 = vadd.f32 %v4351, %v4483
    %v4485 = vpop.f32.mrb[0].mxu0
    %v4486 = vpop.f32.mrb[0].mxu0
    %v4487 = vpop.f32.mrb[0].mxu0
    %4488 = vdwg.mxu0
    %vm4489 = vcmp.gt.f32.partialorder %v4484, 20.0
    %v4490 = vmin.f32 %v4484, 20.0
    %v4491 = vmul.f32 %v4490, 1.442695
    %v4492 = vpow.pop %v4491
    %v4493 = vadd.f32 %v4492, 1.0
    %v4494 = vlog2.pop %v4493
    %v4495 = vmul.f32 %v4494, 0.6931472
    %v4496 = vmul.f32 -0.5, %v4492
    %v4497 = vadd.f32 %v4496, 1.0
    %v4498 = vmul.f32 %v4497, %v4492
    %v4499 = vand.u32 2147483647, %v4492
    %vm4500 = vcmp.lt.f32.partialorder %v4499, 0.0004427343
    %v4501 = vsel %vm4500, %v4498, %v4495
    %v4502 = vsel %vm4489, %v4484, %v4501
    %v4503 = vld [vmem:[%s1] sm:$0xff]
    %v4504 = vrsqrt.pop %v4502
    %v4505 = vmul.f32 %v4502, %v4504
    %vm4506 = vcmp.eq.f32.partialorder %v4502, inf
    %v4507 = vsel %vm4506, %v4502, %v4505
    %vm4508 = vcmp.eq.f32.partialorder %v4502, 0.0
    %v4509 = vand.u32 %v4502, 2147483648
    %v4510 = vsel %vm4508, %v4509, %v4507
    %v4511 = vmul.f32 %v4503, %v4510
    %v4512 = vadd.f32 %v4309, %v4511
    %v4513 = vpack.c.bf16 %v4512, %v4512
    %v4514 = vld [vmem:[%s12] sm:$0xff]
    %v4515 = vld [vmem:[%s12 + $0x8] sm:$0xff]
    %v4516 = vld [vmem:[%s13] sm:$0xf]
    %v4518 = vlaneseq
    %v4519 = vshrl.u32 %v4518, 7
    %v4520 = vsub.s32 0, %v4519
    %v4521 = vrot.slane %v4516, %v4520
    %v4522 = vlaneseq
    %v4523 = vshrl.u32 %v4522, 7
    %v4524 = vsub.s32 1, %v4523
    %v4525 = vrot.slane %v4516, %v4524
    %v4526 = vlaneseq
    %v4527 = vshrl.u32 %v4526, 7
    %v4528 = vsub.s32 2, %v4527
    %v4529 = vrot.slane %v4516, %v4528
    %v4530 = vlaneseq
    %v4531 = vshrl.u32 %v4530, 7
    %v4532 = vsub.s32 3, %v4531
    %v4533 = vrot.slane %v4516, %v4532
    %v4540 = vunpack.c.l.b16 %v4514
    %v4541 = vunpack.c.h.b16 %v4514
    %v4542 = vunpack.c.l.b16 %v4515
    %v4543 = vunpack.c.h.b16 %v4515
    %v4544 = vpack.c.b16 %v4540, %v4540
    %v4545 = vpack.c.b16 %v4541, %v4541
    %v4546 = vpack.c.b16 %v4542, %v4542
    %v4547 = vpack.c.b16 %v4543, %v4543
    %vm4548 = vcmask 64512
    %v4550 = vsel %vm4548, %v4513, 0
    %vm4552 = vcmask 1043456
    %v4554 = vsel %vm4552, %v4544, 0
    %v4557 = vsel %vm4552, %v4545, 0
    %v4560 = vsel %vm4552, %v4546, 0
    %v4563 = vsel %vm4552, %v4547, 0
    %4565 = vmatprep.subr.bf16.mxu0 %v4557
    %4566 = vmatpush1.bf16.msra.mxu0 %v4554
    %4567 = vmatprep.subr.bf16.mxu0 0
    %4568 = vmatpush1.bf16.msra.mxu0 0
    %4569 = vmatprep.subr.bf16.mxu0 0
    %4570 = vmatpush1.bf16.msra.mxu0 0
    %4571 = vmatprep.subr.bf16.mxu0 0
    %4572 = vmatpush1.bf16.msra.mxu0 0
    %4573 = vmatprep.subr.bf16.mxu0 0
    %4574 = vmatpush1.bf16.msra.mxu0 0
    %4575 = vmatprep.subr.bf16.mxu0 0
    %4576 = vmatpush1.bf16.msra.mxu0 0
    %4577 = vmatprep.subr.bf16.mxu0 0
    %4578 = vmatpush1.bf16.msra.mxu0 0
    %4579 = vmatprep.subr.bf16.mxu0 0
    %4580 = vmatpush1.bf16.msra.mxu0 0
    %4581 = vmatprep.subr.bf16.mxu0 0
    %4582 = vmatpush1.bf16.msra.mxu0 0
    %4583 = vmatprep.subr.bf16.mxu0 0
    %4584 = vmatpush1.bf16.msra.mxu0 0
    %4585 = vmatprep.subr.bf16.mxu0 0
    %4586 = vmatpush1.bf16.msra.mxu0 0
    %4587 = vmatprep.subr.bf16.mxu0 0
    %4588 = vmatpush1.bf16.msra.mxu0 0
    %4589 = vmatprep.subr.bf16.mxu0 0
    %4590 = vmatpush1.bf16.msra.mxu0 0
    %4591 = vmatprep.subr.bf16.mxu0 0
    %4592 = vmatpush1.bf16.msra.mxu0 0
    %4593 = vmatprep.subr.bf16.mxu0 0
    %4594 = vmatpush1.bf16.msra.mxu0 0
    %4595 = vmatprep.subr.bf16.mxu0 0
    %4596 = vmatpush1.bf16.msra.mxu0 0
    %4597 = vmatprep.mubr.bf16.mxu0 0
    %4598 = vmatmul.mubr.bf16.gmra.mrb[0].mxu0 %v4550
    %v4599 = vpop.f32.mrb[0].mxu0
    %v4600 = vadd.f32 %v4521, %v4599
    %v4601 = vpop.f32.mrb[0].mxu0
    %v4602 = vadd.f32 %v4525, %v4601
    %v4603 = vpop.f32.mrb[0].mxu0
    %v4604 = vpop.f32.mrb[0].mxu0
    %4605 = vdwg.mxu0
    %4606 = vmatprep.subr.bf16.mxu0 %v4563
    %4607 = vmatpush1.bf16.msra.mxu0 %v4560
    %4608 = vmatprep.subr.bf16.mxu0 0
    %4609 = vmatpush1.bf16.msra.mxu0 0
    %4610 = vmatprep.subr.bf16.mxu0 0
    %4611 = vmatpush1.bf16.msra.mxu0 0
    %4612 = vmatprep.subr.bf16.mxu0 0
    %4613 = vmatpush1.bf16.msra.mxu0 0
    %4614 = vmatprep.subr.bf16.mxu0 0
    %4615 = vmatpush1.bf16.msra.mxu0 0
    %4616 = vmatprep.subr.bf16.mxu0 0
    %4617 = vmatpush1.bf16.msra.mxu0 0
    %4618 = vmatprep.subr.bf16.mxu0 0
    %4619 = vmatpush1.bf16.msra.mxu0 0
    %4620 = vmatprep.subr.bf16.mxu0 0
    %4621 = vmatpush1.bf16.msra.mxu0 0
    %4622 = vmatprep.subr.bf16.mxu0 0
    %4623 = vmatpush1.bf16.msra.mxu0 0
    %4624 = vmatprep.subr.bf16.mxu0 0
    %4625 = vmatpush1.bf16.msra.mxu0 0
    %4626 = vmatprep.subr.bf16.mxu0 0
    %4627 = vmatpush1.bf16.msra.mxu0 0
    %4628 = vmatprep.subr.bf16.mxu0 0
    %4629 = vmatpush1.bf16.msra.mxu0 0
    %4630 = vmatprep.subr.bf16.mxu0 0
    %4631 = vmatpush1.bf16.msra.mxu0 0
    %4632 = vmatprep.subr.bf16.mxu0 0
    %4633 = vmatpush1.bf16.msra.mxu0 0
    %4634 = vmatprep.subr.bf16.mxu0 0
    %4635 = vmatpush1.bf16.msra.mxu0 0
    %4636 = vmatprep.subr.bf16.mxu0 0
    %4637 = vmatpush1.bf16.msra.mxu0 0
    %4638 = vmatprep.mubr.bf16.mxu0 0
    %4639 = vmatmul.mubr.bf16.gmra.mrb[0].mxu0 %v4550
    %v4640 = vpop.f32.mrb[0].mxu0
    %v4641 = vadd.f32 %v4529, %v4640
    %v4642 = vpop.f32.mrb[0].mxu0
    %v4643 = vadd.f32 %v4533, %v4642
    %v4644 = vpop.f32.mrb[0].mxu0
    %v4645 = vpop.f32.mrb[0].mxu0
    %4646 = vdwg.mxu0
    %v4647 = vmax.f32 %v4600, 0.0
    %v4648 = vmax.f32 %v4602, 0.0
    %v4649 = vmax.f32 %v4641, 0.0
    %v4650 = vmax.f32 %v4643, 0.0
    %v4651 = vpack.c.bf16 %v4647, %v4647
    %v4652 = vpack.c.bf16 %v4648, %v4648
    %v4653 = vpack.c.bf16 %v4649, %v4649
    %v4654 = vpack.c.bf16 %v4650, %v4650
    %v4655 = vld [vmem:[%s14] sm:$0xff]
    %v4656 = vld [vmem:[%s14 + $0x8] sm:$0xff]
    %v4657 = vld [vmem:[%s14 + $0x10] sm:$0xff]
    %v4658 = vld [vmem:[%s14 + $0x18] sm:$0xff]
    %v4659 = vld [vmem:[%s14 + $0x20] sm:$0xff]
    %v4660 = vld [vmem:[%s14 + $0x28] sm:$0xff]
    %v4661 = vld [vmem:[%s14 + $0x30] sm:$0xff]
    %v4662 = vld [vmem:[%s14 + $0x38] sm:$0xff]
    %v4663 = vld [vmem:[%s14 + $0x40] sm:$0xff]
    %v4664 = vld [vmem:[%s14 + $0x48] sm:$0xff]
    %v4665 = vld [vmem:[%s14 + $0x50] sm:$0xff]
    %v4666 = vld [vmem:[%s14 + $0x58] sm:$0xff]
    %v4667 = vld [vmem:[%s14 + $0x60] sm:$0xff]
    %v4668 = vld [vmem:[%s14 + $0x68] sm:$0xff]
    %v4669 = vld [vmem:[%s14 + $0x70] sm:$0xff]
    %v4670 = vld [vmem:[%s14 + $0x78] sm:$0xff]
    %v4671 = vld [vmem:[%s14 + $0x80] sm:$0xff]
    %v4672 = vld [vmem:[%s14 + $0x88] sm:$0xff]
    %v4673 = vld [vmem:[%s14 + $0x90] sm:$0xff]
    %v4674 = vld [vmem:[%s14 + $0x98] sm:$0xff]
    %v4675 = vld [vmem:[%s14 + $0xa0] sm:$0xff]
    %v4676 = vld [vmem:[%s14 + $0xa8] sm:$0xff]
    %v4677 = vld [vmem:[%s14 + $0xb0] sm:$0xff]
    %v4678 = vld [vmem:[%s14 + $0xb8] sm:$0xff]
    %v4679 = vld [vmem:[%s14 + $0xc0] sm:$0xff]
    %v4680 = vld [vmem:[%s14 + $0xc8] sm:$0xff]
    %v4681 = vld [vmem:[%s14 + $0xd0] sm:$0xff]
    %v4682 = vld [vmem:[%s14 + $0xd8] sm:$0xff]
    %v4683 = vld [vmem:[%s14 + $0xe0] sm:$0xff]
    %v4684 = vld [vmem:[%s14 + $0xe8] sm:$0xff]
    %v4685 = vld [vmem:[%s14 + $0xf0] sm:$0xff]
    %v4686 = vld [vmem:[%s14 + $0xf8] sm:$0xff]
    %v4687 = vld [vmem:[%s14 + $0x100] sm:$0xff]
    %v4688 = vld [vmem:[%s14 + $0x108] sm:$0xff]
    %v4689 = vld [vmem:[%s14 + $0x110] sm:$0xff]
    %v4690 = vld [vmem:[%s14 + $0x118] sm:$0xff]
    %v4691 = vld [vmem:[%s14 + $0x120] sm:$0xff]
    %v4692 = vld [vmem:[%s14 + $0x128] sm:$0xff]
    %v4693 = vld [vmem:[%s14 + $0x130] sm:$0xff]
    %v4694 = vld [vmem:[%s14 + $0x138] sm:$0xff]
    %v4695 = vld [vmem:[%s14 + $0x140] sm:$0xff]
    %v4696 = vld [vmem:[%s14 + $0x148] sm:$0xff]
    %v4697 = vld [vmem:[%s14 + $0x150] sm:$0xff]
    %v4698 = vld [vmem:[%s14 + $0x158] sm:$0xff]
    %v4699 = vld [vmem:[%s14 + $0x160] sm:$0xff]
    %v4700 = vld [vmem:[%s14 + $0x168] sm:$0xff]
    %v4701 = vld [vmem:[%s14 + $0x170] sm:$0xff]
    %v4702 = vld [vmem:[%s14 + $0x178] sm:$0xff]
    %v4703 = vld [vmem:[%s14 + $0x180] sm:$0xff]
    %v4704 = vld [vmem:[%s14 + $0x188] sm:$0xff]
    %v4705 = vld [vmem:[%s14 + $0x190] sm:$0xff]
    %v4706 = vld [vmem:[%s14 + $0x198] sm:$0xff]
    %v4707 = vld [vmem:[%s14 + $0x1a0] sm:$0xff]
    %v4708 = vld [vmem:[%s14 + $0x1a8] sm:$0xff]
    %v4709 = vld [vmem:[%s14 + $0x1b0] sm:$0xff]
    %v4710 = vld [vmem:[%s14 + $0x1b8] sm:$0xff]
    %v4711 = vld [vmem:[%s14 + $0x1c0] sm:$0xff]
    %v4712 = vld [vmem:[%s14 + $0x1c8] sm:$0xff]
    %v4713 = vld [vmem:[%s14 + $0x1d0] sm:$0xff]
    %v4714 = vld [vmem:[%s14 + $0x1d8] sm:$0xff]
    %v4715 = vld [vmem:[%s14 + $0x1e0] sm:$0xff]
    %v4716 = vld [vmem:[%s14 + $0x1e8] sm:$0xff]
    %v4717 = vld [vmem:[%s14 + $0x1f0] sm:$0xff]
    %v4718 = vld [vmem:[%s14 + $0x1f8] sm:$0xff]
    %v4719 = vld [vmem:[%s15] sm:$0xf]
    %v4721 = vlaneseq
    %v4722 = vshrl.u32 %v4721, 7
    %v4723 = vsub.s32 0, %v4722
    %v4724 = vrot.slane %v4719, %v4723
    %v4725 = vlaneseq
    %v4726 = vshrl.u32 %v4725, 7
    %v4727 = vsub.s32 1, %v4726
    %v4728 = vrot.slane %v4719, %v4727
    %v4729 = vlaneseq
    %v4730 = vshrl.u32 %v4729, 7
    %v4731 = vsub.s32 2, %v4730
    %v4732 = vrot.slane %v4719, %v4731
    %v4733 = vlaneseq
    %v4734 = vshrl.u32 %v4733, 7
    %v4735 = vsub.s32 3, %v4734
    %v4736 = vrot.slane %v4719, %v4735
    %v4805 = vunpack.c.l.b16 %v4655
    %v4806 = vunpack.c.h.b16 %v4655
    %v4807 = vunpack.c.l.b16 %v4656
    %v4808 = vunpack.c.h.b16 %v4656
    %v4809 = vunpack.c.l.b16 %v4657
    %v4810 = vunpack.c.h.b16 %v4657
    %v4811 = vunpack.c.l.b16 %v4658
    %v4812 = vunpack.c.h.b16 %v4658
    %v4813 = vunpack.c.l.b16 %v4659
    %v4814 = vunpack.c.h.b16 %v4659
    %v4815 = vunpack.c.l.b16 %v4660
    %v4816 = vunpack.c.h.b16 %v4660
    %v4817 = vunpack.c.l.b16 %v4661
    %v4818 = vunpack.c.h.b16 %v4661
    %v4819 = vunpack.c.l.b16 %v4662
    %v4820 = vunpack.c.h.b16 %v4662
    %v4821 = vunpack.c.l.b16 %v4663
    %v4822 = vunpack.c.h.b16 %v4663
    %v4823 = vunpack.c.l.b16 %v4664
    %v4824 = vunpack.c.h.b16 %v4664
    %v4825 = vunpack.c.l.b16 %v4665
    %v4826 = vunpack.c.h.b16 %v4665
    %v4827 = vunpack.c.l.b16 %v4666
    %v4828 = vunpack.c.h.b16 %v4666
    %v4829 = vunpack.c.l.b16 %v4667
    %v4830 = vunpack.c.h.b16 %v4667
    %v4831 = vunpack.c.l.b16 %v4668
    %v4832 = vunpack.c.h.b16 %v4668
    %v4833 = vunpack.c.l.b16 %v4669
    %v4834 = vunpack.c.h.b16 %v4669
    %v4835 = vunpack.c.l.b16 %v4670
    %v4836 = vunpack.c.h.b16 %v4670
    %v4837 = vunpack.c.l.b16 %v4671
    %v4838 = vunpack.c.h.b16 %v4671
    %v4839 = vunpack.c.l.b16 %v4672
    %v4840 = vunpack.c.h.b16 %v4672
    %v4841 = vunpack.c.l.b16 %v4673
    %v4842 = vunpack.c.h.b16 %v4673
    %v4843 = vunpack.c.l.b16 %v4674
    %v4844 = vunpack.c.h.b16 %v4674
    %v4845 = vunpack.c.l.b16 %v4675
    %v4846 = vunpack.c.h.b16 %v4675
    %v4847 = vunpack.c.l.b16 %v4676
    %v4848 = vunpack.c.h.b16 %v4676
    %v4849 = vunpack.c.l.b16 %v4677
    %v4850 = vunpack.c.h.b16 %v4677
    %v4851 = vunpack.c.l.b16 %v4678
    %v4852 = vunpack.c.h.b16 %v4678
    %v4853 = vunpack.c.l.b16 %v4679
    %v4854 = vunpack.c.h.b16 %v4679
    %v4855 = vunpack.c.l.b16 %v4680
    %v4856 = vunpack.c.h.b16 %v4680
    %v4857 = vunpack.c.l.b16 %v4681
    %v4858 = vunpack.c.h.b16 %v4681
    %v4859 = vunpack.c.l.b16 %v4682
    %v4860 = vunpack.c.h.b16 %v4682
    %v4861 = vunpack.c.l.b16 %v4683
    %v4862 = vunpack.c.h.b16 %v4683
    %v4863 = vunpack.c.l.b16 %v4684
    %v4864 = vunpack.c.h.b16 %v4684
    %v4865 = vunpack.c.l.b16 %v4685
    %v4866 = vunpack.c.h.b16 %v4685
    %v4867 = vunpack.c.l.b16 %v4686
    %v4868 = vunpack.c.h.b16 %v4686
    %v4869 = vunpack.c.l.b16 %v4687
    %v4870 = vunpack.c.h.b16 %v4687
    %v4871 = vunpack.c.l.b16 %v4688
    %v4872 = vunpack.c.h.b16 %v4688
    %v4873 = vunpack.c.l.b16 %v4689
    %v4874 = vunpack.c.h.b16 %v4689
    %v4875 = vunpack.c.l.b16 %v4690
    %v4876 = vunpack.c.h.b16 %v4690
    %v4877 = vunpack.c.l.b16 %v4691
    %v4878 = vunpack.c.h.b16 %v4691
    %v4879 = vunpack.c.l.b16 %v4692
    %v4880 = vunpack.c.h.b16 %v4692
    %v4881 = vunpack.c.l.b16 %v4693
    %v4882 = vunpack.c.h.b16 %v4693
    %v4883 = vunpack.c.l.b16 %v4694
    %v4884 = vunpack.c.h.b16 %v4694
    %v4885 = vunpack.c.l.b16 %v4695
    %v4886 = vunpack.c.h.b16 %v4695
    %v4887 = vunpack.c.l.b16 %v4696
    %v4888 = vunpack.c.h.b16 %v4696
    %v4889 = vunpack.c.l.b16 %v4697
    %v4890 = vunpack.c.h.b16 %v4697
    %v4891 = vunpack.c.l.b16 %v4698
    %v4892 = vunpack.c.h.b16 %v4698
    %v4893 = vunpack.c.l.b16 %v4699
    %v4894 = vunpack.c.h.b16 %v4699
    %v4895 = vunpack.c.l.b16 %v4700
    %v4896 = vunpack.c.h.b16 %v4700
    %v4897 = vunpack.c.l.b16 %v4701
    %v4898 = vunpack.c.h.b16 %v4701
    %v4899 = vunpack.c.l.b16 %v4702
    %v4900 = vunpack.c.h.b16 %v4702
    %v4901 = vunpack.c.l.b16 %v4703
    %v4902 = vunpack.c.h.b16 %v4703
    %v4903 = vunpack.c.l.b16 %v4704
    %v4904 = vunpack.c.h.b16 %v4704
    %v4905 = vunpack.c.l.b16 %v4705
    %v4906 = vunpack.c.h.b16 %v4705
    %v4907 = vunpack.c.l.b16 %v4706
    %v4908 = vunpack.c.h.b16 %v4706
    %v4909 = vunpack.c.l.b16 %v4707
    %v4910 = vunpack.c.h.b16 %v4707
    %v4911 = vunpack.c.l.b16 %v4708
    %v4912 = vunpack.c.h.b16 %v4708
    %v4913 = vunpack.c.l.b16 %v4709
    %v4914 = vunpack.c.h.b16 %v4709
    %v4915 = vunpack.c.l.b16 %v4710
    %v4916 = vunpack.c.h.b16 %v4710
    %v4917 = vunpack.c.l.b16 %v4711
    %v4918 = vunpack.c.h.b16 %v4711
    %v4919 = vunpack.c.l.b16 %v4712
    %v4920 = vunpack.c.h.b16 %v4712
    %v4921 = vunpack.c.l.b16 %v4713
    %v4922 = vunpack.c.h.b16 %v4713
    %v4923 = vunpack.c.l.b16 %v4714
    %v4924 = vunpack.c.h.b16 %v4714
    %v4925 = vunpack.c.l.b16 %v4715
    %v4926 = vunpack.c.h.b16 %v4715
    %v4927 = vunpack.c.l.b16 %v4716
    %v4928 = vunpack.c.h.b16 %v4716
    %v4929 = vunpack.c.l.b16 %v4717
    %v4930 = vunpack.c.h.b16 %v4717
    %v4931 = vunpack.c.l.b16 %v4718
    %v4932 = vunpack.c.h.b16 %v4718
    %v4933 = vpack.c.b16 %v4809, %v4805
    %v4934 = vpack.c.b16 %v4810, %v4806
    %v4935 = vpack.c.b16 %v4811, %v4807
    %v4936 = vpack.c.b16 %v4812, %v4808
    %v4937 = vpack.c.b16 %v4817, %v4813
    %v4938 = vpack.c.b16 %v4818, %v4814
    %v4939 = vpack.c.b16 %v4819, %v4815
    %v4940 = vpack.c.b16 %v4820, %v4816
    %v4941 = vpack.c.b16 %v4825, %v4821
    %v4942 = vpack.c.b16 %v4826, %v4822
    %v4943 = vpack.c.b16 %v4827, %v4823
    %v4944 = vpack.c.b16 %v4828, %v4824
    %v4945 = vpack.c.b16 %v4833, %v4829
    %v4946 = vpack.c.b16 %v4834, %v4830
    %v4947 = vpack.c.b16 %v4835, %v4831
    %v4948 = vpack.c.b16 %v4836, %v4832
    %v4949 = vpack.c.b16 %v4841, %v4837
    %v4950 = vpack.c.b16 %v4842, %v4838
    %v4951 = vpack.c.b16 %v4843, %v4839
    %v4952 = vpack.c.b16 %v4844, %v4840
    %v4953 = vpack.c.b16 %v4849, %v4845
    %v4954 = vpack.c.b16 %v4850, %v4846
    %v4955 = vpack.c.b16 %v4851, %v4847
    %v4956 = vpack.c.b16 %v4852, %v4848
    %v4957 = vpack.c.b16 %v4857, %v4853
    %v4958 = vpack.c.b16 %v4858, %v4854
    %v4959 = vpack.c.b16 %v4859, %v4855
    %v4960 = vpack.c.b16 %v4860, %v4856
    %v4961 = vpack.c.b16 %v4865, %v4861
    %v4962 = vpack.c.b16 %v4866, %v4862
    %v4963 = vpack.c.b16 %v4867, %v4863
    %v4964 = vpack.c.b16 %v4868, %v4864
    %v4965 = vpack.c.b16 %v4873, %v4869
    %v4966 = vpack.c.b16 %v4874, %v4870
    %v4967 = vpack.c.b16 %v4875, %v4871
    %v4968 = vpack.c.b16 %v4876, %v4872
    %v4969 = vpack.c.b16 %v4881, %v4877
    %v4970 = vpack.c.b16 %v4882, %v4878
    %v4971 = vpack.c.b16 %v4883, %v4879
    %v4972 = vpack.c.b16 %v4884, %v4880
    %v4973 = vpack.c.b16 %v4889, %v4885
    %v4974 = vpack.c.b16 %v4890, %v4886
    %v4975 = vpack.c.b16 %v4891, %v4887
    %v4976 = vpack.c.b16 %v4892, %v4888
    %v4977 = vpack.c.b16 %v4897, %v4893
    %v4978 = vpack.c.b16 %v4898, %v4894
    %v4979 = vpack.c.b16 %v4899, %v4895
    %v4980 = vpack.c.b16 %v4900, %v4896
    %v4981 = vpack.c.b16 %v4905, %v4901
    %v4982 = vpack.c.b16 %v4906, %v4902
    %v4983 = vpack.c.b16 %v4907, %v4903
    %v4984 = vpack.c.b16 %v4908, %v4904
    %v4985 = vpack.c.b16 %v4913, %v4909
    %v4986 = vpack.c.b16 %v4914, %v4910
    %v4987 = vpack.c.b16 %v4915, %v4911
    %v4988 = vpack.c.b16 %v4916, %v4912
    %v4989 = vpack.c.b16 %v4921, %v4917
    %v4990 = vpack.c.b16 %v4922, %v4918
    %v4991 = vpack.c.b16 %v4923, %v4919
    %v4992 = vpack.c.b16 %v4924, %v4920
    %v4993 = vpack.c.b16 %v4929, %v4925
    %v4994 = vpack.c.b16 %v4930, %v4926
    %v4995 = vpack.c.b16 %v4931, %v4927
    %v4996 = vpack.c.b16 %v4932, %v4928
    %5061 = vmatprep.subr.bf16.mxu0 %v4934
    %5062 = vmatpush1.bf16.msra.mxu0 %v4933
    %5063 = vmatprep.subr.bf16.mxu0 %v4938
    %5064 = vmatpush1.bf16.msra.mxu0 %v4937
    %5065 = vmatprep.subr.bf16.mxu0 %v4942
    %5066 = vmatpush1.bf16.msra.mxu0 %v4941
    %5067 = vmatprep.subr.bf16.mxu0 %v4946
    %5068 = vmatpush1.bf16.msra.mxu0 %v4945
    %5069 = vmatprep.subr.bf16.mxu0 %v4950
    %5070 = vmatpush1.bf16.msra.mxu0 %v4949
    %5071 = vmatprep.subr.bf16.mxu0 %v4954
    %5072 = vmatpush1.bf16.msra.mxu0 %v4953
    %5073 = vmatprep.subr.bf16.mxu0 %v4958
    %5074 = vmatpush1.bf16.msra.mxu0 %v4957
    %5075 = vmatprep.subr.bf16.mxu0 %v4962
    %5076 = vmatpush1.bf16.msra.mxu0 %v4961
    %5077 = vmatprep.subr.bf16.mxu0 %v4966
    %5078 = vmatpush1.bf16.msra.mxu0 %v4965
    %5079 = vmatprep.subr.bf16.mxu0 %v4970
    %5080 = vmatpush1.bf16.msra.mxu0 %v4969
    %5081 = vmatprep.subr.bf16.mxu0 %v4974
    %5082 = vmatpush1.bf16.msra.mxu0 %v4973
    %5083 = vmatprep.subr.bf16.mxu0 %v4978
    %5084 = vmatpush1.bf16.msra.mxu0 %v4977
    %5085 = vmatprep.subr.bf16.mxu0 %v4982
    %5086 = vmatpush1.bf16.msra.mxu0 %v4981
    %5087 = vmatprep.subr.bf16.mxu0 %v4986
    %5088 = vmatpush1.bf16.msra.mxu0 %v4985
    %5089 = vmatprep.subr.bf16.mxu0 %v4990
    %5090 = vmatpush1.bf16.msra.mxu0 %v4989
    %5091 = vmatprep.subr.bf16.mxu0 %v4994
    %5092 = vmatpush1.bf16.msra.mxu0 %v4993
    %5093 = vmatprep.mubr.bf16.mxu0 %v4652
    %5094 = vmatmul.mubr.bf16.gmra.mrb[0].mxu0 %v4651
    %v5095 = vpop.f32.mrb[0].mxu0
    %v5096 = vadd.f32 %v4724, %v5095
    %v5097 = vpop.f32.mrb[0].mxu0
    %v5098 = vadd.f32 %v4728, %v5097
    %v5099 = vpop.f32.mrb[0].mxu0
    %v5100 = vpop.f32.mrb[0].mxu0
    %5101 = vdwg.mxu0
    %5102 = vmatprep.subr.bf16.mxu0 %v4936
    %5103 = vmatpush1.bf16.msra.mxu0 %v4935
    %5104 = vmatprep.subr.bf16.mxu0 %v4940
    %5105 = vmatpush1.bf16.msra.mxu0 %v4939
    %5106 = vmatprep.subr.bf16.mxu0 %v4944
    %5107 = vmatpush1.bf16.msra.mxu0 %v4943
    %5108 = vmatprep.subr.bf16.mxu0 %v4948
    %5109 = vmatpush1.bf16.msra.mxu0 %v4947
    %5110 = vmatprep.subr.bf16.mxu0 %v4952
    %5111 = vmatpush1.bf16.msra.mxu0 %v4951
    %5112 = vmatprep.subr.bf16.mxu0 %v4956
    %5113 = vmatpush1.bf16.msra.mxu0 %v4955
    %5114 = vmatprep.subr.bf16.mxu0 %v4960
    %5115 = vmatpush1.bf16.msra.mxu0 %v4959
    %5116 = vmatprep.subr.bf16.mxu0 %v4964
    %5117 = vmatpush1.bf16.msra.mxu0 %v4963
    %5118 = vmatprep.subr.bf16.mxu0 %v4968
    %5119 = vmatpush1.bf16.msra.mxu0 %v4967
    %5120 = vmatprep.subr.bf16.mxu0 %v4972
    %5121 = vmatpush1.bf16.msra.mxu0 %v4971
    %5122 = vmatprep.subr.bf16.mxu0 %v4976
    %5123 = vmatpush1.bf16.msra.mxu0 %v4975
    %5124 = vmatprep.subr.bf16.mxu0 %v4980
    %5125 = vmatpush1.bf16.msra.mxu0 %v4979
    %5126 = vmatprep.subr.bf16.mxu0 %v4984
    %5127 = vmatpush1.bf16.msra.mxu0 %v4983
    %5128 = vmatprep.subr.bf16.mxu0 %v4988
    %5129 = vmatpush1.bf16.msra.mxu0 %v4987
    %5130 = vmatprep.subr.bf16.mxu0 %v4992
    %5131 = vmatpush1.bf16.msra.mxu0 %v4991
    %5132 = vmatprep.subr.bf16.mxu0 %v4996
    %5133 = vmatpush1.bf16.msra.mxu0 %v4995
    %5134 = vmatprep.mubr.bf16.mxu0 %v4652
    %5135 = vmatmul.mubr.bf16.gmra.mrb[0].mxu0 %v4651
    %v5136 = vpop.f32.mrb[0].mxu0
    %v5137 = vadd.f32 %v4732, %v5136
    %v5138 = vpop.f32.mrb[0].mxu0
    %v5139 = vadd.f32 %v4736, %v5138
    %v5140 = vpop.f32.mrb[0].mxu0
    %v5141 = vpop.f32.mrb[0].mxu0
    %5142 = vdwg.mxu0
    %v5143 = vmax.f32 %v5096, 0.0
    %v5144 = vmax.f32 %v5098, 0.0
    %v5145 = vmax.f32 %v5137, 0.0
    %v5146 = vmax.f32 %v5139, 0.0
    %v5147 = vpack.c.bf16 %v5143, %v5143
    %v5148 = vpack.c.bf16 %v5144, %v5144
    %v5149 = vpack.c.bf16 %v5145, %v5145
    %v5150 = vpack.c.bf16 %v5146, %v5146
    %v5151 = vld [vmem:[#allocation3] sm:$0xff]
    %v5152 = vld [vmem:[#allocation3 + $0x8] sm:$0xff]
    %v5153 = vld [vmem:[#allocation3 + $0x10] sm:$0xff]
    %v5154 = vld [vmem:[#allocation3 + $0x18] sm:$0xff]
    %v5155 = vld [vmem:[#allocation3 + $0x20] sm:$0xff]
    %v5156 = vld [vmem:[#allocation3 + $0x28] sm:$0xff]
    %v5157 = vld [vmem:[#allocation3 + $0x30] sm:$0xff]
    %v5158 = vld [vmem:[#allocation3 + $0x38] sm:$0xff]
    %v5159 = vld [vmem:[#allocation3 + $0x40] sm:$0xff]
    %v5160 = vld [vmem:[#allocation3 + $0x48] sm:$0xff]
    %v5161 = vld [vmem:[#allocation3 + $0x50] sm:$0xff]
    %v5162 = vld [vmem:[#allocation3 + $0x58] sm:$0xff]
    %v5163 = vld [vmem:[#allocation3 + $0x60] sm:$0xff]
    %v5164 = vld [vmem:[#allocation3 + $0x68] sm:$0xff]
    %v5165 = vld [vmem:[#allocation3 + $0x70] sm:$0xff]
    %v5166 = vld [vmem:[#allocation3 + $0x78] sm:$0xff]
    %v5167 = vld [vmem:[#allocation3 + $0x80] sm:$0xff]
    %v5168 = vld [vmem:[#allocation3 + $0x88] sm:$0xff]
    %v5169 = vld [vmem:[#allocation3 + $0x90] sm:$0xff]
    %v5170 = vld [vmem:[#allocation3 + $0x98] sm:$0xff]
    %v5171 = vld [vmem:[#allocation3 + $0xa0] sm:$0xff]
    %v5172 = vld [vmem:[#allocation3 + $0xa8] sm:$0xff]
    %v5173 = vld [vmem:[#allocation3 + $0xb0] sm:$0xff]
    %v5174 = vld [vmem:[#allocation3 + $0xb8] sm:$0xff]
    %v5175 = vld [vmem:[#allocation3 + $0xc0] sm:$0xff]
    %v5176 = vld [vmem:[#allocation3 + $0xc8] sm:$0xff]
    %v5177 = vld [vmem:[#allocation3 + $0xd0] sm:$0xff]
    %v5178 = vld [vmem:[#allocation3 + $0xd8] sm:$0xff]
    %v5179 = vld [vmem:[#allocation3 + $0xe0] sm:$0xff]
    %v5180 = vld [vmem:[#allocation3 + $0xe8] sm:$0xff]
    %v5181 = vld [vmem:[#allocation3 + $0xf0] sm:$0xff]
    %v5182 = vld [vmem:[#allocation3 + $0xf8] sm:$0xff]
    %v5183 = vld [vmem:[#allocation3 + $0x100] sm:$0xff]
    %v5184 = vld [vmem:[#allocation3 + $0x108] sm:$0xff]
    %v5185 = vld [vmem:[#allocation3 + $0x110] sm:$0xff]
    %v5186 = vld [vmem:[#allocation3 + $0x118] sm:$0xff]
    %v5187 = vld [vmem:[#allocation3 + $0x120] sm:$0xff]
    %v5188 = vld [vmem:[#allocation3 + $0x128] sm:$0xff]
    %v5189 = vld [vmem:[#allocation3 + $0x130] sm:$0xff]
    %v5190 = vld [vmem:[#allocation3 + $0x138] sm:$0xff]
    %v5191 = vld [vmem:[#allocation3 + $0x140] sm:$0xff]
    %v5192 = vld [vmem:[#allocation3 + $0x148] sm:$0xff]
    %v5193 = vld [vmem:[#allocation3 + $0x150] sm:$0xff]
    %v5194 = vld [vmem:[#allocation3 + $0x158] sm:$0xff]
    %v5195 = vld [vmem:[#allocation3 + $0x160] sm:$0xff]
    %v5196 = vld [vmem:[#allocation3 + $0x168] sm:$0xff]
    %v5197 = vld [vmem:[#allocation3 + $0x170] sm:$0xff]
    %v5198 = vld [vmem:[#allocation3 + $0x178] sm:$0xff]
    %v5199 = vld [vmem:[#allocation3 + $0x180] sm:$0xff]
    %v5200 = vld [vmem:[#allocation3 + $0x188] sm:$0xff]
    %v5201 = vld [vmem:[#allocation3 + $0x190] sm:$0xff]
    %v5202 = vld [vmem:[#allocation3 + $0x198] sm:$0xff]
    %v5203 = vld [vmem:[#allocation3 + $0x1a0] sm:$0xff]
    %v5204 = vld [vmem:[#allocation3 + $0x1a8] sm:$0xff]
    %v5205 = vld [vmem:[#allocation3 + $0x1b0] sm:$0xff]
    %v5206 = vld [vmem:[#allocation3 + $0x1b8] sm:$0xff]
    %v5207 = vld [vmem:[#allocation3 + $0x1c0] sm:$0xff]
    %v5208 = vld [vmem:[#allocation3 + $0x1c8] sm:$0xff]
    %v5209 = vld [vmem:[#allocation3 + $0x1d0] sm:$0xff]
    %v5210 = vld [vmem:[#allocation3 + $0x1d8] sm:$0xff]
    %v5211 = vld [vmem:[#allocation3 + $0x1e0] sm:$0xff]
    %v5212 = vld [vmem:[#allocation3 + $0x1e8] sm:$0xff]
    %v5213 = vld [vmem:[#allocation3 + $0x1f0] sm:$0xff]
    %v5214 = vld [vmem:[#allocation3 + $0x1f8] sm:$0xff]
    %v5215 = vld [vmem:[%s17] sm:$0xf]
    %v5217 = vlaneseq
    %v5218 = vshrl.u32 %v5217, 7
    %v5219 = vsub.s32 0, %v5218
    %v5220 = vrot.slane %v5215, %v5219
    %v5221 = vlaneseq
    %v5222 = vshrl.u32 %v5221, 7
    %v5223 = vsub.s32 1, %v5222
    %v5224 = vrot.slane %v5215, %v5223
    %v5225 = vlaneseq
    %v5226 = vshrl.u32 %v5225, 7
    %v5227 = vsub.s32 2, %v5226
    %v5228 = vrot.slane %v5215, %v5227
    %v5229 = vlaneseq
    %v5230 = vshrl.u32 %v5229, 7
    %v5231 = vsub.s32 3, %v5230
    %v5232 = vrot.slane %v5215, %v5231
    %v5301 = vunpack.c.l.b16 %v5151
    %v5302 = vunpack.c.h.b16 %v5151
    %v5303 = vunpack.c.l.b16 %v5152
    %v5304 = vunpack.c.h.b16 %v5152
    %v5305 = vunpack.c.l.b16 %v5153
    %v5306 = vunpack.c.h.b16 %v5153
    %v5307 = vunpack.c.l.b16 %v5154
    %v5308 = vunpack.c.h.b16 %v5154
    %v5309 = vunpack.c.l.b16 %v5155
    %v5310 = vunpack.c.h.b16 %v5155
    %v5311 = vunpack.c.l.b16 %v5156
    %v5312 = vunpack.c.h.b16 %v5156
    %v5313 = vunpack.c.l.b16 %v5157
    %v5314 = vunpack.c.h.b16 %v5157
    %v5315 = vunpack.c.l.b16 %v5158
    %v5316 = vunpack.c.h.b16 %v5158
    %v5317 = vunpack.c.l.b16 %v5159
    %v5318 = vunpack.c.h.b16 %v5159
    %v5319 = vunpack.c.l.b16 %v5160
    %v5320 = vunpack.c.h.b16 %v5160
    %v5321 = vunpack.c.l.b16 %v5161
    %v5322 = vunpack.c.h.b16 %v5161
    %v5323 = vunpack.c.l.b16 %v5162
    %v5324 = vunpack.c.h.b16 %v5162
    %v5325 = vunpack.c.l.b16 %v5163
    %v5326 = vunpack.c.h.b16 %v5163
    %v5327 = vunpack.c.l.b16 %v5164
    %v5328 = vunpack.c.h.b16 %v5164
    %v5329 = vunpack.c.l.b16 %v5165
    %v5330 = vunpack.c.h.b16 %v5165
    %v5331 = vunpack.c.l.b16 %v5166
    %v5332 = vunpack.c.h.b16 %v5166
    %v5333 = vunpack.c.l.b16 %v5167
    %v5334 = vunpack.c.h.b16 %v5167
    %v5335 = vunpack.c.l.b16 %v5168
    %v5336 = vunpack.c.h.b16 %v5168
    %v5337 = vunpack.c.l.b16 %v5169
    %v5338 = vunpack.c.h.b16 %v5169
    %v5339 = vunpack.c.l.b16 %v5170
    %v5340 = vunpack.c.h.b16 %v5170
    %v5341 = vunpack.c.l.b16 %v5171
    %v5342 = vunpack.c.h.b16 %v5171
    %v5343 = vunpack.c.l.b16 %v5172
    %v5344 = vunpack.c.h.b16 %v5172
    %v5345 = vunpack.c.l.b16 %v5173
    %v5346 = vunpack.c.h.b16 %v5173
    %v5347 = vunpack.c.l.b16 %v5174
    %v5348 = vunpack.c.h.b16 %v5174
    %v5349 = vunpack.c.l.b16 %v5175
    %v5350 = vunpack.c.h.b16 %v5175
    %v5351 = vunpack.c.l.b16 %v5176
    %v5352 = vunpack.c.h.b16 %v5176
    %v5353 = vunpack.c.l.b16 %v5177
    %v5354 = vunpack.c.h.b16 %v5177
    %v5355 = vunpack.c.l.b16 %v5178
    %v5356 = vunpack.c.h.b16 %v5178
    %v5357 = vunpack.c.l.b16 %v5179
    %v5358 = vunpack.c.h.b16 %v5179
    %v5359 = vunpack.c.l.b16 %v5180
    %v5360 = vunpack.c.h.b16 %v5180
    %v5361 = vunpack.c.l.b16 %v5181
    %v5362 = vunpack.c.h.b16 %v5181
    %v5363 = vunpack.c.l.b16 %v5182
    %v5364 = vunpack.c.h.b16 %v5182
    %v5365 = vunpack.c.l.b16 %v5183
    %v5366 = vunpack.c.h.b16 %v5183
    %v5367 = vunpack.c.l.b16 %v5184
    %v5368 = vunpack.c.h.b16 %v5184
    %v5369 = vunpack.c.l.b16 %v5185
    %v5370 = vunpack.c.h.b16 %v5185
    %v5371 = vunpack.c.l.b16 %v5186
    %v5372 = vunpack.c.h.b16 %v5186
    %v5373 = vunpack.c.l.b16 %v5187
    %v5374 = vunpack.c.h.b16 %v5187
    %v5375 = vunpack.c.l.b16 %v5188
    %v5376 = vunpack.c.h.b16 %v5188
    %v5377 = vunpack.c.l.b16 %v5189
    %v5378 = vunpack.c.h.b16 %v5189
    %v5379 = vunpack.c.l.b16 %v5190
    %v5380 = vunpack.c.h.b16 %v5190
    %v5381 = vunpack.c.l.b16 %v5191
    %v5382 = vunpack.c.h.b16 %v5191
    %v5383 = vunpack.c.l.b16 %v5192
    %v5384 = vunpack.c.h.b16 %v5192
    %v5385 = vunpack.c.l.b16 %v5193
    %v5386 = vunpack.c.h.b16 %v5193
    %v5387 = vunpack.c.l.b16 %v5194
    %v5388 = vunpack.c.h.b16 %v5194
    %v5389 = vunpack.c.l.b16 %v5195
    %v5390 = vunpack.c.h.b16 %v5195
    %v5391 = vunpack.c.l.b16 %v5196
    %v5392 = vunpack.c.h.b16 %v5196
    %v5393 = vunpack.c.l.b16 %v5197
    %v5394 = vunpack.c.h.b16 %v5197
    %v5395 = vunpack.c.l.b16 %v5198
    %v5396 = vunpack.c.h.b16 %v5198
    %v5397 = vunpack.c.l.b16 %v5199
    %v5398 = vunpack.c.h.b16 %v5199
    %v5399 = vunpack.c.l.b16 %v5200
    %v5400 = vunpack.c.h.b16 %v5200
    %v5401 = vunpack.c.l.b16 %v5201
    %v5402 = vunpack.c.h.b16 %v5201
    %v5403 = vunpack.c.l.b16 %v5202
    %v5404 = vunpack.c.h.b16 %v5202
    %v5405 = vunpack.c.l.b16 %v5203
    %v5406 = vunpack.c.h.b16 %v5203
    %v5407 = vunpack.c.l.b16 %v5204
    %v5408 = vunpack.c.h.b16 %v5204
    %v5409 = vunpack.c.l.b16 %v5205
    %v5410 = vunpack.c.h.b16 %v5205
    %v5411 = vunpack.c.l.b16 %v5206
    %v5412 = vunpack.c.h.b16 %v5206
    %v5413 = vunpack.c.l.b16 %v5207
    %v5414 = vunpack.c.h.b16 %v5207
    %v5415 = vunpack.c.l.b16 %v5208
    %v5416 = vunpack.c.h.b16 %v5208
    %v5417 = vunpack.c.l.b16 %v5209
    %v5418 = vunpack.c.h.b16 %v5209
    %v5419 = vunpack.c.l.b16 %v5210
    %v5420 = vunpack.c.h.b16 %v5210
    %v5421 = vunpack.c.l.b16 %v5211
    %v5422 = vunpack.c.h.b16 %v5211
    %v5423 = vunpack.c.l.b16 %v5212
    %v5424 = vunpack.c.h.b16 %v5212
    %v5425 = vunpack.c.l.b16 %v5213
    %v5426 = vunpack.c.h.b16 %v5213
    %v5427 = vunpack.c.l.b16 %v5214
    %v5428 = vunpack.c.h.b16 %v5214
    %v5429 = vpack.c.b16 %v5305, %v5301
    %v5430 = vpack.c.b16 %v5306, %v5302
    %v5431 = vpack.c.b16 %v5307, %v5303
    %v5432 = vpack.c.b16 %v5308, %v5304
    %v5433 = vpack.c.b16 %v5313, %v5309
    %v5434 = vpack.c.b16 %v5314, %v5310
    %v5435 = vpack.c.b16 %v5315, %v5311
    %v5436 = vpack.c.b16 %v5316, %v5312
    %v5437 = vpack.c.b16 %v5321, %v5317
    %v5438 = vpack.c.b16 %v5322, %v5318
    %v5439 = vpack.c.b16 %v5323, %v5319
    %v5440 = vpack.c.b16 %v5324, %v5320
    %v5441 = vpack.c.b16 %v5329, %v5325
    %v5442 = vpack.c.b16 %v5330, %v5326
    %v5443 = vpack.c.b16 %v5331, %v5327
    %v5444 = vpack.c.b16 %v5332, %v5328
    %v5445 = vpack.c.b16 %v5337, %v5333
    %v5446 = vpack.c.b16 %v5338, %v5334
    %v5447 = vpack.c.b16 %v5339, %v5335
    %v5448 = vpack.c.b16 %v5340, %v5336
    %v5449 = vpack.c.b16 %v5345, %v5341
    %v5450 = vpack.c.b16 %v5346, %v5342
    %v5451 = vpack.c.b16 %v5347, %v5343
    %v5452 = vpack.c.b16 %v5348, %v5344
    %v5453 = vpack.c.b16 %v5353, %v5349
    %v5454 = vpack.c.b16 %v5354, %v5350
    %v5455 = vpack.c.b16 %v5355, %v5351
    %v5456 = vpack.c.b16 %v5356, %v5352
    %v5457 = vpack.c.b16 %v5361, %v5357
    %v5458 = vpack.c.b16 %v5362, %v5358
    %v5459 = vpack.c.b16 %v5363, %v5359
    %v5460 = vpack.c.b16 %v5364, %v5360
    %v5461 = vpack.c.b16 %v5369, %v5365
    %v5462 = vpack.c.b16 %v5370, %v5366
    %v5463 = vpack.c.b16 %v5371, %v5367
    %v5464 = vpack.c.b16 %v5372, %v5368
    %v5465 = vpack.c.b16 %v5377, %v5373
    %v5466 = vpack.c.b16 %v5378, %v5374
    %v5467 = vpack.c.b16 %v5379, %v5375
    %v5468 = vpack.c.b16 %v5380, %v5376
    %v5469 = vpack.c.b16 %v5385, %v5381
    %v5470 = vpack.c.b16 %v5386, %v5382
    %v5471 = vpack.c.b16 %v5387, %v5383
    %v5472 = vpack.c.b16 %v5388, %v5384
    %v5473 = vpack.c.b16 %v5393, %v5389
    %v5474 = vpack.c.b16 %v5394, %v5390
    %v5475 = vpack.c.b16 %v5395, %v5391
    %v5476 = vpack.c.b16 %v5396, %v5392
    %v5477 = vpack.c.b16 %v5401, %v5397
    %v5478 = vpack.c.b16 %v5402, %v5398
    %v5479 = vpack.c.b16 %v5403, %v5399
    %v5480 = vpack.c.b16 %v5404, %v5400
    %v5481 = vpack.c.b16 %v5409, %v5405
    %v5482 = vpack.c.b16 %v5410, %v5406
    %v5483 = vpack.c.b16 %v5411, %v5407
    %v5484 = vpack.c.b16 %v5412, %v5408
    %v5485 = vpack.c.b16 %v5417, %v5413
    %v5486 = vpack.c.b16 %v5418, %v5414
    %v5487 = vpack.c.b16 %v5419, %v5415
    %v5488 = vpack.c.b16 %v5420, %v5416
    %v5489 = vpack.c.b16 %v5425, %v5421
    %v5490 = vpack.c.b16 %v5426, %v5422
    %v5491 = vpack.c.b16 %v5427, %v5423
    %v5492 = vpack.c.b16 %v5428, %v5424
    %5557 = vmatprep.subr.bf16.mxu0 %v5430
    %5558 = vmatpush1.bf16.msra.mxu0 %v5429
    %5559 = vmatprep.subr.bf16.mxu0 %v5434
    %5560 = vmatpush1.bf16.msra.mxu0 %v5433
    %5561 = vmatprep.subr.bf16.mxu0 %v5438
    %5562 = vmatpush1.bf16.msra.mxu0 %v5437
    %5563 = vmatprep.subr.bf16.mxu0 %v5442
    %5564 = vmatpush1.bf16.msra.mxu0 %v5441
    %5565 = vmatprep.subr.bf16.mxu0 %v5446
    %5566 = vmatpush1.bf16.msra.mxu0 %v5445
    %5567 = vmatprep.subr.bf16.mxu0 %v5450
    %5568 = vmatpush1.bf16.msra.mxu0 %v5449
    %5569 = vmatprep.subr.bf16.mxu0 %v5454
    %5570 = vmatpush1.bf16.msra.mxu0 %v5453
    %5571 = vmatprep.subr.bf16.mxu0 %v5458
    %5572 = vmatpush1.bf16.msra.mxu0 %v5457
    %5573 = vmatprep.subr.bf16.mxu0 %v5462
    %5574 = vmatpush1.bf16.msra.mxu0 %v5461
    %5575 = vmatprep.subr.bf16.mxu0 %v5466
    %5576 = vmatpush1.bf16.msra.mxu0 %v5465
    %5577 = vmatprep.subr.bf16.mxu0 %v5470
    %5578 = vmatpush1.bf16.msra.mxu0 %v5469
    %5579 = vmatprep.subr.bf16.mxu0 %v5474
    %5580 = vmatpush1.bf16.msra.mxu0 %v5473
    %5581 = vmatprep.subr.bf16.mxu0 %v5478
    %5582 = vmatpush1.bf16.msra.mxu0 %v5477
    %5583 = vmatprep.subr.bf16.mxu0 %v5482
    %5584 = vmatpush1.bf16.msra.mxu0 %v5481
    %5585 = vmatprep.subr.bf16.mxu0 %v5486
    %5586 = vmatpush1.bf16.msra.mxu0 %v5485
    %5587 = vmatprep.subr.bf16.mxu0 %v5490
    %5588 = vmatpush1.bf16.msra.mxu0 %v5489
    %5589 = vmatprep.mubr.bf16.mxu0 %v4654
    %5590 = vmatmul.mubr.bf16.gmra.mrb[0].mxu0 %v4653
    %v5591 = vpop.f32.mrb[0].mxu0
    %v5592 = vadd.f32 %v5220, %v5591
    %v5593 = vpop.f32.mrb[0].mxu0
    %v5594 = vadd.f32 %v5224, %v5593
    %v5595 = vpop.f32.mrb[0].mxu0
    %v5596 = vpop.f32.mrb[0].mxu0
    %5597 = vdwg.mxu0
    %5598 = vmatprep.subr.bf16.mxu0 %v5432
    %5599 = vmatpush1.bf16.msra.mxu0 %v5431
    %5600 = vmatprep.subr.bf16.mxu0 %v5436
    %5601 = vmatpush1.bf16.msra.mxu0 %v5435
    %5602 = vmatprep.subr.bf16.mxu0 %v5440
    %5603 = vmatpush1.bf16.msra.mxu0 %v5439
    %5604 = vmatprep.subr.bf16.mxu0 %v5444
    %5605 = vmatpush1.bf16.msra.mxu0 %v5443
    %5606 = vmatprep.subr.bf16.mxu0 %v5448
    %5607 = vmatpush1.bf16.msra.mxu0 %v5447
    %5608 = vmatprep.subr.bf16.mxu0 %v5452
    %5609 = vmatpush1.bf16.msra.mxu0 %v5451
    %5610 = vmatprep.subr.bf16.mxu0 %v5456
    %5611 = vmatpush1.bf16.msra.mxu0 %v5455
    %5612 = vmatprep.subr.bf16.mxu0 %v5460
    %5613 = vmatpush1.bf16.msra.mxu0 %v5459
    %5614 = vmatprep.subr.bf16.mxu0 %v5464
    %5615 = vmatpush1.bf16.msra.mxu0 %v5463
    %5616 = vmatprep.subr.bf16.mxu0 %v5468
    %5617 = vmatpush1.bf16.msra.mxu0 %v5467
    %5618 = vmatprep.subr.bf16.mxu0 %v5472
    %5619 = vmatpush1.bf16.msra.mxu0 %v5471
    %5620 = vmatprep.subr.bf16.mxu0 %v5476
    %5621 = vmatpush1.bf16.msra.mxu0 %v5475
    %5622 = vmatprep.subr.bf16.mxu0 %v5480
    %5623 = vmatpush1.bf16.msra.mxu0 %v5479
    %5624 = vmatprep.subr.bf16.mxu0 %v5484
    %5625 = vmatpush1.bf16.msra.mxu0 %v5483
    %5626 = vmatprep.subr.bf16.mxu0 %v5488
    %5627 = vmatpush1.bf16.msra.mxu0 %v5487
    %5628 = vmatprep.subr.bf16.mxu0 %v5492
    %5629 = vmatpush1.bf16.msra.mxu0 %v5491
    %5630 = vmatprep.mubr.bf16.mxu0 %v4654
    %5631 = vmatmul.mubr.bf16.gmra.mrb[0].mxu0 %v4653
    %v5632 = vpop.f32.mrb[0].mxu0
    %v5633 = vadd.f32 %v5228, %v5632
    %v5634 = vpop.f32.mrb[0].mxu0
    %v5635 = vadd.f32 %v5232, %v5634
    %v5636 = vpop.f32.mrb[0].mxu0
    %v5637 = vpop.f32.mrb[0].mxu0
    %5638 = vdwg.mxu0
    %v5639 = vmax.f32 %v5592, 0.0
    %v5640 = vmax.f32 %v5594, 0.0
    %v5641 = vmax.f32 %v5633, 0.0
    %v5642 = vmax.f32 %v5635, 0.0
    %v5643 = vpack.c.bf16 %v5639, %v5639
    %v5644 = vpack.c.bf16 %v5640, %v5640
    %v5645 = vpack.c.bf16 %v5641, %v5641
    %v5646 = vpack.c.bf16 %v5642, %v5642
    %v5647 = vld [vmem:[%s18] sm:$0xff]
    %v5648 = vld [vmem:[%s18 + $0x8] sm:$0xff]
    %v5649 = vld [vmem:[%s18 + $0x10] sm:$0xff]
    %v5650 = vld [vmem:[%s18 + $0x18] sm:$0xf]
    %v5651 = vld [vmem:[%s18 + $0x1c] sm:$0xff]
    %v5652 = vld [vmem:[%s18 + $0x24] sm:$0xff]
    %v5653 = vld [vmem:[%s18 + $0x2c] sm:$0xff]
    %v5654 = vld [vmem:[%s18 + $0x34] sm:$0xf]
    %v5655 = vld [vmem:[%s18 + $0x38] sm:$0xff]
    %v5656 = vld [vmem:[%s18 + $0x40] sm:$0xff]
    %v5657 = vld [vmem:[%s18 + $0x48] sm:$0xff]
    %v5658 = vld [vmem:[%s18 + $0x50] sm:$0xf]
    %v5659 = vld [vmem:[%s18 + $0x54] sm:$0xff]
    %v5660 = vld [vmem:[%s18 + $0x5c] sm:$0xff]
    %v5661 = vld [vmem:[%s18 + $0x64] sm:$0xff]
    %v5662 = vld [vmem:[%s18 + $0x6c] sm:$0xf]
    %v5663 = vld [vmem:[%s18 + $0x70] sm:$0xff]
    %v5664 = vld [vmem:[%s18 + $0x78] sm:$0xff]
    %v5665 = vld [vmem:[%s18 + $0x80] sm:$0xff]
    %v5666 = vld [vmem:[%s18 + $0x88] sm:$0xf]
    %v5667 = vld [vmem:[%s18 + $0x8c] sm:$0xff]
    %v5668 = vld [vmem:[%s18 + $0x94] sm:$0xff]
    %v5669 = vld [vmem:[%s18 + $0x9c] sm:$0xff]
    %v5670 = vld [vmem:[%s18 + $0xa4] sm:$0xf]
    %v5671 = vld [vmem:[%s18 + $0xa8] sm:$0xff]
    %v5672 = vld [vmem:[%s18 + $0xb0] sm:$0xff]
    %v5673 = vld [vmem:[%s18 + $0xb8] sm:$0xff]
    %v5674 = vld [vmem:[%s18 + $0xc0] sm:$0xf]
    %v5675 = vld [vmem:[%s18 + $0xc4] sm:$0xff]
    %v5676 = vld [vmem:[%s18 + $0xcc] sm:$0xff]
    %v5677 = vld [vmem:[%s18 + $0xd4] sm:$0xff]
    %v5678 = vld [vmem:[%s18 + $0xdc] sm:$0xf]
    %v5679 = vld [vmem:[%s18 + $0xe0] sm:$0xff]
    %v5680 = vld [vmem:[%s18 + $0xe8] sm:$0xff]
    %v5681 = vld [vmem:[%s18 + $0xf0] sm:$0xff]
    %v5682 = vld [vmem:[%s18 + $0xf8] sm:$0xf]
    %v5683 = vld [vmem:[%s18 + $0xfc] sm:$0xff]
    %v5684 = vld [vmem:[%s18 + $0x104] sm:$0xff]
    %v5685 = vld [vmem:[%s18 + $0x10c] sm:$0xff]
    %v5686 = vld [vmem:[%s18 + $0x114] sm:$0xf]
    %v5687 = vld [vmem:[%s18 + $0x118] sm:$0xff]
    %v5688 = vld [vmem:[%s18 + $0x120] sm:$0xff]
    %v5689 = vld [vmem:[%s18 + $0x128] sm:$0xff]
    %v5690 = vld [vmem:[%s18 + $0x130] sm:$0xf]
    %v5691 = vld [vmem:[%s18 + $0x134] sm:$0xff]
    %v5692 = vld [vmem:[%s18 + $0x13c] sm:$0xff]
    %v5693 = vld [vmem:[%s18 + $0x144] sm:$0xff]
    %v5694 = vld [vmem:[%s18 + $0x14c] sm:$0xf]
    %v5695 = vld [vmem:[%s18 + $0x150] sm:$0xff]
    %v5696 = vld [vmem:[%s18 + $0x158] sm:$0xff]
    %v5697 = vld [vmem:[%s18 + $0x160] sm:$0xff]
    %v5698 = vld [vmem:[%s18 + $0x168] sm:$0xf]
    %v5699 = vld [vmem:[%s18 + $0x16c] sm:$0xff]
    %v5700 = vld [vmem:[%s18 + $0x174] sm:$0xff]
    %v5701 = vld [vmem:[%s18 + $0x17c] sm:$0xff]
    %v5702 = vld [vmem:[%s18 + $0x184] sm:$0xf]
    %v5703 = vld [vmem:[%s18 + $0x188] sm:$0xff]
    %v5704 = vld [vmem:[%s18 + $0x190] sm:$0xff]
    %v5705 = vld [vmem:[%s18 + $0x198] sm:$0xff]
    %v5706 = vld [vmem:[%s18 + $0x1a0] sm:$0xf]
    %v5707 = vld [vmem:[%s18 + $0x1a4] sm:$0xff]
    %v5708 = vld [vmem:[%s18 + $0x1ac] sm:$0xff]
    %v5709 = vld [vmem:[%s18 + $0x1b4] sm:$0xff]
    %v5710 = vld [vmem:[%s18 + $0x1bc] sm:$0xf]
    %v5711 = vld [vmem:[%s18 + $0x1c0] sm:$0xff]
    %v5712 = vld [vmem:[%s18 + $0x1c8] sm:$0xff]
    %v5713 = vld [vmem:[%s18 + $0x1d0] sm:$0xff]
    %v5714 = vld [vmem:[%s18 + $0x1d8] sm:$0xf]
    %v5715 = vld [vmem:[%s18 + $0x1dc] sm:$0xff]
    %v5716 = vld [vmem:[%s18 + $0x1e4] sm:$0xff]
    %v5717 = vld [vmem:[%s18 + $0x1ec] sm:$0xff]
    %v5718 = vld [vmem:[%s18 + $0x1f4] sm:$0xf]
    %v5719 = vld [vmem:[%s18 + $0x1f8] sm:$0xff]
    %v5720 = vld [vmem:[%s18 + $0x200] sm:$0xff]
    %v5721 = vld [vmem:[%s18 + $0x208] sm:$0xff]
    %v5722 = vld [vmem:[%s18 + $0x210] sm:$0xf]
    %v5723 = vld [vmem:[%s18 + $0x214] sm:$0xff]
    %v5724 = vld [vmem:[%s18 + $0x21c] sm:$0xff]
    %v5725 = vld [vmem:[%s18 + $0x224] sm:$0xff]
    %v5726 = vld [vmem:[%s18 + $0x22c] sm:$0xf]
    %v5727 = vld [vmem:[%s18 + $0x230] sm:$0xff]
    %v5728 = vld [vmem:[%s18 + $0x238] sm:$0xff]
    %v5729 = vld [vmem:[%s18 + $0x240] sm:$0xff]
    %v5730 = vld [vmem:[%s18 + $0x248] sm:$0xf]
    %v5731 = vld [vmem:[%s18 + $0x24c] sm:$0xff]
    %v5732 = vld [vmem:[%s18 + $0x254] sm:$0xff]
    %v5733 = vld [vmem:[%s18 + $0x25c] sm:$0xff]
    %v5734 = vld [vmem:[%s18 + $0x264] sm:$0xf]
    %v5735 = vld [vmem:[%s18 + $0x268] sm:$0xff]
    %v5736 = vld [vmem:[%s18 + $0x270] sm:$0xff]
    %v5737 = vld [vmem:[%s18 + $0x278] sm:$0xff]
    %v5738 = vld [vmem:[%s18 + $0x280] sm:$0xf]
    %v5739 = vld [vmem:[%s18 + $0x284] sm:$0xff]
    %v5740 = vld [vmem:[%s18 + $0x28c] sm:$0xff]
    %v5741 = vld [vmem:[%s18 + $0x294] sm:$0xff]
    %v5742 = vld [vmem:[%s18 + $0x29c] sm:$0xf]
    %v5743 = vld [vmem:[%s18 + $0x2a0] sm:$0xff]
    %v5744 = vld [vmem:[%s18 + $0x2a8] sm:$0xff]
    %v5745 = vld [vmem:[%s18 + $0x2b0] sm:$0xff]
    %v5746 = vld [vmem:[%s18 + $0x2b8] sm:$0xf]
    %v5747 = vld [vmem:[%s18 + $0x2bc] sm:$0xff]
    %v5748 = vld [vmem:[%s18 + $0x2c4] sm:$0xff]
    %v5749 = vld [vmem:[%s18 + $0x2cc] sm:$0xff]
    %v5750 = vld [vmem:[%s18 + $0x2d4] sm:$0xf]
    %v5751 = vld [vmem:[%s18 + $0x2d8] sm:$0xff]
    %v5752 = vld [vmem:[%s18 + $0x2e0] sm:$0xff]
    %v5753 = vld [vmem:[%s18 + $0x2e8] sm:$0xff]
    %v5754 = vld [vmem:[%s18 + $0x2f0] sm:$0xf]
    %v5755 = vld [vmem:[%s18 + $0x2f4] sm:$0xff]
    %v5756 = vld [vmem:[%s18 + $0x2fc] sm:$0xff]
    %v5757 = vld [vmem:[%s18 + $0x304] sm:$0xff]
    %v5758 = vld [vmem:[%s18 + $0x30c] sm:$0xf]
    %v5759 = vld [vmem:[%s18 + $0x310] sm:$0xff]
    %v5760 = vld [vmem:[%s18 + $0x318] sm:$0xff]
    %v5761 = vld [vmem:[%s18 + $0x320] sm:$0xff]
    %v5762 = vld [vmem:[%s18 + $0x328] sm:$0xf]
    %v5763 = vld [vmem:[%s18 + $0x32c] sm:$0xff]
    %v5764 = vld [vmem:[%s18 + $0x334] sm:$0xff]
    %v5765 = vld [vmem:[%s18 + $0x33c] sm:$0xff]
    %v5766 = vld [vmem:[%s18 + $0x344] sm:$0xf]
    %v5767 = vld [vmem:[%s18 + $0x348] sm:$0xff]
    %v5768 = vld [vmem:[%s18 + $0x350] sm:$0xff]
    %v5769 = vld [vmem:[%s18 + $0x358] sm:$0xff]
    %v5770 = vld [vmem:[%s18 + $0x360] sm:$0xf]
    %v5771 = vld [vmem:[%s18 + $0x364] sm:$0xff]
    %v5772 = vld [vmem:[%s18 + $0x36c] sm:$0xff]
    %v5773 = vld [vmem:[%s18 + $0x374] sm:$0xff]
    %v5774 = vld [vmem:[%s18 + $0x37c] sm:$0xf]
    %v5775 = vld [vmem:[%s18 + $0x380] sm:$0xff]
    %v5776 = vld [vmem:[%s18 + $0x388] sm:$0xff]
    %v5777 = vld [vmem:[%s18 + $0x390] sm:$0xff]
    %v5778 = vld [vmem:[%s18 + $0x398] sm:$0xf]
    %v5779 = vld [vmem:[%s18 + $0x39c] sm:$0xff]
    %v5780 = vld [vmem:[%s18 + $0x3a4] sm:$0xff]
    %v5781 = vld [vmem:[%s18 + $0x3ac] sm:$0xff]
    %v5782 = vld [vmem:[%s18 + $0x3b4] sm:$0xf]
    %v5783 = vld [vmem:[%s18 + $0x3b8] sm:$0xff]
    %v5784 = vld [vmem:[%s18 + $0x3c0] sm:$0xff]
    %v5785 = vld [vmem:[%s18 + $0x3c8] sm:$0xff]
    %v5786 = vld [vmem:[%s18 + $0x3d0] sm:$0xf]
    %v5787 = vld [vmem:[%s18 + $0x3d4] sm:$0xff]
    %v5788 = vld [vmem:[%s18 + $0x3dc] sm:$0xff]
    %v5789 = vld [vmem:[%s18 + $0x3e4] sm:$0xff]
    %v5790 = vld [vmem:[%s18 + $0x3ec] sm:$0xf]
    %v5791 = vld [vmem:[%s18 + $0x3f0] sm:$0xff]
    %v5792 = vld [vmem:[%s18 + $0x3f8] sm:$0xff]
    %v5793 = vld [vmem:[%s18 + $0x400] sm:$0xff]
    %v5794 = vld [vmem:[%s18 + $0x408] sm:$0xf]
    %v5795 = vld [vmem:[%s18 + $0x40c] sm:$0xff]
    %v5796 = vld [vmem:[%s18 + $0x414] sm:$0xff]
    %v5797 = vld [vmem:[%s18 + $0x41c] sm:$0xff]
    %v5798 = vld [vmem:[%s18 + $0x424] sm:$0xf]
    %v5799 = vld [vmem:[%s18 + $0x428] sm:$0xff]
    %v5800 = vld [vmem:[%s18 + $0x430] sm:$0xff]
    %v5801 = vld [vmem:[%s18 + $0x438] sm:$0xff]
    %v5802 = vld [vmem:[%s18 + $0x440] sm:$0xf]
    %v5803 = vld [vmem:[%s18 + $0x444] sm:$0xff]
    %v5804 = vld [vmem:[%s18 + $0x44c] sm:$0xff]
    %v5805 = vld [vmem:[%s18 + $0x454] sm:$0xff]
    %v5806 = vld [vmem:[%s18 + $0x45c] sm:$0xf]
    %v5807 = vld [vmem:[%s18 + $0x460] sm:$0xff]
    %v5808 = vld [vmem:[%s18 + $0x468] sm:$0xff]
    %v5809 = vld [vmem:[%s18 + $0x470] sm:$0xff]
    %v5810 = vld [vmem:[%s18 + $0x478] sm:$0xf]
    %v5811 = vld [vmem:[%s18 + $0x47c] sm:$0xff]
    %v5812 = vld [vmem:[%s18 + $0x484] sm:$0xff]
    %v5813 = vld [vmem:[%s18 + $0x48c] sm:$0xff]
    %v5814 = vld [vmem:[%s18 + $0x494] sm:$0xf]
    %v5815 = vld [vmem:[%s18 + $0x498] sm:$0xff]
    %v5816 = vld [vmem:[%s18 + $0x4a0] sm:$0xff]
    %v5817 = vld [vmem:[%s18 + $0x4a8] sm:$0xff]
    %v5818 = vld [vmem:[%s18 + $0x4b0] sm:$0xf]
    %v5819 = vld [vmem:[%s18 + $0x4b4] sm:$0xff]
    %v5820 = vld [vmem:[%s18 + $0x4bc] sm:$0xff]
    %v5821 = vld [vmem:[%s18 + $0x4c4] sm:$0xff]
    %v5822 = vld [vmem:[%s18 + $0x4cc] sm:$0xf]
    %v5823 = vld [vmem:[%s18 + $0x4d0] sm:$0xff]
    %v5824 = vld [vmem:[%s18 + $0x4d8] sm:$0xff]
    %v5825 = vld [vmem:[%s18 + $0x4e0] sm:$0xff]
    %v5826 = vld [vmem:[%s18 + $0x4e8] sm:$0xf]
    %v5827 = vld [vmem:[%s18 + $0x4ec] sm:$0xff]
    %v5828 = vld [vmem:[%s18 + $0x4f4] sm:$0xff]
    %v5829 = vld [vmem:[%s18 + $0x4fc] sm:$0xff]
    %v5830 = vld [vmem:[%s18 + $0x504] sm:$0xf]
    %v5831 = vld [vmem:[%s18 + $0x508] sm:$0xff]
    %v5832 = vld [vmem:[%s18 + $0x510] sm:$0xff]
    %v5833 = vld [vmem:[%s18 + $0x518] sm:$0xff]
    %v5834 = vld [vmem:[%s18 + $0x520] sm:$0xf]
    %v5835 = vld [vmem:[%s18 + $0x524] sm:$0xff]
    %v5836 = vld [vmem:[%s18 + $0x52c] sm:$0xff]
    %v5837 = vld [vmem:[%s18 + $0x534] sm:$0xff]
    %v5838 = vld [vmem:[%s18 + $0x53c] sm:$0xf]
    %v5839 = vld [vmem:[%s18 + $0x540] sm:$0xff]
    %v5840 = vld [vmem:[%s18 + $0x548] sm:$0xff]
    %v5841 = vld [vmem:[%s18 + $0x550] sm:$0xff]
    %v5842 = vld [vmem:[%s18 + $0x558] sm:$0xf]
    %v5843 = vld [vmem:[%s18 + $0x55c] sm:$0xff]
    %v5844 = vld [vmem:[%s18 + $0x564] sm:$0xff]
    %v5845 = vld [vmem:[%s18 + $0x56c] sm:$0xff]
    %v5846 = vld [vmem:[%s18 + $0x574] sm:$0xf]
    %v5847 = vld [vmem:[%s18 + $0x578] sm:$0xff]
    %v5848 = vld [vmem:[%s18 + $0x580] sm:$0xff]
    %v5849 = vld [vmem:[%s18 + $0x588] sm:$0xff]
    %v5850 = vld [vmem:[%s18 + $0x590] sm:$0xf]
    %v5851 = vld [vmem:[%s18 + $0x594] sm:$0xff]
    %v5852 = vld [vmem:[%s18 + $0x59c] sm:$0xff]
    %v5853 = vld [vmem:[%s18 + $0x5a4] sm:$0xff]
    %v5854 = vld [vmem:[%s18 + $0x5ac] sm:$0xf]
    %v5855 = vld [vmem:[%s18 + $0x5b0] sm:$0xff]
    %v5856 = vld [vmem:[%s18 + $0x5b8] sm:$0xff]
    %v5857 = vld [vmem:[%s18 + $0x5c0] sm:$0xff]
    %v5858 = vld [vmem:[%s18 + $0x5c8] sm:$0xf]
    %v5859 = vld [vmem:[%s18 + $0x5cc] sm:$0xff]
    %v5860 = vld [vmem:[%s18 + $0x5d4] sm:$0xff]
    %v5861 = vld [vmem:[%s18 + $0x5dc] sm:$0xff]
    %v5862 = vld [vmem:[%s18 + $0x5e4] sm:$0xf]
    %v5863 = vld [vmem:[%s18 + $0x5e8] sm:$0xff]
    %v5864 = vld [vmem:[%s18 + $0x5f0] sm:$0xff]
    %v5865 = vld [vmem:[%s18 + $0x5f8] sm:$0xff]
    %v5866 = vld [vmem:[%s18 + $0x600] sm:$0xf]
    %v5867 = vld [vmem:[%s18 + $0x604] sm:$0xff]
    %v5868 = vld [vmem:[%s18 + $0x60c] sm:$0xff]
    %v5869 = vld [vmem:[%s18 + $0x614] sm:$0xff]
    %v5870 = vld [vmem:[%s18 + $0x61c] sm:$0xf]
    %v5871 = vld [vmem:[%s18 + $0x620] sm:$0xff]
    %v5872 = vld [vmem:[%s18 + $0x628] sm:$0xff]
    %v5873 = vld [vmem:[%s18 + $0x630] sm:$0xff]
    %v5874 = vld [vmem:[%s18 + $0x638] sm:$0xf]
    %v5875 = vld [vmem:[%s18 + $0x63c] sm:$0xff]
    %v5876 = vld [vmem:[%s18 + $0x644] sm:$0xff]
    %v5877 = vld [vmem:[%s18 + $0x64c] sm:$0xff]
    %v5878 = vld [vmem:[%s18 + $0x654] sm:$0xf]
    %v5879 = vld [vmem:[%s18 + $0x658] sm:$0xff]
    %v5880 = vld [vmem:[%s18 + $0x660] sm:$0xff]
    %v5881 = vld [vmem:[%s18 + $0x668] sm:$0xff]
    %v5882 = vld [vmem:[%s18 + $0x670] sm:$0xf]
    %v5883 = vld [vmem:[%s18 + $0x674] sm:$0xff]
    %v5884 = vld [vmem:[%s18 + $0x67c] sm:$0xff]
    %v5885 = vld [vmem:[%s18 + $0x684] sm:$0xff]
    %v5886 = vld [vmem:[%s18 + $0x68c] sm:$0xf]
    %v5887 = vld [vmem:[%s18 + $0x690] sm:$0xff]
    %v5888 = vld [vmem:[%s18 + $0x698] sm:$0xff]
    %v5889 = vld [vmem:[%s18 + $0x6a0] sm:$0xff]
    %v5890 = vld [vmem:[%s18 + $0x6a8] sm:$0xf]
    %v5891 = vld [vmem:[%s18 + $0x6ac] sm:$0xff]
    %v5892 = vld [vmem:[%s18 + $0x6b4] sm:$0xff]
    %v5893 = vld [vmem:[%s18 + $0x6bc] sm:$0xff]
    %v5894 = vld [vmem:[%s18 + $0x6c4] sm:$0xf]
    %v5895 = vld [vmem:[%s18 + $0x6c8] sm:$0xff]
    %v5896 = vld [vmem:[%s18 + $0x6d0] sm:$0xff]
    %v5897 = vld [vmem:[%s18 + $0x6d8] sm:$0xff]
    %v5898 = vld [vmem:[%s18 + $0x6e0] sm:$0xf]
    %v5899 = vld [vmem:[%s18 + $0x6e4] sm:$0xff]
    %v5900 = vld [vmem:[%s18 + $0x6ec] sm:$0xff]
    %v5901 = vld [vmem:[%s18 + $0x6f4] sm:$0xff]
    %v5902 = vld [vmem:[%s18 + $0x6fc] sm:$0xf]
    %v5903 = vld [vmem:[%s19] sm:$0x7f]
    %v5905 = vlaneseq
    %v5906 = vshrl.u32 %v5905, 7
    %v5907 = vsub.s32 0, %v5906
    %v5908 = vrot.slane %v5903, %v5907
    %v5909 = vlaneseq
    %v5910 = vshrl.u32 %v5909, 7
    %v5911 = vsub.s32 1, %v5910
    %v5912 = vrot.slane %v5903, %v5911
    %v5913 = vlaneseq
    %v5914 = vshrl.u32 %v5913, 7
    %v5915 = vsub.s32 2, %v5914
    %v5916 = vrot.slane %v5903, %v5915
    %v5917 = vlaneseq
    %v5918 = vshrl.u32 %v5917, 7
    %v5919 = vsub.s32 3, %v5918
    %v5920 = vrot.slane %v5903, %v5919
    %v5921 = vlaneseq
    %v5922 = vshrl.u32 %v5921, 7
    %v5923 = vsub.s32 4, %v5922
    %v5924 = vrot.slane %v5903, %v5923
    %v5925 = vlaneseq
    %v5926 = vshrl.u32 %v5925, 7
    %v5927 = vsub.s32 5, %v5926
    %v5928 = vrot.slane %v5903, %v5927
    %v5929 = vlaneseq
    %v5930 = vshrl.u32 %v5929, 7
    %v5931 = vsub.s32 6, %v5930
    %v5932 = vrot.slane %v5903, %v5931
    %v6196 = vunpack.c.l.b16 %v5647
    %v6197 = vunpack.c.h.b16 %v5647
    %v6198 = vunpack.c.l.b16 %v5648
    %v6199 = vunpack.c.h.b16 %v5648
    %v6200 = vunpack.c.l.b16 %v5649
    %v6201 = vunpack.c.h.b16 %v5649
    %v6202 = vunpack.c.l.b16 %v5650
    %v6203 = vunpack.c.l.b16 %v5651
    %v6204 = vunpack.c.h.b16 %v5651
    %v6205 = vunpack.c.l.b16 %v5652
    %v6206 = vunpack.c.h.b16 %v5652
    %v6207 = vunpack.c.l.b16 %v5653
    %v6208 = vunpack.c.h.b16 %v5653
    %v6209 = vunpack.c.l.b16 %v5654
    %v6210 = vunpack.c.l.b16 %v5655
    %v6211 = vunpack.c.h.b16 %v5655
    %v6212 = vunpack.c.l.b16 %v5656
    %v6213 = vunpack.c.h.b16 %v5656
    %v6214 = vunpack.c.l.b16 %v5657
    %v6215 = vunpack.c.h.b16 %v5657
    %v6216 = vunpack.c.l.b16 %v5658
    %v6217 = vunpack.c.l.b16 %v5659
    %v6218 = vunpack.c.h.b16 %v5659
    %v6219 = vunpack.c.l.b16 %v5660
    %v6220 = vunpack.c.h.b16 %v5660
    %v6221 = vunpack.c.l.b16 %v5661
    %v6222 = vunpack.c.h.b16 %v5661
    %v6223 = vunpack.c.l.b16 %v5662
    %v6224 = vunpack.c.l.b16 %v5663
    %v6225 = vunpack.c.h.b16 %v5663
    %v6226 = vunpack.c.l.b16 %v5664
    %v6227 = vunpack.c.h.b16 %v5664
    %v6228 = vunpack.c.l.b16 %v5665
    %v6229 = vunpack.c.h.b16 %v5665
    %v6230 = vunpack.c.l.b16 %v5666
    %v6231 = vunpack.c.l.b16 %v5667
    %v6232 = vunpack.c.h.b16 %v5667
    %v6233 = vunpack.c.l.b16 %v5668
    %v6234 = vunpack.c.h.b16 %v5668
    %v6235 = vunpack.c.l.b16 %v5669
    %v6236 = vunpack.c.h.b16 %v5669
    %v6237 = vunpack.c.l.b16 %v5670
    %v6238 = vunpack.c.l.b16 %v5671
    %v6239 = vunpack.c.h.b16 %v5671
    %v6240 = vunpack.c.l.b16 %v5672
    %v6241 = vunpack.c.h.b16 %v5672
    %v6242 = vunpack.c.l.b16 %v5673
    %v6243 = vunpack.c.h.b16 %v5673
    %v6244 = vunpack.c.l.b16 %v5674
    %v6245 = vunpack.c.l.b16 %v5675
    %v6246 = vunpack.c.h.b16 %v5675
    %v6247 = vunpack.c.l.b16 %v5676
    %v6248 = vunpack.c.h.b16 %v5676
    %v6249 = vunpack.c.l.b16 %v5677
    %v6250 = vunpack.c.h.b16 %v5677
    %v6251 = vunpack.c.l.b16 %v5678
    %v6252 = vunpack.c.l.b16 %v5679
    %v6253 = vunpack.c.h.b16 %v5679
    %v6254 = vunpack.c.l.b16 %v5680
    %v6255 = vunpack.c.h.b16 %v5680
    %v6256 = vunpack.c.l.b16 %v5681
    %v6257 = vunpack.c.h.b16 %v5681
    %v6258 = vunpack.c.l.b16 %v5682
    %v6259 = vunpack.c.l.b16 %v5683
    %v6260 = vunpack.c.h.b16 %v5683
    %v6261 = vunpack.c.l.b16 %v5684
    %v6262 = vunpack.c.h.b16 %v5684
    %v6263 = vunpack.c.l.b16 %v5685
    %v6264 = vunpack.c.h.b16 %v5685
    %v6265 = vunpack.c.l.b16 %v5686
    %v6266 = vunpack.c.l.b16 %v5687
    %v6267 = vunpack.c.h.b16 %v5687
    %v6268 = vunpack.c.l.b16 %v5688
    %v6269 = vunpack.c.h.b16 %v5688
    %v6270 = vunpack.c.l.b16 %v5689
    %v6271 = vunpack.c.h.b16 %v5689
    %v6272 = vunpack.c.l.b16 %v5690
    %v6273 = vunpack.c.l.b16 %v5691
    %v6274 = vunpack.c.h.b16 %v5691
    %v6275 = vunpack.c.l.b16 %v5692
    %v6276 = vunpack.c.h.b16 %v5692
    %v6277 = vunpack.c.l.b16 %v5693
    %v6278 = vunpack.c.h.b16 %v5693
    %v6279 = vunpack.c.l.b16 %v5694
    %v6280 = vunpack.c.l.b16 %v5695
    %v6281 = vunpack.c.h.b16 %v5695
    %v6282 = vunpack.c.l.b16 %v5696
    %v6283 = vunpack.c.h.b16 %v5696
    %v6284 = vunpack.c.l.b16 %v5697
    %v6285 = vunpack.c.h.b16 %v5697
    %v6286 = vunpack.c.l.b16 %v5698
    %v6287 = vunpack.c.l.b16 %v5699
    %v6288 = vunpack.c.h.b16 %v5699
    %v6289 = vunpack.c.l.b16 %v5700
    %v6290 = vunpack.c.h.b16 %v5700
    %v6291 = vunpack.c.l.b16 %v5701
    %v6292 = vunpack.c.h.b16 %v5701
    %v6293 = vunpack.c.l.b16 %v5702
    %v6294 = vunpack.c.l.b16 %v5703
    %v6295 = vunpack.c.h.b16 %v5703
    %v6296 = vunpack.c.l.b16 %v5704
    %v6297 = vunpack.c.h.b16 %v5704
    %v6298 = vunpack.c.l.b16 %v5705
    %v6299 = vunpack.c.h.b16 %v5705
    %v6300 = vunpack.c.l.b16 %v5706
    %v6301 = vunpack.c.l.b16 %v5707
    %v6302 = vunpack.c.h.b16 %v5707
    %v6303 = vunpack.c.l.b16 %v5708
    %v6304 = vunpack.c.h.b16 %v5708
    %v6305 = vunpack.c.l.b16 %v5709
    %v6306 = vunpack.c.h.b16 %v5709
    %v6307 = vunpack.c.l.b16 %v5710
    %v6308 = vunpack.c.l.b16 %v5711
    %v6309 = vunpack.c.h.b16 %v5711
    %v6310 = vunpack.c.l.b16 %v5712
    %v6311 = vunpack.c.h.b16 %v5712
    %v6312 = vunpack.c.l.b16 %v5713
    %v6313 = vunpack.c.h.b16 %v5713
    %v6314 = vunpack.c.l.b16 %v5714
    %v6315 = vunpack.c.l.b16 %v5715
    %v6316 = vunpack.c.h.b16 %v5715
    %v6317 = vunpack.c.l.b16 %v5716
    %v6318 = vunpack.c.h.b16 %v5716
    %v6319 = vunpack.c.l.b16 %v5717
    %v6320 = vunpack.c.h.b16 %v5717
    %v6321 = vunpack.c.l.b16 %v5718
    %v6322 = vunpack.c.l.b16 %v5719
    %v6323 = vunpack.c.h.b16 %v5719
    %v6324 = vunpack.c.l.b16 %v5720
    %v6325 = vunpack.c.h.b16 %v5720
    %v6326 = vunpack.c.l.b16 %v5721
    %v6327 = vunpack.c.h.b16 %v5721
    %v6328 = vunpack.c.l.b16 %v5722
    %v6329 = vunpack.c.l.b16 %v5723
    %v6330 = vunpack.c.h.b16 %v5723
    %v6331 = vunpack.c.l.b16 %v5724
    %v6332 = vunpack.c.h.b16 %v5724
    %v6333 = vunpack.c.l.b16 %v5725
    %v6334 = vunpack.c.h.b16 %v5725
    %v6335 = vunpack.c.l.b16 %v5726
    %v6336 = vunpack.c.l.b16 %v5727
    %v6337 = vunpack.c.h.b16 %v5727
    %v6338 = vunpack.c.l.b16 %v5728
    %v6339 = vunpack.c.h.b16 %v5728
    %v6340 = vunpack.c.l.b16 %v5729
    %v6341 = vunpack.c.h.b16 %v5729
    %v6342 = vunpack.c.l.b16 %v5730
    %v6343 = vunpack.c.l.b16 %v5731
    %v6344 = vunpack.c.h.b16 %v5731
    %v6345 = vunpack.c.l.b16 %v5732
    %v6346 = vunpack.c.h.b16 %v5732
    %v6347 = vunpack.c.l.b16 %v5733
    %v6348 = vunpack.c.h.b16 %v5733
    %v6349 = vunpack.c.l.b16 %v5734
    %v6350 = vunpack.c.l.b16 %v5735
    %v6351 = vunpack.c.h.b16 %v5735
    %v6352 = vunpack.c.l.b16 %v5736
    %v6353 = vunpack.c.h.b16 %v5736
    %v6354 = vunpack.c.l.b16 %v5737
    %v6355 = vunpack.c.h.b16 %v5737
    %v6356 = vunpack.c.l.b16 %v5738
    %v6357 = vunpack.c.l.b16 %v5739
    %v6358 = vunpack.c.h.b16 %v5739
    %v6359 = vunpack.c.l.b16 %v5740
    %v6360 = vunpack.c.h.b16 %v5740
    %v6361 = vunpack.c.l.b16 %v5741
    %v6362 = vunpack.c.h.b16 %v5741
    %v6363 = vunpack.c.l.b16 %v5742
    %v6364 = vunpack.c.l.b16 %v5743
    %v6365 = vunpack.c.h.b16 %v5743
    %v6366 = vunpack.c.l.b16 %v5744
    %v6367 = vunpack.c.h.b16 %v5744
    %v6368 = vunpack.c.l.b16 %v5745
    %v6369 = vunpack.c.h.b16 %v5745
    %v6370 = vunpack.c.l.b16 %v5746
    %v6371 = vunpack.c.l.b16 %v5747
    %v6372 = vunpack.c.h.b16 %v5747
    %v6373 = vunpack.c.l.b16 %v5748
    %v6374 = vunpack.c.h.b16 %v5748
    %v6375 = vunpack.c.l.b16 %v5749
    %v6376 = vunpack.c.h.b16 %v5749
    %v6377 = vunpack.c.l.b16 %v5750
    %v6378 = vunpack.c.l.b16 %v5751
    %v6379 = vunpack.c.h.b16 %v5751
    %v6380 = vunpack.c.l.b16 %v5752
    %v6381 = vunpack.c.h.b16 %v5752
    %v6382 = vunpack.c.l.b16 %v5753
    %v6383 = vunpack.c.h.b16 %v5753
    %v6384 = vunpack.c.l.b16 %v5754
    %v6385 = vunpack.c.l.b16 %v5755
    %v6386 = vunpack.c.h.b16 %v5755
    %v6387 = vunpack.c.l.b16 %v5756
    %v6388 = vunpack.c.h.b16 %v5756
    %v6389 = vunpack.c.l.b16 %v5757
    %v6390 = vunpack.c.h.b16 %v5757
    %v6391 = vunpack.c.l.b16 %v5758
    %v6392 = vunpack.c.l.b16 %v5759
    %v6393 = vunpack.c.h.b16 %v5759
    %v6394 = vunpack.c.l.b16 %v5760
    %v6395 = vunpack.c.h.b16 %v5760
    %v6396 = vunpack.c.l.b16 %v5761
    %v6397 = vunpack.c.h.b16 %v5761
    %v6398 = vunpack.c.l.b16 %v5762
    %v6399 = vunpack.c.l.b16 %v5763
    %v6400 = vunpack.c.h.b16 %v5763
    %v6401 = vunpack.c.l.b16 %v5764
    %v6402 = vunpack.c.h.b16 %v5764
    %v6403 = vunpack.c.l.b16 %v5765
    %v6404 = vunpack.c.h.b16 %v5765
    %v6405 = vunpack.c.l.b16 %v5766
    %v6406 = vunpack.c.l.b16 %v5767
    %v6407 = vunpack.c.h.b16 %v5767
    %v6408 = vunpack.c.l.b16 %v5768
    %v6409 = vunpack.c.h.b16 %v5768
    %v6410 = vunpack.c.l.b16 %v5769
    %v6411 = vunpack.c.h.b16 %v5769
    %v6412 = vunpack.c.l.b16 %v5770
    %v6413 = vunpack.c.l.b16 %v5771
    %v6414 = vunpack.c.h.b16 %v5771
    %v6415 = vunpack.c.l.b16 %v5772
    %v6416 = vunpack.c.h.b16 %v5772
    %v6417 = vunpack.c.l.b16 %v5773
    %v6418 = vunpack.c.h.b16 %v5773
    %v6419 = vunpack.c.l.b16 %v5774
    %v6420 = vunpack.c.l.b16 %v5775
    %v6421 = vunpack.c.h.b16 %v5775
    %v6422 = vunpack.c.l.b16 %v5776
    %v6423 = vunpack.c.h.b16 %v5776
    %v6424 = vunpack.c.l.b16 %v5777
    %v6425 = vunpack.c.h.b16 %v5777
    %v6426 = vunpack.c.l.b16 %v5778
    %v6427 = vunpack.c.l.b16 %v5779
    %v6428 = vunpack.c.h.b16 %v5779
    %v6429 = vunpack.c.l.b16 %v5780
    %v6430 = vunpack.c.h.b16 %v5780
    %v6431 = vunpack.c.l.b16 %v5781
    %v6432 = vunpack.c.h.b16 %v5781
    %v6433 = vunpack.c.l.b16 %v5782
    %v6434 = vunpack.c.l.b16 %v5783
    %v6435 = vunpack.c.h.b16 %v5783
    %v6436 = vunpack.c.l.b16 %v5784
    %v6437 = vunpack.c.h.b16 %v5784
    %v6438 = vunpack.c.l.b16 %v5785
    %v6439 = vunpack.c.h.b16 %v5785
    %v6440 = vunpack.c.l.b16 %v5786
    %v6441 = vunpack.c.l.b16 %v5787
    %v6442 = vunpack.c.h.b16 %v5787
    %v6443 = vunpack.c.l.b16 %v5788
    %v6444 = vunpack.c.h.b16 %v5788
    %v6445 = vunpack.c.l.b16 %v5789
    %v6446 = vunpack.c.h.b16 %v5789
    %v6447 = vunpack.c.l.b16 %v5790
    %v6448 = vunpack.c.l.b16 %v5791
    %v6449 = vunpack.c.h.b16 %v5791
    %v6450 = vunpack.c.l.b16 %v5792
    %v6451 = vunpack.c.h.b16 %v5792
    %v6452 = vunpack.c.l.b16 %v5793
    %v6453 = vunpack.c.h.b16 %v5793
    %v6454 = vunpack.c.l.b16 %v5794
    %v6455 = vunpack.c.l.b16 %v5795
    %v6456 = vunpack.c.h.b16 %v5795
    %v6457 = vunpack.c.l.b16 %v5796
    %v6458 = vunpack.c.h.b16 %v5796
    %v6459 = vunpack.c.l.b16 %v5797
    %v6460 = vunpack.c.h.b16 %v5797
    %v6461 = vunpack.c.l.b16 %v5798
    %v6462 = vunpack.c.l.b16 %v5799
    %v6463 = vunpack.c.h.b16 %v5799
    %v6464 = vunpack.c.l.b16 %v5800
    %v6465 = vunpack.c.h.b16 %v5800
    %v6466 = vunpack.c.l.b16 %v5801
    %v6467 = vunpack.c.h.b16 %v5801
    %v6468 = vunpack.c.l.b16 %v5802
    %v6469 = vunpack.c.l.b16 %v5803
    %v6470 = vunpack.c.h.b16 %v5803
    %v6471 = vunpack.c.l.b16 %v5804
    %v6472 = vunpack.c.h.b16 %v5804
    %v6473 = vunpack.c.l.b16 %v5805
    %v6474 = vunpack.c.h.b16 %v5805
    %v6475 = vunpack.c.l.b16 %v5806
    %v6476 = vunpack.c.l.b16 %v5807
    %v6477 = vunpack.c.h.b16 %v5807
    %v6478 = vunpack.c.l.b16 %v5808
    %v6479 = vunpack.c.h.b16 %v5808
    %v6480 = vunpack.c.l.b16 %v5809
    %v6481 = vunpack.c.h.b16 %v5809
    %v6482 = vunpack.c.l.b16 %v5810
    %v6483 = vunpack.c.l.b16 %v5811
    %v6484 = vunpack.c.h.b16 %v5811
    %v6485 = vunpack.c.l.b16 %v5812
    %v6486 = vunpack.c.h.b16 %v5812
    %v6487 = vunpack.c.l.b16 %v5813
    %v6488 = vunpack.c.h.b16 %v5813
    %v6489 = vunpack.c.l.b16 %v5814
    %v6490 = vunpack.c.l.b16 %v5815
    %v6491 = vunpack.c.h.b16 %v5815
    %v6492 = vunpack.c.l.b16 %v5816
    %v6493 = vunpack.c.h.b16 %v5816
    %v6494 = vunpack.c.l.b16 %v5817
    %v6495 = vunpack.c.h.b16 %v5817
    %v6496 = vunpack.c.l.b16 %v5818
    %v6497 = vunpack.c.l.b16 %v5819
    %v6498 = vunpack.c.h.b16 %v5819
    %v6499 = vunpack.c.l.b16 %v5820
    %v6500 = vunpack.c.h.b16 %v5820
    %v6501 = vunpack.c.l.b16 %v5821
    %v6502 = vunpack.c.h.b16 %v5821
    %v6503 = vunpack.c.l.b16 %v5822
    %v6504 = vunpack.c.l.b16 %v5823
    %v6505 = vunpack.c.h.b16 %v5823
    %v6506 = vunpack.c.l.b16 %v5824
    %v6507 = vunpack.c.h.b16 %v5824
    %v6508 = vunpack.c.l.b16 %v5825
    %v6509 = vunpack.c.h.b16 %v5825
    %v6510 = vunpack.c.l.b16 %v5826
    %v6511 = vunpack.c.l.b16 %v5827
    %v6512 = vunpack.c.h.b16 %v5827
    %v6513 = vunpack.c.l.b16 %v5828
    %v6514 = vunpack.c.h.b16 %v5828
    %v6515 = vunpack.c.l.b16 %v5829
    %v6516 = vunpack.c.h.b16 %v5829
    %v6517 = vunpack.c.l.b16 %v5830
    %v6518 = vunpack.c.l.b16 %v5831
    %v6519 = vunpack.c.h.b16 %v5831
    %v6520 = vunpack.c.l.b16 %v5832
    %v6521 = vunpack.c.h.b16 %v5832
    %v6522 = vunpack.c.l.b16 %v5833
    %v6523 = vunpack.c.h.b16 %v5833
    %v6524 = vunpack.c.l.b16 %v5834
    %v6525 = vunpack.c.l.b16 %v5835
    %v6526 = vunpack.c.h.b16 %v5835
    %v6527 = vunpack.c.l.b16 %v5836
    %v6528 = vunpack.c.h.b16 %v5836
    %v6529 = vunpack.c.l.b16 %v5837
    %v6530 = vunpack.c.h.b16 %v5837
    %v6531 = vunpack.c.l.b16 %v5838
    %v6532 = vunpack.c.l.b16 %v5839
    %v6533 = vunpack.c.h.b16 %v5839
    %v6534 = vunpack.c.l.b16 %v5840
    %v6535 = vunpack.c.h.b16 %v5840
    %v6536 = vunpack.c.l.b16 %v5841
    %v6537 = vunpack.c.h.b16 %v5841
    %v6538 = vunpack.c.l.b16 %v5842
    %v6539 = vunpack.c.l.b16 %v5843
    %v6540 = vunpack.c.h.b16 %v5843
    %v6541 = vunpack.c.l.b16 %v5844
    %v6542 = vunpack.c.h.b16 %v5844
    %v6543 = vunpack.c.l.b16 %v5845
    %v6544 = vunpack.c.h.b16 %v5845
    %v6545 = vunpack.c.l.b16 %v5846
    %v6546 = vunpack.c.l.b16 %v5847
    %v6547 = vunpack.c.h.b16 %v5847
    %v6548 = vunpack.c.l.b16 %v5848
    %v6549 = vunpack.c.h.b16 %v5848
    %v6550 = vunpack.c.l.b16 %v5849
    %v6551 = vunpack.c.h.b16 %v5849
    %v6552 = vunpack.c.l.b16 %v5850
    %v6553 = vunpack.c.l.b16 %v5851
    %v6554 = vunpack.c.h.b16 %v5851
    %v6555 = vunpack.c.l.b16 %v5852
    %v6556 = vunpack.c.h.b16 %v5852
    %v6557 = vunpack.c.l.b16 %v5853
    %v6558 = vunpack.c.h.b16 %v5853
    %v6559 = vunpack.c.l.b16 %v5854
    %v6560 = vunpack.c.l.b16 %v5855
    %v6561 = vunpack.c.h.b16 %v5855
    %v6562 = vunpack.c.l.b16 %v5856
    %v6563 = vunpack.c.h.b16 %v5856
    %v6564 = vunpack.c.l.b16 %v5857
    %v6565 = vunpack.c.h.b16 %v5857
    %v6566 = vunpack.c.l.b16 %v5858
    %v6567 = vunpack.c.l.b16 %v5859
    %v6568 = vunpack.c.h.b16 %v5859
    %v6569 = vunpack.c.l.b16 %v5860
    %v6570 = vunpack.c.h.b16 %v5860
    %v6571 = vunpack.c.l.b16 %v5861
    %v6572 = vunpack.c.h.b16 %v5861
    %v6573 = vunpack.c.l.b16 %v5862
    %v6574 = vunpack.c.l.b16 %v5863
    %v6575 = vunpack.c.h.b16 %v5863
    %v6576 = vunpack.c.l.b16 %v5864
    %v6577 = vunpack.c.h.b16 %v5864
    %v6578 = vunpack.c.l.b16 %v5865
    %v6579 = vunpack.c.h.b16 %v5865
    %v6580 = vunpack.c.l.b16 %v5866
    %v6581 = vunpack.c.l.b16 %v5867
    %v6582 = vunpack.c.h.b16 %v5867
    %v6583 = vunpack.c.l.b16 %v5868
    %v6584 = vunpack.c.h.b16 %v5868
    %v6585 = vunpack.c.l.b16 %v5869
    %v6586 = vunpack.c.h.b16 %v5869
    %v6587 = vunpack.c.l.b16 %v5870
    %v6588 = vunpack.c.l.b16 %v5871
    %v6589 = vunpack.c.h.b16 %v5871
    %v6590 = vunpack.c.l.b16 %v5872
    %v6591 = vunpack.c.h.b16 %v5872
    %v6592 = vunpack.c.l.b16 %v5873
    %v6593 = vunpack.c.h.b16 %v5873
    %v6594 = vunpack.c.l.b16 %v5874
    %v6595 = vunpack.c.l.b16 %v5875
    %v6596 = vunpack.c.h.b16 %v5875
    %v6597 = vunpack.c.l.b16 %v5876
    %v6598 = vunpack.c.h.b16 %v5876
    %v6599 = vunpack.c.l.b16 %v5877
    %v6600 = vunpack.c.h.b16 %v5877
    %v6601 = vunpack.c.l.b16 %v5878
    %v6602 = vunpack.c.l.b16 %v5879
    %v6603 = vunpack.c.h.b16 %v5879
    %v6604 = vunpack.c.l.b16 %v5880
    %v6605 = vunpack.c.h.b16 %v5880
    %v6606 = vunpack.c.l.b16 %v5881
    %v6607 = vunpack.c.h.b16 %v5881
    %v6608 = vunpack.c.l.b16 %v5882
    %v6609 = vunpack.c.l.b16 %v5883
    %v6610 = vunpack.c.h.b16 %v5883
    %v6611 = vunpack.c.l.b16 %v5884
    %v6612 = vunpack.c.h.b16 %v5884
    %v6613 = vunpack.c.l.b16 %v5885
    %v6614 = vunpack.c.h.b16 %v5885
    %v6615 = vunpack.c.l.b16 %v5886
    %v6616 = vunpack.c.l.b16 %v5887
    %v6617 = vunpack.c.h.b16 %v5887
    %v6618 = vunpack.c.l.b16 %v5888
    %v6619 = vunpack.c.h.b16 %v5888
    %v6620 = vunpack.c.l.b16 %v5889
    %v6621 = vunpack.c.h.b16 %v5889
    %v6622 = vunpack.c.l.b16 %v5890
    %v6623 = vunpack.c.l.b16 %v5891
    %v6624 = vunpack.c.h.b16 %v5891
    %v6625 = vunpack.c.l.b16 %v5892
    %v6626 = vunpack.c.h.b16 %v5892
    %v6627 = vunpack.c.l.b16 %v5893
    %v6628 = vunpack.c.h.b16 %v5893
    %v6629 = vunpack.c.l.b16 %v5894
    %v6630 = vunpack.c.l.b16 %v5895
    %v6631 = vunpack.c.h.b16 %v5895
    %v6632 = vunpack.c.l.b16 %v5896
    %v6633 = vunpack.c.h.b16 %v5896
    %v6634 = vunpack.c.l.b16 %v5897
    %v6635 = vunpack.c.h.b16 %v5897
    %v6636 = vunpack.c.l.b16 %v5898
    %v6637 = vunpack.c.l.b16 %v5899
    %v6638 = vunpack.c.h.b16 %v5899
    %v6639 = vunpack.c.l.b16 %v5900
    %v6640 = vunpack.c.h.b16 %v5900
    %v6641 = vunpack.c.l.b16 %v5901
    %v6642 = vunpack.c.h.b16 %v5901
    %v6643 = vunpack.c.l.b16 %v5902
    %v6644 = vpack.c.b16 %v6203, %v6196
    %v6645 = vpack.c.b16 %v6204, %v6197
    %v6646 = vpack.c.b16 %v6205, %v6198
    %v6647 = vpack.c.b16 %v6206, %v6199
    %v6648 = vpack.c.b16 %v6207, %v6200
    %v6649 = vpack.c.b16 %v6208, %v6201
    %v6650 = vpack.c.b16 %v6209, %v6202
    %v6651 = vpack.c.b16 %v6217, %v6210
    %v6652 = vpack.c.b16 %v6218, %v6211
    %v6653 = vpack.c.b16 %v6219, %v6212
    %v6654 = vpack.c.b16 %v6220, %v6213
    %v6655 = vpack.c.b16 %v6221, %v6214
    %v6656 = vpack.c.b16 %v6222, %v6215
    %v6657 = vpack.c.b16 %v6223, %v6216
    %v6658 = vpack.c.b16 %v6231, %v6224
    %v6659 = vpack.c.b16 %v6232, %v6225
    %v6660 = vpack.c.b16 %v6233, %v6226
    %v6661 = vpack.c.b16 %v6234, %v6227
    %v6662 = vpack.c.b16 %v6235, %v6228
    %v6663 = vpack.c.b16 %v6236, %v6229
    %v6664 = vpack.c.b16 %v6237, %v6230
    %v6665 = vpack.c.b16 %v6245, %v6238
    %v6666 = vpack.c.b16 %v6246, %v6239
    %v6667 = vpack.c.b16 %v6247, %v6240
    %v6668 = vpack.c.b16 %v6248, %v6241
    %v6669 = vpack.c.b16 %v6249, %v6242
    %v6670 = vpack.c.b16 %v6250, %v6243
    %v6671 = vpack.c.b16 %v6251, %v6244
    %v6672 = vpack.c.b16 %v6259, %v6252
    %v6673 = vpack.c.b16 %v6260, %v6253
    %v6674 = vpack.c.b16 %v6261, %v6254
    %v6675 = vpack.c.b16 %v6262, %v6255
    %v6676 = vpack.c.b16 %v6263, %v6256
    %v6677 = vpack.c.b16 %v6264, %v6257
    %v6678 = vpack.c.b16 %v6265, %v6258
    %v6679 = vpack.c.b16 %v6273, %v6266
    %v6680 = vpack.c.b16 %v6274, %v6267
    %v6681 = vpack.c.b16 %v6275, %v6268
    %v6682 = vpack.c.b16 %v6276, %v6269
    %v6683 = vpack.c.b16 %v6277, %v6270
    %v6684 = vpack.c.b16 %v6278, %v6271
    %v6685 = vpack.c.b16 %v6279, %v6272
    %v6686 = vpack.c.b16 %v6287, %v6280
    %v6687 = vpack.c.b16 %v6288, %v6281
    %v6688 = vpack.c.b16 %v6289, %v6282
    %v6689 = vpack.c.b16 %v6290, %v6283
    %v6690 = vpack.c.b16 %v6291, %v6284
    %v6691 = vpack.c.b16 %v6292, %v6285
    %v6692 = vpack.c.b16 %v6293, %v6286
    %v6693 = vpack.c.b16 %v6301, %v6294
    %v6694 = vpack.c.b16 %v6302, %v6295
    %v6695 = vpack.c.b16 %v6303, %v6296
    %v6696 = vpack.c.b16 %v6304, %v6297
    %v6697 = vpack.c.b16 %v6305, %v6298
    %v6698 = vpack.c.b16 %v6306, %v6299
    %v6699 = vpack.c.b16 %v6307, %v6300
    %v6700 = vpack.c.b16 %v6315, %v6308
    %v6701 = vpack.c.b16 %v6316, %v6309
    %v6702 = vpack.c.b16 %v6317, %v6310
    %v6703 = vpack.c.b16 %v6318, %v6311
    %v6704 = vpack.c.b16 %v6319, %v6312
    %v6705 = vpack.c.b16 %v6320, %v6313
    %v6706 = vpack.c.b16 %v6321, %v6314
    %v6707 = vpack.c.b16 %v6329, %v6322
    %v6708 = vpack.c.b16 %v6330, %v6323
    %v6709 = vpack.c.b16 %v6331, %v6324
    %v6710 = vpack.c.b16 %v6332, %v6325
    %v6711 = vpack.c.b16 %v6333, %v6326
    %v6712 = vpack.c.b16 %v6334, %v6327
    %v6713 = vpack.c.b16 %v6335, %v6328
    %v6714 = vpack.c.b16 %v6343, %v6336
    %v6715 = vpack.c.b16 %v6344, %v6337
    %v6716 = vpack.c.b16 %v6345, %v6338
    %v6717 = vpack.c.b16 %v6346, %v6339
    %v6718 = vpack.c.b16 %v6347, %v6340
    %v6719 = vpack.c.b16 %v6348, %v6341
    %v6720 = vpack.c.b16 %v6349, %v6342
    %v6721 = vpack.c.b16 %v6357, %v6350
    %v6722 = vpack.c.b16 %v6358, %v6351
    %v6723 = vpack.c.b16 %v6359, %v6352
    %v6724 = vpack.c.b16 %v6360, %v6353
    %v6725 = vpack.c.b16 %v6361, %v6354
    %v6726 = vpack.c.b16 %v6362, %v6355
    %v6727 = vpack.c.b16 %v6363, %v6356
    %v6728 = vpack.c.b16 %v6371, %v6364
    %v6729 = vpack.c.b16 %v6372, %v6365
    %v6730 = vpack.c.b16 %v6373, %v6366
    %v6731 = vpack.c.b16 %v6374, %v6367
    %v6732 = vpack.c.b16 %v6375, %v6368
    %v6733 = vpack.c.b16 %v6376, %v6369
    %v6734 = vpack.c.b16 %v6377, %v6370
    %v6735 = vpack.c.b16 %v6385, %v6378
    %v6736 = vpack.c.b16 %v6386, %v6379
    %v6737 = vpack.c.b16 %v6387, %v6380
    %v6738 = vpack.c.b16 %v6388, %v6381
    %v6739 = vpack.c.b16 %v6389, %v6382
    %v6740 = vpack.c.b16 %v6390, %v6383
    %v6741 = vpack.c.b16 %v6391, %v6384
    %v6742 = vpack.c.b16 %v6399, %v6392
    %v6743 = vpack.c.b16 %v6400, %v6393
    %v6744 = vpack.c.b16 %v6401, %v6394
    %v6745 = vpack.c.b16 %v6402, %v6395
    %v6746 = vpack.c.b16 %v6403, %v6396
    %v6747 = vpack.c.b16 %v6404, %v6397
    %v6748 = vpack.c.b16 %v6405, %v6398
    %v6749 = vpack.c.b16 %v6413, %v6406
    %v6750 = vpack.c.b16 %v6414, %v6407
    %v6751 = vpack.c.b16 %v6415, %v6408
    %v6752 = vpack.c.b16 %v6416, %v6409
    %v6753 = vpack.c.b16 %v6417, %v6410
    %v6754 = vpack.c.b16 %v6418, %v6411
    %v6755 = vpack.c.b16 %v6419, %v6412
    %v6756 = vpack.c.b16 %v6427, %v6420
    %v6757 = vpack.c.b16 %v6428, %v6421
    %v6758 = vpack.c.b16 %v6429, %v6422
    %v6759 = vpack.c.b16 %v6430, %v6423
    %v6760 = vpack.c.b16 %v6431, %v6424
    %v6761 = vpack.c.b16 %v6432, %v6425
    %v6762 = vpack.c.b16 %v6433, %v6426
    %v6763 = vpack.c.b16 %v6441, %v6434
    %v6764 = vpack.c.b16 %v6442, %v6435
    %v6765 = vpack.c.b16 %v6443, %v6436
    %v6766 = vpack.c.b16 %v6444, %v6437
    %v6767 = vpack.c.b16 %v6445, %v6438
    %v6768 = vpack.c.b16 %v6446, %v6439
    %v6769 = vpack.c.b16 %v6447, %v6440
    %v6770 = vpack.c.b16 %v6455, %v6448
    %v6771 = vpack.c.b16 %v6456, %v6449
    %v6772 = vpack.c.b16 %v6457, %v6450
    %v6773 = vpack.c.b16 %v6458, %v6451
    %v6774 = vpack.c.b16 %v6459, %v6452
    %v6775 = vpack.c.b16 %v6460, %v6453
    %v6776 = vpack.c.b16 %v6461, %v6454
    %v6777 = vpack.c.b16 %v6469, %v6462
    %v6778 = vpack.c.b16 %v6470, %v6463
    %v6779 = vpack.c.b16 %v6471, %v6464
    %v6780 = vpack.c.b16 %v6472, %v6465
    %v6781 = vpack.c.b16 %v6473, %v6466
    %v6782 = vpack.c.b16 %v6474, %v6467
    %v6783 = vpack.c.b16 %v6475, %v6468
    %v6784 = vpack.c.b16 %v6483, %v6476
    %v6785 = vpack.c.b16 %v6484, %v6477
    %v6786 = vpack.c.b16 %v6485, %v6478
    %v6787 = vpack.c.b16 %v6486, %v6479
    %v6788 = vpack.c.b16 %v6487, %v6480
    %v6789 = vpack.c.b16 %v6488, %v6481
    %v6790 = vpack.c.b16 %v6489, %v6482
    %v6791 = vpack.c.b16 %v6497, %v6490
    %v6792 = vpack.c.b16 %v6498, %v6491
    %v6793 = vpack.c.b16 %v6499, %v6492
    %v6794 = vpack.c.b16 %v6500, %v6493
    %v6795 = vpack.c.b16 %v6501, %v6494
    %v6796 = vpack.c.b16 %v6502, %v6495
    %v6797 = vpack.c.b16 %v6503, %v6496
    %v6798 = vpack.c.b16 %v6511, %v6504
    %v6799 = vpack.c.b16 %v6512, %v6505
    %v6800 = vpack.c.b16 %v6513, %v6506
    %v6801 = vpack.c.b16 %v6514, %v6507
    %v6802 = vpack.c.b16 %v6515, %v6508
    %v6803 = vpack.c.b16 %v6516, %v6509
    %v6804 = vpack.c.b16 %v6517, %v6510
    %v6805 = vpack.c.b16 %v6525, %v6518
    %v6806 = vpack.c.b16 %v6526, %v6519
    %v6807 = vpack.c.b16 %v6527, %v6520
    %v6808 = vpack.c.b16 %v6528, %v6521
    %v6809 = vpack.c.b16 %v6529, %v6522
    %v6810 = vpack.c.b16 %v6530, %v6523
    %v6811 = vpack.c.b16 %v6531, %v6524
    %v6812 = vpack.c.b16 %v6539, %v6532
    %v6813 = vpack.c.b16 %v6540, %v6533
    %v6814 = vpack.c.b16 %v6541, %v6534
    %v6815 = vpack.c.b16 %v6542, %v6535
    %v6816 = vpack.c.b16 %v6543, %v6536
    %v6817 = vpack.c.b16 %v6544, %v6537
    %v6818 = vpack.c.b16 %v6545, %v6538
    %v6819 = vpack.c.b16 %v6553, %v6546
    %v6820 = vpack.c.b16 %v6554, %v6547
    %v6821 = vpack.c.b16 %v6555, %v6548
    %v6822 = vpack.c.b16 %v6556, %v6549
    %v6823 = vpack.c.b16 %v6557, %v6550
    %v6824 = vpack.c.b16 %v6558, %v6551
    %v6825 = vpack.c.b16 %v6559, %v6552
    %v6826 = vpack.c.b16 %v6567, %v6560
    %v6827 = vpack.c.b16 %v6568, %v6561
    %v6828 = vpack.c.b16 %v6569, %v6562
    %v6829 = vpack.c.b16 %v6570, %v6563
    %v6830 = vpack.c.b16 %v6571, %v6564
    %v6831 = vpack.c.b16 %v6572, %v6565
    %v6832 = vpack.c.b16 %v6573, %v6566
    %v6833 = vpack.c.b16 %v6581, %v6574
    %v6834 = vpack.c.b16 %v6582, %v6575
    %v6835 = vpack.c.b16 %v6583, %v6576
    %v6836 = vpack.c.b16 %v6584, %v6577
    %v6837 = vpack.c.b16 %v6585, %v6578
    %v6838 = vpack.c.b16 %v6586, %v6579
    %v6839 = vpack.c.b16 %v6587, %v6580
    %v6840 = vpack.c.b16 %v6595, %v6588
    %v6841 = vpack.c.b16 %v6596, %v6589
    %v6842 = vpack.c.b16 %v6597, %v6590
    %v6843 = vpack.c.b16 %v6598, %v6591
    %v6844 = vpack.c.b16 %v6599, %v6592
    %v6845 = vpack.c.b16 %v6600, %v6593
    %v6846 = vpack.c.b16 %v6601, %v6594
    %v6847 = vpack.c.b16 %v6609, %v6602
    %v6848 = vpack.c.b16 %v6610, %v6603
    %v6849 = vpack.c.b16 %v6611, %v6604
    %v6850 = vpack.c.b16 %v6612, %v6605
    %v6851 = vpack.c.b16 %v6613, %v6606
    %v6852 = vpack.c.b16 %v6614, %v6607
    %v6853 = vpack.c.b16 %v6615, %v6608
    %v6854 = vpack.c.b16 %v6623, %v6616
    %v6855 = vpack.c.b16 %v6624, %v6617
    %v6856 = vpack.c.b16 %v6625, %v6618
    %v6857 = vpack.c.b16 %v6626, %v6619
    %v6858 = vpack.c.b16 %v6627, %v6620
    %v6859 = vpack.c.b16 %v6628, %v6621
    %v6860 = vpack.c.b16 %v6629, %v6622
    %v6861 = vpack.c.b16 %v6637, %v6630
    %v6862 = vpack.c.b16 %v6638, %v6631
    %v6863 = vpack.c.b16 %v6639, %v6632
    %v6864 = vpack.c.b16 %v6640, %v6633
    %v6865 = vpack.c.b16 %v6641, %v6634
    %v6866 = vpack.c.b16 %v6642, %v6635
    %v6867 = vpack.c.b16 %v6643, %v6636
    %7092 = vmatprep.subr.bf16.mxu0 %v6645
    %7093 = vmatpush1.bf16.msra.mxu0 %v6644
    %7094 = vmatprep.subr.bf16.mxu0 %v6652
    %7095 = vmatpush1.bf16.msra.mxu0 %v6651
    %7096 = vmatprep.subr.bf16.mxu0 %v6659
    %7097 = vmatpush1.bf16.msra.mxu0 %v6658
    %7098 = vmatprep.subr.bf16.mxu0 %v6666
    %7099 = vmatpush1.bf16.msra.mxu0 %v6665
    %7100 = vmatprep.subr.bf16.mxu0 %v6673
    %7101 = vmatpush1.bf16.msra.mxu0 %v6672
    %7102 = vmatprep.subr.bf16.mxu0 %v6680
    %7103 = vmatpush1.bf16.msra.mxu0 %v6679
    %7104 = vmatprep.subr.bf16.mxu0 %v6687
    %7105 = vmatpush1.bf16.msra.mxu0 %v6686
    %7106 = vmatprep.subr.bf16.mxu0 %v6694
    %7107 = vmatpush1.bf16.msra.mxu0 %v6693
    %7108 = vmatprep.subr.bf16.mxu0 %v6701
    %7109 = vmatpush1.bf16.msra.mxu0 %v6700
    %7110 = vmatprep.subr.bf16.mxu0 %v6708
    %7111 = vmatpush1.bf16.msra.mxu0 %v6707
    %7112 = vmatprep.subr.bf16.mxu0 %v6715
    %7113 = vmatpush1.bf16.msra.mxu0 %v6714
    %7114 = vmatprep.subr.bf16.mxu0 %v6722
    %7115 = vmatpush1.bf16.msra.mxu0 %v6721
    %7116 = vmatprep.subr.bf16.mxu0 %v6729
    %7117 = vmatpush1.bf16.msra.mxu0 %v6728
    %7118 = vmatprep.subr.bf16.mxu0 %v6736
    %7119 = vmatpush1.bf16.msra.mxu0 %v6735
    %7120 = vmatprep.subr.bf16.mxu0 %v6743
    %7121 = vmatpush1.bf16.msra.mxu0 %v6742
    %7122 = vmatprep.subr.bf16.mxu0 %v6750
    %7123 = vmatpush1.bf16.msra.mxu0 %v6749
    %7124 = vmatprep.mubr.bf16.mxu0 %v5148
    %7125 = vmatmul.mubr.bf16.gmra.mrb[0].mxu0 %v5147
    %v7126 = vpop.f32.mrb[0].mxu0
    %v7127 = vadd.f32 %v5908, %v7126
    %v7128 = vpop.f32.mrb[0].mxu0
    %v7129 = vadd.f32 %v5912, %v7128
    %v7130 = vpop.f32.mrb[0].mxu0
    %v7131 = vpop.f32.mrb[0].mxu0
    %7132 = vdwg.mxu0
    %7133 = vmatprep.subr.bf16.mxu0 %v6757
    %7134 = vmatpush1.bf16.msra.mxu0 %v6756
    %7135 = vmatprep.subr.bf16.mxu0 %v6764
    %7136 = vmatpush1.bf16.msra.mxu0 %v6763
    %7137 = vmatprep.subr.bf16.mxu0 %v6771
    %7138 = vmatpush1.bf16.msra.mxu0 %v6770
    %7139 = vmatprep.subr.bf16.mxu0 %v6778
    %7140 = vmatpush1.bf16.msra.mxu0 %v6777
    %7141 = vmatprep.subr.bf16.mxu0 %v6785
    %7142 = vmatpush1.bf16.msra.mxu0 %v6784
    %7143 = vmatprep.subr.bf16.mxu0 %v6792
    %7144 = vmatpush1.bf16.msra.mxu0 %v6791
    %7145 = vmatprep.subr.bf16.mxu0 %v6799
    %7146 = vmatpush1.bf16.msra.mxu0 %v6798
    %7147 = vmatprep.subr.bf16.mxu0 %v6806
    %7148 = vmatpush1.bf16.msra.mxu0 %v6805
    %7149 = vmatprep.subr.bf16.mxu0 %v6813
    %7150 = vmatpush1.bf16.msra.mxu0 %v6812
    %7151 = vmatprep.subr.bf16.mxu0 %v6820
    %7152 = vmatpush1.bf16.msra.mxu0 %v6819
    %7153 = vmatprep.subr.bf16.mxu0 %v6827
    %7154 = vmatpush1.bf16.msra.mxu0 %v6826
    %7155 = vmatprep.subr.bf16.mxu0 %v6834
    %7156 = vmatpush1.bf16.msra.mxu0 %v6833
    %7157 = vmatprep.subr.bf16.mxu0 %v6841
    %7158 = vmatpush1.bf16.msra.mxu0 %v6840
    %7159 = vmatprep.subr.bf16.mxu0 %v6848
    %7160 = vmatpush1.bf16.msra.mxu0 %v6847
    %7161 = vmatprep.subr.bf16.mxu0 %v6855
    %7162 = vmatpush1.bf16.msra.mxu0 %v6854
    %7163 = vmatprep.subr.bf16.mxu0 %v6862
    %7164 = vmatpush1.bf16.msra.mxu0 %v6861
    %7165 = vmatprep.mubr.bf16.mxu0 %v5150
    %7166 = vmatmul.mubr.bf16.gmra.mrb[0].mxu0 %v5149
    %v7167 = vpop.f32.mrb[0].mxu0
    %v7168 = vadd.f32 %v7127, %v7167
    %v7169 = vpop.f32.mrb[0].mxu0
    %v7170 = vadd.f32 %v7129, %v7169
    %v7171 = vpop.f32.mrb[0].mxu0
    %v7172 = vpop.f32.mrb[0].mxu0
    %7173 = vdwg.mxu0
    %7174 = vmatprep.subr.bf16.mxu0 %v6647
    %7175 = vmatpush1.bf16.msra.mxu0 %v6646
    %7176 = vmatprep.subr.bf16.mxu0 %v6654
    %7177 = vmatpush1.bf16.msra.mxu0 %v6653
    %7178 = vmatprep.subr.bf16.mxu0 %v6661
    %7179 = vmatpush1.bf16.msra.mxu0 %v6660
    %7180 = vmatprep.subr.bf16.mxu0 %v6668
    %7181 = vmatpush1.bf16.msra.mxu0 %v6667
    %7182 = vmatprep.subr.bf16.mxu0 %v6675
    %7183 = vmatpush1.bf16.msra.mxu0 %v6674
    %7184 = vmatprep.subr.bf16.mxu0 %v6682
    %7185 = vmatpush1.bf16.msra.mxu0 %v6681
    %7186 = vmatprep.subr.bf16.mxu0 %v6689
    %7187 = vmatpush1.bf16.msra.mxu0 %v6688
    %7188 = vmatprep.subr.bf16.mxu0 %v6696
    %7189 = vmatpush1.bf16.msra.mxu0 %v6695
    %7190 = vmatprep.subr.bf16.mxu0 %v6703
    %7191 = vmatpush1.bf16.msra.mxu0 %v6702
    %7192 = vmatprep.subr.bf16.mxu0 %v6710
    %7193 = vmatpush1.bf16.msra.mxu0 %v6709
    %7194 = vmatprep.subr.bf16.mxu0 %v6717
    %7195 = vmatpush1.bf16.msra.mxu0 %v6716
    %7196 = vmatprep.subr.bf16.mxu0 %v6724
    %7197 = vmatpush1.bf16.msra.mxu0 %v6723
    %7198 = vmatprep.subr.bf16.mxu0 %v6731
    %7199 = vmatpush1.bf16.msra.mxu0 %v6730
    %7200 = vmatprep.subr.bf16.mxu0 %v6738
    %7201 = vmatpush1.bf16.msra.mxu0 %v6737
    %7202 = vmatprep.subr.bf16.mxu0 %v6745
    %7203 = vmatpush1.bf16.msra.mxu0 %v6744
    %7204 = vmatprep.subr.bf16.mxu0 %v6752
    %7205 = vmatpush1.bf16.msra.mxu0 %v6751
    %7206 = vmatprep.mubr.bf16.mxu0 %v5148
    %7207 = vmatmul.mubr.bf16.gmra.mrb[0].mxu0 %v5147
    %v7208 = vpop.f32.mrb[0].mxu0
    %v7209 = vadd.f32 %v5916, %v7208
    %v7210 = vpop.f32.mrb[0].mxu0
    %v7211 = vadd.f32 %v5920, %v7210
    %v7212 = vpop.f32.mrb[0].mxu0
    %v7213 = vpop.f32.mrb[0].mxu0
    %7214 = vdwg.mxu0
    %7215 = vmatprep.subr.bf16.mxu0 %v6759
    %7216 = vmatpush1.bf16.msra.mxu0 %v6758
    %7217 = vmatprep.subr.bf16.mxu0 %v6766
    %7218 = vmatpush1.bf16.msra.mxu0 %v6765
    %7219 = vmatprep.subr.bf16.mxu0 %v6773
    %7220 = vmatpush1.bf16.msra.mxu0 %v6772
    %7221 = vmatprep.subr.bf16.mxu0 %v6780
    %7222 = vmatpush1.bf16.msra.mxu0 %v6779
    %7223 = vmatprep.subr.bf16.mxu0 %v6787
    %7224 = vmatpush1.bf16.msra.mxu0 %v6786
    %7225 = vmatprep.subr.bf16.mxu0 %v6794
    %7226 = vmatpush1.bf16.msra.mxu0 %v6793
    %7227 = vmatprep.subr.bf16.mxu0 %v6801
    %7228 = vmatpush1.bf16.msra.mxu0 %v6800
    %7229 = vmatprep.subr.bf16.mxu0 %v6808
    %7230 = vmatpush1.bf16.msra.mxu0 %v6807
    %7231 = vmatprep.subr.bf16.mxu0 %v6815
    %7232 = vmatpush1.bf16.msra.mxu0 %v6814
    %7233 = vmatprep.subr.bf16.mxu0 %v6822
    %7234 = vmatpush1.bf16.msra.mxu0 %v6821
    %7235 = vmatprep.subr.bf16.mxu0 %v6829
    %7236 = vmatpush1.bf16.msra.mxu0 %v6828
    %7237 = vmatprep.subr.bf16.mxu0 %v6836
    %7238 = vmatpush1.bf16.msra.mxu0 %v6835
    %7239 = vmatprep.subr.bf16.mxu0 %v6843
    %7240 = vmatpush1.bf16.msra.mxu0 %v6842
    %7241 = vmatprep.subr.bf16.mxu0 %v6850
    %7242 = vmatpush1.bf16.msra.mxu0 %v6849
    %7243 = vmatprep.subr.bf16.mxu0 %v6857
    %7244 = vmatpush1.bf16.msra.mxu0 %v6856
    %7245 = vmatprep.subr.bf16.mxu0 %v6864
    %7246 = vmatpush1.bf16.msra.mxu0 %v6863
    %7247 = vmatprep.mubr.bf16.mxu0 %v5150
    %7248 = vmatmul.mubr.bf16.gmra.mrb[0].mxu0 %v5149
    %v7249 = vpop.f32.mrb[0].mxu0
    %v7250 = vadd.f32 %v7209, %v7249
    %v7251 = vpop.f32.mrb[0].mxu0
    %v7252 = vadd.f32 %v7211, %v7251
    %v7253 = vpop.f32.mrb[0].mxu0
    %v7254 = vpop.f32.mrb[0].mxu0
    %7255 = vdwg.mxu0
    %7256 = vmatprep.subr.bf16.mxu0 %v6649
    %7257 = vmatpush1.bf16.msra.mxu0 %v6648
    %7258 = vmatprep.subr.bf16.mxu0 %v6656
    %7259 = vmatpush1.bf16.msra.mxu0 %v6655
    %7260 = vmatprep.subr.bf16.mxu0 %v6663
    %7261 = vmatpush1.bf16.msra.mxu0 %v6662
    %7262 = vmatprep.subr.bf16.mxu0 %v6670
    %7263 = vmatpush1.bf16.msra.mxu0 %v6669
    %7264 = vmatprep.subr.bf16.mxu0 %v6677
    %7265 = vmatpush1.bf16.msra.mxu0 %v6676
    %7266 = vmatprep.subr.bf16.mxu0 %v6684
    %7267 = vmatpush1.bf16.msra.mxu0 %v6683
    %7268 = vmatprep.subr.bf16.mxu0 %v6691
    %7269 = vmatpush1.bf16.msra.mxu0 %v6690
    %7270 = vmatprep.subr.bf16.mxu0 %v6698
    %7271 = vmatpush1.bf16.msra.mxu0 %v6697
    %7272 = vmatprep.subr.bf16.mxu0 %v6705
    %7273 = vmatpush1.bf16.msra.mxu0 %v6704
    %7274 = vmatprep.subr.bf16.mxu0 %v6712
    %7275 = vmatpush1.bf16.msra.mxu0 %v6711
    %7276 = vmatprep.subr.bf16.mxu0 %v6719
    %7277 = vmatpush1.bf16.msra.mxu0 %v6718
    %7278 = vmatprep.subr.bf16.mxu0 %v6726
    %7279 = vmatpush1.bf16.msra.mxu0 %v6725
    %7280 = vmatprep.subr.bf16.mxu0 %v6733
    %7281 = vmatpush1.bf16.msra.mxu0 %v6732
    %7282 = vmatprep.subr.bf16.mxu0 %v6740
    %7283 = vmatpush1.bf16.msra.mxu0 %v6739
    %7284 = vmatprep.subr.bf16.mxu0 %v6747
    %7285 = vmatpush1.bf16.msra.mxu0 %v6746
    %7286 = vmatprep.subr.bf16.mxu0 %v6754
    %7287 = vmatpush1.bf16.msra.mxu0 %v6753
    %7288 = vmatprep.mubr.bf16.mxu0 %v5148
    %7289 = vmatmul.mubr.bf16.gmra.mrb[0].mxu0 %v5147
    %v7290 = vpop.f32.mrb[0].mxu0
    %v7291 = vadd.f32 %v5924, %v7290
    %v7292 = vpop.f32.mrb[0].mxu0
    %v7293 = vadd.f32 %v5928, %v7292
    %v7294 = vpop.f32.mrb[0].mxu0
    %v7295 = vpop.f32.mrb[0].mxu0
    %7296 = vdwg.mxu0
    %7297 = vmatprep.subr.bf16.mxu0 %v6761
    %7298 = vmatpush1.bf16.msra.mxu0 %v6760
    %7299 = vmatprep.subr.bf16.mxu0 %v6768
    %7300 = vmatpush1.bf16.msra.mxu0 %v6767
    %7301 = vmatprep.subr.bf16.mxu0 %v6775
    %7302 = vmatpush1.bf16.msra.mxu0 %v6774
    %7303 = vmatprep.subr.bf16.mxu0 %v6782
    %7304 = vmatpush1.bf16.msra.mxu0 %v6781
    %7305 = vmatprep.subr.bf16.mxu0 %v6789
    %7306 = vmatpush1.bf16.msra.mxu0 %v6788
    %7307 = vmatprep.subr.bf16.mxu0 %v6796
    %7308 = vmatpush1.bf16.msra.mxu0 %v6795
    %7309 = vmatprep.subr.bf16.mxu0 %v6803
    %7310 = vmatpush1.bf16.msra.mxu0 %v6802
    %7311 = vmatprep.subr.bf16.mxu0 %v6810
    %7312 = vmatpush1.bf16.msra.mxu0 %v6809
    %7313 = vmatprep.subr.bf16.mxu0 %v6817
    %7314 = vmatpush1.bf16.msra.mxu0 %v6816
    %7315 = vmatprep.subr.bf16.mxu0 %v6824
    %7316 = vmatpush1.bf16.msra.mxu0 %v6823
    %7317 = vmatprep.subr.bf16.mxu0 %v6831
    %7318 = vmatpush1.bf16.msra.mxu0 %v6830
    %7319 = vmatprep.subr.bf16.mxu0 %v6838
    %7320 = vmatpush1.bf16.msra.mxu0 %v6837
    %7321 = vmatprep.subr.bf16.mxu0 %v6845
    %7322 = vmatpush1.bf16.msra.mxu0 %v6844
    %7323 = vmatprep.subr.bf16.mxu0 %v6852
    %7324 = vmatpush1.bf16.msra.mxu0 %v6851
    %7325 = vmatprep.subr.bf16.mxu0 %v6859
    %7326 = vmatpush1.bf16.msra.mxu0 %v6858
    %7327 = vmatprep.subr.bf16.mxu0 %v6866
    %7328 = vmatpush1.bf16.msra.mxu0 %v6865
    %7329 = vmatprep.mubr.bf16.mxu0 %v5150
    %7330 = vmatmul.mubr.bf16.gmra.mrb[0].mxu0 %v5149
    %v7331 = vpop.f32.mrb[0].mxu0
    %v7332 = vadd.f32 %v7291, %v7331
    %v7333 = vpop.f32.mrb[0].mxu0
    %v7334 = vadd.f32 %v7293, %v7333
    %v7335 = vpop.f32.mrb[0].mxu0
    %v7336 = vpop.f32.mrb[0].mxu0
    %7337 = vdwg.mxu0
    %7338 = vmatprep.subr.bf16.mxu0 0
    %7339 = vmatpush1.bf16.msra.mxu0 %v6650
    %7340 = vmatprep.subr.bf16.mxu0 0
    %7341 = vmatpush1.bf16.msra.mxu0 %v6657
    %7342 = vmatprep.subr.bf16.mxu0 0
    %7343 = vmatpush1.bf16.msra.mxu0 %v6664
    %7344 = vmatprep.subr.bf16.mxu0 0
    %7345 = vmatpush1.bf16.msra.mxu0 %v6671
    %7346 = vmatprep.subr.bf16.mxu0 0
    %7347 = vmatpush1.bf16.msra.mxu0 %v6678
    %7348 = vmatprep.subr.bf16.mxu0 0
    %7349 = vmatpush1.bf16.msra.mxu0 %v6685
    %7350 = vmatprep.subr.bf16.mxu0 0
    %7351 = vmatpush1.bf16.msra.mxu0 %v6692
    %7352 = vmatprep.subr.bf16.mxu0 0
    %7353 = vmatpush1.bf16.msra.mxu0 %v6699
    %7354 = vmatprep.subr.bf16.mxu0 0
    %7355 = vmatpush1.bf16.msra.mxu0 %v6706
    %7356 = vmatprep.subr.bf16.mxu0 0
    %7357 = vmatpush1.bf16.msra.mxu0 %v6713
    %7358 = vmatprep.subr.bf16.mxu0 0
    %7359 = vmatpush1.bf16.msra.mxu0 %v6720
    %7360 = vmatprep.subr.bf16.mxu0 0
    %7361 = vmatpush1.bf16.msra.mxu0 %v6727
    %7362 = vmatprep.subr.bf16.mxu0 0
    %7363 = vmatpush1.bf16.msra.mxu0 %v6734
    %7364 = vmatprep.subr.bf16.mxu0 0
    %7365 = vmatpush1.bf16.msra.mxu0 %v6741
    %7366 = vmatprep.subr.bf16.mxu0 0
    %7367 = vmatpush1.bf16.msra.mxu0 %v6748
    %7368 = vmatprep.subr.bf16.mxu0 0
    %7369 = vmatpush1.bf16.msra.mxu0 %v6755
    %7370 = vmatprep.mubr.bf16.mxu0 %v5148
    %7371 = vmatmul.mubr.bf16.gmra.mrb[0].mxu0 %v5147
    %v7372 = vpop.f32.mrb[0].mxu0
    %v7373 = vadd.f32 %v5932, %v7372
    %v7374 = vpop.f32.mrb[0].mxu0
    %v7375 = vpop.f32.mrb[0].mxu0
    %v7376 = vpop.f32.mrb[0].mxu0
    %7377 = vdwg.mxu0
    %7378 = vmatprep.subr.bf16.mxu0 0
    %7379 = vmatpush1.bf16.msra.mxu0 %v6762
    %7380 = vmatprep.subr.bf16.mxu0 0
    %7381 = vmatpush1.bf16.msra.mxu0 %v6769
    %7382 = vmatprep.subr.bf16.mxu0 0
    %7383 = vmatpush1.bf16.msra.mxu0 %v6776
    %7384 = vmatprep.subr.bf16.mxu0 0
    %7385 = vmatpush1.bf16.msra.mxu0 %v6783
    %7386 = vmatprep.subr.bf16.mxu0 0
    %7387 = vmatpush1.bf16.msra.mxu0 %v6790
    %7388 = vmatprep.subr.bf16.mxu0 0
    %7389 = vmatpush1.bf16.msra.mxu0 %v6797
    %7390 = vmatprep.subr.bf16.mxu0 0
    %7391 = vmatpush1.bf16.msra.mxu0 %v6804
    %7392 = vmatprep.subr.bf16.mxu0 0
    %7393 = vmatpush1.bf16.msra.mxu0 %v6811
    %7394 = vmatprep.subr.bf16.mxu0 0
    %7395 = vmatpush1.bf16.msra.mxu0 %v6818
    %7396 = vmatprep.subr.bf16.mxu0 0
    %7397 = vmatpush1.bf16.msra.mxu0 %v6825
    %7398 = vmatprep.subr.bf16.mxu0 0
    %7399 = vmatpush1.bf16.msra.mxu0 %v6832
    %7400 = vmatprep.subr.bf16.mxu0 0
    %7401 = vmatpush1.bf16.msra.mxu0 %v6839
    %7402 = vmatprep.subr.bf16.mxu0 0
    %7403 = vmatpush1.bf16.msra.mxu0 %v6846
    %7404 = vmatprep.subr.bf16.mxu0 0
    %7405 = vmatpush1.bf16.msra.mxu0 %v6853
    %7406 = vmatprep.subr.bf16.mxu0 0
    %7407 = vmatpush1.bf16.msra.mxu0 %v6860
    %7408 = vmatprep.subr.bf16.mxu0 0
    %7409 = vmatpush1.bf16.msra.mxu0 %v6867
    %7410 = vmatprep.mubr.bf16.mxu0 %v5150
    %7411 = vmatmul.mubr.bf16.gmra.mrb[0].mxu0 %v5149
    %v7412 = vpop.f32.mrb[0].mxu0
    %v7413 = vadd.f32 %v7373, %v7412
    %v7414 = vpop.f32.mrb[0].mxu0
    %v7415 = vpop.f32.mrb[0].mxu0
    %v7416 = vpop.f32.mrb[0].mxu0
    %7417 = vdwg.mxu0
    %v7418 = vmul.f32 %v7168, 0.5
    %v7419 = vmul.f32 %v7170, 0.5
    %v7420 = vmul.f32 %v7250, 0.5
    %v7421 = vmul.f32 %v7252, 0.5
    %v7422 = vmul.f32 %v7332, 0.5
    %v7423 = vmul.f32 %v7334, 0.5
    %v7424 = vmul.f32 %v7413, 0.5
    %v7425 = vtanh.pop %v7418
    %v7426 = vtanh.pop %v7419
    %v7427 = vtanh.pop %v7420
    %v7428 = vtanh.pop %v7421
    %v7429 = vtanh.pop %v7422
    %v7430 = vtanh.pop %v7423
    %v7431 = vtanh.pop %v7424
    %v7432 = vadd.f32 %v7425, 1.0
    %v7433 = vadd.f32 %v7426, 1.0
    %v7434 = vadd.f32 %v7427, 1.0
    %v7435 = vadd.f32 %v7428, 1.0
    %v7436 = vadd.f32 %v7429, 1.0
    %v7437 = vadd.f32 %v7430, 1.0
    %v7438 = vadd.f32 %v7431, 1.0
    %v7439 = vmul.f32 %v7432, 0.5
    %v7440 = vmul.f32 %v7433, 0.5
    %v7441 = vmul.f32 %v7434, 0.5
    %v7442 = vmul.f32 %v7435, 0.5
    %v7443 = vmul.f32 %v7436, 0.5
    %v7444 = vmul.f32 %v7437, 0.5
    %v7445 = vmul.f32 %v7438, 0.5
    %v7446 = vld [vmem:[%s20] sm:$0xf]
    %v7447 = vld [vmem:[%s20 + $0x4] sm:$0xf]
    %v7448 = vld [vmem:[%s20 + $0x8] sm:$0xf]
    %v7449 = vld [vmem:[%s20 + $0xc] sm:$0xf]
    %v7450 = vld [vmem:[%s20 + $0x10] sm:$0xf]
    %v7451 = vld [vmem:[%s20 + $0x14] sm:$0xf]
    %v7452 = vld [vmem:[%s20 + $0x18] sm:$0xf]
    %v7453 = vld [vmem:[%s20 + $0x1c] sm:$0xf]
    %v7454 = vld [vmem:[%s20 + $0x20] sm:$0xf]
    %v7455 = vld [vmem:[%s20 + $0x24] sm:$0xf]
    %v7456 = vld [vmem:[%s20 + $0x28] sm:$0xf]
    %v7457 = vld [vmem:[%s20 + $0x2c] sm:$0xf]
    %v7458 = vld [vmem:[%s20 + $0x30] sm:$0xf]
    %v7459 = vld [vmem:[%s20 + $0x34] sm:$0xf]
    %v7460 = vld [vmem:[%s20 + $0x38] sm:$0xf]
    %v7461 = vld [vmem:[%s20 + $0x3c] sm:$0xf]
    %v7462 = vld [vmem:[%s20 + $0x40] sm:$0xf]
    %v7463 = vld [vmem:[%s20 + $0x44] sm:$0xf]
    %v7464 = vld [vmem:[%s20 + $0x48] sm:$0xf]
    %v7465 = vld [vmem:[%s20 + $0x4c] sm:$0xf]
    %v7466 = vld [vmem:[%s20 + $0x50] sm:$0xf]
    %v7467 = vld [vmem:[%s20 + $0x54] sm:$0xf]
    %v7468 = vld [vmem:[%s20 + $0x58] sm:$0xf]
    %v7469 = vld [vmem:[%s20 + $0x5c] sm:$0xf]
    %v7470 = vld [vmem:[%s20 + $0x60] sm:$0xf]
    %v7471 = vld [vmem:[%s20 + $0x64] sm:$0xf]
    %v7472 = vld [vmem:[%s20 + $0x68] sm:$0xf]
    %v7473 = vld [vmem:[%s20 + $0x6c] sm:$0xf]
    %v7474 = vld [vmem:[%s20 + $0x70] sm:$0xf]
    %v7475 = vld [vmem:[%s20 + $0x74] sm:$0xf]
    %v7476 = vld [vmem:[%s20 + $0x78] sm:$0xf]
    %v7477 = vld [vmem:[%s20 + $0x7c] sm:$0xf]
    %v7478 = vld [vmem:[%s20 + $0x80] sm:$0xf]
    %v7479 = vld [vmem:[%s20 + $0x84] sm:$0xf]
    %v7480 = vld [vmem:[%s20 + $0x88] sm:$0xf]
    %v7481 = vld [vmem:[%s20 + $0x8c] sm:$0xf]
    %v7482 = vld [vmem:[%s20 + $0x90] sm:$0xf]
    %v7483 = vld [vmem:[%s20 + $0x94] sm:$0xf]
    %v7484 = vld [vmem:[%s20 + $0x98] sm:$0xf]
    %v7485 = vld [vmem:[%s20 + $0x9c] sm:$0xf]
    %v7486 = vld [vmem:[%s20 + $0xa0] sm:$0xf]
    %v7487 = vld [vmem:[%s20 + $0xa4] sm:$0xf]
    %v7488 = vld [vmem:[%s20 + $0xa8] sm:$0xf]
    %v7489 = vld [vmem:[%s20 + $0xac] sm:$0xf]
    %v7490 = vld [vmem:[%s20 + $0xb0] sm:$0xf]
    %v7491 = vld [vmem:[%s20 + $0xb4] sm:$0xf]
    %v7492 = vld [vmem:[%s20 + $0xb8] sm:$0xf]
    %v7493 = vld [vmem:[%s20 + $0xbc] sm:$0xf]
    %v7494 = vld [vmem:[%s20 + $0xc0] sm:$0xf]
    %v7495 = vld [vmem:[%s20 + $0xc4] sm:$0xf]
    %v7496 = vld [vmem:[%s20 + $0xc8] sm:$0xf]
    %v7497 = vld [vmem:[%s20 + $0xcc] sm:$0xf]
    %v7498 = vld [vmem:[%s20 + $0xd0] sm:$0xf]
    %v7499 = vld [vmem:[%s20 + $0xd4] sm:$0xf]
    %v7500 = vld [vmem:[%s20 + $0xd8] sm:$0xf]
    %v7501 = vld [vmem:[%s20 + $0xdc] sm:$0xf]
    %v7502 = vld [vmem:[%s20 + $0xe0] sm:$0xf]
    %v7503 = vld [vmem:[%s20 + $0xe4] sm:$0xf]
    %v7504 = vld [vmem:[%s20 + $0xe8] sm:$0xf]
    %v7505 = vld [vmem:[%s20 + $0xec] sm:$0xf]
    %v7506 = vld [vmem:[%s20 + $0xf0] sm:$0xf]
    %v7507 = vld [vmem:[%s20 + $0xf4] sm:$0xf]
    %v7508 = vld [vmem:[%s20 + $0xf8] sm:$0xf]
    %v7509 = vld [vmem:[%s20 + $0xfc] sm:$0xf]
    %v7510 = vld [vmem:[#allocation2] sm:$0x1]
    %v7512 = vlaneseq
    %v7513 = vshrl.u32 %v7512, 7
    %v7514 = vsub.s32 0, %v7513
    %v7515 = vrot.slane %v7510, %v7514
    %v7581 = vunpack.c.l.b16 %v7446
    %v7582 = vunpack.c.l.b16 %v7447
    %v7583 = vunpack.c.l.b16 %v7448
    %v7584 = vunpack.c.l.b16 %v7449
    %v7585 = vunpack.c.l.b16 %v7450
    %v7586 = vunpack.c.l.b16 %v7451
    %v7587 = vunpack.c.l.b16 %v7452
    %v7588 = vunpack.c.l.b16 %v7453
    %v7589 = vunpack.c.l.b16 %v7454
    %v7590 = vunpack.c.l.b16 %v7455
    %v7591 = vunpack.c.l.b16 %v7456
    %v7592 = vunpack.c.l.b16 %v7457
    %v7593 = vunpack.c.l.b16 %v7458
    %v7594 = vunpack.c.l.b16 %v7459
    %v7595 = vunpack.c.l.b16 %v7460
    %v7596 = vunpack.c.l.b16 %v7461
    %v7597 = vunpack.c.l.b16 %v7462
    %v7598 = vunpack.c.l.b16 %v7463
    %v7599 = vunpack.c.l.b16 %v7464
    %v7600 = vunpack.c.l.b16 %v7465
    %v7601 = vunpack.c.l.b16 %v7466
    %v7602 = vunpack.c.l.b16 %v7467
    %v7603 = vunpack.c.l.b16 %v7468
    %v7604 = vunpack.c.l.b16 %v7469
    %v7605 = vunpack.c.l.b16 %v7470
    %v7606 = vunpack.c.l.b16 %v7471
    %v7607 = vunpack.c.l.b16 %v7472
    %v7608 = vunpack.c.l.b16 %v7473
    %v7609 = vunpack.c.l.b16 %v7474
    %v7610 = vunpack.c.l.b16 %v7475
    %v7611 = vunpack.c.l.b16 %v7476
    %v7612 = vunpack.c.l.b16 %v7477
    %v7613 = vunpack.c.l.b16 %v7478
    %v7614 = vunpack.c.l.b16 %v7479
    %v7615 = vunpack.c.l.b16 %v7480
    %v7616 = vunpack.c.l.b16 %v7481
    %v7617 = vunpack.c.l.b16 %v7482
    %v7618 = vunpack.c.l.b16 %v7483
    %v7619 = vunpack.c.l.b16 %v7484
    %v7620 = vunpack.c.l.b16 %v7485
    %v7621 = vunpack.c.l.b16 %v7486
    %v7622 = vunpack.c.l.b16 %v7487
    %v7623 = vunpack.c.l.b16 %v7488
    %v7624 = vunpack.c.l.b16 %v7489
    %v7625 = vunpack.c.l.b16 %v7490
    %v7626 = vunpack.c.l.b16 %v7491
    %v7627 = vunpack.c.l.b16 %v7492
    %v7628 = vunpack.c.l.b16 %v7493
    %v7629 = vunpack.c.l.b16 %v7494
    %v7630 = vunpack.c.l.b16 %v7495
    %v7631 = vunpack.c.l.b16 %v7496
    %v7632 = vunpack.c.l.b16 %v7497
    %v7633 = vunpack.c.l.b16 %v7498
    %v7634 = vunpack.c.l.b16 %v7499
    %v7635 = vunpack.c.l.b16 %v7500
    %v7636 = vunpack.c.l.b16 %v7501
    %v7637 = vunpack.c.l.b16 %v7502
    %v7638 = vunpack.c.l.b16 %v7503
    %v7639 = vunpack.c.l.b16 %v7504
    %v7640 = vunpack.c.l.b16 %v7505
    %v7641 = vunpack.c.l.b16 %v7506
    %v7642 = vunpack.c.l.b16 %v7507
    %v7643 = vunpack.c.l.b16 %v7508
    %v7644 = vunpack.c.l.b16 %v7509
    %v7645 = vpack.c.b16 %v7582, %v7581
    %v7646 = vpack.c.b16 %v7584, %v7583
    %v7647 = vpack.c.b16 %v7586, %v7585
    %v7648 = vpack.c.b16 %v7588, %v7587
    %v7649 = vpack.c.b16 %v7590, %v7589
    %v7650 = vpack.c.b16 %v7592, %v7591
    %v7651 = vpack.c.b16 %v7594, %v7593
    %v7652 = vpack.c.b16 %v7596, %v7595
    %v7653 = vpack.c.b16 %v7598, %v7597
    %v7654 = vpack.c.b16 %v7600, %v7599
    %v7655 = vpack.c.b16 %v7602, %v7601
    %v7656 = vpack.c.b16 %v7604, %v7603
    %v7657 = vpack.c.b16 %v7606, %v7605
    %v7658 = vpack.c.b16 %v7608, %v7607
    %v7659 = vpack.c.b16 %v7610, %v7609
    %v7660 = vpack.c.b16 %v7612, %v7611
    %v7661 = vpack.c.b16 %v7614, %v7613
    %v7662 = vpack.c.b16 %v7616, %v7615
    %v7663 = vpack.c.b16 %v7618, %v7617
    %v7664 = vpack.c.b16 %v7620, %v7619
    %v7665 = vpack.c.b16 %v7622, %v7621
    %v7666 = vpack.c.b16 %v7624, %v7623
    %v7667 = vpack.c.b16 %v7626, %v7625
    %v7668 = vpack.c.b16 %v7628, %v7627
    %v7669 = vpack.c.b16 %v7630, %v7629
    %v7670 = vpack.c.b16 %v7632, %v7631
    %v7671 = vpack.c.b16 %v7634, %v7633
    %v7672 = vpack.c.b16 %v7636, %v7635
    %v7673 = vpack.c.b16 %v7638, %v7637
    %v7674 = vpack.c.b16 %v7640, %v7639
    %v7675 = vpack.c.b16 %v7642, %v7641
    %v7676 = vpack.c.b16 %v7644, %v7643
    %7709 = vmatprep.subr.bf16.mxu0 0
    %7710 = vmatpush1.bf16.msra.mxu0 %v7645
    %7711 = vmatprep.subr.bf16.mxu0 0
    %7712 = vmatpush1.bf16.msra.mxu0 %v7646
    %7713 = vmatprep.subr.bf16.mxu0 0
    %7714 = vmatpush1.bf16.msra.mxu0 %v7647
    %7715 = vmatprep.subr.bf16.mxu0 0
    %7716 = vmatpush1.bf16.msra.mxu0 %v7648
    %7717 = vmatprep.subr.bf16.mxu0 0
    %7718 = vmatpush1.bf16.msra.mxu0 %v7649
    %7719 = vmatprep.subr.bf16.mxu0 0
    %7720 = vmatpush1.bf16.msra.mxu0 %v7650
    %7721 = vmatprep.subr.bf16.mxu0 0
    %7722 = vmatpush1.bf16.msra.mxu0 %v7651
    %7723 = vmatprep.subr.bf16.mxu0 0
    %7724 = vmatpush1.bf16.msra.mxu0 %v7652
    %7725 = vmatprep.subr.bf16.mxu0 0
    %7726 = vmatpush1.bf16.msra.mxu0 %v7653
    %7727 = vmatprep.subr.bf16.mxu0 0
    %7728 = vmatpush1.bf16.msra.mxu0 %v7654
    %7729 = vmatprep.subr.bf16.mxu0 0
    %7730 = vmatpush1.bf16.msra.mxu0 %v7655
    %7731 = vmatprep.subr.bf16.mxu0 0
    %7732 = vmatpush1.bf16.msra.mxu0 %v7656
    %7733 = vmatprep.subr.bf16.mxu0 0
    %7734 = vmatpush1.bf16.msra.mxu0 %v7657
    %7735 = vmatprep.subr.bf16.mxu0 0
    %7736 = vmatpush1.bf16.msra.mxu0 %v7658
    %7737 = vmatprep.subr.bf16.mxu0 0
    %7738 = vmatpush1.bf16.msra.mxu0 %v7659
    %7739 = vmatprep.subr.bf16.mxu0 0
    %7740 = vmatpush1.bf16.msra.mxu0 %v7660
    %7741 = vmatprep.mubr.bf16.mxu0 %v5644
    %7742 = vmatmul.mubr.bf16.gmra.mrb[0].mxu0 %v5643
    %v7743 = vpop.f32.mrb[0].mxu0
    %v7744 = vadd.f32 %v7515, %v7743
    %v7745 = vpop.f32.mrb[0].mxu0
    %v7746 = vpop.f32.mrb[0].mxu0
    %v7747 = vpop.f32.mrb[0].mxu0
    %7748 = vdwg.mxu0
    %7749 = vmatprep.subr.bf16.mxu0 0
    %7750 = vmatpush1.bf16.msra.mxu0 %v7661
    %7751 = vmatprep.subr.bf16.mxu0 0
    %7752 = vmatpush1.bf16.msra.mxu0 %v7662
    %7753 = vmatprep.subr.bf16.mxu0 0
    %7754 = vmatpush1.bf16.msra.mxu0 %v7663
    %7755 = vmatprep.subr.bf16.mxu0 0
    %7756 = vmatpush1.bf16.msra.mxu0 %v7664
    %7757 = vmatprep.subr.bf16.mxu0 0
    %7758 = vmatpush1.bf16.msra.mxu0 %v7665
    %7759 = vmatprep.subr.bf16.mxu0 0
    %7760 = vmatpush1.bf16.msra.mxu0 %v7666
    %7761 = vmatprep.subr.bf16.mxu0 0
    %7762 = vmatpush1.bf16.msra.mxu0 %v7667
    %7763 = vmatprep.subr.bf16.mxu0 0
    %7764 = vmatpush1.bf16.msra.mxu0 %v7668
    %7765 = vmatprep.subr.bf16.mxu0 0
    %7766 = vmatpush1.bf16.msra.mxu0 %v7669
    %7767 = vmatprep.subr.bf16.mxu0 0
    %7768 = vmatpush1.bf16.msra.mxu0 %v7670
    %7769 = vmatprep.subr.bf16.mxu0 0
    %7770 = vmatpush1.bf16.msra.mxu0 %v7671
    %7771 = vmatprep.subr.bf16.mxu0 0
    %7772 = vmatpush1.bf16.msra.mxu0 %v7672
    %7773 = vmatprep.subr.bf16.mxu0 0
    %7774 = vmatpush1.bf16.msra.mxu0 %v7673
    %7775 = vmatprep.subr.bf16.mxu0 0
    %7776 = vmatpush1.bf16.msra.mxu0 %v7674
    %7777 = vmatprep.subr.bf16.mxu0 0
    %7778 = vmatpush1.bf16.msra.mxu0 %v7675
    %7779 = vmatprep.subr.bf16.mxu0 0
    %7780 = vmatpush1.bf16.msra.mxu0 %v7676
    %7781 = vmatprep.mubr.bf16.mxu0 %v5646
    %7782 = vmatmul.mubr.bf16.gmra.mrb[0].mxu0 %v5645
    %v7783 = vpop.f32.mrb[0].mxu0
    %v7784 = vadd.f32 %v7744, %v7783
    %v7785 = vpop.f32.mrb[0].mxu0
    %v7786 = vpop.f32.mrb[0].mxu0
    %v7787 = vpop.f32.mrb[0].mxu0
    %7788 = vdwg.mxu0
    %vm7789 = vcmp.gt.f32.partialorder %v7784, 20.0
    %v7790 = vmin.f32 %v7784, 20.0
    %v7791 = vmul.f32 %v7790, 1.442695
    %v7792 = vpow.pop %v7791
    %v7793 = vadd.f32 %v7792, 1.0
    %v7794 = vlog2.pop %v7793
    %v7795 = vmul.f32 %v7794, 0.6931472
    %v7796 = vmul.f32 -0.5, %v7792
    %v7797 = vadd.f32 %v7796, 1.0
    %v7798 = vmul.f32 %v7797, %v7792
    %v7799 = vand.u32 2147483647, %v7792
    %vm7800 = vcmp.lt.f32.partialorder %v7799, 0.0004427343
    %v7801 = vsel %vm7800, %v7798, %v7795
    %v7802 = vsel %vm7789, %v7784, %v7801
    %v7803 = vadd.f32 %v7802, 0.0
    %7804 = vst [vmem:[#allocation6] sm:$0xff] %v7439
    %7805 = vst [vmem:[#allocation6 + $0x8] sm:$0xff] %v7440
    %7806 = vst [vmem:[#allocation6 + $0x10] sm:$0xff] %v7441
    %7807 = vst [vmem:[#allocation6 + $0x18] sm:$0xff] %v7442
    %7808 = vst [vmem:[#allocation6 + $0x20] sm:$0xff] %v7443
    %7809 = vst [vmem:[#allocation6 + $0x28] sm:$0xff] %v7444
    %7810 = vst.msk [vmem:[#allocation6 + $0x30] sm:$0xff] %vm2499, %v7445
    %7812 = vrot.lane.b32.xlu0 %v4502, 8
    %v7813 = vpop.permute.xlu0 %7812
    %7816 = vrot.lane.b32.xlu0 %v7803, 16
    %v7817 = vpop.permute.xlu0 %7816
    %v7819 = vsel %vm4548, %v4309, %v7813
    %v7820 = vsel %vm2499, %v7819, %v7817
    %vm7821 = vcmask 138240
    %v7822 = vsel %vm7821, %v7820, 0.0
    %7823 = vst [vmem:[%s23] sm:$0xff] %v7822
    // Predicated region
    $region94: #{vae_normal_forward.1} parent=1 // pred_check
      _
    $region95: #{vae_normal_forward.1} parent=1 // pred_check_branch
      %7825 = sbr.rel (0) target = $region97
    $region96: #{vae_normal_forward.1} parent=1 // pred_region
      %s7827 = ssub.s32 896, 896
      %7828 = vsyncadd [#allocation5], %s7827
      %s7830 = sshll.u32 [#allocation6], 4
      %s7831 = int_to_ptr.vmem [resolvable:$true] %s7830
      %7833 = dma.vmem_to_hbm [thread:$0]  %s7831, 896, %s22, [#allocation5]
    $region97: #{vae_normal_forward.1} parent=1 // pred_fallthru
      _
    // Predicated region
    $region98: #{vae_normal_forward.1} parent=1 // pred_check
      _
    $region99: #{vae_normal_forward.1} parent=1 // pred_check_branch
      %7835 = sbr.rel (0) target = $region101
    $region100: #{vae_normal_forward.1} parent=1 // pred_region
      _
    $region101: #{vae_normal_forward.1} parent=1 // pred_fallthru
      _
    // Predicated region
    $region102: #{vae_normal_forward.1} parent=1 // pred_check
      _
    $region103: #{vae_normal_forward.1} parent=1 // pred_check_branch
      %7837 = sbr.rel (0) target = $region105
    $region104: #{vae_normal_forward.1} parent=1 // pred_region
      %7838 = dma.done [#allocation5], 896
    $region105: #{vae_normal_forward.1} parent=1 // pred_fallthru
      _
    // Predicated region
    $region106: #{vae_normal_forward.1} parent=1 // pred_check
      _
    $region107: #{vae_normal_forward.1} parent=1 // pred_check_branch
      %7840 = sbr.rel (0) target = $region109
    $region108: #{vae_normal_forward.1} parent=1 // pred_region
      _
    $region109: #{vae_normal_forward.1} parent=1 // pred_fallthru
      _
    %7841 = vsyncpa [#allocation4], 1
    %7842 = vsyncpa [#allocation5], 1

</llo_original>
